<compile_context>
chip_gen: v5e
topology: v5e:2x2
jax: 0.10.0
libtpu: 0.0.40
codegen_flags: <defaults>
</compile_context>

<pallas_src>
import jax
import jax.numpy as jnp
from jax.experimental import pallas as pl
from jax.experimental.pallas import tpu as pltpu

EPS = 1e-5


def _pick_row_tile(hin, win, cin, c2, budget_bytes=24 * 1024 * 1024):
    """Largest input-row tile TIN (divisor of hin) whose per-tile VMEM footprint fits the
    budget and whose output block satisfies the (8, x) sublane rule."""
    ok = []
    for t in range(1, hin + 1):
        if hin % t:
            continue
        th, num_h = 2 * t, hin // t
        if ((th * win) % 8 == 0) or (num_h == 1):
            ok.append(t)

    def need(t):
        th = 2 * t
        return (2 * th * win * c2 * 2          # double-buffered bf16 output block
                + th * win * c2 * 4            # f32 accumulator
                + (th + 2) * (win + 2) * cin * 2)   # bf16 window scratch

    fitting = [t for t in ok if need(t) <= budget_bytes]
    return max(fitting) if fitting else min(ok)


def up_conv_forward(x_nchw, weight_oihw, bias, gamma, beta):
    """Forward of up_conv: Upsample(x2, nearest) -> Conv2d(3x3, pad=1) -> BN(train) -> ReLU.

    Returns the NCHW output in bfloat16 (internally NHWC; only the final convention
    transpose is left to XLA, done in bf16)."""
    N, Cin, Hin, Win = x_nchw.shape
    Cout = weight_oihw.shape[0]
    H, W = 2 * Hin, 2 * Win
    C2 = 2 * Cout

    TIN = _pick_row_tile(Hin, Win, Cin, C2)
    assert Hin % TIN == 0
    TH = 2 * TIN                              # upsampled output rows per tile
    num_h = Hin // TIN
    assert ((TH * Win) % 8 == 0) or (num_h == 1)

    # Small pre-upsample input: NCHW -> NHWC, bf16 for the MXU.
    x_nhwc = jnp.transpose(x_nchw, (0, 2, 3, 1)).astype(jnp.bfloat16)

    # Fold the column-direction nearest upsample into the weights.  For output column
    # w = 2q + t the 3x3 conv on the upsampled, column-padded image reads original
    # columns {q-1, q} (t=0) / {q, q+1} (t=1); both parities become extra GEMM output
    # channels, packed [t=0 | t=1] which is the NHWC memory order of (..., 2, Cout).
    w32 = weight_oihw.astype(jnp.float32)
    Wm = jnp.transpose(w32, (2, 3, 1, 0))          # (kh, kw, Cin, Cout)
    z = jnp.zeros((Cin, Cout), jnp.float32)
    taps = []
    for kh in range(3):
        taps.append(jnp.concatenate([Wm[kh, 0], z], axis=1))                           # col q-1
        taps.append(jnp.concatenate([Wm[kh, 1] + Wm[kh, 2], Wm[kh, 0] + Wm[kh, 1]], 1))  # col q
        taps.append(jnp.concatenate([z, Wm[kh, 2]], axis=1))                           # col q+1
    g = jnp.stack(taps, axis=0).astype(jnp.bfloat16)            # (9, Cin, 2*Cout)

    # Conv bias cancels through training-mode BN (mean is subtracted right after the conv).
    # TODO(synk): if BN running_mean/running_var updates are needed, add `bias` to `mean`.
    del bias

    def fill_window(x_ref, v_ref):
        """v_ref[r, p, :] = zero-padded, 2x-row-upsampled activation row (h0+r), col (p-1)."""
        i = pl.program_id(1)
        r0 = pl.multiple_of(i * TIN, TIN)           # first input row of this tile
        # Only the two pad columns need zeroing; the interior is fully overwritten below.
        zc = jnp.zeros((TH + 2, 1, Cin), v_ref.dtype)
        v_ref[:, 0:1, :] = zc
        v_ref[:, Win + 1:Win + 2, :] = zc
        # Bulk rows 1..TH: one wide store of the 2x row-repeated input rows [r0, r0+TIN).
        xt = x_ref[pl.ds(r0, TIN), :, :]                                    # (TIN, Win, Cin)
        up = jnp.broadcast_to(xt[:, None, :, :], (TIN, 2, Win, Cin))
        v_ref[1:TH + 1, 1:Win + 1, :] = up.reshape(TH, Win, Cin)
        # Halo rows: neighbouring input row, or zeros at the image border (hoisted check).
        top = x_ref[pl.ds(jnp.maximum(r0 - 1, 0), 1), :, :]                 # (1, Win, Cin)
        v_ref[0:1, 1:Win + 1, :] = jnp.where(i > 0, top, jnp.zeros_like(top))
        bot = x_ref[pl.ds(jnp.minimum(r0 + TIN, Hin - 1), 1), :, :]
        v_ref[TH + 1:TH + 2, 1:Win + 1, :] = jnp.where(i < num_h - 1, bot,
                                                       jnp.zeros_like(bot))

    def conv_tile(x_ref, g_ref, v_ref):
        """Fused row-upsample + pad + 3x3 conv for one tile -> (TH*Win, 2*Cout) f32."""
        fill_window(x_ref, v_ref)
        # 9-tap implicit GEMM: no im2col concat / patches materialization.
        acc = jnp.zeros((TH * Win, C2), jnp.float32)
        for kh in range(3):
            for j in range(3):
                lhs = v_ref[kh:kh + TH, j:j + Win, :].reshape(TH * Win, Cin)
                acc = acc + jnp.dot(lhs, g_ref[kh * 3 + j],
                                    preferred_element_type=jnp.float32)
        return acc

    def stats_kernel(x_ref, g_ref, sum_ref, sqs_ref, v_ref):
        # Pass 1: conv only; per-tile partial sum / sum-of-squares for BN statistics.
        y = conv_tile(x_ref, g_ref, v_ref)
        sum_ref[...] = jnp.sum(y, axis=0, keepdims=True)
        sqs_ref[...] = jnp.sum(y * y, axis=0, keepdims=True)

    def bn_relu_kernel(x_ref, g_ref, scale_ref, shift_ref, out_ref, v_ref):
        # Pass 2: recompute conv, apply folded BN affine + ReLU, bf16 store.
        # TODO(synk): for MXU-bound (large-channel) configs, materialize the pass-1 conv
        # in bf16 and make pass 2 a pure elementwise kernel instead of recomputing.
        y = conv_tile(x_ref, g_ref, v_ref)
        y = jnp.maximum(y * scale_ref[...] + shift_ref[...], 0.0)
        out_ref[...] = y.astype(out_ref.dtype)

    cparams = pltpu.CompilerParams(
        dimension_semantics=("parallel", "parallel"),
        vmem_limit_bytes=48 * 1024 * 1024,
    )

    # TODO(synk): for very large Hin*Win*Cin (v7x 64 MiB VMEM), replace the whole-image
    # x block with a manually DMA'd (TIN+2)-row halo window (memory_space=pl.ANY).
    x_spec = pl.BlockSpec((None, Hin, Win, Cin), lambda n, i: (n, 0, 0, 0))
    g_spec = pl.BlockSpec((9, Cin, C2), lambda n, i: (0, 0, 0))

    conv_flops = int(2 * N * H * W * Cout * 9 * Cin)
    x_bytes = int(x_nhwc.size) * 2
    g_bytes = int(g.size) * 2

    # ---- Pass 1: conv + per-tile partial BN statistics (no big HBM intermediate). ----
    stat_spec = pl.BlockSpec((None, None, 1, C2), lambda n, i: (n, i, 0, 0))
    p_sum, p_sqs = pl.pallas_call(
        stats_kernel,
        grid=(N, num_h),
        in_specs=[x_spec, g_spec],
        out_specs=(stat_spec, stat_spec),
        out_shape=(jax.ShapeDtypeStruct((N, num_h, 1, C2), jnp.float32),
                   jax.ShapeDtypeStruct((N, num_h, 1, C2), jnp.float32)),
        scratch_shapes=[pltpu.VMEM((TH + 2, Win + 2, Cin), jnp.bfloat16)],
        compiler_params=cparams,
        cost_estimate=pl.CostEstimate(
            flops=conv_flops, transcendentals=0,
            bytes_accessed=x_bytes + g_bytes + 2 * N * num_h * C2 * 4),
    )(x_nhwc, g)

    # Tiny cross-tile reduction + BN affine folding (O(Cout), plain JAX).
    # TODO(synk): E[x^2]-E[x]^2 in f32 can cancel for huge N*H*W / far-from-zero-mean
    # activations; switch to per-tile mean-shifted sums if that regime matters.
    count = float(N * H * W)
    sums = p_sum.sum(axis=(0, 1, 2)).reshape(2, Cout).sum(axis=0)
    sqs = p_sqs.sum(axis=(0, 1, 2)).reshape(2, Cout).sum(axis=0)
    mean = sums / count
    var = jnp.maximum(sqs / count - mean * mean, 0.0)           # biased (training) variance
    inv = jax.lax.rsqrt(var + EPS)
    scale_c = gamma.astype(jnp.float32) * inv
    shift_c = beta.astype(jnp.float32) - mean * scale_c
    scale2 = jnp.tile(scale_c, 2).reshape(1, C2)                # packed (parity, c) order
    shift2 = jnp.tile(shift_c, 2).reshape(1, C2)
    aff_spec = pl.BlockSpec((1, C2), lambda n, i: (0, 0))

    # ---- Pass 2: conv (recomputed) + BN affine + ReLU, bf16 packed store. ----
    # Output layout (N, H*Win, 2*Cout) is row-major identical to NHWC (N, H, W, Cout);
    # for production Cout >= 64 the last dim (2*Cout >= 128) makes stores lane-dense.
    out_spec = pl.BlockSpec((None, TH * Win, C2), lambda n, i: (n, i, 0))
    y_packed = pl.pallas_call(
        bn_relu_kernel,
        grid=(N, num_h),
        in_specs=[x_spec, g_spec, aff_spec, aff_spec],
        out_specs=out_spec,
        out_shape=jax.ShapeDtypeStruct((N, H * Win, C2), jnp.bfloat16),
        scratch_shapes=[pltpu.VMEM((TH + 2, Win + 2, Cin), jnp.bfloat16)],
        compiler_params=cparams,
        cost_estimate=pl.CostEstimate(
            flops=conv_flops + int(3 * N * H * W * Cout), transcendentals=0,
            bytes_accessed=x_bytes + g_bytes + N * H * W * Cout * 2),
    )(x_nhwc, g, scale2, shift2)

    out_nhwc = y_packed.reshape(N, H, W, Cout)                  # free reshape (same bytes)
    # TODO(synk): NHWC consumers should take `out_nhwc` directly and skip this transpose
    # (one extra HBM pass); kept only to match the PyTorch NCHW return convention.
    return jnp.transpose(out_nhwc, (0, 3, 1, 2))


if __name__ == "__main__":
    key = jax.random.PRNGKey(0)
    k_x, k_w, k_b, k_g, k_be = jax.random.split(key, 5)

    N, Cin, Cout, Hin, Win = 2, 4, 8, 16, 16                    # output spatial = 32x32

    x = jax.random.normal(k_x, (N, Cin, Hin, Win), dtype=jnp.float32)
    weight = jax.random.normal(k_w, (Cout, Cin, 3, 3), dtype=jnp.float32) * 0.1
    bias = jax.random.normal(k_b, (Cout,), dtype=jnp.float32) * 0.1
    gamma = 1.0 + 0.1 * jax.random.normal(k_g, (Cout,), dtype=jnp.float32)
    beta = 0.1 * jax.random.normal(k_be, (Cout,), dtype=jnp.float32)

    out = up_conv_forward(x, weight, bias, gamma, beta)
    out = jax.block_until_ready(out)
    assert out.shape == (N, Cout, 2 * Hin, 2 * Win)
    out_f32 = out.astype(jnp.float32)
    assert bool(jnp.all(out_f32 >= 0.0))                        # ReLU post-condition

    # Reference (same bf16 quantization of x / weights as the kernel's MXU path).
    xb = x.astype(jnp.bfloat16).astype(jnp.float32)
    wb = weight.astype(jnp.bfloat16).astype(jnp.float32)
    up = jnp.repeat(jnp.repeat(xb, 2, axis=2), 2, axis=3)
    conv = jax.lax.conv_general_dilated(
        up, wb, window_strides=(1, 1), padding=((1, 1), (1, 1)),
        dimension_numbers=("NCHW", "OIHW", "NCHW"),
        precision=jax.lax.Precision.HIGHEST) + bias.reshape(1, Cout, 1, 1)
    mu = conv.mean(axis=(0, 2, 3), keepdims=True)
    var = conv.var(axis=(0, 2, 3), keepdims=True)               # biased, like BN training
    ref = (conv - mu) * jax.lax.rsqrt(var + EPS)
    ref = jnp.maximum(ref * gamma.reshape(1, Cout, 1, 1) + beta.reshape(1, Cout, 1, 1), 0.0)

    err = float(jnp.max(jnp.abs(out_f32 - ref)))
    assert err < 3e-2, err                                      # bf16 output tolerance
    print("KERNEL_OK")
</pallas_src>

<mosaic_0001>
module attributes {stable_mosaic.version = 11 : i64} {
  func.func @stats_kernel(%arg0: i32, %arg1: i32, %arg2: memref<1x16x16x4xbf16, #tpu.memory_space<vmem>>, %arg3: memref<9x4x16xbf16, #tpu.memory_space<vmem>>, %arg4: memref<1x1x1x16xf32, #tpu.memory_space<vmem>>, %arg5: memref<1x1x1x16xf32, #tpu.memory_space<vmem>>, %arg6: memref<34x18x4xbf16, #tpu.memory_space<vmem>>) attributes {dimension_semantics = [#tpu.dimension_semantics<parallel>, #tpu.dimension_semantics<parallel>], iteration_bounds = array<i64: 2, 1>, scalar_prefetch = 0 : i64, scratch_operands = 1 : i64, tpu.core_type = #tpu.core_type<tc>, window_params = [{transform_indices = @transform_0, window_bounds = array<i64: 1, 16, 16, 4>}, {pipeline_mode = #tpu.pipeline_mode<synchronous>, transform_indices = @transform_1, window_bounds = array<i64: 9, 4, 16>}, {transform_indices = @transform_2, window_bounds = array<i64: 1, 1, 1, 16>}, {transform_indices = @transform_3, window_bounds = array<i64: 1, 1, 1, 16>}]} {
    %c16_i32 = arith.constant 16 : i32
    %0 = arith.muli %arg1, %c16_i32 : i32
    %1 = tpu.assume_multiple %0, 16 : i32
    %cst = arith.constant 0.000000e+00 : bf16
    %2 = vector.broadcast %cst : bf16 to vector<34x1x4xbf16>
    %c0 = arith.constant 0 : index
    %c0_0 = arith.constant 0 : index
    %c0_1 = arith.constant 0 : index
    %3 = vector.load %arg6[%c0, %c0_0, %c0_1] : memref<34x18x4xbf16, #tpu.memory_space<vmem>>, vector<34x1x4xbf16>
    tpu.vector_store %arg6[%c0, %c0_0, %c0_1], %2 {strides = array<i32>} : memref<34x18x4xbf16, #tpu.memory_space<vmem>>, vector<34x1x4xbf16>,
    %c0_2 = arith.constant 0 : index
    %c17 = arith.constant 17 : index
    %c0_3 = arith.constant 0 : index
    %4 = vector.load %arg6[%c0_2, %c17, %c0_3] : memref<34x18x4xbf16, #tpu.memory_space<vmem>>, vector<34x1x4xbf16>
    tpu.vector_store %arg6[%c0_2, %c17, %c0_3], %2 {strides = array<i32>} : memref<34x18x4xbf16, #tpu.memory_space<vmem>>, vector<34x1x4xbf16>,
    %c0_4 = arith.constant 0 : index
    %5 = arith.index_cast %1 : i32 to index
    %c0_5 = arith.constant 0 : index
    %c0_6 = arith.constant 0 : index
    %6 = vector.load %arg2[%c0_4, %5, %c0_5, %c0_6] : memref<1x16x16x4xbf16, #tpu.memory_space<vmem>>, vector<1x16x16x4xbf16>
    %7 = vector.shape_cast %6 : vector<1x16x16x4xbf16> to vector<16x16x4xbf16>
    %8 = vector.shape_cast %7 : vector<16x16x4xbf16> to vector<16x1x16x4xbf16>
    %9 = vector.shape_cast %8 : vector<16x1x16x4xbf16> to vector<16x1x16x4xbf16>
    %10 = vector.broadcast %9 : vector<16x1x16x4xbf16> to vector<16x2x16x4xbf16>
    %11 = vector.shape_cast %10 : vector<16x2x16x4xbf16> to vector<32x16x4xbf16>
    %c1 = arith.constant 1 : index
    %c1_7 = arith.constant 1 : index
    %c0_8 = arith.constant 0 : index
    %12 = vector.load %arg6[%c1, %c1_7, %c0_8] : memref<34x18x4xbf16, #tpu.memory_space<vmem>>, vector<32x16x4xbf16>
    tpu.vector_store %arg6[%c1, %c1_7, %c0_8], %11 {strides = array<i32>} : memref<34x18x4xbf16, #tpu.memory_space<vmem>>, vector<32x16x4xbf16>,
    %c1_i32 = arith.constant 1 : i32
    %13 = arith.subi %1, %c1_i32 : i32
    %c0_i32 = arith.constant 0 : i32
    %14 = arith.maxsi %13, %c0_i32 : i32
    %c0_9 = arith.constant 0 : index
    %15 = arith.index_cast %14 : i32 to index
    %c0_10 = arith.constant 0 : index
    %c0_11 = arith.constant 0 : index
    %16 = vector.load %arg2[%c0_9, %15, %c0_10, %c0_11] : memref<1x16x16x4xbf16, #tpu.memory_space<vmem>>, vector<1x1x16x4xbf16>
    %17 = vector.shape_cast %16 : vector<1x1x16x4xbf16> to vector<1x16x4xbf16>
    %c0_i32_12 = arith.constant 0 : i32
    %18 = arith.cmpi sgt, %arg1, %c0_i32_12 : i32
    %cst_13 = arith.constant 0.000000e+00 : bf16
    %19 = vector.broadcast %cst_13 : bf16 to vector<1x16x4xbf16>
    %20 = arith.select %18, %17, %19 : vector<1x16x4xbf16>
    %c0_14 = arith.constant 0 : index
    %c1_15 = arith.constant 1 : index
    %c0_16 = arith.constant 0 : index
    %21 = vector.load %arg6[%c0_14, %c1_15, %c0_16] : memref<34x18x4xbf16, #tpu.memory_space<vmem>>, vector<1x16x4xbf16>
    tpu.vector_store %arg6[%c0_14, %c1_15, %c0_16], %20 {strides = array<i32>} : memref<34x18x4xbf16, #tpu.memory_space<vmem>>, vector<1x16x4xbf16>,
    %c16_i32_17 = arith.constant 16 : i32
    %22 = arith.addi %1, %c16_i32_17 : i32
    %c15_i32 = arith.constant 15 : i32
    %23 = arith.minsi %22, %c15_i32 : i32
    %c0_18 = arith.constant 0 : index
    %24 = arith.index_cast %23 : i32 to index
    %c0_19 = arith.constant 0 : index
    %c0_20 = arith.constant 0 : index
    %25 = vector.load %arg2[%c0_18, %24, %c0_19, %c0_20] : memref<1x16x16x4xbf16, #tpu.memory_space<vmem>>, vector<1x1x16x4xbf16>
    %26 = vector.shape_cast %25 : vector<1x1x16x4xbf16> to vector<1x16x4xbf16>
    %c0_i32_21 = arith.constant 0 : i32
    %27 = arith.cmpi slt, %arg1, %c0_i32_21 : i32
    %cst_22 = arith.constant 0.000000e+00 : bf16
    %28 = vector.broadcast %cst_22 : bf16 to vector<1x16x4xbf16>
    %29 = arith.select %27, %26, %28 : vector<1x16x4xbf16>
    %c33 = arith.constant 33 : index
    %c1_23 = arith.constant 1 : index
    %c0_24 = arith.constant 0 : index
    %30 = vector.load %arg6[%c33, %c1_23, %c0_24] : memref<34x18x4xbf16, #tpu.memory_space<vmem>>, vector<1x16x4xbf16>
    tpu.vector_store %arg6[%c33, %c1_23, %c0_24], %29 {strides = array<i32>} : memref<34x18x4xbf16, #tpu.memory_space<vmem>>, vector<1x16x4xbf16>,
    %cst_25 = arith.constant 0.000000e+00 : f32
    %31 = vector.broadcast %cst_25 : f32 to vector<512x16xf32>
    %c0_26 = arith.constant 0 : index
    %c0_27 = arith.constant 0 : index
    %c0_28 = arith.constant 0 : index
    %32 = vector.load %arg6[%c0_26, %c0_27, %c0_28] : memref<34x18x4xbf16, #tpu.memory_space<vmem>>, vector<32x16x4xbf16>
    %33 = vector.shape_cast %32 : vector<32x16x4xbf16> to vector<512x4xbf16>
    %c0_29 = arith.constant 0 : index
    %c0_30 = arith.constant 0 : index
    %c0_31 = arith.constant 0 : index
    %34 = vector.load %arg3[%c0_29, %c0_30, %c0_31] : memref<9x4x16xbf16, #tpu.memory_space<vmem>>, vector<1x4x16xbf16>
    %35 = vector.shape_cast %34 : vector<1x4x16xbf16> to vector<4x16xbf16>
    %cst_32 = arith.constant dense<0.000000e+00> : vector<512x16xf32>
    %36 = tpu.matmul %33, %35, %cst_32 {dimension_numbers = #tpu.dot_dimension_numbers<[1], [0], [0], [1], [0, 0, 1, 1], [], []>} : vector<512x4xbf16>, vector<4x16xbf16>, vector<512x16xf32> -> vector<512x16xf32>
    %37 = arith.addf %31, %36 : vector<512x16xf32>
    %c0_33 = arith.constant 0 : index
    %c1_34 = arith.constant 1 : index
    %c0_35 = arith.constant 0 : index
    %38 = vector.load %arg6[%c0_33, %c1_34, %c0_35] : memref<34x18x4xbf16, #tpu.memory_space<vmem>>, vector<32x16x4xbf16>
    %39 = vector.shape_cast %38 : vector<32x16x4xbf16> to vector<512x4xbf16>
    %c1_36 = arith.constant 1 : index
    %c0_37 = arith.constant 0 : index
    %c0_38 = arith.constant 0 : index
    %40 = vector.load %arg3[%c1_36, %c0_37, %c0_38] : memref<9x4x16xbf16, #tpu.memory_space<vmem>>, vector<1x4x16xbf16>
    %41 = vector.shape_cast %40 : vector<1x4x16xbf16> to vector<4x16xbf16>
    %cst_39 = arith.constant dense<0.000000e+00> : vector<512x16xf32>
    %42 = tpu.matmul %39, %41, %cst_39 {dimension_numbers = #tpu.dot_dimension_numbers<[1], [0], [0], [1], [0, 0, 1, 1], [], []>} : vector<512x4xbf16>, vector<4x16xbf16>, vector<512x16xf32> -> vector<512x16xf32>
    %43 = arith.addf %37, %42 : vector<512x16xf32>
    %c0_40 = arith.constant 0 : index
    %c2 = arith.constant 2 : index
    %c0_41 = arith.constant 0 : index
    %44 = vector.load %arg6[%c0_40, %c2, %c0_41] : memref<34x18x4xbf16, #tpu.memory_space<vmem>>, vector<32x16x4xbf16>
    %45 = vector.shape_cast %44 : vector<32x16x4xbf16> to vector<512x4xbf16>
    %c2_42 = arith.constant 2 : index
    %c0_43 = arith.constant 0 : index
    %c0_44 = arith.constant 0 : index
    %46 = vector.load %arg3[%c2_42, %c0_43, %c0_44] : memref<9x4x16xbf16, #tpu.memory_space<vmem>>, vector<1x4x16xbf16>
    %47 = vector.shape_cast %46 : vector<1x4x16xbf16> to vector<4x16xbf16>
    %cst_45 = arith.constant dense<0.000000e+00> : vector<512x16xf32>
    %48 = tpu.matmul %45, %47, %cst_45 {dimension_numbers = #tpu.dot_dimension_numbers<[1], [0], [0], [1], [0, 0, 1, 1], [], []>} : vector<512x4xbf16>, vector<4x16xbf16>, vector<512x16xf32> -> vector<512x16xf32>
    %49 = arith.addf %43, %48 : vector<512x16xf32>
    %c1_46 = arith.constant 1 : index
    %c0_47 = arith.constant 0 : index
    %c0_48 = arith.constant 0 : index
    %50 = vector.load %arg6[%c1_46, %c0_47, %c0_48] : memref<34x18x4xbf16, #tpu.memory_space<vmem>>, vector<32x16x4xbf16>
    %51 = vector.shape_cast %50 : vector<32x16x4xbf16> to vector<512x4xbf16>
    %c3 = arith.constant 3 : index
    %c0_49 = arith.constant 0 : index
    %c0_50 = arith.constant 0 : index
    %52 = vector.load %arg3[%c3, %c0_49, %c0_50] : memref<9x4x16xbf16, #tpu.memory_space<vmem>>, vector<1x4x16xbf16>
    %53 = vector.shape_cast %52 : vector<1x4x16xbf16> to vector<4x16xbf16>
    %cst_51 = arith.constant dense<0.000000e+00> : vector<512x16xf32>
    %54 = tpu.matmul %51, %53, %cst_51 {dimension_numbers = #tpu.dot_dimension_numbers<[1], [0], [0], [1], [0, 0, 1, 1], [], []>} : vector<512x4xbf16>, vector<4x16xbf16>, vector<512x16xf32> -> vector<512x16xf32>
    %55 = arith.addf %49, %54 : vector<512x16xf32>
    %c1_52 = arith.constant 1 : index
    %c1_53 = arith.constant 1 : index
    %c0_54 = arith.constant 0 : index
    %56 = vector.load %arg6[%c1_52, %c1_53, %c0_54] : memref<34x18x4xbf16, #tpu.memory_space<vmem>>, vector<32x16x4xbf16>
    %57 = vector.shape_cast %56 : vector<32x16x4xbf16> to vector<512x4xbf16>
    %c4 = arith.constant 4 : index
    %c0_55 = arith.constant 0 : index
    %c0_56 = arith.constant 0 : index
    %58 = vector.load %arg3[%c4, %c0_55, %c0_56] : memref<9x4x16xbf16, #tpu.memory_space<vmem>>, vector<1x4x16xbf16>
    %59 = vector.shape_cast %58 : vector<1x4x16xbf16> to vector<4x16xbf16>
    %cst_57 = arith.constant dense<0.000000e+00> : vector<512x16xf32>
    %60 = tpu.matmul %57, %59, %cst_57 {dimension_numbers = #tpu.dot_dimension_numbers<[1], [0], [0], [1], [0, 0, 1, 1], [], []>} : vector<512x4xbf16>, vector<4x16xbf16>, vector<512x16xf32> -> vector<512x16xf32>
    %61 = arith.addf %55, %60 : vector<512x16xf32>
    %c1_58 = arith.constant 1 : index
    %c2_59 = arith.constant 2 : index
    %c0_60 = arith.constant 0 : index
    %62 = vector.load %arg6[%c1_58, %c2_59, %c0_60] : memref<34x18x4xbf16, #tpu.memory_space<vmem>>, vector<32x16x4xbf16>
    %63 = vector.shape_cast %62 : vector<32x16x4xbf16> to vector<512x4xbf16>
    %c5 = arith.constant 5 : index
    %c0_61 = arith.constant 0 : index
    %c0_62 = arith.constant 0 : index
    %64 = vector.load %arg3[%c5, %c0_61, %c0_62] : memref<9x4x16xbf16, #tpu.memory_space<vmem>>, vector<1x4x16xbf16>
    %65 = vector.shape_cast %64 : vector<1x4x16xbf16> to vector<4x16xbf16>
    %cst_63 = arith.constant dense<0.000000e+00> : vector<512x16xf32>
    %66 = tpu.matmul %63, %65, %cst_63 {dimension_numbers = #tpu.dot_dimension_numbers<[1], [0], [0], [1], [0, 0, 1, 1], [], []>} : vector<512x4xbf16>, vector<4x16xbf16>, vector<512x16xf32> -> vector<512x16xf32>
    %67 = arith.addf %61, %66 : vector<512x16xf32>
    %c2_64 = arith.constant 2 : index
    %c0_65 = arith.constant 0 : index
    %c0_66 = arith.constant 0 : index
    %68 = vector.load %arg6[%c2_64, %c0_65, %c0_66] : memref<34x18x4xbf16, #tpu.memory_space<vmem>>, vector<32x16x4xbf16>
    %69 = vector.shape_cast %68 : vector<32x16x4xbf16> to vector<512x4xbf16>
    %c6 = arith.constant 6 : index
    %c0_67 = arith.constant 0 : index
    %c0_68 = arith.constant 0 : index
    %70 = vector.load %arg3[%c6, %c0_67, %c0_68] : memref<9x4x16xbf16, #tpu.memory_space<vmem>>, vector<1x4x16xbf16>
    %71 = vector.shape_cast %70 : vector<1x4x16xbf16> to vector<4x16xbf16>
    %cst_69 = arith.constant dense<0.000000e+00> : vector<512x16xf32>
    %72 = tpu.matmul %69, %71, %cst_69 {dimension_numbers = #tpu.dot_dimension_numbers<[1], [0], [0], [1], [0, 0, 1, 1], [], []>} : vector<512x4xbf16>, vector<4x16xbf16>, vector<512x16xf32> -> vector<512x16xf32>
    %73 = arith.addf %67, %72 : vector<512x16xf32>
    %c2_70 = arith.constant 2 : index
    %c1_71 = arith.constant 1 : index
    %c0_72 = arith.constant 0 : index
    %74 = vector.load %arg6[%c2_70, %c1_71, %c0_72] : memref<34x18x4xbf16, #tpu.memory_space<vmem>>, vector<32x16x4xbf16>
    %75 = vector.shape_cast %74 : vector<32x16x4xbf16> to vector<512x4xbf16>
    %c7 = arith.constant 7 : index
    %c0_73 = arith.constant 0 : index
    %c0_74 = arith.constant 0 : index
    %76 = vector.load %arg3[%c7, %c0_73, %c0_74] : memref<9x4x16xbf16, #tpu.memory_space<vmem>>, vector<1x4x16xbf16>
    %77 = vector.shape_cast %76 : vector<1x4x16xbf16> to vector<4x16xbf16>
    %cst_75 = arith.constant dense<0.000000e+00> : vector<512x16xf32>
    %78 = tpu.matmul %75, %77, %cst_75 {dimension_numbers = #tpu.dot_dimension_numbers<[1], [0], [0], [1], [0, 0, 1, 1], [], []>} : vector<512x4xbf16>, vector<4x16xbf16>, vector<512x16xf32> -> vector<512x16xf32>
    %79 = arith.addf %73, %78 : vector<512x16xf32>
    %c2_76 = arith.constant 2 : index
    %c2_77 = arith.constant 2 : index
    %c0_78 = arith.constant 0 : index
    %80 = vector.load %arg6[%c2_76, %c2_77, %c0_78] : memref<34x18x4xbf16, #tpu.memory_space<vmem>>, vector<32x16x4xbf16>
    %81 = vector.shape_cast %80 : vector<32x16x4xbf16> to vector<512x4xbf16>
    %c8 = arith.constant 8 : index
    %c0_79 = arith.constant 0 : index
    %c0_80 = arith.constant 0 : index
    %82 = vector.load %arg3[%c8, %c0_79, %c0_80] : memref<9x4x16xbf16, #tpu.memory_space<vmem>>, vector<1x4x16xbf16>
    %83 = vector.shape_cast %82 : vector<1x4x16xbf16> to vector<4x16xbf16>
    %cst_81 = arith.constant dense<0.000000e+00> : vector<512x16xf32>
    %84 = tpu.matmul %81, %83, %cst_81 {dimension_numbers = #tpu.dot_dimension_numbers<[1], [0], [0], [1], [0, 0, 1, 1], [], []>} : vector<512x4xbf16>, vector<4x16xbf16>, vector<512x16xf32> -> vector<512x16xf32>
    %85 = arith.addf %79, %84 : vector<512x16xf32>
    %cst_82 = arith.constant dense<0.000000e+00> : vector<16xf32>
    %86 = vector.multi_reduction <add>, %85, %cst_82 [0] : vector<512x16xf32> to vector<16xf32>
    %87 = vector.shape_cast %86 : vector<16xf32> to vector<1x16xf32>
    %c0_83 = arith.constant 0 : index
    %c0_84 = arith.constant 0 : index
    %c0_85 = arith.constant 0 : index
    %c0_86 = arith.constant 0 : index
    %88 = vector.load %arg4[%c0_83, %c0_84, %c0_85, %c0_86] : memref<1x1x1x16xf32, #tpu.memory_space<vmem>>, vector<1x1x1x16xf32>
    %89 = vector.shape_cast %88 : vector<1x1x1x16xf32> to vector<1x16xf32>
    %90 = vector.shape_cast %87 : vector<1x16xf32> to vector<1x1x1x16xf32>
    tpu.vector_store %arg4[%c0_83, %c0_84, %c0_85, %c0_86], %90 {strides = array<i32>} : memref<1x1x1x16xf32, #tpu.memory_space<vmem>>, vector<1x1x1x16xf32>,
    %91 = arith.mulf %85, %85 : vector<512x16xf32>
    %cst_87 = arith.constant dense<0.000000e+00> : vector<16xf32>
    %92 = vector.multi_reduction <add>, %91, %cst_87 [0] : vector<512x16xf32> to vector<16xf32>
    %93 = vector.shape_cast %92 : vector<16xf32> to vector<1x16xf32>
    %c0_88 = arith.constant 0 : index
    %c0_89 = arith.constant 0 : index
    %c0_90 = arith.constant 0 : index
    %c0_91 = arith.constant 0 : index
    %94 = vector.load %arg5[%c0_88, %c0_89, %c0_90, %c0_91] : memref<1x1x1x16xf32, #tpu.memory_space<vmem>>, vector<1x1x1x16xf32>
    %95 = vector.shape_cast %94 : vector<1x1x1x16xf32> to vector<1x16xf32>
    %96 = vector.shape_cast %93 : vector<1x16xf32> to vector<1x1x1x16xf32>
    tpu.vector_store %arg5[%c0_88, %c0_89, %c0_90, %c0_91], %96 {strides = array<i32>} : memref<1x1x1x16xf32, #tpu.memory_space<vmem>>, vector<1x1x1x16xf32>,
    return
  }
  func.func @transform_0(%arg0: i32, %arg1: i32) -> (i32, i32, i32, i32) {
    %c0_i32 = arith.constant 0 : i32
    %c0_i32_0 = arith.constant 0 : i32
    %c0_i32_1 = arith.constant 0 : i32
    %c0_i32_2 = arith.constant 0 : i32
    return %arg0, %c0_i32, %c0_i32_0, %c0_i32_1 : i32, i32, i32, i32
  }
  func.func @transform_1(%arg0: i32, %arg1: i32) -> (i32, i32, i32) {
    %c0_i32 = arith.constant 0 : i32
    %c0_i32_0 = arith.constant 0 : i32
    %c0_i32_1 = arith.constant 0 : i32
    %c0_i32_2 = arith.constant 0 : i32
    return %c0_i32, %c0_i32_0, %c0_i32_1 : i32, i32, i32
  }
  func.func @transform_2(%arg0: i32, %arg1: i32) -> (i32, i32, i32, i32) {
    %c0_i32 = arith.constant 0 : i32
    %c0_i32_0 = arith.constant 0 : i32
    %c0_i32_1 = arith.constant 0 : i32
    return %arg0, %arg1, %c0_i32, %c0_i32_0 : i32, i32, i32, i32
  }
  func.func @transform_3(%arg0: i32, %arg1: i32) -> (i32, i32, i32, i32) {
    %c0_i32 = arith.constant 0 : i32
    %c0_i32_0 = arith.constant 0 : i32
    %c0_i32_1 = arith.constant 0 : i32
    return %arg0, %arg1, %c0_i32, %c0_i32_0 : i32, i32, i32, i32
  }
}

</mosaic_0001>

<llo_original>
// kernel: tpu_custom_call.1
$region0: #{tpu_custom_call.1}
  #allocation0 [shape = 'u32[]', space=smem, size = 0x4, offset = 0x4, fixed_abs, tag = 'smem constant byte address 0x4 - core index']
  #allocation1 [shape = 'u32[72,128]{1,0:T(1,128)}', space=vmem, size = 0x9000, scoped, tag = 'internal scratch']
  #allocation2 [shape = 'bf16[34,18,4]{2,1,0:T(8,128)(2,1)}', space=vmem, size = 0x33000, scoped, tag = 'scratch operand']
  %s0 = inlined_call_operand.vmem [shape: bf16[2,16,16,4], index: 0, kind: input, shape index: {}]
  %s1 = inlined_call_operand.vmem [shape: bf16[9,4,16], index: 1, kind: input, shape index: {}]
  %s2 = inlined_call_operand.hbm [shape: f32[2,1,1,16], index: 2, kind: output, shape index: {0}]
  %s3 = inlined_call_operand.hbm [shape: f32[2,1,1,16], index: 3, kind: output, shape index: {1}]
  %4 = xla_tuple %s2, %s3
  %s5 = sld [smem:[#allocation0]]
  $region49: #{tpu_custom_call.1} parent=0
    _
  %s7 = ssub.s32 1, %s5
  %s8 = scalar_select 0, %s7, %s5
  $region1: #{tpu_custom_call.1} parent=0
    #allocation3 [shape = 'u8[1024]{0}', space=vmem, size = 0x400, scoped, tag = 'output window, operand 0']
    #allocation4 [shape = 's32[2]{0}', space=sflag, size = 0x8, scoped, tag = 'scoped memory for tpu_custom_call.1']
    #allocation5 [shape = 'u8[1024]{0}', space=vmem, size = 0x400, scoped, tag = 'output window, operand 1']
    #allocation6 [shape = 's32[2]{0}', space=sflag, size = 0x8, scoped, tag = 'scoped memory for tpu_custom_call.1']
    %9 = vsyncpa [#allocation4], 0
    %s10 = scalar_lea.sflag [#allocation4], 1
    %11 = vsyncpa %s10, 0
    %12 = vsyncpa [#allocation6], 0
    %s13 = scalar_lea.sflag [#allocation6], 1
    %14 = vsyncpa %s13, 0
    loop: start=0, step=1, limit=4
    $region2: #{tpu_custom_call.1} parent=1 // loop_pre_header
      _
    $region3: #{tpu_custom_call.1} parent=1 // loop_header
      %s16 = sphi 0, %s20
      %p17 = scmp.ge.s32.totalorder %s16, 4
      %s23 = sphi 0, %s35
      %s24 = sphi 0, %s31
      %s25 = sphi 0, %s23
      %s26 = sphi 0, %s24
      %s27 = sphi 0, %s25
      %s28 = sphi 0, %s26
      %s38 = sphi 0, %s40
      %s41 = sphi 0, %s38
      %s42 = sphi 0, %s41
      %s58 = sphi 0, %s42
      %s62 = sphi 0, %s62
      %s64 = sphi 0, %s62
      %s65 = sphi 0, %s64
      %s79 = sphi 0, %s65
      %s87 = sphi 0, %s89
      %s90 = sphi 0, %s87
      %s91 = sphi 0, %s90
      %s107 = sphi 0, %s91
      %s115 = sphi 0, %s117
      %s118 = sphi 0, %s115
      %s119 = sphi 0, %s118
      %s135 = sphi 0, %s119
    $region4: #{tpu_custom_call.1} parent=1 // loop_header_branch
      %19 = sbr.rel (%p17) target = $region8
    $region5: #{tpu_custom_call.1} parent=1 // loop_body
      %s21 = ssub.s32 %s16, 1
      %s22 = ssub.s32 %s16, 2
      %s29 = sadd.s32 1, %s24
      %p30 = scmp.ge.s32.totalorder %s29, 1
      %s31 = scalar_select %p30, 0, %s29
      %s32 = sadd.s32 1, %s23
      %s33 = scalar_select %p30, %s32, %s23
      %p34 = scmp.ge.s32.totalorder %s33, 2
      %s35 = scalar_select %p34, 0, %s33
      %s36 = ssub.s32 %s23, %s35
      %p37 = scmp.eq.s32.totalorder %s36, 0
      %s39 = sadd.s32 %s38, 1
      %s40 = scalar_select %p37, %s38, %s39
      %p43 = pneg %p37
      %p44 = scmp.eq.s32.totalorder %s16, 1
      %p45 = por %p43, %p44
      %p46 = scmp.ne.s32.totalorder %s38, %s41
      %p47 = scmp.eq.s32.totalorder %s16, 0
      %p48 = por %p46, %p47
      %p49 = scmp.ne.s32.totalorder %s38, %s41
      %p50 = scmp.eq.s32.totalorder %s21, 1
      %p51 = por %p49, %p50
      %p52 = scmp.ne.s32.totalorder %s41, %s42
      %p53 = scmp.eq.s32.totalorder %s21, 0
      %p54 = por %p52, %p53
      %p55 = scmp.ne.s32.totalorder %s41, %s42
      %p56 = scmp.eq.s32.totalorder %s22, 1
      %p57 = por %p55, %p56
      %p59 = scmp.ne.s32.totalorder %s42, %s58
      %p60 = scmp.eq.s32.totalorder %s22, 0
      %p61 = por %p59, %p60
      %s63 = sadd.s32 %s62, 1
      %p66 = scmp.eq.s32.totalorder %s16, 1
      %p67 = scmp.ne.s32.totalorder %s62, %s64
      %p68 = scmp.eq.s32.totalorder %s16, 0
      %p69 = por %p67, %p68
      %p70 = scmp.ne.s32.totalorder %s62, %s64
      %p71 = scmp.eq.s32.totalorder %s21, 1
      %p72 = por %p70, %p71
      %p73 = scmp.ne.s32.totalorder %s64, %s65
      %p74 = scmp.eq.s32.totalorder %s21, 0
      %p75 = por %p73, %p74
      %p76 = scmp.ne.s32.totalorder %s64, %s65
      %p77 = scmp.eq.s32.totalorder %s22, 1
      %p78 = por %p76, %p77
      %p80 = scmp.ne.s32.totalorder %s65, %s79
      %p81 = scmp.eq.s32.totalorder %s22, 0
      %p82 = por %p80, %p81
      %s83 = ssub.s32 %s23, %s35
      %s84 = ssub.s32 %s24, %s31
      %s85 = sor.u32 %s83, %s84
      %p86 = scmp.eq.s32.totalorder %s85, 0
      %s88 = sadd.s32 %s87, 1
      %s89 = scalar_select %p86, %s87, %s88
      %p92 = pneg %p86
      %p93 = scmp.eq.s32.totalorder %s16, 1
      %p94 = por %p92, %p93
      %p95 = scmp.ne.s32.totalorder %s87, %s90
      %p96 = scmp.eq.s32.totalorder %s16, 0
      %p97 = por %p95, %p96
      %p98 = scmp.ne.s32.totalorder %s87, %s90
      %p99 = scmp.eq.s32.totalorder %s21, 1
      %p100 = por %p98, %p99
      %p101 = scmp.ne.s32.totalorder %s90, %s91
      %p102 = scmp.eq.s32.totalorder %s21, 0
      %p103 = por %p101, %p102
      %p104 = scmp.ne.s32.totalorder %s90, %s91
      %p105 = scmp.eq.s32.totalorder %s22, 1
      %p106 = por %p104, %p105
      %p108 = scmp.ne.s32.totalorder %s91, %s107
      %p109 = scmp.eq.s32.totalorder %s22, 0
      %p110 = por %p108, %p109
      %s111 = ssub.s32 %s23, %s35
      %s112 = ssub.s32 %s24, %s31
      %s113 = sor.u32 %s111, %s112
      %p114 = scmp.eq.s32.totalorder %s113, 0
      %s116 = sadd.s32 %s115, 1
      %s117 = scalar_select %p114, %s115, %s116
      %p120 = pneg %p114
      %p121 = scmp.eq.s32.totalorder %s16, 1
      %p122 = por %p120, %p121
      %p123 = scmp.ne.s32.totalorder %s115, %s118
      %p124 = scmp.eq.s32.totalorder %s16, 0
      %p125 = por %p123, %p124
      %p126 = scmp.ne.s32.totalorder %s115, %s118
      %p127 = scmp.eq.s32.totalorder %s21, 1
      %p128 = por %p126, %p127
      %p129 = scmp.ne.s32.totalorder %s118, %s119
      %p130 = scmp.eq.s32.totalorder %s21, 0
      %p131 = por %p129, %p130
      %p132 = scmp.ne.s32.totalorder %s118, %s119
      %p133 = scmp.eq.s32.totalorder %s22, 1
      %p134 = por %p132, %p133
      %p136 = scmp.ne.s32.totalorder %s119, %s135
      %p137 = scmp.eq.s32.totalorder %s22, 0
      %p138 = por %p136, %p137
      %p139 = scmp.le.s32.totalorder 1, %s16
      %p140 = scmp.lt.s32.totalorder %s16, 3
      %p141 = pnand %p139, %p140
      %p142 = pneg %p141
      // Predicated region
      $region9: #{tpu_custom_call.1} parent=5 // pred_check
        _
      $region10: #{tpu_custom_call.1} parent=5 // pred_check_branch
        %144 = sbr.rel (%p141) target = $region12
      $region11: #{tpu_custom_call.1} parent=5 // pred_region
        %s145 = ssub.s32 %s16, 1
        // Predicated region
        $region13: #{tpu_custom_call.1} parent=11 // pred_check
          %p146 = pneg %p75
        $region14: #{tpu_custom_call.1} parent=11 // pred_check_branch
          %148 = sbr.rel (%p146) target = $region16
        $region15: #{tpu_custom_call.1} parent=11 // pred_region
          _
        $region16: #{tpu_custom_call.1} parent=11 // pred_fallthru
          _
      $region12: #{tpu_custom_call.1} parent=5 // pred_fallthru
        _
      %p149 = scmp.lt.s32.totalorder %s16, 2
      // Predicated region
      $region17: #{tpu_custom_call.1} parent=5 // pred_check
        %p150 = pneg %p149
      $region18: #{tpu_custom_call.1} parent=5 // pred_check_branch
        %152 = sbr.rel (%p150) target = $region20
      $region19: #{tpu_custom_call.1} parent=5 // pred_region
        // Predicated region
        $region21: #{tpu_custom_call.1} parent=19 // pred_check
          %p153 = pneg %p48
        $region22: #{tpu_custom_call.1} parent=19 // pred_check_branch
          %155 = sbr.rel (%p153) target = $region24
        $region23: #{tpu_custom_call.1} parent=19 // pred_region
          %p156 = scmp.lt.s32.totalorder %s23, 1
          %s157 = scalar_select %p156, %s23, 1
          %s158 = smul.addr %s157, 32
          %s159 = smul.addr %s158, 4
          %s160 = scalar_lea.vmem %s0, %s159
        $region24: #{tpu_custom_call.1} parent=19 // pred_fallthru
          _
      $region20: #{tpu_custom_call.1} parent=5 // pred_fallthru
        _
      %p161 = scmp.le.s32.totalorder 1, %s16
      %p162 = scmp.lt.s32.totalorder %s16, 3
      %p163 = pnand %p161, %p162
      %p164 = pneg %p163
      // Predicated region
      $region25: #{tpu_custom_call.1} parent=5 // pred_check
        _
      $region26: #{tpu_custom_call.1} parent=5 // pred_check_branch
        %166 = sbr.rel (%p163) target = $region28
      $region27: #{tpu_custom_call.1} parent=5 // pred_region
        %s167 = ssub.s32 %s16, 1
        %p168 = scmp.lt.s32.totalorder %s25, 1
        %s169 = scalar_select %p168, %s25, 1
        %s170 = smul.addr %s169, 32
        %s171 = smul.addr %s170, 4
        %s172 = scalar_lea.vmem %s0, %s171
        %p173 = pneg %p54
        %p174 = pneg %p51
        %p175 = pneg %p75
        %p176 = pneg %p72
        %p177 = pneg %p103
        %p178 = pneg %p100
        %s179 = sand.u32 %s90, 1
        %s180 = scalar_lea.sflag [#allocation4], %s179
        %s181 = sand.u32 %s90, 1
        %s182 = scalar_lea.vmem [#allocation3], %s181
        %p183 = pneg %p131
        %p184 = pneg %p128
        %s185 = sand.u32 %s118, 1
        %s186 = scalar_lea.sflag [#allocation6], %s185
        %s187 = sand.u32 %s118, 1
        %s188 = scalar_lea.vmem [#allocation5], %s187
        %p189 = scmp.lt.s32.totalorder %s25, 1
        %s190 = scalar_select %p189, %s25, 1
        %s191 = smul.addr %s190, 32
        %s192 = smul.addr %s191, 4
        %s193 = scalar_lea.vmem %s0, %s192
        %s195 = smul.u32 %s26, 16
        %vm196 = vcmask 24576
        %vm197 = vsmask.f32 256
        %vm198 = vmand %vm196, %vm197
        %v199 = vld [vmem:[#allocation2] sm:$0x1]
        %v200 = vsel %vm198, 0, %v199
        %201 = vst [vmem:[#allocation2] sm:$0x1] %v200
        %v202 = vld [vmem:[#allocation2 + $0xc] sm:$0x1]
        %v203 = vsel %vm198, 0, %v202
        %204 = vst [vmem:[#allocation2 + $0xc] sm:$0x1] %v203
        %v205 = vld [vmem:[#allocation2 + $0x18] sm:$0x1]
        %v206 = vsel %vm198, 0, %v205
        %207 = vst [vmem:[#allocation2 + $0x18] sm:$0x1] %v206
        %v208 = vld [vmem:[#allocation2 + $0x24] sm:$0x1]
        %v209 = vsel %vm198, 0, %v208
        %210 = vst [vmem:[#allocation2 + $0x24] sm:$0x1] %v209
        %v211 = vld [vmem:[#allocation2 + $0x30] sm:$0x1]
        %v212 = vsel %vm198, 0, %v211
        %213 = vst [vmem:[#allocation2 + $0x30] sm:$0x1] %v212
        %v214 = vld [vmem:[#allocation2 + $0x3c] sm:$0x1]
        %v215 = vsel %vm198, 0, %v214
        %216 = vst [vmem:[#allocation2 + $0x3c] sm:$0x1] %v215
        %v217 = vld [vmem:[#allocation2 + $0x48] sm:$0x1]
        %v218 = vsel %vm198, 0, %v217
        %219 = vst [vmem:[#allocation2 + $0x48] sm:$0x1] %v218
        %v220 = vld [vmem:[#allocation2 + $0x54] sm:$0x1]
        %v221 = vsel %vm198, 0, %v220
        %222 = vst [vmem:[#allocation2 + $0x54] sm:$0x1] %v221
        %v223 = vld [vmem:[#allocation2 + $0x60] sm:$0x1]
        %v224 = vsel %vm198, 0, %v223
        %225 = vst [vmem:[#allocation2 + $0x60] sm:$0x1] %v224
        %v226 = vld [vmem:[#allocation2 + $0x6c] sm:$0x1]
        %v227 = vsel %vm198, 0, %v226
        %228 = vst [vmem:[#allocation2 + $0x6c] sm:$0x1] %v227
        %v229 = vld [vmem:[#allocation2 + $0x78] sm:$0x1]
        %v230 = vsel %vm198, 0, %v229
        %231 = vst [vmem:[#allocation2 + $0x78] sm:$0x1] %v230
        %v232 = vld [vmem:[#allocation2 + $0x84] sm:$0x1]
        %v233 = vsel %vm198, 0, %v232
        %234 = vst [vmem:[#allocation2 + $0x84] sm:$0x1] %v233
        %v235 = vld [vmem:[#allocation2 + $0x90] sm:$0x1]
        %v236 = vsel %vm198, 0, %v235
        %237 = vst [vmem:[#allocation2 + $0x90] sm:$0x1] %v236
        %v238 = vld [vmem:[#allocation2 + $0x9c] sm:$0x1]
        %v239 = vsel %vm198, 0, %v238
        %240 = vst [vmem:[#allocation2 + $0x9c] sm:$0x1] %v239
        %v241 = vld [vmem:[#allocation2 + $0xa8] sm:$0x1]
        %v242 = vsel %vm198, 0, %v241
        %243 = vst [vmem:[#allocation2 + $0xa8] sm:$0x1] %v242
        %v244 = vld [vmem:[#allocation2 + $0xb4] sm:$0x1]
        %v245 = vsel %vm198, 0, %v244
        %246 = vst [vmem:[#allocation2 + $0xb4] sm:$0x1] %v245
        %v247 = vld [vmem:[#allocation2 + $0xc0] sm:$0x1]
        %v248 = vsel %vm198, 0, %v247
        %249 = vst [vmem:[#allocation2 + $0xc0] sm:$0x1] %v248
        %v250 = vld [vmem:[#allocation2 + $0xcc] sm:$0x1]
        %v251 = vsel %vm198, 0, %v250
        %252 = vst [vmem:[#allocation2 + $0xcc] sm:$0x1] %v251
        %v253 = vld [vmem:[#allocation2 + $0xd8] sm:$0x1]
        %v254 = vsel %vm198, 0, %v253
        %255 = vst [vmem:[#allocation2 + $0xd8] sm:$0x1] %v254
        %v256 = vld [vmem:[#allocation2 + $0xe4] sm:$0x1]
        %v257 = vsel %vm198, 0, %v256
        %258 = vst [vmem:[#allocation2 + $0xe4] sm:$0x1] %v257
        %v259 = vld [vmem:[#allocation2 + $0xf0] sm:$0x1]
        %v260 = vsel %vm198, 0, %v259
        %261 = vst [vmem:[#allocation2 + $0xf0] sm:$0x1] %v260
        %v262 = vld [vmem:[#allocation2 + $0xfc] sm:$0x1]
        %v263 = vsel %vm198, 0, %v262
        %264 = vst [vmem:[#allocation2 + $0xfc] sm:$0x1] %v263
        %v265 = vld [vmem:[#allocation2 + $0x108] sm:$0x1]
        %v266 = vsel %vm198, 0, %v265
        %267 = vst [vmem:[#allocation2 + $0x108] sm:$0x1] %v266
        %v268 = vld [vmem:[#allocation2 + $0x114] sm:$0x1]
        %v269 = vsel %vm198, 0, %v268
        %270 = vst [vmem:[#allocation2 + $0x114] sm:$0x1] %v269
        %v271 = vld [vmem:[#allocation2 + $0x120] sm:$0x1]
        %v272 = vsel %vm198, 0, %v271
        %273 = vst [vmem:[#allocation2 + $0x120] sm:$0x1] %v272
        %v274 = vld [vmem:[#allocation2 + $0x12c] sm:$0x1]
        %v275 = vsel %vm198, 0, %v274
        %276 = vst [vmem:[#allocation2 + $0x12c] sm:$0x1] %v275
        %v277 = vld [vmem:[#allocation2 + $0x138] sm:$0x1]
        %v278 = vsel %vm198, 0, %v277
        %279 = vst [vmem:[#allocation2 + $0x138] sm:$0x1] %v278
        %v280 = vld [vmem:[#allocation2 + $0x144] sm:$0x1]
        %v281 = vsel %vm198, 0, %v280
        %282 = vst [vmem:[#allocation2 + $0x144] sm:$0x1] %v281
        %v283 = vld [vmem:[#allocation2 + $0x150] sm:$0x1]
        %v284 = vsel %vm198, 0, %v283
        %285 = vst [vmem:[#allocation2 + $0x150] sm:$0x1] %v284
        %v286 = vld [vmem:[#allocation2 + $0x15c] sm:$0x1]
        %v287 = vsel %vm198, 0, %v286
        %288 = vst [vmem:[#allocation2 + $0x15c] sm:$0x1] %v287
        %v289 = vld [vmem:[#allocation2 + $0x168] sm:$0x1]
        %v290 = vsel %vm198, 0, %v289
        %291 = vst [vmem:[#allocation2 + $0x168] sm:$0x1] %v290
        %v292 = vld [vmem:[#allocation2 + $0x174] sm:$0x1]
        %v293 = vsel %vm198, 0, %v292
        %294 = vst [vmem:[#allocation2 + $0x174] sm:$0x1] %v293
        %v295 = vld [vmem:[#allocation2 + $0x180] sm:$0x1]
        %v296 = vsel %vm198, 0, %v295
        %297 = vst [vmem:[#allocation2 + $0x180] sm:$0x1] %v296
        %v298 = vld [vmem:[#allocation2 + $0x18c] sm:$0x1]
        %v299 = vsel %vm198, 0, %v298
        %300 = vst [vmem:[#allocation2 + $0x18c] sm:$0x1] %v299
        %vm301 = vsmask.f32 7938
        %vm302 = vmand %vm196, %vm301
        %v303 = vld [vmem:[#allocation2 + $0x8] sm:$0x1]
        %v304 = vsel %vm302, 0, %v303
        %305 = vst [vmem:[#allocation2 + $0x8] sm:$0x1] %v304
        %v306 = vld [vmem:[#allocation2 + $0x14] sm:$0x1]
        %v307 = vsel %vm302, 0, %v306
        %308 = vst [vmem:[#allocation2 + $0x14] sm:$0x1] %v307
        %v309 = vld [vmem:[#allocation2 + $0x20] sm:$0x1]
        %v310 = vsel %vm302, 0, %v309
        %311 = vst [vmem:[#allocation2 + $0x20] sm:$0x1] %v310
        %v312 = vld [vmem:[#allocation2 + $0x2c] sm:$0x1]
        %v313 = vsel %vm302, 0, %v312
        %314 = vst [vmem:[#allocation2 + $0x2c] sm:$0x1] %v313
        %v315 = vld [vmem:[#allocation2 + $0x38] sm:$0x1]
        %v316 = vsel %vm302, 0, %v315
        %317 = vst [vmem:[#allocation2 + $0x38] sm:$0x1] %v316
        %v318 = vld [vmem:[#allocation2 + $0x44] sm:$0x1]
        %v319 = vsel %vm302, 0, %v318
        %320 = vst [vmem:[#allocation2 + $0x44] sm:$0x1] %v319
        %v321 = vld [vmem:[#allocation2 + $0x50] sm:$0x1]
        %v322 = vsel %vm302, 0, %v321
        %323 = vst [vmem:[#allocation2 + $0x50] sm:$0x1] %v322
        %v324 = vld [vmem:[#allocation2 + $0x5c] sm:$0x1]
        %v325 = vsel %vm302, 0, %v324
        %326 = vst [vmem:[#allocation2 + $0x5c] sm:$0x1] %v325
        %v327 = vld [vmem:[#allocation2 + $0x68] sm:$0x1]
        %v328 = vsel %vm302, 0, %v327
        %329 = vst [vmem:[#allocation2 + $0x68] sm:$0x1] %v328
        %v330 = vld [vmem:[#allocation2 + $0x74] sm:$0x1]
        %v331 = vsel %vm302, 0, %v330
        %332 = vst [vmem:[#allocation2 + $0x74] sm:$0x1] %v331
        %v333 = vld [vmem:[#allocation2 + $0x80] sm:$0x1]
        %v334 = vsel %vm302, 0, %v333
        %335 = vst [vmem:[#allocation2 + $0x80] sm:$0x1] %v334
        %v336 = vld [vmem:[#allocation2 + $0x8c] sm:$0x1]
        %v337 = vsel %vm302, 0, %v336
        %338 = vst [vmem:[#allocation2 + $0x8c] sm:$0x1] %v337
        %v339 = vld [vmem:[#allocation2 + $0x98] sm:$0x1]
        %v340 = vsel %vm302, 0, %v339
        %341 = vst [vmem:[#allocation2 + $0x98] sm:$0x1] %v340
        %v342 = vld [vmem:[#allocation2 + $0xa4] sm:$0x1]
        %v343 = vsel %vm302, 0, %v342
        %344 = vst [vmem:[#allocation2 + $0xa4] sm:$0x1] %v343
        %v345 = vld [vmem:[#allocation2 + $0xb0] sm:$0x1]
        %v346 = vsel %vm302, 0, %v345
        %347 = vst [vmem:[#allocation2 + $0xb0] sm:$0x1] %v346
        %v348 = vld [vmem:[#allocation2 + $0xbc] sm:$0x1]
        %v349 = vsel %vm302, 0, %v348
        %350 = vst [vmem:[#allocation2 + $0xbc] sm:$0x1] %v349
        %v351 = vld [vmem:[#allocation2 + $0xc8] sm:$0x1]
        %v352 = vsel %vm302, 0, %v351
        %353 = vst [vmem:[#allocation2 + $0xc8] sm:$0x1] %v352
        %v354 = vld [vmem:[#allocation2 + $0xd4] sm:$0x1]
        %v355 = vsel %vm302, 0, %v354
        %356 = vst [vmem:[#allocation2 + $0xd4] sm:$0x1] %v355
        %v357 = vld [vmem:[#allocation2 + $0xe0] sm:$0x1]
        %v358 = vsel %vm302, 0, %v357
        %359 = vst [vmem:[#allocation2 + $0xe0] sm:$0x1] %v358
        %v360 = vld [vmem:[#allocation2 + $0xec] sm:$0x1]
        %v361 = vsel %vm302, 0, %v360
        %362 = vst [vmem:[#allocation2 + $0xec] sm:$0x1] %v361
        %v363 = vld [vmem:[#allocation2 + $0xf8] sm:$0x1]
        %v364 = vsel %vm302, 0, %v363
        %365 = vst [vmem:[#allocation2 + $0xf8] sm:$0x1] %v364
        %v366 = vld [vmem:[#allocation2 + $0x104] sm:$0x1]
        %v367 = vsel %vm302, 0, %v366
        %368 = vst [vmem:[#allocation2 + $0x104] sm:$0x1] %v367
        %v369 = vld [vmem:[#allocation2 + $0x110] sm:$0x1]
        %v370 = vsel %vm302, 0, %v369
        %371 = vst [vmem:[#allocation2 + $0x110] sm:$0x1] %v370
        %v372 = vld [vmem:[#allocation2 + $0x11c] sm:$0x1]
        %v373 = vsel %vm302, 0, %v372
        %374 = vst [vmem:[#allocation2 + $0x11c] sm:$0x1] %v373
        %v375 = vld [vmem:[#allocation2 + $0x128] sm:$0x1]
        %v376 = vsel %vm302, 0, %v375
        %377 = vst [vmem:[#allocation2 + $0x128] sm:$0x1] %v376
        %v378 = vld [vmem:[#allocation2 + $0x134] sm:$0x1]
        %v379 = vsel %vm302, 0, %v378
        %380 = vst [vmem:[#allocation2 + $0x134] sm:$0x1] %v379
        %v381 = vld [vmem:[#allocation2 + $0x140] sm:$0x1]
        %v382 = vsel %vm302, 0, %v381
        %383 = vst [vmem:[#allocation2 + $0x140] sm:$0x1] %v382
        %v384 = vld [vmem:[#allocation2 + $0x14c] sm:$0x1]
        %v385 = vsel %vm302, 0, %v384
        %386 = vst [vmem:[#allocation2 + $0x14c] sm:$0x1] %v385
        %v387 = vld [vmem:[#allocation2 + $0x158] sm:$0x1]
        %v388 = vsel %vm302, 0, %v387
        %389 = vst [vmem:[#allocation2 + $0x158] sm:$0x1] %v388
        %v390 = vld [vmem:[#allocation2 + $0x164] sm:$0x1]
        %v391 = vsel %vm302, 0, %v390
        %392 = vst [vmem:[#allocation2 + $0x164] sm:$0x1] %v391
        %v393 = vld [vmem:[#allocation2 + $0x170] sm:$0x1]
        %v394 = vsel %vm302, 0, %v393
        %395 = vst [vmem:[#allocation2 + $0x170] sm:$0x1] %v394
        %v396 = vld [vmem:[#allocation2 + $0x17c] sm:$0x1]
        %v397 = vsel %vm302, 0, %v396
        %398 = vst [vmem:[#allocation2 + $0x17c] sm:$0x1] %v397
        %v399 = vld [vmem:[#allocation2 + $0x188] sm:$0x1]
        %v400 = vsel %vm302, 0, %v399
        %401 = vst [vmem:[#allocation2 + $0x188] sm:$0x1] %v400
        %v402 = vld [vmem:[#allocation2 + $0x194] sm:$0x1]
        %v403 = vsel %vm302, 0, %v402
        %404 = vst [vmem:[#allocation2 + $0x194] sm:$0x1] %v403
        %s405 = smul.u32 %s195, 2
        %s406 = smul.addr %s405, 4
        %s407 = scalar_lea.vmem %s193, %s406
        %v408 = vld [vmem:[%s407] sm:$0xf]
        %v409 = vld [vmem:[%s407 + $0x4] sm:$0xf]
        %v410 = vld [vmem:[%s407 + $0x8] sm:$0xf]
        %v411 = vld [vmem:[%s407 + $0xc] sm:$0xf]
        %v412 = vld [vmem:[%s407 + $0x10] sm:$0xf]
        %v413 = vld [vmem:[%s407 + $0x14] sm:$0xf]
        %v414 = vld [vmem:[%s407 + $0x18] sm:$0xf]
        %v415 = vld [vmem:[%s407 + $0x1c] sm:$0xf]
        %v416 = vld [vmem:[%s407 + $0x20] sm:$0xf]
        %v417 = vld [vmem:[%s407 + $0x24] sm:$0xf]
        %v418 = vld [vmem:[%s407 + $0x28] sm:$0xf]
        %v419 = vld [vmem:[%s407 + $0x2c] sm:$0xf]
        %v420 = vld [vmem:[%s407 + $0x30] sm:$0xf]
        %v421 = vld [vmem:[%s407 + $0x34] sm:$0xf]
        %v422 = vld [vmem:[%s407 + $0x38] sm:$0xf]
        %v423 = vld [vmem:[%s407 + $0x3c] sm:$0xf]
        %v424 = vld [vmem:[%s407 + $0x40] sm:$0xf]
        %v425 = vld [vmem:[%s407 + $0x44] sm:$0xf]
        %v426 = vld [vmem:[%s407 + $0x48] sm:$0xf]
        %v427 = vld [vmem:[%s407 + $0x4c] sm:$0xf]
        %v428 = vld [vmem:[%s407 + $0x50] sm:$0xf]
        %v429 = vld [vmem:[%s407 + $0x54] sm:$0xf]
        %v430 = vld [vmem:[%s407 + $0x58] sm:$0xf]
        %v431 = vld [vmem:[%s407 + $0x5c] sm:$0xf]
        %v432 = vld [vmem:[%s407 + $0x60] sm:$0xf]
        %v433 = vld [vmem:[%s407 + $0x64] sm:$0xf]
        %v434 = vld [vmem:[%s407 + $0x68] sm:$0xf]
        %v435 = vld [vmem:[%s407 + $0x6c] sm:$0xf]
        %v436 = vld [vmem:[%s407 + $0x70] sm:$0xf]
        %v437 = vld [vmem:[%s407 + $0x74] sm:$0xf]
        %v438 = vld [vmem:[%s407 + $0x78] sm:$0xf]
        %v439 = vld [vmem:[%s407 + $0x7c] sm:$0xf]
        %vm440 = vsmask.f32 4368
        %vm441 = vmor %vm197, %vm440
        %v443 = vshrl.u32 %v408, 16
        %v445 = vrot.slane %v443, 7
        %v446 = vshll.u32 %v408, 16
        %v448 = vor.u32 %v445, %v446
        %v449 = vrot.slane %v445, 4
        %v451 = vshrl.u32 %v409, 16
        %v453 = vrot.slane %v451, 7
        %v454 = vshll.u32 %v409, 16
        %v456 = vor.u32 %v453, %v454
        %v457 = vsel %vm441, %v449, %v456
        %v458 = vrot.slane %v453, 4
        %v460 = vshrl.u32 %v410, 16
        %v462 = vrot.slane %v460, 7
        %v463 = vshll.u32 %v410, 16
        %v465 = vor.u32 %v462, %v463
        %v466 = vrot.slane %v462, 4
        %v468 = vshrl.u32 %v411, 16
        %v470 = vrot.slane %v468, 7
        %v471 = vshll.u32 %v411, 16
        %v473 = vor.u32 %v470, %v471
        %v474 = vsel %vm441, %v466, %v473
        %v475 = vrot.slane %v470, 4
        %v477 = vshrl.u32 %v412, 16
        %v479 = vrot.slane %v477, 7
        %v480 = vshll.u32 %v412, 16
        %v482 = vor.u32 %v479, %v480
        %v483 = vrot.slane %v479, 4
        %v485 = vshrl.u32 %v413, 16
        %v487 = vrot.slane %v485, 7
        %v488 = vshll.u32 %v413, 16
        %v490 = vor.u32 %v487, %v488
        %v491 = vsel %vm441, %v483, %v490
        %v492 = vrot.slane %v487, 4
        %v494 = vshrl.u32 %v414, 16
        %v496 = vrot.slane %v494, 7
        %v497 = vshll.u32 %v414, 16
        %v499 = vor.u32 %v496, %v497
        %v500 = vrot.slane %v496, 4
        %v502 = vshrl.u32 %v415, 16
        %v504 = vrot.slane %v502, 7
        %v505 = vshll.u32 %v415, 16
        %v507 = vor.u32 %v504, %v505
        %v508 = vsel %vm441, %v500, %v507
        %v509 = vrot.slane %v504, 4
        %v511 = vshrl.u32 %v416, 16
        %v513 = vrot.slane %v511, 7
        %v514 = vshll.u32 %v416, 16
        %v516 = vor.u32 %v513, %v514
        %v517 = vrot.slane %v513, 4
        %v519 = vshrl.u32 %v417, 16
        %v521 = vrot.slane %v519, 7
        %v522 = vshll.u32 %v417, 16
        %v524 = vor.u32 %v521, %v522
        %v525 = vsel %vm441, %v517, %v524
        %v526 = vrot.slane %v521, 4
        %v528 = vshrl.u32 %v418, 16
        %v530 = vrot.slane %v528, 7
        %v531 = vshll.u32 %v418, 16
        %v533 = vor.u32 %v530, %v531
        %v534 = vrot.slane %v530, 4
        %v536 = vshrl.u32 %v419, 16
        %v538 = vrot.slane %v536, 7
        %v539 = vshll.u32 %v419, 16
        %v541 = vor.u32 %v538, %v539
        %v542 = vsel %vm441, %v534, %v541
        %v543 = vrot.slane %v538, 4
        %v545 = vshrl.u32 %v420, 16
        %v547 = vrot.slane %v545, 7
        %v548 = vshll.u32 %v420, 16
        %v550 = vor.u32 %v547, %v548
        %v551 = vrot.slane %v547, 4
        %v553 = vshrl.u32 %v421, 16
        %v555 = vrot.slane %v553, 7
        %v556 = vshll.u32 %v421, 16
        %v558 = vor.u32 %v555, %v556
        %v559 = vsel %vm441, %v551, %v558
        %v560 = vrot.slane %v555, 4
        %v562 = vshrl.u32 %v422, 16
        %v564 = vrot.slane %v562, 7
        %v565 = vshll.u32 %v422, 16
        %v567 = vor.u32 %v564, %v565
        %v568 = vrot.slane %v564, 4
        %v570 = vshrl.u32 %v423, 16
        %v572 = vrot.slane %v570, 7
        %v573 = vshll.u32 %v423, 16
        %v575 = vor.u32 %v572, %v573
        %v576 = vsel %vm441, %v568, %v575
        %v577 = vrot.slane %v572, 4
        %v579 = vshrl.u32 %v424, 16
        %v581 = vrot.slane %v579, 7
        %v582 = vshll.u32 %v424, 16
        %v584 = vor.u32 %v581, %v582
        %v585 = vrot.slane %v581, 4
        %v587 = vshrl.u32 %v425, 16
        %v589 = vrot.slane %v587, 7
        %v590 = vshll.u32 %v425, 16
        %v592 = vor.u32 %v589, %v590
        %v593 = vsel %vm441, %v585, %v592
        %v594 = vrot.slane %v589, 4
        %v596 = vshrl.u32 %v426, 16
        %v598 = vrot.slane %v596, 7
        %v599 = vshll.u32 %v426, 16
        %v601 = vor.u32 %v598, %v599
        %v602 = vrot.slane %v598, 4
        %v604 = vshrl.u32 %v427, 16
        %v606 = vrot.slane %v604, 7
        %v607 = vshll.u32 %v427, 16
        %v609 = vor.u32 %v606, %v607
        %v610 = vsel %vm441, %v602, %v609
        %v611 = vrot.slane %v606, 4
        %v613 = vshrl.u32 %v428, 16
        %v615 = vrot.slane %v613, 7
        %v616 = vshll.u32 %v428, 16
        %v618 = vor.u32 %v615, %v616
        %v619 = vrot.slane %v615, 4
        %v621 = vshrl.u32 %v429, 16
        %v623 = vrot.slane %v621, 7
        %v624 = vshll.u32 %v429, 16
        %v626 = vor.u32 %v623, %v624
        %v627 = vsel %vm441, %v619, %v626
        %v628 = vrot.slane %v623, 4
        %v630 = vshrl.u32 %v430, 16
        %v632 = vrot.slane %v630, 7
        %v633 = vshll.u32 %v430, 16
        %v635 = vor.u32 %v632, %v633
        %v636 = vrot.slane %v632, 4
        %v638 = vshrl.u32 %v431, 16
        %v640 = vrot.slane %v638, 7
        %v641 = vshll.u32 %v431, 16
        %v643 = vor.u32 %v640, %v641
        %v644 = vsel %vm441, %v636, %v643
        %v645 = vrot.slane %v640, 4
        %v647 = vshrl.u32 %v432, 16
        %v649 = vrot.slane %v647, 7
        %v650 = vshll.u32 %v432, 16
        %v652 = vor.u32 %v649, %v650
        %v653 = vrot.slane %v649, 4
        %v655 = vshrl.u32 %v433, 16
        %v657 = vrot.slane %v655, 7
        %v658 = vshll.u32 %v433, 16
        %v660 = vor.u32 %v657, %v658
        %v661 = vsel %vm441, %v653, %v660
        %v662 = vrot.slane %v657, 4
        %v664 = vshrl.u32 %v434, 16
        %v666 = vrot.slane %v664, 7
        %v667 = vshll.u32 %v434, 16
        %v669 = vor.u32 %v666, %v667
        %v670 = vrot.slane %v666, 4
        %v672 = vshrl.u32 %v435, 16
        %v674 = vrot.slane %v672, 7
        %v675 = vshll.u32 %v435, 16
        %v677 = vor.u32 %v674, %v675
        %v678 = vsel %vm441, %v670, %v677
        %v679 = vrot.slane %v674, 4
        %v681 = vshrl.u32 %v436, 16
        %v683 = vrot.slane %v681, 7
        %v684 = vshll.u32 %v436, 16
        %v686 = vor.u32 %v683, %v684
        %v687 = vrot.slane %v683, 4
        %v689 = vshrl.u32 %v437, 16
        %v691 = vrot.slane %v689, 7
        %v692 = vshll.u32 %v437, 16
        %v694 = vor.u32 %v691, %v692
        %v695 = vsel %vm441, %v687, %v694
        %v696 = vrot.slane %v691, 4
        %v698 = vshrl.u32 %v438, 16
        %v700 = vrot.slane %v698, 7
        %v701 = vshll.u32 %v438, 16
        %v703 = vor.u32 %v700, %v701
        %v704 = vrot.slane %v700, 4
        %v706 = vshrl.u32 %v439, 16
        %v708 = vrot.slane %v706, 7
        %v709 = vshll.u32 %v439, 16
        %v711 = vor.u32 %v708, %v709
        %v712 = vsel %vm441, %v704, %v711
        %v713 = vrot.slane %v708, 4
        %s762 = scalar_lea.vmem [#allocation2], 12
        %vm763 = vcmask 27648
        %vm764 = vmand %vm763, %vm301
        %v765 = vld [vmem:[%s762] sm:$0xf]
        %v766 = vsel %vm764, %v448, %v765
        %767 = vst [vmem:[%s762] sm:$0xf] %v766
        %vm768 = vcmask 27648
        %769 = vst.msk [vmem:[%s762 + $0x4] sm:$0xf] %vm768, %v457
        %v770 = vld [vmem:[%s762 + $0x8] sm:$0x1]
        %v771 = vsel %vm198, %v458, %v770
        %772 = vst [vmem:[%s762 + $0x8] sm:$0x1] %v771
        %v773 = vld [vmem:[%s762 + $0xc] sm:$0xf]
        %v774 = vsel %vm764, %v448, %v773
        %775 = vst [vmem:[%s762 + $0xc] sm:$0xf] %v774
        %776 = vst.msk [vmem:[%s762 + $0x10] sm:$0xf] %vm768, %v457
        %v777 = vld [vmem:[%s762 + $0x14] sm:$0x1]
        %v778 = vsel %vm198, %v458, %v777
        %779 = vst [vmem:[%s762 + $0x14] sm:$0x1] %v778
        %v780 = vld [vmem:[%s762 + $0x18] sm:$0xf]
        %v781 = vsel %vm764, %v465, %v780
        %782 = vst [vmem:[%s762 + $0x18] sm:$0xf] %v781
        %783 = vst.msk [vmem:[%s762 + $0x1c] sm:$0xf] %vm768, %v474
        %v784 = vld [vmem:[%s762 + $0x20] sm:$0x1]
        %v785 = vsel %vm198, %v475, %v784
        %786 = vst [vmem:[%s762 + $0x20] sm:$0x1] %v785
        %v787 = vld [vmem:[%s762 + $0x24] sm:$0xf]
        %v788 = vsel %vm764, %v465, %v787
        %789 = vst [vmem:[%s762 + $0x24] sm:$0xf] %v788
        %790 = vst.msk [vmem:[%s762 + $0x28] sm:$0xf] %vm768, %v474
        %v791 = vld [vmem:[%s762 + $0x2c] sm:$0x1]
        %v792 = vsel %vm198, %v475, %v791
        %793 = vst [vmem:[%s762 + $0x2c] sm:$0x1] %v792
        %v794 = vld [vmem:[%s762 + $0x30] sm:$0xf]
        %v795 = vsel %vm764, %v482, %v794
        %796 = vst [vmem:[%s762 + $0x30] sm:$0xf] %v795
        %797 = vst.msk [vmem:[%s762 + $0x34] sm:$0xf] %vm768, %v491
        %v798 = vld [vmem:[%s762 + $0x38] sm:$0x1]
        %v799 = vsel %vm198, %v492, %v798
        %800 = vst [vmem:[%s762 + $0x38] sm:$0x1] %v799
        %v801 = vld [vmem:[%s762 + $0x3c] sm:$0xf]
        %v802 = vsel %vm764, %v482, %v801
        %803 = vst [vmem:[%s762 + $0x3c] sm:$0xf] %v802
        %804 = vst.msk [vmem:[%s762 + $0x40] sm:$0xf] %vm768, %v491
        %v805 = vld [vmem:[%s762 + $0x44] sm:$0x1]
        %v806 = vsel %vm198, %v492, %v805
        %807 = vst [vmem:[%s762 + $0x44] sm:$0x1] %v806
        %v808 = vld [vmem:[%s762 + $0x48] sm:$0xf]
        %v809 = vsel %vm764, %v499, %v808
        %810 = vst [vmem:[%s762 + $0x48] sm:$0xf] %v809
        %811 = vst.msk [vmem:[%s762 + $0x4c] sm:$0xf] %vm768, %v508
        %v812 = vld [vmem:[%s762 + $0x50] sm:$0x1]
        %v813 = vsel %vm198, %v509, %v812
        %814 = vst [vmem:[%s762 + $0x50] sm:$0x1] %v813
        %v815 = vld [vmem:[%s762 + $0x54] sm:$0xf]
        %v816 = vsel %vm764, %v499, %v815
        %817 = vst [vmem:[%s762 + $0x54] sm:$0xf] %v816
        %818 = vst.msk [vmem:[%s762 + $0x58] sm:$0xf] %vm768, %v508
        %v819 = vld [vmem:[%s762 + $0x5c] sm:$0x1]
        %v820 = vsel %vm198, %v509, %v819
        %821 = vst [vmem:[%s762 + $0x5c] sm:$0x1] %v820
        %v822 = vld [vmem:[%s762 + $0x60] sm:$0xf]
        %v823 = vsel %vm764, %v516, %v822
        %824 = vst [vmem:[%s762 + $0x60] sm:$0xf] %v823
        %825 = vst.msk [vmem:[%s762 + $0x64] sm:$0xf] %vm768, %v525
        %v826 = vld [vmem:[%s762 + $0x68] sm:$0x1]
        %v827 = vsel %vm198, %v526, %v826
        %828 = vst [vmem:[%s762 + $0x68] sm:$0x1] %v827
        %v829 = vld [vmem:[%s762 + $0x6c] sm:$0xf]
        %v830 = vsel %vm764, %v516, %v829
        %831 = vst [vmem:[%s762 + $0x6c] sm:$0xf] %v830
        %832 = vst.msk [vmem:[%s762 + $0x70] sm:$0xf] %vm768, %v525
        %v833 = vld [vmem:[%s762 + $0x74] sm:$0x1]
        %v834 = vsel %vm198, %v526, %v833
        %835 = vst [vmem:[%s762 + $0x74] sm:$0x1] %v834
        %v836 = vld [vmem:[%s762 + $0x78] sm:$0xf]
        %v837 = vsel %vm764, %v533, %v836
        %838 = vst [vmem:[%s762 + $0x78] sm:$0xf] %v837
        %839 = vst.msk [vmem:[%s762 + $0x7c] sm:$0xf] %vm768, %v542
        %v840 = vld [vmem:[%s762 + $0x80] sm:$0x1]
        %v841 = vsel %vm198, %v543, %v840
        %842 = vst [vmem:[%s762 + $0x80] sm:$0x1] %v841
        %v843 = vld [vmem:[%s762 + $0x84] sm:$0xf]
        %v844 = vsel %vm764, %v533, %v843
        %845 = vst [vmem:[%s762 + $0x84] sm:$0xf] %v844
        %846 = vst.msk [vmem:[%s762 + $0x88] sm:$0xf] %vm768, %v542
        %v847 = vld [vmem:[%s762 + $0x8c] sm:$0x1]
        %v848 = vsel %vm198, %v543, %v847
        %849 = vst [vmem:[%s762 + $0x8c] sm:$0x1] %v848
        %v850 = vld [vmem:[%s762 + $0x90] sm:$0xf]
        %v851 = vsel %vm764, %v550, %v850
        %852 = vst [vmem:[%s762 + $0x90] sm:$0xf] %v851
        %853 = vst.msk [vmem:[%s762 + $0x94] sm:$0xf] %vm768, %v559
        %v854 = vld [vmem:[%s762 + $0x98] sm:$0x1]
        %v855 = vsel %vm198, %v560, %v854
        %856 = vst [vmem:[%s762 + $0x98] sm:$0x1] %v855
        %v857 = vld [vmem:[%s762 + $0x9c] sm:$0xf]
        %v858 = vsel %vm764, %v550, %v857
        %859 = vst [vmem:[%s762 + $0x9c] sm:$0xf] %v858
        %860 = vst.msk [vmem:[%s762 + $0xa0] sm:$0xf] %vm768, %v559
        %v861 = vld [vmem:[%s762 + $0xa4] sm:$0x1]
        %v862 = vsel %vm198, %v560, %v861
        %863 = vst [vmem:[%s762 + $0xa4] sm:$0x1] %v862
        %v864 = vld [vmem:[%s762 + $0xa8] sm:$0xf]
        %v865 = vsel %vm764, %v567, %v864
        %866 = vst [vmem:[%s762 + $0xa8] sm:$0xf] %v865
        %867 = vst.msk [vmem:[%s762 + $0xac] sm:$0xf] %vm768, %v576
        %v868 = vld [vmem:[%s762 + $0xb0] sm:$0x1]
        %v869 = vsel %vm198, %v577, %v868
        %870 = vst [vmem:[%s762 + $0xb0] sm:$0x1] %v869
        %v871 = vld [vmem:[%s762 + $0xb4] sm:$0xf]
        %v872 = vsel %vm764, %v567, %v871
        %873 = vst [vmem:[%s762 + $0xb4] sm:$0xf] %v872
        %874 = vst.msk [vmem:[%s762 + $0xb8] sm:$0xf] %vm768, %v576
        %v875 = vld [vmem:[%s762 + $0xbc] sm:$0x1]
        %v876 = vsel %vm198, %v577, %v875
        %877 = vst [vmem:[%s762 + $0xbc] sm:$0x1] %v876
        %v878 = vld [vmem:[%s762 + $0xc0] sm:$0xf]
        %v879 = vsel %vm764, %v584, %v878
        %880 = vst [vmem:[%s762 + $0xc0] sm:$0xf] %v879
        %881 = vst.msk [vmem:[%s762 + $0xc4] sm:$0xf] %vm768, %v593
        %v882 = vld [vmem:[%s762 + $0xc8] sm:$0x1]
        %v883 = vsel %vm198, %v594, %v882
        %884 = vst [vmem:[%s762 + $0xc8] sm:$0x1] %v883
        %v885 = vld [vmem:[%s762 + $0xcc] sm:$0xf]
        %v886 = vsel %vm764, %v584, %v885
        %887 = vst [vmem:[%s762 + $0xcc] sm:$0xf] %v886
        %888 = vst.msk [vmem:[%s762 + $0xd0] sm:$0xf] %vm768, %v593
        %v889 = vld [vmem:[%s762 + $0xd4] sm:$0x1]
        %v890 = vsel %vm198, %v594, %v889
        %891 = vst [vmem:[%s762 + $0xd4] sm:$0x1] %v890
        %v892 = vld [vmem:[%s762 + $0xd8] sm:$0xf]
        %v893 = vsel %vm764, %v601, %v892
        %894 = vst [vmem:[%s762 + $0xd8] sm:$0xf] %v893
        %895 = vst.msk [vmem:[%s762 + $0xdc] sm:$0xf] %vm768, %v610
        %v896 = vld [vmem:[%s762 + $0xe0] sm:$0x1]
        %v897 = vsel %vm198, %v611, %v896
        %898 = vst [vmem:[%s762 + $0xe0] sm:$0x1] %v897
        %v899 = vld [vmem:[%s762 + $0xe4] sm:$0xf]
        %v900 = vsel %vm764, %v601, %v899
        %901 = vst [vmem:[%s762 + $0xe4] sm:$0xf] %v900
        %902 = vst.msk [vmem:[%s762 + $0xe8] sm:$0xf] %vm768, %v610
        %v903 = vld [vmem:[%s762 + $0xec] sm:$0x1]
        %v904 = vsel %vm198, %v611, %v903
        %905 = vst [vmem:[%s762 + $0xec] sm:$0x1] %v904
        %v906 = vld [vmem:[%s762 + $0xf0] sm:$0xf]
        %v907 = vsel %vm764, %v618, %v906
        %908 = vst [vmem:[%s762 + $0xf0] sm:$0xf] %v907
        %909 = vst.msk [vmem:[%s762 + $0xf4] sm:$0xf] %vm768, %v627
        %v910 = vld [vmem:[%s762 + $0xf8] sm:$0x1]
        %v911 = vsel %vm198, %v628, %v910
        %912 = vst [vmem:[%s762 + $0xf8] sm:$0x1] %v911
        %v913 = vld [vmem:[%s762 + $0xfc] sm:$0xf]
        %v914 = vsel %vm764, %v618, %v913
        %915 = vst [vmem:[%s762 + $0xfc] sm:$0xf] %v914
        %916 = vst.msk [vmem:[%s762 + $0x100] sm:$0xf] %vm768, %v627
        %v917 = vld [vmem:[%s762 + $0x104] sm:$0x1]
        %v918 = vsel %vm198, %v628, %v917
        %919 = vst [vmem:[%s762 + $0x104] sm:$0x1] %v918
        %v920 = vld [vmem:[%s762 + $0x108] sm:$0xf]
        %v921 = vsel %vm764, %v635, %v920
        %922 = vst [vmem:[%s762 + $0x108] sm:$0xf] %v921
        %923 = vst.msk [vmem:[%s762 + $0x10c] sm:$0xf] %vm768, %v644
        %v924 = vld [vmem:[%s762 + $0x110] sm:$0x1]
        %v925 = vsel %vm198, %v645, %v924
        %926 = vst [vmem:[%s762 + $0x110] sm:$0x1] %v925
        %v927 = vld [vmem:[%s762 + $0x114] sm:$0xf]
        %v928 = vsel %vm764, %v635, %v927
        %929 = vst [vmem:[%s762 + $0x114] sm:$0xf] %v928
        %930 = vst.msk [vmem:[%s762 + $0x118] sm:$0xf] %vm768, %v644
        %v931 = vld [vmem:[%s762 + $0x11c] sm:$0x1]
        %v932 = vsel %vm198, %v645, %v931
        %933 = vst [vmem:[%s762 + $0x11c] sm:$0x1] %v932
        %v934 = vld [vmem:[%s762 + $0x120] sm:$0xf]
        %v935 = vsel %vm764, %v652, %v934
        %936 = vst [vmem:[%s762 + $0x120] sm:$0xf] %v935
        %937 = vst.msk [vmem:[%s762 + $0x124] sm:$0xf] %vm768, %v661
        %v938 = vld [vmem:[%s762 + $0x128] sm:$0x1]
        %v939 = vsel %vm198, %v662, %v938
        %940 = vst [vmem:[%s762 + $0x128] sm:$0x1] %v939
        %v941 = vld [vmem:[%s762 + $0x12c] sm:$0xf]
        %v942 = vsel %vm764, %v652, %v941
        %943 = vst [vmem:[%s762 + $0x12c] sm:$0xf] %v942
        %944 = vst.msk [vmem:[%s762 + $0x130] sm:$0xf] %vm768, %v661
        %v945 = vld [vmem:[%s762 + $0x134] sm:$0x1]
        %v946 = vsel %vm198, %v662, %v945
        %947 = vst [vmem:[%s762 + $0x134] sm:$0x1] %v946
        %v948 = vld [vmem:[%s762 + $0x138] sm:$0xf]
        %v949 = vsel %vm764, %v669, %v948
        %950 = vst [vmem:[%s762 + $0x138] sm:$0xf] %v949
        %951 = vst.msk [vmem:[%s762 + $0x13c] sm:$0xf] %vm768, %v678
        %v952 = vld [vmem:[%s762 + $0x140] sm:$0x1]
        %v953 = vsel %vm198, %v679, %v952
        %954 = vst [vmem:[%s762 + $0x140] sm:$0x1] %v953
        %v955 = vld [vmem:[%s762 + $0x144] sm:$0xf]
        %v956 = vsel %vm764, %v669, %v955
        %957 = vst [vmem:[%s762 + $0x144] sm:$0xf] %v956
        %958 = vst.msk [vmem:[%s762 + $0x148] sm:$0xf] %vm768, %v678
        %v959 = vld [vmem:[%s762 + $0x14c] sm:$0x1]
        %v960 = vsel %vm198, %v679, %v959
        %961 = vst [vmem:[%s762 + $0x14c] sm:$0x1] %v960
        %v962 = vld [vmem:[%s762 + $0x150] sm:$0xf]
        %v963 = vsel %vm764, %v686, %v962
        %964 = vst [vmem:[%s762 + $0x150] sm:$0xf] %v963
        %965 = vst.msk [vmem:[%s762 + $0x154] sm:$0xf] %vm768, %v695
        %v966 = vld [vmem:[%s762 + $0x158] sm:$0x1]
        %v967 = vsel %vm198, %v696, %v966
        %968 = vst [vmem:[%s762 + $0x158] sm:$0x1] %v967
        %v969 = vld [vmem:[%s762 + $0x15c] sm:$0xf]
        %v970 = vsel %vm764, %v686, %v969
        %971 = vst [vmem:[%s762 + $0x15c] sm:$0xf] %v970
        %972 = vst.msk [vmem:[%s762 + $0x160] sm:$0xf] %vm768, %v695
        %v973 = vld [vmem:[%s762 + $0x164] sm:$0x1]
        %v974 = vsel %vm198, %v696, %v973
        %975 = vst [vmem:[%s762 + $0x164] sm:$0x1] %v974
        %v976 = vld [vmem:[%s762 + $0x168] sm:$0xf]
        %v977 = vsel %vm764, %v703, %v976
        %978 = vst [vmem:[%s762 + $0x168] sm:$0xf] %v977
        %979 = vst.msk [vmem:[%s762 + $0x16c] sm:$0xf] %vm768, %v712
        %v980 = vld [vmem:[%s762 + $0x170] sm:$0x1]
        %v981 = vsel %vm198, %v713, %v980
        %982 = vst [vmem:[%s762 + $0x170] sm:$0x1] %v981
        %v983 = vld [vmem:[%s762 + $0x174] sm:$0xf]
        %v984 = vsel %vm764, %v703, %v983
        %985 = vst [vmem:[%s762 + $0x174] sm:$0xf] %v984
        %986 = vst.msk [vmem:[%s762 + $0x178] sm:$0xf] %vm768, %v712
        %v987 = vld [vmem:[%s762 + $0x17c] sm:$0x1]
        %v988 = vsel %vm198, %v713, %v987
        %989 = vst [vmem:[%s762 + $0x17c] sm:$0x1] %v988
        %s990 = ssub.s32 %s195, 1
        %p991 = scmp.gt.s32.totalorder %s990, 0
        %s992 = scalar_select %p991, %s990, 0
        %s993 = smul.u32 %s992, 2
        %s994 = smul.addr %s993, 4
        %s995 = scalar_lea.vmem %s193, %s994
        %v996 = vld [vmem:[%s995] sm:$0xf]
        %v997 = vld [vmem:[%s995 + $0x4] sm:$0xf]
        %p998 = scmp.gt.s32.totalorder %s26, 0
        %s999 = scalar_select %p998, 1, 0
        %v1000 = vstv %s999
        %vm1001 = vcmp.eq.s32.totalorder %v1000, 1
        %v1002 = vsel %vm1001, %v996, 0
        %v1003 = vsel %vm1001, %v997, 0
        %v1005 = vshrl.u32 %v1002, 16
        %v1007 = vrot.slane %v1005, 7
        %v1008 = vshll.u32 %v1002, 16
        %v1010 = vor.u32 %v1007, %v1008
        %v1011 = vrot.slane %v1007, 4
        %v1013 = vshrl.u32 %v1003, 16
        %v1015 = vrot.slane %v1013, 7
        %v1016 = vshll.u32 %v1003, 16
        %v1018 = vor.u32 %v1015, %v1016
        %v1019 = vsel %vm441, %v1011, %v1018
        %v1020 = vrot.slane %v1015, 4
        %v1024 = vld [vmem:[#allocation2] sm:$0xf]
        %v1025 = vsel %vm764, %v1010, %v1024
        %1026 = vst [vmem:[#allocation2] sm:$0xf] %v1025
        %1027 = vst.msk [vmem:[#allocation2 + $0x4] sm:$0xf] %vm768, %v1019
        %v1028 = vld [vmem:[#allocation2 + $0x8] sm:$0x1]
        %v1029 = vsel %vm198, %v1020, %v1028
        %1030 = vst [vmem:[#allocation2 + $0x8] sm:$0x1] %v1029
        %s1031 = sadd.s32 %s195, 16
        %p1032 = scmp.lt.s32.totalorder %s1031, 15
        %s1033 = scalar_select %p1032, %s1031, 15
        %s1034 = smul.u32 %s1033, 2
        %s1035 = smul.addr %s1034, 4
        %s1036 = scalar_lea.vmem %s193, %s1035
        %v1037 = vld [vmem:[%s1036] sm:$0xf]
        %v1038 = vld [vmem:[%s1036 + $0x4] sm:$0xf]
        %p1039 = scmp.lt.s32.totalorder %s26, 0
        %s1040 = scalar_select %p1039, 1, 0
        %v1041 = vstv %s1040
        %vm1042 = vcmp.eq.s32.totalorder %v1041, 1
        %v1043 = vsel %vm1042, %v1037, 0
        %v1044 = vsel %vm1042, %v1038, 0
        %v1046 = vshrl.u32 %v1043, 16
        %v1048 = vrot.slane %v1046, 7
        %v1049 = vshll.u32 %v1043, 16
        %v1051 = vor.u32 %v1048, %v1049
        %v1052 = vrot.slane %v1048, 4
        %v1054 = vshrl.u32 %v1044, 16
        %v1056 = vrot.slane %v1054, 7
        %v1057 = vshll.u32 %v1044, 16
        %v1059 = vor.u32 %v1056, %v1057
        %v1060 = vsel %vm441, %v1052, %v1059
        %v1061 = vrot.slane %v1056, 4
        %s1065 = scalar_lea.vmem [#allocation2], 396
        %v1066 = vld [vmem:[%s1065] sm:$0xf]
        %v1067 = vsel %vm764, %v1051, %v1066
        %1068 = vst [vmem:[%s1065] sm:$0xf] %v1067
        %1069 = vst.msk [vmem:[%s1065 + $0x4] sm:$0xf] %vm768, %v1060
        %v1070 = vld [vmem:[%s1065 + $0x8] sm:$0x1]
        %v1071 = vsel %vm198, %v1061, %v1070
        %1072 = vst [vmem:[%s1065 + $0x8] sm:$0x1] %v1071
        %v1073 = vld [vmem:[#allocation2] sm:$0xf]
        %v1074 = vld [vmem:[#allocation2 + $0x4] sm:$0xf]
        %v1075 = vld [vmem:[#allocation2 + $0xc] sm:$0xf]
        %v1076 = vld [vmem:[#allocation2 + $0x10] sm:$0xf]
        %v1077 = vld [vmem:[#allocation2 + $0x18] sm:$0xf]
        %v1078 = vld [vmem:[#allocation2 + $0x1c] sm:$0xf]
        %v1079 = vld [vmem:[#allocation2 + $0x24] sm:$0xf]
        %v1080 = vld [vmem:[#allocation2 + $0x28] sm:$0xf]
        %v1081 = vld [vmem:[#allocation2 + $0x30] sm:$0xf]
        %v1082 = vld [vmem:[#allocation2 + $0x34] sm:$0xf]
        %v1083 = vld [vmem:[#allocation2 + $0x3c] sm:$0xf]
        %v1084 = vld [vmem:[#allocation2 + $0x40] sm:$0xf]
        %v1085 = vld [vmem:[#allocation2 + $0x48] sm:$0xf]
        %v1086 = vld [vmem:[#allocation2 + $0x4c] sm:$0xf]
        %v1087 = vld [vmem:[#allocation2 + $0x54] sm:$0xf]
        %v1088 = vld [vmem:[#allocation2 + $0x58] sm:$0xf]
        %v1089 = vld [vmem:[#allocation2 + $0x60] sm:$0xf]
        %v1090 = vld [vmem:[#allocation2 + $0x64] sm:$0xf]
        %v1091 = vld [vmem:[#allocation2 + $0x6c] sm:$0xf]
        %v1092 = vld [vmem:[#allocation2 + $0x70] sm:$0xf]
        %v1093 = vld [vmem:[#allocation2 + $0x78] sm:$0xf]
        %v1094 = vld [vmem:[#allocation2 + $0x7c] sm:$0xf]
        %v1095 = vld [vmem:[#allocation2 + $0x84] sm:$0xf]
        %v1096 = vld [vmem:[#allocation2 + $0x88] sm:$0xf]
        %v1097 = vld [vmem:[#allocation2 + $0x90] sm:$0xf]
        %v1098 = vld [vmem:[#allocation2 + $0x94] sm:$0xf]
        %v1099 = vld [vmem:[#allocation2 + $0x9c] sm:$0xf]
        %v1100 = vld [vmem:[#allocation2 + $0xa0] sm:$0xf]
        %v1101 = vld [vmem:[#allocation2 + $0xa8] sm:$0xf]
        %v1102 = vld [vmem:[#allocation2 + $0xac] sm:$0xf]
        %v1103 = vld [vmem:[#allocation2 + $0xb4] sm:$0xf]
        %v1104 = vld [vmem:[#allocation2 + $0xb8] sm:$0xf]
        %v1105 = vld [vmem:[#allocation2 + $0xc0] sm:$0xf]
        %v1106 = vld [vmem:[#allocation2 + $0xc4] sm:$0xf]
        %v1107 = vld [vmem:[#allocation2 + $0xcc] sm:$0xf]
        %v1108 = vld [vmem:[#allocation2 + $0xd0] sm:$0xf]
        %v1109 = vld [vmem:[#allocation2 + $0xd8] sm:$0xf]
        %v1110 = vld [vmem:[#allocation2 + $0xdc] sm:$0xf]
        %v1111 = vld [vmem:[#allocation2 + $0xe4] sm:$0xf]
        %v1112 = vld [vmem:[#allocation2 + $0xe8] sm:$0xf]
        %v1113 = vld [vmem:[#allocation2 + $0xf0] sm:$0xf]
        %v1114 = vld [vmem:[#allocation2 + $0xf4] sm:$0xf]
        %v1115 = vld [vmem:[#allocation2 + $0xfc] sm:$0xf]
        %v1116 = vld [vmem:[#allocation2 + $0x100] sm:$0xf]
        %v1117 = vld [vmem:[#allocation2 + $0x108] sm:$0xf]
        %v1118 = vld [vmem:[#allocation2 + $0x10c] sm:$0xf]
        %v1119 = vld [vmem:[#allocation2 + $0x114] sm:$0xf]
        %v1120 = vld [vmem:[#allocation2 + $0x118] sm:$0xf]
        %v1121 = vld [vmem:[#allocation2 + $0x120] sm:$0xf]
        %v1122 = vld [vmem:[#allocation2 + $0x124] sm:$0xf]
        %v1123 = vld [vmem:[#allocation2 + $0x12c] sm:$0xf]
        %v1124 = vld [vmem:[#allocation2 + $0x130] sm:$0xf]
        %v1125 = vld [vmem:[#allocation2 + $0x138] sm:$0xf]
        %v1126 = vld [vmem:[#allocation2 + $0x13c] sm:$0xf]
        %v1127 = vld [vmem:[#allocation2 + $0x144] sm:$0xf]
        %v1128 = vld [vmem:[#allocation2 + $0x148] sm:$0xf]
        %v1129 = vld [vmem:[#allocation2 + $0x150] sm:$0xf]
        %v1130 = vld [vmem:[#allocation2 + $0x154] sm:$0xf]
        %v1131 = vld [vmem:[#allocation2 + $0x15c] sm:$0xf]
        %v1132 = vld [vmem:[#allocation2 + $0x160] sm:$0xf]
        %v1133 = vld [vmem:[#allocation2 + $0x168] sm:$0xf]
        %v1134 = vld [vmem:[#allocation2 + $0x16c] sm:$0xf]
        %v1135 = vld [vmem:[#allocation2 + $0x174] sm:$0xf]
        %v1136 = vld [vmem:[#allocation2 + $0x178] sm:$0xf]
        %v1137 = vld [vmem:[%s1] sm:$0x3]
        %v1138 = vld [vmem:[#allocation2 + $0x8] sm:$0x1]
        %v1139 = vld [vmem:[#allocation2 + $0x14] sm:$0x1]
        %v1140 = vld [vmem:[#allocation2 + $0x20] sm:$0x1]
        %v1141 = vld [vmem:[#allocation2 + $0x2c] sm:$0x1]
        %v1142 = vld [vmem:[#allocation2 + $0x38] sm:$0x1]
        %v1143 = vld [vmem:[#allocation2 + $0x44] sm:$0x1]
        %v1144 = vld [vmem:[#allocation2 + $0x50] sm:$0x1]
        %v1145 = vld [vmem:[#allocation2 + $0x5c] sm:$0x1]
        %v1146 = vld [vmem:[#allocation2 + $0x68] sm:$0x1]
        %v1147 = vld [vmem:[#allocation2 + $0x74] sm:$0x1]
        %v1148 = vld [vmem:[#allocation2 + $0x80] sm:$0x1]
        %v1149 = vld [vmem:[#allocation2 + $0x8c] sm:$0x1]
        %v1150 = vld [vmem:[#allocation2 + $0x98] sm:$0x1]
        %v1151 = vld [vmem:[#allocation2 + $0xa4] sm:$0x1]
        %v1152 = vld [vmem:[#allocation2 + $0xb0] sm:$0x1]
        %v1153 = vld [vmem:[#allocation2 + $0xbc] sm:$0x1]
        %v1154 = vld [vmem:[#allocation2 + $0xc8] sm:$0x1]
        %v1155 = vld [vmem:[#allocation2 + $0xd4] sm:$0x1]
        %v1156 = vld [vmem:[#allocation2 + $0xe0] sm:$0x1]
        %v1157 = vld [vmem:[#allocation2 + $0xec] sm:$0x1]
        %v1158 = vld [vmem:[#allocation2 + $0xf8] sm:$0x1]
        %v1159 = vld [vmem:[#allocation2 + $0x104] sm:$0x1]
        %v1160 = vld [vmem:[#allocation2 + $0x110] sm:$0x1]
        %v1161 = vld [vmem:[#allocation2 + $0x11c] sm:$0x1]
        %v1162 = vld [vmem:[#allocation2 + $0x128] sm:$0x1]
        %v1163 = vld [vmem:[#allocation2 + $0x134] sm:$0x1]
        %v1164 = vld [vmem:[#allocation2 + $0x140] sm:$0x1]
        %v1165 = vld [vmem:[#allocation2 + $0x14c] sm:$0x1]
        %v1166 = vld [vmem:[#allocation2 + $0x158] sm:$0x1]
        %v1167 = vld [vmem:[#allocation2 + $0x164] sm:$0x1]
        %v1168 = vld [vmem:[#allocation2 + $0x170] sm:$0x1]
        %v1169 = vld [vmem:[#allocation2 + $0x17c] sm:$0x1]
        %vm1170 = vsmask.f32 3328
        %vm1171 = vsmask.f32 7440
        %vm1172 = vmor %vm1170, %vm1171
        %v1174 = vshrl.u32 %v1073, 16
        %v1176 = vrot.slane %v1174, 4
        %v1177 = vshll.u32 %v1073, 16
        %v1179 = vrot.slane %v1177, 5
        %v1180 = vor.u32 %v1176, %v1179
        %v1181 = vrot.slane %v1180, 4
        %v1183 = vshll.u32 %v1074, 16
        %v1185 = vrot.slane %v1183, 5
        %v1186 = vsel %vm1172, %v1181, %v1185
        %v1187 = vshrl.u32 %v1074, 16
        %v1189 = vrot.slane %v1187, 4
        %v1190 = vor.u32 %v1189, %v1185
        %v1191 = vrot.slane %v1190, 4
        %v1193 = vshll.u32 %v1138, 16
        %v1195 = vrot.slane %v1193, 5
        %v1196 = vsel %vm1172, %v1191, %v1195
        %v1198 = vshrl.u32 %v1075, 16
        %v1200 = vrot.slane %v1198, 4
        %v1201 = vshll.u32 %v1075, 16
        %v1203 = vrot.slane %v1201, 5
        %v1204 = vor.u32 %v1200, %v1203
        %v1205 = vrot.slane %v1204, 4
        %v1207 = vshll.u32 %v1076, 16
        %v1209 = vrot.slane %v1207, 5
        %v1210 = vsel %vm1172, %v1205, %v1209
        %v1211 = vshrl.u32 %v1076, 16
        %v1213 = vrot.slane %v1211, 4
        %v1214 = vor.u32 %v1213, %v1209
        %v1215 = vrot.slane %v1214, 4
        %v1217 = vshll.u32 %v1139, 16
        %v1219 = vrot.slane %v1217, 5
        %v1220 = vsel %vm1172, %v1215, %v1219
        %v1222 = vshrl.u32 %v1077, 16
        %v1224 = vrot.slane %v1222, 4
        %v1225 = vshll.u32 %v1077, 16
        %v1227 = vrot.slane %v1225, 5
        %v1228 = vor.u32 %v1224, %v1227
        %v1229 = vrot.slane %v1228, 4
        %v1231 = vshll.u32 %v1078, 16
        %v1233 = vrot.slane %v1231, 5
        %v1234 = vsel %vm1172, %v1229, %v1233
        %v1235 = vshrl.u32 %v1078, 16
        %v1237 = vrot.slane %v1235, 4
        %v1238 = vor.u32 %v1237, %v1233
        %v1239 = vrot.slane %v1238, 4
        %v1241 = vshll.u32 %v1140, 16
        %v1243 = vrot.slane %v1241, 5
        %v1244 = vsel %vm1172, %v1239, %v1243
        %v1246 = vshrl.u32 %v1079, 16
        %v1248 = vrot.slane %v1246, 4
        %v1249 = vshll.u32 %v1079, 16
        %v1251 = vrot.slane %v1249, 5
        %v1252 = vor.u32 %v1248, %v1251
        %v1253 = vrot.slane %v1252, 4
        %v1255 = vshll.u32 %v1080, 16
        %v1257 = vrot.slane %v1255, 5
        %v1258 = vsel %vm1172, %v1253, %v1257
        %v1259 = vshrl.u32 %v1080, 16
        %v1261 = vrot.slane %v1259, 4
        %v1262 = vor.u32 %v1261, %v1257
        %v1263 = vrot.slane %v1262, 4
        %v1265 = vshll.u32 %v1141, 16
        %v1267 = vrot.slane %v1265, 5
        %v1268 = vsel %vm1172, %v1263, %v1267
        %v1270 = vshrl.u32 %v1081, 16
        %v1272 = vrot.slane %v1270, 4
        %v1273 = vshll.u32 %v1081, 16
        %v1275 = vrot.slane %v1273, 5
        %v1276 = vor.u32 %v1272, %v1275
        %v1277 = vrot.slane %v1276, 4
        %v1279 = vshll.u32 %v1082, 16
        %v1281 = vrot.slane %v1279, 5
        %v1282 = vsel %vm1172, %v1277, %v1281
        %v1283 = vshrl.u32 %v1082, 16
        %v1285 = vrot.slane %v1283, 4
        %v1286 = vor.u32 %v1285, %v1281
        %v1287 = vrot.slane %v1286, 4
        %v1289 = vshll.u32 %v1142, 16
        %v1291 = vrot.slane %v1289, 5
        %v1292 = vsel %vm1172, %v1287, %v1291
        %v1294 = vshrl.u32 %v1083, 16
        %v1296 = vrot.slane %v1294, 4
        %v1297 = vshll.u32 %v1083, 16
        %v1299 = vrot.slane %v1297, 5
        %v1300 = vor.u32 %v1296, %v1299
        %v1301 = vrot.slane %v1300, 4
        %v1303 = vshll.u32 %v1084, 16
        %v1305 = vrot.slane %v1303, 5
        %v1306 = vsel %vm1172, %v1301, %v1305
        %v1307 = vshrl.u32 %v1084, 16
        %v1309 = vrot.slane %v1307, 4
        %v1310 = vor.u32 %v1309, %v1305
        %v1311 = vrot.slane %v1310, 4
        %v1313 = vshll.u32 %v1143, 16
        %v1315 = vrot.slane %v1313, 5
        %v1316 = vsel %vm1172, %v1311, %v1315
        %v1318 = vshrl.u32 %v1085, 16
        %v1320 = vrot.slane %v1318, 4
        %v1321 = vshll.u32 %v1085, 16
        %v1323 = vrot.slane %v1321, 5
        %v1324 = vor.u32 %v1320, %v1323
        %v1325 = vrot.slane %v1324, 4
        %v1327 = vshll.u32 %v1086, 16
        %v1329 = vrot.slane %v1327, 5
        %v1330 = vsel %vm1172, %v1325, %v1329
        %v1331 = vshrl.u32 %v1086, 16
        %v1333 = vrot.slane %v1331, 4
        %v1334 = vor.u32 %v1333, %v1329
        %v1335 = vrot.slane %v1334, 4
        %v1337 = vshll.u32 %v1144, 16
        %v1339 = vrot.slane %v1337, 5
        %v1340 = vsel %vm1172, %v1335, %v1339
        %v1342 = vshrl.u32 %v1087, 16
        %v1344 = vrot.slane %v1342, 4
        %v1345 = vshll.u32 %v1087, 16
        %v1347 = vrot.slane %v1345, 5
        %v1348 = vor.u32 %v1344, %v1347
        %v1349 = vrot.slane %v1348, 4
        %v1351 = vshll.u32 %v1088, 16
        %v1353 = vrot.slane %v1351, 5
        %v1354 = vsel %vm1172, %v1349, %v1353
        %v1355 = vshrl.u32 %v1088, 16
        %v1357 = vrot.slane %v1355, 4
        %v1358 = vor.u32 %v1357, %v1353
        %v1359 = vrot.slane %v1358, 4
        %v1361 = vshll.u32 %v1145, 16
        %v1363 = vrot.slane %v1361, 5
        %v1364 = vsel %vm1172, %v1359, %v1363
        %v1366 = vshrl.u32 %v1089, 16
        %v1368 = vrot.slane %v1366, 4
        %v1369 = vshll.u32 %v1089, 16
        %v1371 = vrot.slane %v1369, 5
        %v1372 = vor.u32 %v1368, %v1371
        %v1373 = vrot.slane %v1372, 4
        %v1375 = vshll.u32 %v1090, 16
        %v1377 = vrot.slane %v1375, 5
        %v1378 = vsel %vm1172, %v1373, %v1377
        %v1379 = vshrl.u32 %v1090, 16
        %v1381 = vrot.slane %v1379, 4
        %v1382 = vor.u32 %v1381, %v1377
        %v1383 = vrot.slane %v1382, 4
        %v1385 = vshll.u32 %v1146, 16
        %v1387 = vrot.slane %v1385, 5
        %v1388 = vsel %vm1172, %v1383, %v1387
        %v1390 = vshrl.u32 %v1091, 16
        %v1392 = vrot.slane %v1390, 4
        %v1393 = vshll.u32 %v1091, 16
        %v1395 = vrot.slane %v1393, 5
        %v1396 = vor.u32 %v1392, %v1395
        %v1397 = vrot.slane %v1396, 4
        %v1399 = vshll.u32 %v1092, 16
        %v1401 = vrot.slane %v1399, 5
        %v1402 = vsel %vm1172, %v1397, %v1401
        %v1403 = vshrl.u32 %v1092, 16
        %v1405 = vrot.slane %v1403, 4
        %v1406 = vor.u32 %v1405, %v1401
        %v1407 = vrot.slane %v1406, 4
        %v1409 = vshll.u32 %v1147, 16
        %v1411 = vrot.slane %v1409, 5
        %v1412 = vsel %vm1172, %v1407, %v1411
        %v1414 = vshrl.u32 %v1093, 16
        %v1416 = vrot.slane %v1414, 4
        %v1417 = vshll.u32 %v1093, 16
        %v1419 = vrot.slane %v1417, 5
        %v1420 = vor.u32 %v1416, %v1419
        %v1421 = vrot.slane %v1420, 4
        %v1423 = vshll.u32 %v1094, 16
        %v1425 = vrot.slane %v1423, 5
        %v1426 = vsel %vm1172, %v1421, %v1425
        %v1427 = vshrl.u32 %v1094, 16
        %v1429 = vrot.slane %v1427, 4
        %v1430 = vor.u32 %v1429, %v1425
        %v1431 = vrot.slane %v1430, 4
        %v1433 = vshll.u32 %v1148, 16
        %v1435 = vrot.slane %v1433, 5
        %v1436 = vsel %vm1172, %v1431, %v1435
        %v1438 = vshrl.u32 %v1095, 16
        %v1440 = vrot.slane %v1438, 4
        %v1441 = vshll.u32 %v1095, 16
        %v1443 = vrot.slane %v1441, 5
        %v1444 = vor.u32 %v1440, %v1443
        %v1445 = vrot.slane %v1444, 4
        %v1447 = vshll.u32 %v1096, 16
        %v1449 = vrot.slane %v1447, 5
        %v1450 = vsel %vm1172, %v1445, %v1449
        %v1451 = vshrl.u32 %v1096, 16
        %v1453 = vrot.slane %v1451, 4
        %v1454 = vor.u32 %v1453, %v1449
        %v1455 = vrot.slane %v1454, 4
        %v1457 = vshll.u32 %v1149, 16
        %v1459 = vrot.slane %v1457, 5
        %v1460 = vsel %vm1172, %v1455, %v1459
        %v1462 = vshrl.u32 %v1097, 16
        %v1464 = vrot.slane %v1462, 4
        %v1465 = vshll.u32 %v1097, 16
        %v1467 = vrot.slane %v1465, 5
        %v1468 = vor.u32 %v1464, %v1467
        %v1469 = vrot.slane %v1468, 4
        %v1471 = vshll.u32 %v1098, 16
        %v1473 = vrot.slane %v1471, 5
        %v1474 = vsel %vm1172, %v1469, %v1473
        %v1475 = vshrl.u32 %v1098, 16
        %v1477 = vrot.slane %v1475, 4
        %v1478 = vor.u32 %v1477, %v1473
        %v1479 = vrot.slane %v1478, 4
        %v1481 = vshll.u32 %v1150, 16
        %v1483 = vrot.slane %v1481, 5
        %v1484 = vsel %vm1172, %v1479, %v1483
        %v1486 = vshrl.u32 %v1099, 16
        %v1488 = vrot.slane %v1486, 4
        %v1489 = vshll.u32 %v1099, 16
        %v1491 = vrot.slane %v1489, 5
        %v1492 = vor.u32 %v1488, %v1491
        %v1493 = vrot.slane %v1492, 4
        %v1495 = vshll.u32 %v1100, 16
        %v1497 = vrot.slane %v1495, 5
        %v1498 = vsel %vm1172, %v1493, %v1497
        %v1499 = vshrl.u32 %v1100, 16
        %v1501 = vrot.slane %v1499, 4
        %v1502 = vor.u32 %v1501, %v1497
        %v1503 = vrot.slane %v1502, 4
        %v1505 = vshll.u32 %v1151, 16
        %v1507 = vrot.slane %v1505, 5
        %v1508 = vsel %vm1172, %v1503, %v1507
        %v1510 = vshrl.u32 %v1101, 16
        %v1512 = vrot.slane %v1510, 4
        %v1513 = vshll.u32 %v1101, 16
        %v1515 = vrot.slane %v1513, 5
        %v1516 = vor.u32 %v1512, %v1515
        %v1517 = vrot.slane %v1516, 4
        %v1519 = vshll.u32 %v1102, 16
        %v1521 = vrot.slane %v1519, 5
        %v1522 = vsel %vm1172, %v1517, %v1521
        %v1523 = vshrl.u32 %v1102, 16
        %v1525 = vrot.slane %v1523, 4
        %v1526 = vor.u32 %v1525, %v1521
        %v1527 = vrot.slane %v1526, 4
        %v1529 = vshll.u32 %v1152, 16
        %v1531 = vrot.slane %v1529, 5
        %v1532 = vsel %vm1172, %v1527, %v1531
        %v1534 = vshrl.u32 %v1103, 16
        %v1536 = vrot.slane %v1534, 4
        %v1537 = vshll.u32 %v1103, 16
        %v1539 = vrot.slane %v1537, 5
        %v1540 = vor.u32 %v1536, %v1539
        %v1541 = vrot.slane %v1540, 4
        %v1543 = vshll.u32 %v1104, 16
        %v1545 = vrot.slane %v1543, 5
        %v1546 = vsel %vm1172, %v1541, %v1545
        %v1547 = vshrl.u32 %v1104, 16
        %v1549 = vrot.slane %v1547, 4
        %v1550 = vor.u32 %v1549, %v1545
        %v1551 = vrot.slane %v1550, 4
        %v1553 = vshll.u32 %v1153, 16
        %v1555 = vrot.slane %v1553, 5
        %v1556 = vsel %vm1172, %v1551, %v1555
        %v1558 = vshrl.u32 %v1105, 16
        %v1560 = vrot.slane %v1558, 4
        %v1561 = vshll.u32 %v1105, 16
        %v1563 = vrot.slane %v1561, 5
        %v1564 = vor.u32 %v1560, %v1563
        %v1565 = vrot.slane %v1564, 4
        %v1567 = vshll.u32 %v1106, 16
        %v1569 = vrot.slane %v1567, 5
        %v1570 = vsel %vm1172, %v1565, %v1569
        %v1571 = vshrl.u32 %v1106, 16
        %v1573 = vrot.slane %v1571, 4
        %v1574 = vor.u32 %v1573, %v1569
        %v1575 = vrot.slane %v1574, 4
        %v1577 = vshll.u32 %v1154, 16
        %v1579 = vrot.slane %v1577, 5
        %v1580 = vsel %vm1172, %v1575, %v1579
        %v1582 = vshrl.u32 %v1107, 16
        %v1584 = vrot.slane %v1582, 4
        %v1585 = vshll.u32 %v1107, 16
        %v1587 = vrot.slane %v1585, 5
        %v1588 = vor.u32 %v1584, %v1587
        %v1589 = vrot.slane %v1588, 4
        %v1591 = vshll.u32 %v1108, 16
        %v1593 = vrot.slane %v1591, 5
        %v1594 = vsel %vm1172, %v1589, %v1593
        %v1595 = vshrl.u32 %v1108, 16
        %v1597 = vrot.slane %v1595, 4
        %v1598 = vor.u32 %v1597, %v1593
        %v1599 = vrot.slane %v1598, 4
        %v1601 = vshll.u32 %v1155, 16
        %v1603 = vrot.slane %v1601, 5
        %v1604 = vsel %vm1172, %v1599, %v1603
        %v1606 = vshrl.u32 %v1109, 16
        %v1608 = vrot.slane %v1606, 4
        %v1609 = vshll.u32 %v1109, 16
        %v1611 = vrot.slane %v1609, 5
        %v1612 = vor.u32 %v1608, %v1611
        %v1613 = vrot.slane %v1612, 4
        %v1615 = vshll.u32 %v1110, 16
        %v1617 = vrot.slane %v1615, 5
        %v1618 = vsel %vm1172, %v1613, %v1617
        %v1619 = vshrl.u32 %v1110, 16
        %v1621 = vrot.slane %v1619, 4
        %v1622 = vor.u32 %v1621, %v1617
        %v1623 = vrot.slane %v1622, 4
        %v1625 = vshll.u32 %v1156, 16
        %v1627 = vrot.slane %v1625, 5
        %v1628 = vsel %vm1172, %v1623, %v1627
        %v1630 = vshrl.u32 %v1111, 16
        %v1632 = vrot.slane %v1630, 4
        %v1633 = vshll.u32 %v1111, 16
        %v1635 = vrot.slane %v1633, 5
        %v1636 = vor.u32 %v1632, %v1635
        %v1637 = vrot.slane %v1636, 4
        %v1639 = vshll.u32 %v1112, 16
        %v1641 = vrot.slane %v1639, 5
        %v1642 = vsel %vm1172, %v1637, %v1641
        %v1643 = vshrl.u32 %v1112, 16
        %v1645 = vrot.slane %v1643, 4
        %v1646 = vor.u32 %v1645, %v1641
        %v1647 = vrot.slane %v1646, 4
        %v1649 = vshll.u32 %v1157, 16
        %v1651 = vrot.slane %v1649, 5
        %v1652 = vsel %vm1172, %v1647, %v1651
        %v1654 = vshrl.u32 %v1113, 16
        %v1656 = vrot.slane %v1654, 4
        %v1657 = vshll.u32 %v1113, 16
        %v1659 = vrot.slane %v1657, 5
        %v1660 = vor.u32 %v1656, %v1659
        %v1661 = vrot.slane %v1660, 4
        %v1663 = vshll.u32 %v1114, 16
        %v1665 = vrot.slane %v1663, 5
        %v1666 = vsel %vm1172, %v1661, %v1665
        %v1667 = vshrl.u32 %v1114, 16
        %v1669 = vrot.slane %v1667, 4
        %v1670 = vor.u32 %v1669, %v1665
        %v1671 = vrot.slane %v1670, 4
        %v1673 = vshll.u32 %v1158, 16
        %v1675 = vrot.slane %v1673, 5
        %v1676 = vsel %vm1172, %v1671, %v1675
        %v1678 = vshrl.u32 %v1115, 16
        %v1680 = vrot.slane %v1678, 4
        %v1681 = vshll.u32 %v1115, 16
        %v1683 = vrot.slane %v1681, 5
        %v1684 = vor.u32 %v1680, %v1683
        %v1685 = vrot.slane %v1684, 4
        %v1687 = vshll.u32 %v1116, 16
        %v1689 = vrot.slane %v1687, 5
        %v1690 = vsel %vm1172, %v1685, %v1689
        %v1691 = vshrl.u32 %v1116, 16
        %v1693 = vrot.slane %v1691, 4
        %v1694 = vor.u32 %v1693, %v1689
        %v1695 = vrot.slane %v1694, 4
        %v1697 = vshll.u32 %v1159, 16
        %v1699 = vrot.slane %v1697, 5
        %v1700 = vsel %vm1172, %v1695, %v1699
        %v1702 = vshrl.u32 %v1117, 16
        %v1704 = vrot.slane %v1702, 4
        %v1705 = vshll.u32 %v1117, 16
        %v1707 = vrot.slane %v1705, 5
        %v1708 = vor.u32 %v1704, %v1707
        %v1709 = vrot.slane %v1708, 4
        %v1711 = vshll.u32 %v1118, 16
        %v1713 = vrot.slane %v1711, 5
        %v1714 = vsel %vm1172, %v1709, %v1713
        %v1715 = vshrl.u32 %v1118, 16
        %v1717 = vrot.slane %v1715, 4
        %v1718 = vor.u32 %v1717, %v1713
        %v1719 = vrot.slane %v1718, 4
        %v1721 = vshll.u32 %v1160, 16
        %v1723 = vrot.slane %v1721, 5
        %v1724 = vsel %vm1172, %v1719, %v1723
        %v1726 = vshrl.u32 %v1119, 16
        %v1728 = vrot.slane %v1726, 4
        %v1729 = vshll.u32 %v1119, 16
        %v1731 = vrot.slane %v1729, 5
        %v1732 = vor.u32 %v1728, %v1731
        %v1733 = vrot.slane %v1732, 4
        %v1735 = vshll.u32 %v1120, 16
        %v1737 = vrot.slane %v1735, 5
        %v1738 = vsel %vm1172, %v1733, %v1737
        %v1739 = vshrl.u32 %v1120, 16
        %v1741 = vrot.slane %v1739, 4
        %v1742 = vor.u32 %v1741, %v1737
        %v1743 = vrot.slane %v1742, 4
        %v1745 = vshll.u32 %v1161, 16
        %v1747 = vrot.slane %v1745, 5
        %v1748 = vsel %vm1172, %v1743, %v1747
        %v1750 = vshrl.u32 %v1121, 16
        %v1752 = vrot.slane %v1750, 4
        %v1753 = vshll.u32 %v1121, 16
        %v1755 = vrot.slane %v1753, 5
        %v1756 = vor.u32 %v1752, %v1755
        %v1757 = vrot.slane %v1756, 4
        %v1759 = vshll.u32 %v1122, 16
        %v1761 = vrot.slane %v1759, 5
        %v1762 = vsel %vm1172, %v1757, %v1761
        %v1763 = vshrl.u32 %v1122, 16
        %v1765 = vrot.slane %v1763, 4
        %v1766 = vor.u32 %v1765, %v1761
        %v1767 = vrot.slane %v1766, 4
        %v1769 = vshll.u32 %v1162, 16
        %v1771 = vrot.slane %v1769, 5
        %v1772 = vsel %vm1172, %v1767, %v1771
        %v1774 = vshrl.u32 %v1123, 16
        %v1776 = vrot.slane %v1774, 4
        %v1777 = vshll.u32 %v1123, 16
        %v1779 = vrot.slane %v1777, 5
        %v1780 = vor.u32 %v1776, %v1779
        %v1781 = vrot.slane %v1780, 4
        %v1783 = vshll.u32 %v1124, 16
        %v1785 = vrot.slane %v1783, 5
        %v1786 = vsel %vm1172, %v1781, %v1785
        %v1787 = vshrl.u32 %v1124, 16
        %v1789 = vrot.slane %v1787, 4
        %v1790 = vor.u32 %v1789, %v1785
        %v1791 = vrot.slane %v1790, 4
        %v1793 = vshll.u32 %v1163, 16
        %v1795 = vrot.slane %v1793, 5
        %v1796 = vsel %vm1172, %v1791, %v1795
        %v1798 = vshrl.u32 %v1125, 16
        %v1800 = vrot.slane %v1798, 4
        %v1801 = vshll.u32 %v1125, 16
        %v1803 = vrot.slane %v1801, 5
        %v1804 = vor.u32 %v1800, %v1803
        %v1805 = vrot.slane %v1804, 4
        %v1807 = vshll.u32 %v1126, 16
        %v1809 = vrot.slane %v1807, 5
        %v1810 = vsel %vm1172, %v1805, %v1809
        %v1811 = vshrl.u32 %v1126, 16
        %v1813 = vrot.slane %v1811, 4
        %v1814 = vor.u32 %v1813, %v1809
        %v1815 = vrot.slane %v1814, 4
        %v1817 = vshll.u32 %v1164, 16
        %v1819 = vrot.slane %v1817, 5
        %v1820 = vsel %vm1172, %v1815, %v1819
        %v1822 = vshrl.u32 %v1127, 16
        %v1824 = vrot.slane %v1822, 4
        %v1825 = vshll.u32 %v1127, 16
        %v1827 = vrot.slane %v1825, 5
        %v1828 = vor.u32 %v1824, %v1827
        %v1829 = vrot.slane %v1828, 4
        %v1831 = vshll.u32 %v1128, 16
        %v1833 = vrot.slane %v1831, 5
        %v1834 = vsel %vm1172, %v1829, %v1833
        %v1835 = vshrl.u32 %v1128, 16
        %v1837 = vrot.slane %v1835, 4
        %v1838 = vor.u32 %v1837, %v1833
        %v1839 = vrot.slane %v1838, 4
        %v1841 = vshll.u32 %v1165, 16
        %v1843 = vrot.slane %v1841, 5
        %v1844 = vsel %vm1172, %v1839, %v1843
        %v1846 = vshrl.u32 %v1129, 16
        %v1848 = vrot.slane %v1846, 4
        %v1849 = vshll.u32 %v1129, 16
        %v1851 = vrot.slane %v1849, 5
        %v1852 = vor.u32 %v1848, %v1851
        %v1853 = vrot.slane %v1852, 4
        %v1855 = vshll.u32 %v1130, 16
        %v1857 = vrot.slane %v1855, 5
        %v1858 = vsel %vm1172, %v1853, %v1857
        %v1859 = vshrl.u32 %v1130, 16
        %v1861 = vrot.slane %v1859, 4
        %v1862 = vor.u32 %v1861, %v1857
        %v1863 = vrot.slane %v1862, 4
        %v1865 = vshll.u32 %v1166, 16
        %v1867 = vrot.slane %v1865, 5
        %v1868 = vsel %vm1172, %v1863, %v1867
        %v1870 = vshrl.u32 %v1131, 16
        %v1872 = vrot.slane %v1870, 4
        %v1873 = vshll.u32 %v1131, 16
        %v1875 = vrot.slane %v1873, 5
        %v1876 = vor.u32 %v1872, %v1875
        %v1877 = vrot.slane %v1876, 4
        %v1879 = vshll.u32 %v1132, 16
        %v1881 = vrot.slane %v1879, 5
        %v1882 = vsel %vm1172, %v1877, %v1881
        %v1883 = vshrl.u32 %v1132, 16
        %v1885 = vrot.slane %v1883, 4
        %v1886 = vor.u32 %v1885, %v1881
        %v1887 = vrot.slane %v1886, 4
        %v1889 = vshll.u32 %v1167, 16
        %v1891 = vrot.slane %v1889, 5
        %v1892 = vsel %vm1172, %v1887, %v1891
        %v1894 = vshrl.u32 %v1133, 16
        %v1896 = vrot.slane %v1894, 4
        %v1897 = vshll.u32 %v1133, 16
        %v1899 = vrot.slane %v1897, 5
        %v1900 = vor.u32 %v1896, %v1899
        %v1901 = vrot.slane %v1900, 4
        %v1903 = vshll.u32 %v1134, 16
        %v1905 = vrot.slane %v1903, 5
        %v1906 = vsel %vm1172, %v1901, %v1905
        %v1907 = vshrl.u32 %v1134, 16
        %v1909 = vrot.slane %v1907, 4
        %v1910 = vor.u32 %v1909, %v1905
        %v1911 = vrot.slane %v1910, 4
        %v1913 = vshll.u32 %v1168, 16
        %v1915 = vrot.slane %v1913, 5
        %v1916 = vsel %vm1172, %v1911, %v1915
        %v1918 = vshrl.u32 %v1135, 16
        %v1920 = vrot.slane %v1918, 4
        %v1921 = vshll.u32 %v1135, 16
        %v1923 = vrot.slane %v1921, 5
        %v1924 = vor.u32 %v1920, %v1923
        %v1925 = vrot.slane %v1924, 4
        %v1927 = vshll.u32 %v1136, 16
        %v1929 = vrot.slane %v1927, 5
        %v1930 = vsel %vm1172, %v1925, %v1929
        %v1931 = vshrl.u32 %v1136, 16
        %v1933 = vrot.slane %v1931, 4
        %v1934 = vor.u32 %v1933, %v1929
        %v1935 = vrot.slane %v1934, 4
        %v1937 = vshll.u32 %v1169, 16
        %v1939 = vrot.slane %v1937, 5
        %v1940 = vsel %vm1172, %v1935, %v1939
        %s1941 = scalar_lea.vmem %s1, 2
        %v1942 = vld [vmem:[%s1941] sm:$0x3]
        %v1943 = vunpack.c.l.b16 %v1186
        %v1944 = vunpack.c.l.b16 %v1196
        %v1945 = vunpack.c.l.b16 %v1210
        %v1946 = vunpack.c.l.b16 %v1220
        %v1947 = vunpack.c.l.b16 %v1234
        %v1948 = vunpack.c.l.b16 %v1244
        %v1949 = vunpack.c.l.b16 %v1258
        %v1950 = vunpack.c.l.b16 %v1268
        %v1951 = vunpack.c.l.b16 %v1282
        %v1952 = vunpack.c.l.b16 %v1292
        %v1953 = vunpack.c.l.b16 %v1306
        %v1954 = vunpack.c.l.b16 %v1316
        %v1955 = vunpack.c.l.b16 %v1330
        %v1956 = vunpack.c.l.b16 %v1340
        %v1957 = vunpack.c.l.b16 %v1354
        %v1958 = vunpack.c.l.b16 %v1364
        %v1959 = vunpack.c.l.b16 %v1378
        %v1960 = vunpack.c.l.b16 %v1388
        %v1961 = vunpack.c.l.b16 %v1402
        %v1962 = vunpack.c.l.b16 %v1412
        %v1963 = vunpack.c.l.b16 %v1426
        %v1964 = vunpack.c.l.b16 %v1436
        %v1965 = vunpack.c.l.b16 %v1450
        %v1966 = vunpack.c.l.b16 %v1460
        %v1967 = vunpack.c.l.b16 %v1474
        %v1968 = vunpack.c.l.b16 %v1484
        %v1969 = vunpack.c.l.b16 %v1498
        %v1970 = vunpack.c.l.b16 %v1508
        %v1971 = vunpack.c.l.b16 %v1522
        %v1972 = vunpack.c.l.b16 %v1532
        %v1973 = vunpack.c.l.b16 %v1546
        %v1974 = vunpack.c.l.b16 %v1556
        %v1975 = vunpack.c.l.b16 %v1570
        %v1976 = vunpack.c.l.b16 %v1580
        %v1977 = vunpack.c.l.b16 %v1594
        %v1978 = vunpack.c.l.b16 %v1604
        %v1979 = vunpack.c.l.b16 %v1618
        %v1980 = vunpack.c.l.b16 %v1628
        %v1981 = vunpack.c.l.b16 %v1642
        %v1982 = vunpack.c.l.b16 %v1652
        %v1983 = vunpack.c.l.b16 %v1666
        %v1984 = vunpack.c.l.b16 %v1676
        %v1985 = vunpack.c.l.b16 %v1690
        %v1986 = vunpack.c.l.b16 %v1700
        %v1987 = vunpack.c.l.b16 %v1714
        %v1988 = vunpack.c.l.b16 %v1724
        %v1989 = vunpack.c.l.b16 %v1738
        %v1990 = vunpack.c.l.b16 %v1748
        %v1991 = vunpack.c.l.b16 %v1762
        %v1992 = vunpack.c.l.b16 %v1772
        %v1993 = vunpack.c.l.b16 %v1786
        %v1994 = vunpack.c.l.b16 %v1796
        %v1995 = vunpack.c.l.b16 %v1810
        %v1996 = vunpack.c.l.b16 %v1820
        %v1997 = vunpack.c.l.b16 %v1834
        %v1998 = vunpack.c.l.b16 %v1844
        %v1999 = vunpack.c.l.b16 %v1858
        %v2000 = vunpack.c.l.b16 %v1868
        %v2001 = vunpack.c.l.b16 %v1882
        %v2002 = vunpack.c.l.b16 %v1892
        %v2003 = vunpack.c.l.b16 %v1906
        %v2004 = vunpack.c.l.b16 %v1916
        %v2005 = vunpack.c.l.b16 %v1930
        %v2006 = vunpack.c.l.b16 %v1940
        %v2007 = vpack.c.b16 %v1944, %v1943
        %v2008 = vpack.c.b16 %v1946, %v1945
        %v2009 = vpack.c.b16 %v1948, %v1947
        %v2010 = vpack.c.b16 %v1950, %v1949
        %v2011 = vpack.c.b16 %v1952, %v1951
        %v2012 = vpack.c.b16 %v1954, %v1953
        %v2013 = vpack.c.b16 %v1956, %v1955
        %v2014 = vpack.c.b16 %v1958, %v1957
        %v2015 = vpack.c.b16 %v1960, %v1959
        %v2016 = vpack.c.b16 %v1962, %v1961
        %v2017 = vpack.c.b16 %v1964, %v1963
        %v2018 = vpack.c.b16 %v1966, %v1965
        %v2019 = vpack.c.b16 %v1968, %v1967
        %v2020 = vpack.c.b16 %v1970, %v1969
        %v2021 = vpack.c.b16 %v1972, %v1971
        %v2022 = vpack.c.b16 %v1974, %v1973
        %v2023 = vpack.c.b16 %v1976, %v1975
        %v2024 = vpack.c.b16 %v1978, %v1977
        %v2025 = vpack.c.b16 %v1980, %v1979
        %v2026 = vpack.c.b16 %v1982, %v1981
        %v2027 = vpack.c.b16 %v1984, %v1983
        %v2028 = vpack.c.b16 %v1986, %v1985
        %v2029 = vpack.c.b16 %v1988, %v1987
        %v2030 = vpack.c.b16 %v1990, %v1989
        %v2031 = vpack.c.b16 %v1992, %v1991
        %v2032 = vpack.c.b16 %v1994, %v1993
        %v2033 = vpack.c.b16 %v1996, %v1995
        %v2034 = vpack.c.b16 %v1998, %v1997
        %v2035 = vpack.c.b16 %v2000, %v1999
        %v2036 = vpack.c.b16 %v2002, %v2001
        %v2037 = vpack.c.b16 %v2004, %v2003
        %v2038 = vpack.c.b16 %v2006, %v2005
        %vm2039 = vcmask 31744
        %v2041 = vsel %vm2039, %v2007, 0
        %v2044 = vsel %vm2039, %v2008, 0
        %v2047 = vsel %vm2039, %v2009, 0
        %v2050 = vsel %vm2039, %v2010, 0
        %v2053 = vsel %vm2039, %v2011, 0
        %v2056 = vsel %vm2039, %v2012, 0
        %v2059 = vsel %vm2039, %v2013, 0
        %v2062 = vsel %vm2039, %v2014, 0
        %v2065 = vsel %vm2039, %v2015, 0
        %v2068 = vsel %vm2039, %v2016, 0
        %v2071 = vsel %vm2039, %v2017, 0
        %v2074 = vsel %vm2039, %v2018, 0
        %v2077 = vsel %vm2039, %v2019, 0
        %v2080 = vsel %vm2039, %v2020, 0
        %v2083 = vsel %vm2039, %v2021, 0
        %v2086 = vsel %vm2039, %v2022, 0
        %v2089 = vsel %vm2039, %v2023, 0
        %v2092 = vsel %vm2039, %v2024, 0
        %v2095 = vsel %vm2039, %v2025, 0
        %v2098 = vsel %vm2039, %v2026, 0
        %v2101 = vsel %vm2039, %v2027, 0
        %v2104 = vsel %vm2039, %v2028, 0
        %v2107 = vsel %vm2039, %v2029, 0
        %v2110 = vsel %vm2039, %v2030, 0
        %v2113 = vsel %vm2039, %v2031, 0
        %v2116 = vsel %vm2039, %v2032, 0
        %v2119 = vsel %vm2039, %v2033, 0
        %v2122 = vsel %vm2039, %v2034, 0
        %v2125 = vsel %vm2039, %v2035, 0
        %v2128 = vsel %vm2039, %v2036, 0
        %v2131 = vsel %vm2039, %v2037, 0
        %v2134 = vsel %vm2039, %v2038, 0
        %vm2136 = vcmask 1041408
        %v2138 = vsel %vm2136, %v1942, 0
        %2140 = vmatpush.bf16.msra.mxu0 0
        %2141 = vmatpush.bf16.msra.mxu0 0
        %2142 = vmatpush.bf16.msra.mxu0 0
        %2143 = vmatpush.bf16.msra.mxu0 0
        %2144 = vmatpush.bf16.msra.mxu0 0
        %2145 = vmatpush.bf16.msra.mxu0 0
        %2146 = vmatpush.bf16.msra.mxu0 0
        %2147 = vmatpush.bf16.msra.mxu0 %v2138
        %2148 = vmatmul.bf16.gmra.mxu0 %v2041
        %v2149 = vpop.f32.mrf.mxu0
        %v2150 = vadd.f32 0.0, %v2149
        %v2151 = vpop.f32.mrf.mxu0
        %v2152 = vadd.f32 0.0, %v2151
        %2153 = vmatmul.bf16.gmra.mxu0 %v2044
        %v2154 = vpop.f32.mrf.mxu0
        %v2155 = vadd.f32 0.0, %v2154
        %v2156 = vpop.f32.mrf.mxu0
        %v2157 = vadd.f32 0.0, %v2156
        %2158 = vmatmul.bf16.gmra.mxu0 %v2047
        %v2159 = vpop.f32.mrf.mxu0
        %v2160 = vadd.f32 0.0, %v2159
        %v2161 = vpop.f32.mrf.mxu0
        %v2162 = vadd.f32 0.0, %v2161
        %2163 = vmatmul.bf16.gmra.mxu0 %v2050
        %v2164 = vpop.f32.mrf.mxu0
        %v2165 = vadd.f32 0.0, %v2164
        %v2166 = vpop.f32.mrf.mxu0
        %v2167 = vadd.f32 0.0, %v2166
        %2168 = vmatmul.bf16.gmra.mxu0 %v2053
        %v2169 = vpop.f32.mrf.mxu0
        %v2170 = vadd.f32 0.0, %v2169
        %v2171 = vpop.f32.mrf.mxu0
        %v2172 = vadd.f32 0.0, %v2171
        %2173 = vmatmul.bf16.gmra.mxu0 %v2056
        %v2174 = vpop.f32.mrf.mxu0
        %v2175 = vadd.f32 0.0, %v2174
        %v2176 = vpop.f32.mrf.mxu0
        %v2177 = vadd.f32 0.0, %v2176
        %2178 = vmatmul.bf16.gmra.mxu0 %v2059
        %v2179 = vpop.f32.mrf.mxu0
        %v2180 = vadd.f32 0.0, %v2179
        %v2181 = vpop.f32.mrf.mxu0
        %v2182 = vadd.f32 0.0, %v2181
        %2183 = vmatmul.bf16.gmra.mxu0 %v2062
        %v2184 = vpop.f32.mrf.mxu0
        %v2185 = vadd.f32 0.0, %v2184
        %v2186 = vpop.f32.mrf.mxu0
        %v2187 = vadd.f32 0.0, %v2186
        %2188 = vmatmul.bf16.gmra.mxu0 %v2065
        %v2189 = vpop.f32.mrf.mxu0
        %v2190 = vadd.f32 0.0, %v2189
        %v2191 = vpop.f32.mrf.mxu0
        %v2192 = vadd.f32 0.0, %v2191
        %2193 = vmatmul.bf16.gmra.mxu0 %v2068
        %v2194 = vpop.f32.mrf.mxu0
        %v2195 = vadd.f32 0.0, %v2194
        %v2196 = vpop.f32.mrf.mxu0
        %v2197 = vadd.f32 0.0, %v2196
        %2198 = vmatmul.bf16.gmra.mxu0 %v2071
        %v2199 = vpop.f32.mrf.mxu0
        %v2200 = vadd.f32 0.0, %v2199
        %v2201 = vpop.f32.mrf.mxu0
        %v2202 = vadd.f32 0.0, %v2201
        %2203 = vmatmul.bf16.gmra.mxu0 %v2074
        %v2204 = vpop.f32.mrf.mxu0
        %v2205 = vadd.f32 0.0, %v2204
        %v2206 = vpop.f32.mrf.mxu0
        %v2207 = vadd.f32 0.0, %v2206
        %2208 = vmatmul.bf16.gmra.mxu0 %v2077
        %v2209 = vpop.f32.mrf.mxu0
        %v2210 = vadd.f32 0.0, %v2209
        %v2211 = vpop.f32.mrf.mxu0
        %v2212 = vadd.f32 0.0, %v2211
        %2213 = vmatmul.bf16.gmra.mxu0 %v2080
        %v2214 = vpop.f32.mrf.mxu0
        %v2215 = vadd.f32 0.0, %v2214
        %v2216 = vpop.f32.mrf.mxu0
        %v2217 = vadd.f32 0.0, %v2216
        %2218 = vmatmul.bf16.gmra.mxu0 %v2083
        %v2219 = vpop.f32.mrf.mxu0
        %v2220 = vadd.f32 0.0, %v2219
        %v2221 = vpop.f32.mrf.mxu0
        %v2222 = vadd.f32 0.0, %v2221
        %2223 = vmatmul.bf16.gmra.mxu0 %v2086
        %v2224 = vpop.f32.mrf.mxu0
        %v2225 = vadd.f32 0.0, %v2224
        %v2226 = vpop.f32.mrf.mxu0
        %v2227 = vadd.f32 0.0, %v2226
        %2228 = vmatmul.bf16.gmra.mxu0 %v2089
        %v2229 = vpop.f32.mrf.mxu0
        %v2230 = vadd.f32 0.0, %v2229
        %v2231 = vpop.f32.mrf.mxu0
        %v2232 = vadd.f32 0.0, %v2231
        %2233 = vmatmul.bf16.gmra.mxu0 %v2092
        %v2234 = vpop.f32.mrf.mxu0
        %v2235 = vadd.f32 0.0, %v2234
        %v2236 = vpop.f32.mrf.mxu0
        %v2237 = vadd.f32 0.0, %v2236
        %2238 = vmatmul.bf16.gmra.mxu0 %v2095
        %v2239 = vpop.f32.mrf.mxu0
        %v2240 = vadd.f32 0.0, %v2239
        %v2241 = vpop.f32.mrf.mxu0
        %v2242 = vadd.f32 0.0, %v2241
        %2243 = vmatmul.bf16.gmra.mxu0 %v2098
        %v2244 = vpop.f32.mrf.mxu0
        %v2245 = vadd.f32 0.0, %v2244
        %v2246 = vpop.f32.mrf.mxu0
        %v2247 = vadd.f32 0.0, %v2246
        %2248 = vmatmul.bf16.gmra.mxu0 %v2101
        %v2249 = vpop.f32.mrf.mxu0
        %v2250 = vadd.f32 0.0, %v2249
        %v2251 = vpop.f32.mrf.mxu0
        %v2252 = vadd.f32 0.0, %v2251
        %2253 = vmatmul.bf16.gmra.mxu0 %v2104
        %v2254 = vpop.f32.mrf.mxu0
        %v2255 = vadd.f32 0.0, %v2254
        %v2256 = vpop.f32.mrf.mxu0
        %v2257 = vadd.f32 0.0, %v2256
        %2258 = vmatmul.bf16.gmra.mxu0 %v2107
        %v2259 = vpop.f32.mrf.mxu0
        %v2260 = vadd.f32 0.0, %v2259
        %v2261 = vpop.f32.mrf.mxu0
        %v2262 = vadd.f32 0.0, %v2261
        %2263 = vmatmul.bf16.gmra.mxu0 %v2110
        %v2264 = vpop.f32.mrf.mxu0
        %v2265 = vadd.f32 0.0, %v2264
        %v2266 = vpop.f32.mrf.mxu0
        %v2267 = vadd.f32 0.0, %v2266
        %2268 = vmatmul.bf16.gmra.mxu0 %v2113
        %v2269 = vpop.f32.mrf.mxu0
        %v2270 = vadd.f32 0.0, %v2269
        %v2271 = vpop.f32.mrf.mxu0
        %v2272 = vadd.f32 0.0, %v2271
        %2273 = vmatmul.bf16.gmra.mxu0 %v2116
        %v2274 = vpop.f32.mrf.mxu0
        %v2275 = vadd.f32 0.0, %v2274
        %v2276 = vpop.f32.mrf.mxu0
        %v2277 = vadd.f32 0.0, %v2276
        %2278 = vmatmul.bf16.gmra.mxu0 %v2119
        %v2279 = vpop.f32.mrf.mxu0
        %v2280 = vadd.f32 0.0, %v2279
        %v2281 = vpop.f32.mrf.mxu0
        %v2282 = vadd.f32 0.0, %v2281
        %2283 = vmatmul.bf16.gmra.mxu0 %v2122
        %v2284 = vpop.f32.mrf.mxu0
        %v2285 = vadd.f32 0.0, %v2284
        %v2286 = vpop.f32.mrf.mxu0
        %v2287 = vadd.f32 0.0, %v2286
        %2288 = vmatmul.bf16.gmra.mxu0 %v2125
        %v2289 = vpop.f32.mrf.mxu0
        %v2290 = vadd.f32 0.0, %v2289
        %v2291 = vpop.f32.mrf.mxu0
        %v2292 = vadd.f32 0.0, %v2291
        %2293 = vmatmul.bf16.gmra.mxu0 %v2128
        %v2294 = vpop.f32.mrf.mxu0
        %v2295 = vadd.f32 0.0, %v2294
        %v2296 = vpop.f32.mrf.mxu0
        %v2297 = vadd.f32 0.0, %v2296
        %2298 = vmatmul.bf16.gmra.mxu0 %v2131
        %v2299 = vpop.f32.mrf.mxu0
        %v2300 = vadd.f32 0.0, %v2299
        %v2301 = vpop.f32.mrf.mxu0
        %v2302 = vadd.f32 0.0, %v2301
        %2303 = vmatmul.bf16.gmra.mxu0 %v2134
        %v2304 = vpop.f32.mrf.mxu0
        %v2305 = vadd.f32 0.0, %v2304
        %v2306 = vpop.f32.mrf.mxu0
        %v2307 = vadd.f32 0.0, %v2306
        %2308 = vdwg.mxu0
        %v2373 = vunpack.c.l.b16 %v1073
        %v2374 = vunpack.c.l.b16 %v1074
        %v2375 = vunpack.c.l.b16 %v1075
        %v2376 = vunpack.c.l.b16 %v1076
        %v2377 = vunpack.c.l.b16 %v1077
        %v2378 = vunpack.c.l.b16 %v1078
        %v2379 = vunpack.c.l.b16 %v1079
        %v2380 = vunpack.c.l.b16 %v1080
        %v2381 = vunpack.c.l.b16 %v1081
        %v2382 = vunpack.c.l.b16 %v1082
        %v2383 = vunpack.c.l.b16 %v1083
        %v2384 = vunpack.c.l.b16 %v1084
        %v2385 = vunpack.c.l.b16 %v1085
        %v2386 = vunpack.c.l.b16 %v1086
        %v2387 = vunpack.c.l.b16 %v1087
        %v2388 = vunpack.c.l.b16 %v1088
        %v2389 = vunpack.c.l.b16 %v1089
        %v2390 = vunpack.c.l.b16 %v1090
        %v2391 = vunpack.c.l.b16 %v1091
        %v2392 = vunpack.c.l.b16 %v1092
        %v2393 = vunpack.c.l.b16 %v1093
        %v2394 = vunpack.c.l.b16 %v1094
        %v2395 = vunpack.c.l.b16 %v1095
        %v2396 = vunpack.c.l.b16 %v1096
        %v2397 = vunpack.c.l.b16 %v1097
        %v2398 = vunpack.c.l.b16 %v1098
        %v2399 = vunpack.c.l.b16 %v1099
        %v2400 = vunpack.c.l.b16 %v1100
        %v2401 = vunpack.c.l.b16 %v1101
        %v2402 = vunpack.c.l.b16 %v1102
        %v2403 = vunpack.c.l.b16 %v1103
        %v2404 = vunpack.c.l.b16 %v1104
        %v2405 = vunpack.c.l.b16 %v1105
        %v2406 = vunpack.c.l.b16 %v1106
        %v2407 = vunpack.c.l.b16 %v1107
        %v2408 = vunpack.c.l.b16 %v1108
        %v2409 = vunpack.c.l.b16 %v1109
        %v2410 = vunpack.c.l.b16 %v1110
        %v2411 = vunpack.c.l.b16 %v1111
        %v2412 = vunpack.c.l.b16 %v1112
        %v2413 = vunpack.c.l.b16 %v1113
        %v2414 = vunpack.c.l.b16 %v1114
        %v2415 = vunpack.c.l.b16 %v1115
        %v2416 = vunpack.c.l.b16 %v1116
        %v2417 = vunpack.c.l.b16 %v1117
        %v2418 = vunpack.c.l.b16 %v1118
        %v2419 = vunpack.c.l.b16 %v1119
        %v2420 = vunpack.c.l.b16 %v1120
        %v2421 = vunpack.c.l.b16 %v1121
        %v2422 = vunpack.c.l.b16 %v1122
        %v2423 = vunpack.c.l.b16 %v1123
        %v2424 = vunpack.c.l.b16 %v1124
        %v2425 = vunpack.c.l.b16 %v1125
        %v2426 = vunpack.c.l.b16 %v1126
        %v2427 = vunpack.c.l.b16 %v1127
        %v2428 = vunpack.c.l.b16 %v1128
        %v2429 = vunpack.c.l.b16 %v1129
        %v2430 = vunpack.c.l.b16 %v1130
        %v2431 = vunpack.c.l.b16 %v1131
        %v2432 = vunpack.c.l.b16 %v1132
        %v2433 = vunpack.c.l.b16 %v1133
        %v2434 = vunpack.c.l.b16 %v1134
        %v2435 = vunpack.c.l.b16 %v1135
        %v2436 = vunpack.c.l.b16 %v1136
        %v2437 = vpack.c.b16 %v2374, %v2373
        %v2438 = vpack.c.b16 %v2376, %v2375
        %v2439 = vpack.c.b16 %v2378, %v2377
        %v2440 = vpack.c.b16 %v2380, %v2379
        %v2441 = vpack.c.b16 %v2382, %v2381
        %v2442 = vpack.c.b16 %v2384, %v2383
        %v2443 = vpack.c.b16 %v2386, %v2385
        %v2444 = vpack.c.b16 %v2388, %v2387
        %v2445 = vpack.c.b16 %v2390, %v2389
        %v2446 = vpack.c.b16 %v2392, %v2391
        %v2447 = vpack.c.b16 %v2394, %v2393
        %v2448 = vpack.c.b16 %v2396, %v2395
        %v2449 = vpack.c.b16 %v2398, %v2397
        %v2450 = vpack.c.b16 %v2400, %v2399
        %v2451 = vpack.c.b16 %v2402, %v2401
        %v2452 = vpack.c.b16 %v2404, %v2403
        %v2453 = vpack.c.b16 %v2406, %v2405
        %v2454 = vpack.c.b16 %v2408, %v2407
        %v2455 = vpack.c.b16 %v2410, %v2409
        %v2456 = vpack.c.b16 %v2412, %v2411
        %v2457 = vpack.c.b16 %v2414, %v2413
        %v2458 = vpack.c.b16 %v2416, %v2415
        %v2459 = vpack.c.b16 %v2418, %v2417
        %v2460 = vpack.c.b16 %v2420, %v2419
        %v2461 = vpack.c.b16 %v2422, %v2421
        %v2462 = vpack.c.b16 %v2424, %v2423
        %v2463 = vpack.c.b16 %v2426, %v2425
        %v2464 = vpack.c.b16 %v2428, %v2427
        %v2465 = vpack.c.b16 %v2430, %v2429
        %v2466 = vpack.c.b16 %v2432, %v2431
        %v2467 = vpack.c.b16 %v2434, %v2433
        %v2468 = vpack.c.b16 %v2436, %v2435
        %v2470 = vsel %vm2039, %v2437, 0
        %v2473 = vsel %vm2039, %v2438, 0
        %v2476 = vsel %vm2039, %v2439, 0
        %v2479 = vsel %vm2039, %v2440, 0
        %v2482 = vsel %vm2039, %v2441, 0
        %v2485 = vsel %vm2039, %v2442, 0
        %v2488 = vsel %vm2039, %v2443, 0
        %v2491 = vsel %vm2039, %v2444, 0
        %v2494 = vsel %vm2039, %v2445, 0
        %v2497 = vsel %vm2039, %v2446, 0
        %v2500 = vsel %vm2039, %v2447, 0
        %v2503 = vsel %vm2039, %v2448, 0
        %v2506 = vsel %vm2039, %v2449, 0
        %v2509 = vsel %vm2039, %v2450, 0
        %v2512 = vsel %vm2039, %v2451, 0
        %v2515 = vsel %vm2039, %v2452, 0
        %v2518 = vsel %vm2039, %v2453, 0
        %v2521 = vsel %vm2039, %v2454, 0
        %v2524 = vsel %vm2039, %v2455, 0
        %v2527 = vsel %vm2039, %v2456, 0
        %v2530 = vsel %vm2039, %v2457, 0
        %v2533 = vsel %vm2039, %v2458, 0
        %v2536 = vsel %vm2039, %v2459, 0
        %v2539 = vsel %vm2039, %v2460, 0
        %v2542 = vsel %vm2039, %v2461, 0
        %v2545 = vsel %vm2039, %v2462, 0
        %v2548 = vsel %vm2039, %v2463, 0
        %v2551 = vsel %vm2039, %v2464, 0
        %v2554 = vsel %vm2039, %v2465, 0
        %v2557 = vsel %vm2039, %v2466, 0
        %v2560 = vsel %vm2039, %v2467, 0
        %v2563 = vsel %vm2039, %v2468, 0
        %v2566 = vsel %vm2136, %v1137, 0
        %2568 = vmatpush.bf16.msra.mxu0 0
        %2569 = vmatpush.bf16.msra.mxu0 0
        %2570 = vmatpush.bf16.msra.mxu0 0
        %2571 = vmatpush.bf16.msra.mxu0 0
        %2572 = vmatpush.bf16.msra.mxu0 0
        %2573 = vmatpush.bf16.msra.mxu0 0
        %2574 = vmatpush.bf16.msra.mxu0 0
        %2575 = vmatpush.bf16.msra.mxu0 %v2566
        %2576 = vmatmul.bf16.gmra.mxu0 %v2470
        %v2577 = vpop.f32.mrf.mxu0
        %v2578 = vadd.f32 %v2150, %v2577
        %v2579 = vpop.f32.mrf.mxu0
        %v2580 = vadd.f32 %v2152, %v2579
        %2581 = vmatmul.bf16.gmra.mxu0 %v2473
        %v2582 = vpop.f32.mrf.mxu0
        %v2583 = vadd.f32 %v2155, %v2582
        %v2584 = vpop.f32.mrf.mxu0
        %v2585 = vadd.f32 %v2157, %v2584
        %2586 = vmatmul.bf16.gmra.mxu0 %v2476
        %v2587 = vpop.f32.mrf.mxu0
        %v2588 = vadd.f32 %v2160, %v2587
        %v2589 = vpop.f32.mrf.mxu0
        %v2590 = vadd.f32 %v2162, %v2589
        %2591 = vmatmul.bf16.gmra.mxu0 %v2479
        %v2592 = vpop.f32.mrf.mxu0
        %v2593 = vadd.f32 %v2165, %v2592
        %v2594 = vpop.f32.mrf.mxu0
        %v2595 = vadd.f32 %v2167, %v2594
        %2596 = vmatmul.bf16.gmra.mxu0 %v2482
        %v2597 = vpop.f32.mrf.mxu0
        %v2598 = vadd.f32 %v2170, %v2597
        %v2599 = vpop.f32.mrf.mxu0
        %v2600 = vadd.f32 %v2172, %v2599
        %2601 = vmatmul.bf16.gmra.mxu0 %v2485
        %v2602 = vpop.f32.mrf.mxu0
        %v2603 = vadd.f32 %v2175, %v2602
        %v2604 = vpop.f32.mrf.mxu0
        %v2605 = vadd.f32 %v2177, %v2604
        %2606 = vmatmul.bf16.gmra.mxu0 %v2488
        %v2607 = vpop.f32.mrf.mxu0
        %v2608 = vadd.f32 %v2180, %v2607
        %v2609 = vpop.f32.mrf.mxu0
        %v2610 = vadd.f32 %v2182, %v2609
        %2611 = vmatmul.bf16.gmra.mxu0 %v2491
        %v2612 = vpop.f32.mrf.mxu0
        %v2613 = vadd.f32 %v2185, %v2612
        %v2614 = vpop.f32.mrf.mxu0
        %v2615 = vadd.f32 %v2187, %v2614
        %2616 = vmatmul.bf16.gmra.mxu0 %v2494
        %v2617 = vpop.f32.mrf.mxu0
        %v2618 = vadd.f32 %v2190, %v2617
        %v2619 = vpop.f32.mrf.mxu0
        %v2620 = vadd.f32 %v2192, %v2619
        %2621 = vmatmul.bf16.gmra.mxu0 %v2497
        %v2622 = vpop.f32.mrf.mxu0
        %v2623 = vadd.f32 %v2195, %v2622
        %v2624 = vpop.f32.mrf.mxu0
        %v2625 = vadd.f32 %v2197, %v2624
        %2626 = vmatmul.bf16.gmra.mxu0 %v2500
        %v2627 = vpop.f32.mrf.mxu0
        %v2628 = vadd.f32 %v2200, %v2627
        %v2629 = vpop.f32.mrf.mxu0
        %v2630 = vadd.f32 %v2202, %v2629
        %2631 = vmatmul.bf16.gmra.mxu0 %v2503
        %v2632 = vpop.f32.mrf.mxu0
        %v2633 = vadd.f32 %v2205, %v2632
        %v2634 = vpop.f32.mrf.mxu0
        %v2635 = vadd.f32 %v2207, %v2634
        %2636 = vmatmul.bf16.gmra.mxu0 %v2506
        %v2637 = vpop.f32.mrf.mxu0
        %v2638 = vadd.f32 %v2210, %v2637
        %v2639 = vpop.f32.mrf.mxu0
        %v2640 = vadd.f32 %v2212, %v2639
        %2641 = vmatmul.bf16.gmra.mxu0 %v2509
        %v2642 = vpop.f32.mrf.mxu0
        %v2643 = vadd.f32 %v2215, %v2642
        %v2644 = vpop.f32.mrf.mxu0
        %v2645 = vadd.f32 %v2217, %v2644
        %2646 = vmatmul.bf16.gmra.mxu0 %v2512
        %v2647 = vpop.f32.mrf.mxu0
        %v2648 = vadd.f32 %v2220, %v2647
        %v2649 = vpop.f32.mrf.mxu0
        %v2650 = vadd.f32 %v2222, %v2649
        %2651 = vmatmul.bf16.gmra.mxu0 %v2515
        %v2652 = vpop.f32.mrf.mxu0
        %v2653 = vadd.f32 %v2225, %v2652
        %v2654 = vpop.f32.mrf.mxu0
        %v2655 = vadd.f32 %v2227, %v2654
        %2656 = vmatmul.bf16.gmra.mxu0 %v2518
        %v2657 = vpop.f32.mrf.mxu0
        %v2658 = vadd.f32 %v2230, %v2657
        %v2659 = vpop.f32.mrf.mxu0
        %v2660 = vadd.f32 %v2232, %v2659
        %2661 = vmatmul.bf16.gmra.mxu0 %v2521
        %v2662 = vpop.f32.mrf.mxu0
        %v2663 = vadd.f32 %v2235, %v2662
        %v2664 = vpop.f32.mrf.mxu0
        %v2665 = vadd.f32 %v2237, %v2664
        %2666 = vmatmul.bf16.gmra.mxu0 %v2524
        %v2667 = vpop.f32.mrf.mxu0
        %v2668 = vadd.f32 %v2240, %v2667
        %v2669 = vpop.f32.mrf.mxu0
        %v2670 = vadd.f32 %v2242, %v2669
        %2671 = vmatmul.bf16.gmra.mxu0 %v2527
        %v2672 = vpop.f32.mrf.mxu0
        %v2673 = vadd.f32 %v2245, %v2672
        %v2674 = vpop.f32.mrf.mxu0
        %v2675 = vadd.f32 %v2247, %v2674
        %2676 = vmatmul.bf16.gmra.mxu0 %v2530
        %v2677 = vpop.f32.mrf.mxu0
        %v2678 = vadd.f32 %v2250, %v2677
        %v2679 = vpop.f32.mrf.mxu0
        %v2680 = vadd.f32 %v2252, %v2679
        %2681 = vmatmul.bf16.gmra.mxu0 %v2533
        %v2682 = vpop.f32.mrf.mxu0
        %v2683 = vadd.f32 %v2255, %v2682
        %v2684 = vpop.f32.mrf.mxu0
        %v2685 = vadd.f32 %v2257, %v2684
        %2686 = vmatmul.bf16.gmra.mxu0 %v2536
        %v2687 = vpop.f32.mrf.mxu0
        %v2688 = vadd.f32 %v2260, %v2687
        %v2689 = vpop.f32.mrf.mxu0
        %v2690 = vadd.f32 %v2262, %v2689
        %2691 = vmatmul.bf16.gmra.mxu0 %v2539
        %v2692 = vpop.f32.mrf.mxu0
        %v2693 = vadd.f32 %v2265, %v2692
        %v2694 = vpop.f32.mrf.mxu0
        %v2695 = vadd.f32 %v2267, %v2694
        %2696 = vmatmul.bf16.gmra.mxu0 %v2542
        %v2697 = vpop.f32.mrf.mxu0
        %v2698 = vadd.f32 %v2270, %v2697
        %v2699 = vpop.f32.mrf.mxu0
        %v2700 = vadd.f32 %v2272, %v2699
        %2701 = vmatmul.bf16.gmra.mxu0 %v2545
        %v2702 = vpop.f32.mrf.mxu0
        %v2703 = vadd.f32 %v2275, %v2702
        %v2704 = vpop.f32.mrf.mxu0
        %v2705 = vadd.f32 %v2277, %v2704
        %2706 = vmatmul.bf16.gmra.mxu0 %v2548
        %v2707 = vpop.f32.mrf.mxu0
        %v2708 = vadd.f32 %v2280, %v2707
        %v2709 = vpop.f32.mrf.mxu0
        %v2710 = vadd.f32 %v2282, %v2709
        %2711 = vmatmul.bf16.gmra.mxu0 %v2551
        %v2712 = vpop.f32.mrf.mxu0
        %v2713 = vadd.f32 %v2285, %v2712
        %v2714 = vpop.f32.mrf.mxu0
        %v2715 = vadd.f32 %v2287, %v2714
        %2716 = vmatmul.bf16.gmra.mxu0 %v2554
        %v2717 = vpop.f32.mrf.mxu0
        %v2718 = vadd.f32 %v2290, %v2717
        %v2719 = vpop.f32.mrf.mxu0
        %v2720 = vadd.f32 %v2292, %v2719
        %2721 = vmatmul.bf16.gmra.mxu0 %v2557
        %v2722 = vpop.f32.mrf.mxu0
        %v2723 = vadd.f32 %v2295, %v2722
        %v2724 = vpop.f32.mrf.mxu0
        %v2725 = vadd.f32 %v2297, %v2724
        %2726 = vmatmul.bf16.gmra.mxu0 %v2560
        %v2727 = vpop.f32.mrf.mxu0
        %v2728 = vadd.f32 %v2300, %v2727
        %v2729 = vpop.f32.mrf.mxu0
        %v2730 = vadd.f32 %v2302, %v2729
        %2731 = vmatmul.bf16.gmra.mxu0 %v2563
        %v2732 = vpop.f32.mrf.mxu0
        %v2733 = vadd.f32 %v2305, %v2732
        %v2734 = vpop.f32.mrf.mxu0
        %v2735 = vadd.f32 %v2307, %v2734
        %2736 = vdwg.mxu0
        %v2737 = vld [vmem:[#allocation2] sm:$0xe]
        %v2738 = vld [vmem:[#allocation2 + $0xc] sm:$0xe]
        %v2739 = vld [vmem:[#allocation2 + $0x18] sm:$0xe]
        %v2740 = vld [vmem:[#allocation2 + $0x24] sm:$0xe]
        %v2741 = vld [vmem:[#allocation2 + $0x30] sm:$0xe]
        %v2742 = vld [vmem:[#allocation2 + $0x3c] sm:$0xe]
        %v2743 = vld [vmem:[#allocation2 + $0x48] sm:$0xe]
        %v2744 = vld [vmem:[#allocation2 + $0x54] sm:$0xe]
        %v2745 = vld [vmem:[#allocation2 + $0x60] sm:$0xe]
        %v2746 = vld [vmem:[#allocation2 + $0x6c] sm:$0xe]
        %v2747 = vld [vmem:[#allocation2 + $0x78] sm:$0xe]
        %v2748 = vld [vmem:[#allocation2 + $0x84] sm:$0xe]
        %v2749 = vld [vmem:[#allocation2 + $0x90] sm:$0xe]
        %v2750 = vld [vmem:[#allocation2 + $0x9c] sm:$0xe]
        %v2751 = vld [vmem:[#allocation2 + $0xa8] sm:$0xe]
        %v2752 = vld [vmem:[#allocation2 + $0xb4] sm:$0xe]
        %v2753 = vld [vmem:[#allocation2 + $0xc0] sm:$0xe]
        %v2754 = vld [vmem:[#allocation2 + $0xcc] sm:$0xe]
        %v2755 = vld [vmem:[#allocation2 + $0xd8] sm:$0xe]
        %v2756 = vld [vmem:[#allocation2 + $0xe4] sm:$0xe]
        %v2757 = vld [vmem:[#allocation2 + $0xf0] sm:$0xe]
        %v2758 = vld [vmem:[#allocation2 + $0xfc] sm:$0xe]
        %v2759 = vld [vmem:[#allocation2 + $0x108] sm:$0xe]
        %v2760 = vld [vmem:[#allocation2 + $0x114] sm:$0xe]
        %v2761 = vld [vmem:[#allocation2 + $0x120] sm:$0xe]
        %v2762 = vld [vmem:[#allocation2 + $0x12c] sm:$0xe]
        %v2763 = vld [vmem:[#allocation2 + $0x138] sm:$0xe]
        %v2764 = vld [vmem:[#allocation2 + $0x144] sm:$0xe]
        %v2765 = vld [vmem:[#allocation2 + $0x150] sm:$0xe]
        %v2766 = vld [vmem:[#allocation2 + $0x15c] sm:$0xe]
        %v2767 = vld [vmem:[#allocation2 + $0x168] sm:$0xe]
        %v2768 = vld [vmem:[#allocation2 + $0x174] sm:$0xe]
        %vm2833 = vcmask 1042432
        %vm2834 = vcmask 1046532
        %vm2835 = vmor %vm2833, %vm2834
        %v2836 = vrot.slane %v2737, 5
        %v2837 = vrot.slane %v2836, 4
        %v2838 = vrot.slane %v1074, 5
        %v2839 = vsel %vm2835, %v2837, %v2838
        %v2840 = vrot.slane %v2838, 4
        %v2841 = vrot.slane %v1138, 5
        %v2842 = vsel %vm2835, %v2840, %v2841
        %v2843 = vrot.slane %v2738, 5
        %v2844 = vrot.slane %v2843, 4
        %v2845 = vrot.slane %v1076, 5
        %v2846 = vsel %vm2835, %v2844, %v2845
        %v2847 = vrot.slane %v2845, 4
        %v2848 = vrot.slane %v1139, 5
        %v2849 = vsel %vm2835, %v2847, %v2848
        %v2850 = vrot.slane %v2739, 5
        %v2851 = vrot.slane %v2850, 4
        %v2852 = vrot.slane %v1078, 5
        %v2853 = vsel %vm2835, %v2851, %v2852
        %v2854 = vrot.slane %v2852, 4
        %v2855 = vrot.slane %v1140, 5
        %v2856 = vsel %vm2835, %v2854, %v2855
        %v2857 = vrot.slane %v2740, 5
        %v2858 = vrot.slane %v2857, 4
        %v2859 = vrot.slane %v1080, 5
        %v2860 = vsel %vm2835, %v2858, %v2859
        %v2861 = vrot.slane %v2859, 4
        %v2862 = vrot.slane %v1141, 5
        %v2863 = vsel %vm2835, %v2861, %v2862
        %v2864 = vrot.slane %v2741, 5
        %v2865 = vrot.slane %v2864, 4
        %v2866 = vrot.slane %v1082, 5
        %v2867 = vsel %vm2835, %v2865, %v2866
        %v2868 = vrot.slane %v2866, 4
        %v2869 = vrot.slane %v1142, 5
        %v2870 = vsel %vm2835, %v2868, %v2869
        %v2871 = vrot.slane %v2742, 5
        %v2872 = vrot.slane %v2871, 4
        %v2873 = vrot.slane %v1084, 5
        %v2874 = vsel %vm2835, %v2872, %v2873
        %v2875 = vrot.slane %v2873, 4
        %v2876 = vrot.slane %v1143, 5
        %v2877 = vsel %vm2835, %v2875, %v2876
        %v2878 = vrot.slane %v2743, 5
        %v2879 = vrot.slane %v2878, 4
        %v2880 = vrot.slane %v1086, 5
        %v2881 = vsel %vm2835, %v2879, %v2880
        %v2882 = vrot.slane %v2880, 4
        %v2883 = vrot.slane %v1144, 5
        %v2884 = vsel %vm2835, %v2882, %v2883
        %v2885 = vrot.slane %v2744, 5
        %v2886 = vrot.slane %v2885, 4
        %v2887 = vrot.slane %v1088, 5
        %v2888 = vsel %vm2835, %v2886, %v2887
        %v2889 = vrot.slane %v2887, 4
        %v2890 = vrot.slane %v1145, 5
        %v2891 = vsel %vm2835, %v2889, %v2890
        %v2892 = vrot.slane %v2745, 5
        %v2893 = vrot.slane %v2892, 4
        %v2894 = vrot.slane %v1090, 5
        %v2895 = vsel %vm2835, %v2893, %v2894
        %v2896 = vrot.slane %v2894, 4
        %v2897 = vrot.slane %v1146, 5
        %v2898 = vsel %vm2835, %v2896, %v2897
        %v2899 = vrot.slane %v2746, 5
        %v2900 = vrot.slane %v2899, 4
        %v2901 = vrot.slane %v1092, 5
        %v2902 = vsel %vm2835, %v2900, %v2901
        %v2903 = vrot.slane %v2901, 4
        %v2904 = vrot.slane %v1147, 5
        %v2905 = vsel %vm2835, %v2903, %v2904
        %v2906 = vrot.slane %v2747, 5
        %v2907 = vrot.slane %v2906, 4
        %v2908 = vrot.slane %v1094, 5
        %v2909 = vsel %vm2835, %v2907, %v2908
        %v2910 = vrot.slane %v2908, 4
        %v2911 = vrot.slane %v1148, 5
        %v2912 = vsel %vm2835, %v2910, %v2911
        %v2913 = vrot.slane %v2748, 5
        %v2914 = vrot.slane %v2913, 4
        %v2915 = vrot.slane %v1096, 5
        %v2916 = vsel %vm2835, %v2914, %v2915
        %v2917 = vrot.slane %v2915, 4
        %v2918 = vrot.slane %v1149, 5
        %v2919 = vsel %vm2835, %v2917, %v2918
        %v2920 = vrot.slane %v2749, 5
        %v2921 = vrot.slane %v2920, 4
        %v2922 = vrot.slane %v1098, 5
        %v2923 = vsel %vm2835, %v2921, %v2922
        %v2924 = vrot.slane %v2922, 4
        %v2925 = vrot.slane %v1150, 5
        %v2926 = vsel %vm2835, %v2924, %v2925
        %v2927 = vrot.slane %v2750, 5
        %v2928 = vrot.slane %v2927, 4
        %v2929 = vrot.slane %v1100, 5
        %v2930 = vsel %vm2835, %v2928, %v2929
        %v2931 = vrot.slane %v2929, 4
        %v2932 = vrot.slane %v1151, 5
        %v2933 = vsel %vm2835, %v2931, %v2932
        %v2934 = vrot.slane %v2751, 5
        %v2935 = vrot.slane %v2934, 4
        %v2936 = vrot.slane %v1102, 5
        %v2937 = vsel %vm2835, %v2935, %v2936
        %v2938 = vrot.slane %v2936, 4
        %v2939 = vrot.slane %v1152, 5
        %v2940 = vsel %vm2835, %v2938, %v2939
        %v2941 = vrot.slane %v2752, 5
        %v2942 = vrot.slane %v2941, 4
        %v2943 = vrot.slane %v1104, 5
        %v2944 = vsel %vm2835, %v2942, %v2943
        %v2945 = vrot.slane %v2943, 4
        %v2946 = vrot.slane %v1153, 5
        %v2947 = vsel %vm2835, %v2945, %v2946
        %v2948 = vrot.slane %v2753, 5
        %v2949 = vrot.slane %v2948, 4
        %v2950 = vrot.slane %v1106, 5
        %v2951 = vsel %vm2835, %v2949, %v2950
        %v2952 = vrot.slane %v2950, 4
        %v2953 = vrot.slane %v1154, 5
        %v2954 = vsel %vm2835, %v2952, %v2953
        %v2955 = vrot.slane %v2754, 5
        %v2956 = vrot.slane %v2955, 4
        %v2957 = vrot.slane %v1108, 5
        %v2958 = vsel %vm2835, %v2956, %v2957
        %v2959 = vrot.slane %v2957, 4
        %v2960 = vrot.slane %v1155, 5
        %v2961 = vsel %vm2835, %v2959, %v2960
        %v2962 = vrot.slane %v2755, 5
        %v2963 = vrot.slane %v2962, 4
        %v2964 = vrot.slane %v1110, 5
        %v2965 = vsel %vm2835, %v2963, %v2964
        %v2966 = vrot.slane %v2964, 4
        %v2967 = vrot.slane %v1156, 5
        %v2968 = vsel %vm2835, %v2966, %v2967
        %v2969 = vrot.slane %v2756, 5
        %v2970 = vrot.slane %v2969, 4
        %v2971 = vrot.slane %v1112, 5
        %v2972 = vsel %vm2835, %v2970, %v2971
        %v2973 = vrot.slane %v2971, 4
        %v2974 = vrot.slane %v1157, 5
        %v2975 = vsel %vm2835, %v2973, %v2974
        %v2976 = vrot.slane %v2757, 5
        %v2977 = vrot.slane %v2976, 4
        %v2978 = vrot.slane %v1114, 5
        %v2979 = vsel %vm2835, %v2977, %v2978
        %v2980 = vrot.slane %v2978, 4
        %v2981 = vrot.slane %v1158, 5
        %v2982 = vsel %vm2835, %v2980, %v2981
        %v2983 = vrot.slane %v2758, 5
        %v2984 = vrot.slane %v2983, 4
        %v2985 = vrot.slane %v1116, 5
        %v2986 = vsel %vm2835, %v2984, %v2985
        %v2987 = vrot.slane %v2985, 4
        %v2988 = vrot.slane %v1159, 5
        %v2989 = vsel %vm2835, %v2987, %v2988
        %v2990 = vrot.slane %v2759, 5
        %v2991 = vrot.slane %v2990, 4
        %v2992 = vrot.slane %v1118, 5
        %v2993 = vsel %vm2835, %v2991, %v2992
        %v2994 = vrot.slane %v2992, 4
        %v2995 = vrot.slane %v1160, 5
        %v2996 = vsel %vm2835, %v2994, %v2995
        %v2997 = vrot.slane %v2760, 5
        %v2998 = vrot.slane %v2997, 4
        %v2999 = vrot.slane %v1120, 5
        %v3000 = vsel %vm2835, %v2998, %v2999
        %v3001 = vrot.slane %v2999, 4
        %v3002 = vrot.slane %v1161, 5
        %v3003 = vsel %vm2835, %v3001, %v3002
        %v3004 = vrot.slane %v2761, 5
        %v3005 = vrot.slane %v3004, 4
        %v3006 = vrot.slane %v1122, 5
        %v3007 = vsel %vm2835, %v3005, %v3006
        %v3008 = vrot.slane %v3006, 4
        %v3009 = vrot.slane %v1162, 5
        %v3010 = vsel %vm2835, %v3008, %v3009
        %v3011 = vrot.slane %v2762, 5
        %v3012 = vrot.slane %v3011, 4
        %v3013 = vrot.slane %v1124, 5
        %v3014 = vsel %vm2835, %v3012, %v3013
        %v3015 = vrot.slane %v3013, 4
        %v3016 = vrot.slane %v1163, 5
        %v3017 = vsel %vm2835, %v3015, %v3016
        %v3018 = vrot.slane %v2763, 5
        %v3019 = vrot.slane %v3018, 4
        %v3020 = vrot.slane %v1126, 5
        %v3021 = vsel %vm2835, %v3019, %v3020
        %v3022 = vrot.slane %v3020, 4
        %v3023 = vrot.slane %v1164, 5
        %v3024 = vsel %vm2835, %v3022, %v3023
        %v3025 = vrot.slane %v2764, 5
        %v3026 = vrot.slane %v3025, 4
        %v3027 = vrot.slane %v1128, 5
        %v3028 = vsel %vm2835, %v3026, %v3027
        %v3029 = vrot.slane %v3027, 4
        %v3030 = vrot.slane %v1165, 5
        %v3031 = vsel %vm2835, %v3029, %v3030
        %v3032 = vrot.slane %v2765, 5
        %v3033 = vrot.slane %v3032, 4
        %v3034 = vrot.slane %v1130, 5
        %v3035 = vsel %vm2835, %v3033, %v3034
        %v3036 = vrot.slane %v3034, 4
        %v3037 = vrot.slane %v1166, 5
        %v3038 = vsel %vm2835, %v3036, %v3037
        %v3039 = vrot.slane %v2766, 5
        %v3040 = vrot.slane %v3039, 4
        %v3041 = vrot.slane %v1132, 5
        %v3042 = vsel %vm2835, %v3040, %v3041
        %v3043 = vrot.slane %v3041, 4
        %v3044 = vrot.slane %v1167, 5
        %v3045 = vsel %vm2835, %v3043, %v3044
        %v3046 = vrot.slane %v2767, 5
        %v3047 = vrot.slane %v3046, 4
        %v3048 = vrot.slane %v1134, 5
        %v3049 = vsel %vm2835, %v3047, %v3048
        %v3050 = vrot.slane %v3048, 4
        %v3051 = vrot.slane %v1168, 5
        %v3052 = vsel %vm2835, %v3050, %v3051
        %v3053 = vrot.slane %v2768, 5
        %v3054 = vrot.slane %v3053, 4
        %v3055 = vrot.slane %v1136, 5
        %v3056 = vsel %vm2835, %v3054, %v3055
        %v3057 = vrot.slane %v3055, 4
        %v3058 = vrot.slane %v1169, 5
        %v3059 = vsel %vm2835, %v3057, %v3058
        %s3060 = scalar_lea.vmem %s1, 4
        %v3061 = vld [vmem:[%s3060] sm:$0x3]
        %v3062 = vunpack.c.l.b16 %v2839
        %v3063 = vunpack.c.l.b16 %v2842
        %v3064 = vunpack.c.l.b16 %v2846
        %v3065 = vunpack.c.l.b16 %v2849
        %v3066 = vunpack.c.l.b16 %v2853
        %v3067 = vunpack.c.l.b16 %v2856
        %v3068 = vunpack.c.l.b16 %v2860
        %v3069 = vunpack.c.l.b16 %v2863
        %v3070 = vunpack.c.l.b16 %v2867
        %v3071 = vunpack.c.l.b16 %v2870
        %v3072 = vunpack.c.l.b16 %v2874
        %v3073 = vunpack.c.l.b16 %v2877
        %v3074 = vunpack.c.l.b16 %v2881
        %v3075 = vunpack.c.l.b16 %v2884
        %v3076 = vunpack.c.l.b16 %v2888
        %v3077 = vunpack.c.l.b16 %v2891
        %v3078 = vunpack.c.l.b16 %v2895
        %v3079 = vunpack.c.l.b16 %v2898
        %v3080 = vunpack.c.l.b16 %v2902
        %v3081 = vunpack.c.l.b16 %v2905
        %v3082 = vunpack.c.l.b16 %v2909
        %v3083 = vunpack.c.l.b16 %v2912
        %v3084 = vunpack.c.l.b16 %v2916
        %v3085 = vunpack.c.l.b16 %v2919
        %v3086 = vunpack.c.l.b16 %v2923
        %v3087 = vunpack.c.l.b16 %v2926
        %v3088 = vunpack.c.l.b16 %v2930
        %v3089 = vunpack.c.l.b16 %v2933
        %v3090 = vunpack.c.l.b16 %v2937
        %v3091 = vunpack.c.l.b16 %v2940
        %v3092 = vunpack.c.l.b16 %v2944
        %v3093 = vunpack.c.l.b16 %v2947
        %v3094 = vunpack.c.l.b16 %v2951
        %v3095 = vunpack.c.l.b16 %v2954
        %v3096 = vunpack.c.l.b16 %v2958
        %v3097 = vunpack.c.l.b16 %v2961
        %v3098 = vunpack.c.l.b16 %v2965
        %v3099 = vunpack.c.l.b16 %v2968
        %v3100 = vunpack.c.l.b16 %v2972
        %v3101 = vunpack.c.l.b16 %v2975
        %v3102 = vunpack.c.l.b16 %v2979
        %v3103 = vunpack.c.l.b16 %v2982
        %v3104 = vunpack.c.l.b16 %v2986
        %v3105 = vunpack.c.l.b16 %v2989
        %v3106 = vunpack.c.l.b16 %v2993
        %v3107 = vunpack.c.l.b16 %v2996
        %v3108 = vunpack.c.l.b16 %v3000
        %v3109 = vunpack.c.l.b16 %v3003
        %v3110 = vunpack.c.l.b16 %v3007
        %v3111 = vunpack.c.l.b16 %v3010
        %v3112 = vunpack.c.l.b16 %v3014
        %v3113 = vunpack.c.l.b16 %v3017
        %v3114 = vunpack.c.l.b16 %v3021
        %v3115 = vunpack.c.l.b16 %v3024
        %v3116 = vunpack.c.l.b16 %v3028
        %v3117 = vunpack.c.l.b16 %v3031
        %v3118 = vunpack.c.l.b16 %v3035
        %v3119 = vunpack.c.l.b16 %v3038
        %v3120 = vunpack.c.l.b16 %v3042
        %v3121 = vunpack.c.l.b16 %v3045
        %v3122 = vunpack.c.l.b16 %v3049
        %v3123 = vunpack.c.l.b16 %v3052
        %v3124 = vunpack.c.l.b16 %v3056
        %v3125 = vunpack.c.l.b16 %v3059
        %v3126 = vpack.c.b16 %v3063, %v3062
        %v3127 = vpack.c.b16 %v3065, %v3064
        %v3128 = vpack.c.b16 %v3067, %v3066
        %v3129 = vpack.c.b16 %v3069, %v3068
        %v3130 = vpack.c.b16 %v3071, %v3070
        %v3131 = vpack.c.b16 %v3073, %v3072
        %v3132 = vpack.c.b16 %v3075, %v3074
        %v3133 = vpack.c.b16 %v3077, %v3076
        %v3134 = vpack.c.b16 %v3079, %v3078
        %v3135 = vpack.c.b16 %v3081, %v3080
        %v3136 = vpack.c.b16 %v3083, %v3082
        %v3137 = vpack.c.b16 %v3085, %v3084
        %v3138 = vpack.c.b16 %v3087, %v3086
        %v3139 = vpack.c.b16 %v3089, %v3088
        %v3140 = vpack.c.b16 %v3091, %v3090
        %v3141 = vpack.c.b16 %v3093, %v3092
        %v3142 = vpack.c.b16 %v3095, %v3094
        %v3143 = vpack.c.b16 %v3097, %v3096
        %v3144 = vpack.c.b16 %v3099, %v3098
        %v3145 = vpack.c.b16 %v3101, %v3100
        %v3146 = vpack.c.b16 %v3103, %v3102
        %v3147 = vpack.c.b16 %v3105, %v3104
        %v3148 = vpack.c.b16 %v3107, %v3106
        %v3149 = vpack.c.b16 %v3109, %v3108
        %v3150 = vpack.c.b16 %v3111, %v3110
        %v3151 = vpack.c.b16 %v3113, %v3112
        %v3152 = vpack.c.b16 %v3115, %v3114
        %v3153 = vpack.c.b16 %v3117, %v3116
        %v3154 = vpack.c.b16 %v3119, %v3118
        %v3155 = vpack.c.b16 %v3121, %v3120
        %v3156 = vpack.c.b16 %v3123, %v3122
        %v3157 = vpack.c.b16 %v3125, %v3124
        %v3159 = vsel %vm2039, %v3126, 0
        %v3162 = vsel %vm2039, %v3127, 0
        %v3165 = vsel %vm2039, %v3128, 0
        %v3168 = vsel %vm2039, %v3129, 0
        %v3171 = vsel %vm2039, %v3130, 0
        %v3174 = vsel %vm2039, %v3131, 0
        %v3177 = vsel %vm2039, %v3132, 0
        %v3180 = vsel %vm2039, %v3133, 0
        %v3183 = vsel %vm2039, %v3134, 0
        %v3186 = vsel %vm2039, %v3135, 0
        %v3189 = vsel %vm2039, %v3136, 0
        %v3192 = vsel %vm2039, %v3137, 0
        %v3195 = vsel %vm2039, %v3138, 0
        %v3198 = vsel %vm2039, %v3139, 0
        %v3201 = vsel %vm2039, %v3140, 0
        %v3204 = vsel %vm2039, %v3141, 0
        %v3207 = vsel %vm2039, %v3142, 0
        %v3210 = vsel %vm2039, %v3143, 0
        %v3213 = vsel %vm2039, %v3144, 0
        %v3216 = vsel %vm2039, %v3145, 0
        %v3219 = vsel %vm2039, %v3146, 0
        %v3222 = vsel %vm2039, %v3147, 0
        %v3225 = vsel %vm2039, %v3148, 0
        %v3228 = vsel %vm2039, %v3149, 0
        %v3231 = vsel %vm2039, %v3150, 0
        %v3234 = vsel %vm2039, %v3151, 0
        %v3237 = vsel %vm2039, %v3152, 0
        %v3240 = vsel %vm2039, %v3153, 0
        %v3243 = vsel %vm2039, %v3154, 0
        %v3246 = vsel %vm2039, %v3155, 0
        %v3249 = vsel %vm2039, %v3156, 0
        %v3252 = vsel %vm2039, %v3157, 0
        %v3255 = vsel %vm2136, %v3061, 0
        %3257 = vmatpush.bf16.msra.mxu0 0
        %3258 = vmatpush.bf16.msra.mxu0 0
        %3259 = vmatpush.bf16.msra.mxu0 0
        %3260 = vmatpush.bf16.msra.mxu0 0
        %3261 = vmatpush.bf16.msra.mxu0 0
        %3262 = vmatpush.bf16.msra.mxu0 0
        %3263 = vmatpush.bf16.msra.mxu0 0
        %3264 = vmatpush.bf16.msra.mxu0 %v3255
        %3265 = vmatmul.bf16.gmra.mxu0 %v3159
        %v3266 = vpop.f32.mrf.mxu0
        %v3267 = vadd.f32 0.0, %v3266
        %v3268 = vpop.f32.mrf.mxu0
        %v3269 = vadd.f32 0.0, %v3268
        %3270 = vmatmul.bf16.gmra.mxu0 %v3162
        %v3271 = vpop.f32.mrf.mxu0
        %v3272 = vadd.f32 0.0, %v3271
        %v3273 = vpop.f32.mrf.mxu0
        %v3274 = vadd.f32 0.0, %v3273
        %3275 = vmatmul.bf16.gmra.mxu0 %v3165
        %v3276 = vpop.f32.mrf.mxu0
        %v3277 = vadd.f32 0.0, %v3276
        %v3278 = vpop.f32.mrf.mxu0
        %v3279 = vadd.f32 0.0, %v3278
        %3280 = vmatmul.bf16.gmra.mxu0 %v3168
        %v3281 = vpop.f32.mrf.mxu0
        %v3282 = vadd.f32 0.0, %v3281
        %v3283 = vpop.f32.mrf.mxu0
        %v3284 = vadd.f32 0.0, %v3283
        %3285 = vmatmul.bf16.gmra.mxu0 %v3171
        %v3286 = vpop.f32.mrf.mxu0
        %v3287 = vadd.f32 0.0, %v3286
        %v3288 = vpop.f32.mrf.mxu0
        %v3289 = vadd.f32 0.0, %v3288
        %3290 = vmatmul.bf16.gmra.mxu0 %v3174
        %v3291 = vpop.f32.mrf.mxu0
        %v3292 = vadd.f32 0.0, %v3291
        %v3293 = vpop.f32.mrf.mxu0
        %v3294 = vadd.f32 0.0, %v3293
        %3295 = vmatmul.bf16.gmra.mxu0 %v3177
        %v3296 = vpop.f32.mrf.mxu0
        %v3297 = vadd.f32 0.0, %v3296
        %v3298 = vpop.f32.mrf.mxu0
        %v3299 = vadd.f32 0.0, %v3298
        %3300 = vmatmul.bf16.gmra.mxu0 %v3180
        %v3301 = vpop.f32.mrf.mxu0
        %v3302 = vadd.f32 0.0, %v3301
        %v3303 = vpop.f32.mrf.mxu0
        %v3304 = vadd.f32 0.0, %v3303
        %3305 = vmatmul.bf16.gmra.mxu0 %v3183
        %v3306 = vpop.f32.mrf.mxu0
        %v3307 = vadd.f32 0.0, %v3306
        %v3308 = vpop.f32.mrf.mxu0
        %v3309 = vadd.f32 0.0, %v3308
        %3310 = vmatmul.bf16.gmra.mxu0 %v3186
        %v3311 = vpop.f32.mrf.mxu0
        %v3312 = vadd.f32 0.0, %v3311
        %v3313 = vpop.f32.mrf.mxu0
        %v3314 = vadd.f32 0.0, %v3313
        %3315 = vmatmul.bf16.gmra.mxu0 %v3189
        %v3316 = vpop.f32.mrf.mxu0
        %v3317 = vadd.f32 0.0, %v3316
        %v3318 = vpop.f32.mrf.mxu0
        %v3319 = vadd.f32 0.0, %v3318
        %3320 = vmatmul.bf16.gmra.mxu0 %v3192
        %v3321 = vpop.f32.mrf.mxu0
        %v3322 = vadd.f32 0.0, %v3321
        %v3323 = vpop.f32.mrf.mxu0
        %v3324 = vadd.f32 0.0, %v3323
        %3325 = vmatmul.bf16.gmra.mxu0 %v3195
        %v3326 = vpop.f32.mrf.mxu0
        %v3327 = vadd.f32 0.0, %v3326
        %v3328 = vpop.f32.mrf.mxu0
        %v3329 = vadd.f32 0.0, %v3328
        %3330 = vmatmul.bf16.gmra.mxu0 %v3198
        %v3331 = vpop.f32.mrf.mxu0
        %v3332 = vadd.f32 0.0, %v3331
        %v3333 = vpop.f32.mrf.mxu0
        %v3334 = vadd.f32 0.0, %v3333
        %3335 = vmatmul.bf16.gmra.mxu0 %v3201
        %v3336 = vpop.f32.mrf.mxu0
        %v3337 = vadd.f32 0.0, %v3336
        %v3338 = vpop.f32.mrf.mxu0
        %v3339 = vadd.f32 0.0, %v3338
        %3340 = vmatmul.bf16.gmra.mxu0 %v3204
        %v3341 = vpop.f32.mrf.mxu0
        %v3342 = vadd.f32 0.0, %v3341
        %v3343 = vpop.f32.mrf.mxu0
        %v3344 = vadd.f32 0.0, %v3343
        %3345 = vmatmul.bf16.gmra.mxu0 %v3207
        %v3346 = vpop.f32.mrf.mxu0
        %v3347 = vadd.f32 0.0, %v3346
        %v3348 = vpop.f32.mrf.mxu0
        %v3349 = vadd.f32 0.0, %v3348
        %3350 = vmatmul.bf16.gmra.mxu0 %v3210
        %v3351 = vpop.f32.mrf.mxu0
        %v3352 = vadd.f32 0.0, %v3351
        %v3353 = vpop.f32.mrf.mxu0
        %v3354 = vadd.f32 0.0, %v3353
        %3355 = vmatmul.bf16.gmra.mxu0 %v3213
        %v3356 = vpop.f32.mrf.mxu0
        %v3357 = vadd.f32 0.0, %v3356
        %v3358 = vpop.f32.mrf.mxu0
        %v3359 = vadd.f32 0.0, %v3358
        %3360 = vmatmul.bf16.gmra.mxu0 %v3216
        %v3361 = vpop.f32.mrf.mxu0
        %v3362 = vadd.f32 0.0, %v3361
        %v3363 = vpop.f32.mrf.mxu0
        %v3364 = vadd.f32 0.0, %v3363
        %3365 = vmatmul.bf16.gmra.mxu0 %v3219
        %v3366 = vpop.f32.mrf.mxu0
        %v3367 = vadd.f32 0.0, %v3366
        %v3368 = vpop.f32.mrf.mxu0
        %v3369 = vadd.f32 0.0, %v3368
        %3370 = vmatmul.bf16.gmra.mxu0 %v3222
        %v3371 = vpop.f32.mrf.mxu0
        %v3372 = vadd.f32 0.0, %v3371
        %v3373 = vpop.f32.mrf.mxu0
        %v3374 = vadd.f32 0.0, %v3373
        %3375 = vmatmul.bf16.gmra.mxu0 %v3225
        %v3376 = vpop.f32.mrf.mxu0
        %v3377 = vadd.f32 0.0, %v3376
        %v3378 = vpop.f32.mrf.mxu0
        %v3379 = vadd.f32 0.0, %v3378
        %3380 = vmatmul.bf16.gmra.mxu0 %v3228
        %v3381 = vpop.f32.mrf.mxu0
        %v3382 = vadd.f32 0.0, %v3381
        %v3383 = vpop.f32.mrf.mxu0
        %v3384 = vadd.f32 0.0, %v3383
        %3385 = vmatmul.bf16.gmra.mxu0 %v3231
        %v3386 = vpop.f32.mrf.mxu0
        %v3387 = vadd.f32 0.0, %v3386
        %v3388 = vpop.f32.mrf.mxu0
        %v3389 = vadd.f32 0.0, %v3388
        %3390 = vmatmul.bf16.gmra.mxu0 %v3234
        %v3391 = vpop.f32.mrf.mxu0
        %v3392 = vadd.f32 0.0, %v3391
        %v3393 = vpop.f32.mrf.mxu0
        %v3394 = vadd.f32 0.0, %v3393
        %3395 = vmatmul.bf16.gmra.mxu0 %v3237
        %v3396 = vpop.f32.mrf.mxu0
        %v3397 = vadd.f32 0.0, %v3396
        %v3398 = vpop.f32.mrf.mxu0
        %v3399 = vadd.f32 0.0, %v3398
        %3400 = vmatmul.bf16.gmra.mxu0 %v3240
        %v3401 = vpop.f32.mrf.mxu0
        %v3402 = vadd.f32 0.0, %v3401
        %v3403 = vpop.f32.mrf.mxu0
        %v3404 = vadd.f32 0.0, %v3403
        %3405 = vmatmul.bf16.gmra.mxu0 %v3243
        %v3406 = vpop.f32.mrf.mxu0
        %v3407 = vadd.f32 0.0, %v3406
        %v3408 = vpop.f32.mrf.mxu0
        %v3409 = vadd.f32 0.0, %v3408
        %3410 = vmatmul.bf16.gmra.mxu0 %v3246
        %v3411 = vpop.f32.mrf.mxu0
        %v3412 = vadd.f32 0.0, %v3411
        %v3413 = vpop.f32.mrf.mxu0
        %v3414 = vadd.f32 0.0, %v3413
        %3415 = vmatmul.bf16.gmra.mxu0 %v3249
        %v3416 = vpop.f32.mrf.mxu0
        %v3417 = vadd.f32 0.0, %v3416
        %v3418 = vpop.f32.mrf.mxu0
        %v3419 = vadd.f32 0.0, %v3418
        %3420 = vmatmul.bf16.gmra.mxu0 %v3252
        %v3421 = vpop.f32.mrf.mxu0
        %v3422 = vadd.f32 0.0, %v3421
        %v3423 = vpop.f32.mrf.mxu0
        %v3424 = vadd.f32 0.0, %v3423
        %3425 = vdwg.mxu0
        %v3426 = vadd.f32 %v2578, %v3267
        %v3427 = vadd.f32 %v2580, %v3269
        %v3428 = vadd.f32 %v2583, %v3272
        %v3429 = vadd.f32 %v2585, %v3274
        %v3430 = vadd.f32 %v2588, %v3277
        %v3431 = vadd.f32 %v2590, %v3279
        %v3432 = vadd.f32 %v2593, %v3282
        %v3433 = vadd.f32 %v2595, %v3284
        %v3434 = vadd.f32 %v2598, %v3287
        %v3435 = vadd.f32 %v2600, %v3289
        %v3436 = vadd.f32 %v2603, %v3292
        %v3437 = vadd.f32 %v2605, %v3294
        %v3438 = vadd.f32 %v2608, %v3297
        %v3439 = vadd.f32 %v2610, %v3299
        %v3440 = vadd.f32 %v2613, %v3302
        %v3441 = vadd.f32 %v2615, %v3304
        %v3442 = vadd.f32 %v2618, %v3307
        %v3443 = vadd.f32 %v2620, %v3309
        %v3444 = vadd.f32 %v2623, %v3312
        %v3445 = vadd.f32 %v2625, %v3314
        %v3446 = vadd.f32 %v2628, %v3317
        %v3447 = vadd.f32 %v2630, %v3319
        %v3448 = vadd.f32 %v2633, %v3322
        %v3449 = vadd.f32 %v2635, %v3324
        %v3450 = vadd.f32 %v2638, %v3327
        %v3451 = vadd.f32 %v2640, %v3329
        %v3452 = vadd.f32 %v2643, %v3332
        %v3453 = vadd.f32 %v2645, %v3334
        %v3454 = vadd.f32 %v2648, %v3337
        %v3455 = vadd.f32 %v2650, %v3339
        %v3456 = vadd.f32 %v2653, %v3342
        %v3457 = vadd.f32 %v2655, %v3344
        %v3458 = vadd.f32 %v2658, %v3347
        %v3459 = vadd.f32 %v2660, %v3349
        %v3460 = vadd.f32 %v2663, %v3352
        %v3461 = vadd.f32 %v2665, %v3354
        %v3462 = vadd.f32 %v2668, %v3357
        %v3463 = vadd.f32 %v2670, %v3359
        %v3464 = vadd.f32 %v2673, %v3362
        %v3465 = vadd.f32 %v2675, %v3364
        %v3466 = vadd.f32 %v2678, %v3367
        %v3467 = vadd.f32 %v2680, %v3369
        %v3468 = vadd.f32 %v2683, %v3372
        %v3469 = vadd.f32 %v2685, %v3374
        %v3470 = vadd.f32 %v2688, %v3377
        %v3471 = vadd.f32 %v2690, %v3379
        %v3472 = vadd.f32 %v2693, %v3382
        %v3473 = vadd.f32 %v2695, %v3384
        %v3474 = vadd.f32 %v2698, %v3387
        %v3475 = vadd.f32 %v2700, %v3389
        %v3476 = vadd.f32 %v2703, %v3392
        %v3477 = vadd.f32 %v2705, %v3394
        %v3478 = vadd.f32 %v2708, %v3397
        %v3479 = vadd.f32 %v2710, %v3399
        %v3480 = vadd.f32 %v2713, %v3402
        %v3481 = vadd.f32 %v2715, %v3404
        %v3482 = vadd.f32 %v2718, %v3407
        %v3483 = vadd.f32 %v2720, %v3409
        %v3484 = vadd.f32 %v2723, %v3412
        %v3485 = vadd.f32 %v2725, %v3414
        %v3486 = vadd.f32 %v2728, %v3417
        %v3487 = vadd.f32 %v2730, %v3419
        %v3488 = vadd.f32 %v2733, %v3422
        %v3489 = vadd.f32 %v2735, %v3424
        %v3490 = vld [vmem:[%s762] sm:$0xf]
        %v3491 = vld [vmem:[%s762 + $0x4] sm:$0xf]
        %v3492 = vld [vmem:[%s762 + $0xc] sm:$0xf]
        %v3493 = vld [vmem:[%s762 + $0x10] sm:$0xf]
        %v3494 = vld [vmem:[%s762 + $0x18] sm:$0xf]
        %v3495 = vld [vmem:[%s762 + $0x1c] sm:$0xf]
        %v3496 = vld [vmem:[%s762 + $0x24] sm:$0xf]
        %v3497 = vld [vmem:[%s762 + $0x28] sm:$0xf]
        %v3498 = vld [vmem:[%s762 + $0x30] sm:$0xf]
        %v3499 = vld [vmem:[%s762 + $0x34] sm:$0xf]
        %v3500 = vld [vmem:[%s762 + $0x3c] sm:$0xf]
        %v3501 = vld [vmem:[%s762 + $0x40] sm:$0xf]
        %v3502 = vld [vmem:[%s762 + $0x48] sm:$0xf]
        %v3503 = vld [vmem:[%s762 + $0x4c] sm:$0xf]
        %v3504 = vld [vmem:[%s762 + $0x54] sm:$0xf]
        %v3505 = vld [vmem:[%s762 + $0x58] sm:$0xf]
        %v3506 = vld [vmem:[%s762 + $0x60] sm:$0xf]
        %v3507 = vld [vmem:[%s762 + $0x64] sm:$0xf]
        %v3508 = vld [vmem:[%s762 + $0x6c] sm:$0xf]
        %v3509 = vld [vmem:[%s762 + $0x70] sm:$0xf]
        %v3510 = vld [vmem:[%s762 + $0x78] sm:$0xf]
        %v3511 = vld [vmem:[%s762 + $0x7c] sm:$0xf]
        %v3512 = vld [vmem:[%s762 + $0x84] sm:$0xf]
        %v3513 = vld [vmem:[%s762 + $0x88] sm:$0xf]
        %v3514 = vld [vmem:[%s762 + $0x90] sm:$0xf]
        %v3515 = vld [vmem:[%s762 + $0x94] sm:$0xf]
        %v3516 = vld [vmem:[%s762 + $0x9c] sm:$0xf]
        %v3517 = vld [vmem:[%s762 + $0xa0] sm:$0xf]
        %v3518 = vld [vmem:[%s762 + $0xa8] sm:$0xf]
        %v3519 = vld [vmem:[%s762 + $0xac] sm:$0xf]
        %v3520 = vld [vmem:[%s762 + $0xb4] sm:$0xf]
        %v3521 = vld [vmem:[%s762 + $0xb8] sm:$0xf]
        %v3522 = vld [vmem:[%s762 + $0xc0] sm:$0xf]
        %v3523 = vld [vmem:[%s762 + $0xc4] sm:$0xf]
        %v3524 = vld [vmem:[%s762 + $0xcc] sm:$0xf]
        %v3525 = vld [vmem:[%s762 + $0xd0] sm:$0xf]
        %v3526 = vld [vmem:[%s762 + $0xd8] sm:$0xf]
        %v3527 = vld [vmem:[%s762 + $0xdc] sm:$0xf]
        %v3528 = vld [vmem:[%s762 + $0xe4] sm:$0xf]
        %v3529 = vld [vmem:[%s762 + $0xe8] sm:$0xf]
        %v3530 = vld [vmem:[%s762 + $0xf0] sm:$0xf]
        %v3531 = vld [vmem:[%s762 + $0xf4] sm:$0xf]
        %v3532 = vld [vmem:[%s762 + $0xfc] sm:$0xf]
        %v3533 = vld [vmem:[%s762 + $0x100] sm:$0xf]
        %v3534 = vld [vmem:[%s762 + $0x108] sm:$0xf]
        %v3535 = vld [vmem:[%s762 + $0x10c] sm:$0xf]
        %v3536 = vld [vmem:[%s762 + $0x114] sm:$0xf]
        %v3537 = vld [vmem:[%s762 + $0x118] sm:$0xf]
        %v3538 = vld [vmem:[%s762 + $0x120] sm:$0xf]
        %v3539 = vld [vmem:[%s762 + $0x124] sm:$0xf]
        %v3540 = vld [vmem:[%s762 + $0x12c] sm:$0xf]
        %v3541 = vld [vmem:[%s762 + $0x130] sm:$0xf]
        %v3542 = vld [vmem:[%s762 + $0x138] sm:$0xf]
        %v3543 = vld [vmem:[%s762 + $0x13c] sm:$0xf]
        %v3544 = vld [vmem:[%s762 + $0x144] sm:$0xf]
        %v3545 = vld [vmem:[%s762 + $0x148] sm:$0xf]
        %v3546 = vld [vmem:[%s762 + $0x150] sm:$0xf]
        %v3547 = vld [vmem:[%s762 + $0x154] sm:$0xf]
        %v3548 = vld [vmem:[%s762 + $0x15c] sm:$0xf]
        %v3549 = vld [vmem:[%s762 + $0x160] sm:$0xf]
        %v3550 = vld [vmem:[%s762 + $0x168] sm:$0xf]
        %v3551 = vld [vmem:[%s762 + $0x16c] sm:$0xf]
        %v3552 = vld [vmem:[%s762 + $0x174] sm:$0xf]
        %v3553 = vld [vmem:[%s762 + $0x178] sm:$0xf]
        %s3554 = scalar_lea.vmem %s1, 6
        %v3555 = vld [vmem:[%s3554] sm:$0x3]
        %v3620 = vunpack.c.l.b16 %v3490
        %v3621 = vunpack.c.l.b16 %v3491
        %v3622 = vunpack.c.l.b16 %v3492
        %v3623 = vunpack.c.l.b16 %v3493
        %v3624 = vunpack.c.l.b16 %v3494
        %v3625 = vunpack.c.l.b16 %v3495
        %v3626 = vunpack.c.l.b16 %v3496
        %v3627 = vunpack.c.l.b16 %v3497
        %v3628 = vunpack.c.l.b16 %v3498
        %v3629 = vunpack.c.l.b16 %v3499
        %v3630 = vunpack.c.l.b16 %v3500
        %v3631 = vunpack.c.l.b16 %v3501
        %v3632 = vunpack.c.l.b16 %v3502
        %v3633 = vunpack.c.l.b16 %v3503
        %v3634 = vunpack.c.l.b16 %v3504
        %v3635 = vunpack.c.l.b16 %v3505
        %v3636 = vunpack.c.l.b16 %v3506
        %v3637 = vunpack.c.l.b16 %v3507
        %v3638 = vunpack.c.l.b16 %v3508
        %v3639 = vunpack.c.l.b16 %v3509
        %v3640 = vunpack.c.l.b16 %v3510
        %v3641 = vunpack.c.l.b16 %v3511
        %v3642 = vunpack.c.l.b16 %v3512
        %v3643 = vunpack.c.l.b16 %v3513
        %v3644 = vunpack.c.l.b16 %v3514
        %v3645 = vunpack.c.l.b16 %v3515
        %v3646 = vunpack.c.l.b16 %v3516
        %v3647 = vunpack.c.l.b16 %v3517
        %v3648 = vunpack.c.l.b16 %v3518
        %v3649 = vunpack.c.l.b16 %v3519
        %v3650 = vunpack.c.l.b16 %v3520
        %v3651 = vunpack.c.l.b16 %v3521
        %v3652 = vunpack.c.l.b16 %v3522
        %v3653 = vunpack.c.l.b16 %v3523
        %v3654 = vunpack.c.l.b16 %v3524
        %v3655 = vunpack.c.l.b16 %v3525
        %v3656 = vunpack.c.l.b16 %v3526
        %v3657 = vunpack.c.l.b16 %v3527
        %v3658 = vunpack.c.l.b16 %v3528
        %v3659 = vunpack.c.l.b16 %v3529
        %v3660 = vunpack.c.l.b16 %v3530
        %v3661 = vunpack.c.l.b16 %v3531
        %v3662 = vunpack.c.l.b16 %v3532
        %v3663 = vunpack.c.l.b16 %v3533
        %v3664 = vunpack.c.l.b16 %v3534
        %v3665 = vunpack.c.l.b16 %v3535
        %v3666 = vunpack.c.l.b16 %v3536
        %v3667 = vunpack.c.l.b16 %v3537
        %v3668 = vunpack.c.l.b16 %v3538
        %v3669 = vunpack.c.l.b16 %v3539
        %v3670 = vunpack.c.l.b16 %v3540
        %v3671 = vunpack.c.l.b16 %v3541
        %v3672 = vunpack.c.l.b16 %v3542
        %v3673 = vunpack.c.l.b16 %v3543
        %v3674 = vunpack.c.l.b16 %v3544
        %v3675 = vunpack.c.l.b16 %v3545
        %v3676 = vunpack.c.l.b16 %v3546
        %v3677 = vunpack.c.l.b16 %v3547
        %v3678 = vunpack.c.l.b16 %v3548
        %v3679 = vunpack.c.l.b16 %v3549
        %v3680 = vunpack.c.l.b16 %v3550
        %v3681 = vunpack.c.l.b16 %v3551
        %v3682 = vunpack.c.l.b16 %v3552
        %v3683 = vunpack.c.l.b16 %v3553
        %v3684 = vpack.c.b16 %v3621, %v3620
        %v3685 = vpack.c.b16 %v3623, %v3622
        %v3686 = vpack.c.b16 %v3625, %v3624
        %v3687 = vpack.c.b16 %v3627, %v3626
        %v3688 = vpack.c.b16 %v3629, %v3628
        %v3689 = vpack.c.b16 %v3631, %v3630
        %v3690 = vpack.c.b16 %v3633, %v3632
        %v3691 = vpack.c.b16 %v3635, %v3634
        %v3692 = vpack.c.b16 %v3637, %v3636
        %v3693 = vpack.c.b16 %v3639, %v3638
        %v3694 = vpack.c.b16 %v3641, %v3640
        %v3695 = vpack.c.b16 %v3643, %v3642
        %v3696 = vpack.c.b16 %v3645, %v3644
        %v3697 = vpack.c.b16 %v3647, %v3646
        %v3698 = vpack.c.b16 %v3649, %v3648
        %v3699 = vpack.c.b16 %v3651, %v3650
        %v3700 = vpack.c.b16 %v3653, %v3652
        %v3701 = vpack.c.b16 %v3655, %v3654
        %v3702 = vpack.c.b16 %v3657, %v3656
        %v3703 = vpack.c.b16 %v3659, %v3658
        %v3704 = vpack.c.b16 %v3661, %v3660
        %v3705 = vpack.c.b16 %v3663, %v3662
        %v3706 = vpack.c.b16 %v3665, %v3664
        %v3707 = vpack.c.b16 %v3667, %v3666
        %v3708 = vpack.c.b16 %v3669, %v3668
        %v3709 = vpack.c.b16 %v3671, %v3670
        %v3710 = vpack.c.b16 %v3673, %v3672
        %v3711 = vpack.c.b16 %v3675, %v3674
        %v3712 = vpack.c.b16 %v3677, %v3676
        %v3713 = vpack.c.b16 %v3679, %v3678
        %v3714 = vpack.c.b16 %v3681, %v3680
        %v3715 = vpack.c.b16 %v3683, %v3682
        %v3717 = vsel %vm2039, %v3684, 0
        %v3720 = vsel %vm2039, %v3685, 0
        %v3723 = vsel %vm2039, %v3686, 0
        %v3726 = vsel %vm2039, %v3687, 0
        %v3729 = vsel %vm2039, %v3688, 0
        %v3732 = vsel %vm2039, %v3689, 0
        %v3735 = vsel %vm2039, %v3690, 0
        %v3738 = vsel %vm2039, %v3691, 0
        %v3741 = vsel %vm2039, %v3692, 0
        %v3744 = vsel %vm2039, %v3693, 0
        %v3747 = vsel %vm2039, %v3694, 0
        %v3750 = vsel %vm2039, %v3695, 0
        %v3753 = vsel %vm2039, %v3696, 0
        %v3756 = vsel %vm2039, %v3697, 0
        %v3759 = vsel %vm2039, %v3698, 0
        %v3762 = vsel %vm2039, %v3699, 0
        %v3765 = vsel %vm2039, %v3700, 0
        %v3768 = vsel %vm2039, %v3701, 0
        %v3771 = vsel %vm2039, %v3702, 0
        %v3774 = vsel %vm2039, %v3703, 0
        %v3777 = vsel %vm2039, %v3704, 0
        %v3780 = vsel %vm2039, %v3705, 0
        %v3783 = vsel %vm2039, %v3706, 0
        %v3786 = vsel %vm2039, %v3707, 0
        %v3789 = vsel %vm2039, %v3708, 0
        %v3792 = vsel %vm2039, %v3709, 0
        %v3795 = vsel %vm2039, %v3710, 0
        %v3798 = vsel %vm2039, %v3711, 0
        %v3801 = vsel %vm2039, %v3712, 0
        %v3804 = vsel %vm2039, %v3713, 0
        %v3807 = vsel %vm2039, %v3714, 0
        %v3810 = vsel %vm2039, %v3715, 0
        %v3813 = vsel %vm2136, %v3555, 0
        %3815 = vmatpush.bf16.msra.mxu0 0
        %3816 = vmatpush.bf16.msra.mxu0 0
        %3817 = vmatpush.bf16.msra.mxu0 0
        %3818 = vmatpush.bf16.msra.mxu0 0
        %3819 = vmatpush.bf16.msra.mxu0 0
        %3820 = vmatpush.bf16.msra.mxu0 0
        %3821 = vmatpush.bf16.msra.mxu0 0
        %3822 = vmatpush.bf16.msra.mxu0 %v3813
        %3823 = vmatmul.bf16.gmra.mxu0 %v3717
        %v3824 = vpop.f32.mrf.mxu0
        %v3825 = vadd.f32 0.0, %v3824
        %v3826 = vpop.f32.mrf.mxu0
        %v3827 = vadd.f32 0.0, %v3826
        %3828 = vmatmul.bf16.gmra.mxu0 %v3720
        %v3829 = vpop.f32.mrf.mxu0
        %v3830 = vadd.f32 0.0, %v3829
        %v3831 = vpop.f32.mrf.mxu0
        %v3832 = vadd.f32 0.0, %v3831
        %3833 = vmatmul.bf16.gmra.mxu0 %v3723
        %v3834 = vpop.f32.mrf.mxu0
        %v3835 = vadd.f32 0.0, %v3834
        %v3836 = vpop.f32.mrf.mxu0
        %v3837 = vadd.f32 0.0, %v3836
        %3838 = vmatmul.bf16.gmra.mxu0 %v3726
        %v3839 = vpop.f32.mrf.mxu0
        %v3840 = vadd.f32 0.0, %v3839
        %v3841 = vpop.f32.mrf.mxu0
        %v3842 = vadd.f32 0.0, %v3841
        %3843 = vmatmul.bf16.gmra.mxu0 %v3729
        %v3844 = vpop.f32.mrf.mxu0
        %v3845 = vadd.f32 0.0, %v3844
        %v3846 = vpop.f32.mrf.mxu0
        %v3847 = vadd.f32 0.0, %v3846
        %3848 = vmatmul.bf16.gmra.mxu0 %v3732
        %v3849 = vpop.f32.mrf.mxu0
        %v3850 = vadd.f32 0.0, %v3849
        %v3851 = vpop.f32.mrf.mxu0
        %v3852 = vadd.f32 0.0, %v3851
        %3853 = vmatmul.bf16.gmra.mxu0 %v3735
        %v3854 = vpop.f32.mrf.mxu0
        %v3855 = vadd.f32 0.0, %v3854
        %v3856 = vpop.f32.mrf.mxu0
        %v3857 = vadd.f32 0.0, %v3856
        %3858 = vmatmul.bf16.gmra.mxu0 %v3738
        %v3859 = vpop.f32.mrf.mxu0
        %v3860 = vadd.f32 0.0, %v3859
        %v3861 = vpop.f32.mrf.mxu0
        %v3862 = vadd.f32 0.0, %v3861
        %3863 = vmatmul.bf16.gmra.mxu0 %v3741
        %v3864 = vpop.f32.mrf.mxu0
        %v3865 = vadd.f32 0.0, %v3864
        %v3866 = vpop.f32.mrf.mxu0
        %v3867 = vadd.f32 0.0, %v3866
        %3868 = vmatmul.bf16.gmra.mxu0 %v3744
        %v3869 = vpop.f32.mrf.mxu0
        %v3870 = vadd.f32 0.0, %v3869
        %v3871 = vpop.f32.mrf.mxu0
        %v3872 = vadd.f32 0.0, %v3871
        %3873 = vmatmul.bf16.gmra.mxu0 %v3747
        %v3874 = vpop.f32.mrf.mxu0
        %v3875 = vadd.f32 0.0, %v3874
        %v3876 = vpop.f32.mrf.mxu0
        %v3877 = vadd.f32 0.0, %v3876
        %3878 = vmatmul.bf16.gmra.mxu0 %v3750
        %v3879 = vpop.f32.mrf.mxu0
        %v3880 = vadd.f32 0.0, %v3879
        %v3881 = vpop.f32.mrf.mxu0
        %v3882 = vadd.f32 0.0, %v3881
        %3883 = vmatmul.bf16.gmra.mxu0 %v3753
        %v3884 = vpop.f32.mrf.mxu0
        %v3885 = vadd.f32 0.0, %v3884
        %v3886 = vpop.f32.mrf.mxu0
        %v3887 = vadd.f32 0.0, %v3886
        %3888 = vmatmul.bf16.gmra.mxu0 %v3756
        %v3889 = vpop.f32.mrf.mxu0
        %v3890 = vadd.f32 0.0, %v3889
        %v3891 = vpop.f32.mrf.mxu0
        %v3892 = vadd.f32 0.0, %v3891
        %3893 = vmatmul.bf16.gmra.mxu0 %v3759
        %v3894 = vpop.f32.mrf.mxu0
        %v3895 = vadd.f32 0.0, %v3894
        %v3896 = vpop.f32.mrf.mxu0
        %v3897 = vadd.f32 0.0, %v3896
        %3898 = vmatmul.bf16.gmra.mxu0 %v3762
        %v3899 = vpop.f32.mrf.mxu0
        %v3900 = vadd.f32 0.0, %v3899
        %v3901 = vpop.f32.mrf.mxu0
        %v3902 = vadd.f32 0.0, %v3901
        %3903 = vmatmul.bf16.gmra.mxu0 %v3765
        %v3904 = vpop.f32.mrf.mxu0
        %v3905 = vadd.f32 0.0, %v3904
        %v3906 = vpop.f32.mrf.mxu0
        %v3907 = vadd.f32 0.0, %v3906
        %3908 = vmatmul.bf16.gmra.mxu0 %v3768
        %v3909 = vpop.f32.mrf.mxu0
        %v3910 = vadd.f32 0.0, %v3909
        %v3911 = vpop.f32.mrf.mxu0
        %v3912 = vadd.f32 0.0, %v3911
        %3913 = vmatmul.bf16.gmra.mxu0 %v3771
        %v3914 = vpop.f32.mrf.mxu0
        %v3915 = vadd.f32 0.0, %v3914
        %v3916 = vpop.f32.mrf.mxu0
        %v3917 = vadd.f32 0.0, %v3916
        %3918 = vmatmul.bf16.gmra.mxu0 %v3774
        %v3919 = vpop.f32.mrf.mxu0
        %v3920 = vadd.f32 0.0, %v3919
        %v3921 = vpop.f32.mrf.mxu0
        %v3922 = vadd.f32 0.0, %v3921
        %3923 = vmatmul.bf16.gmra.mxu0 %v3777
        %v3924 = vpop.f32.mrf.mxu0
        %v3925 = vadd.f32 0.0, %v3924
        %v3926 = vpop.f32.mrf.mxu0
        %v3927 = vadd.f32 0.0, %v3926
        %3928 = vmatmul.bf16.gmra.mxu0 %v3780
        %v3929 = vpop.f32.mrf.mxu0
        %v3930 = vadd.f32 0.0, %v3929
        %v3931 = vpop.f32.mrf.mxu0
        %v3932 = vadd.f32 0.0, %v3931
        %3933 = vmatmul.bf16.gmra.mxu0 %v3783
        %v3934 = vpop.f32.mrf.mxu0
        %v3935 = vadd.f32 0.0, %v3934
        %v3936 = vpop.f32.mrf.mxu0
        %v3937 = vadd.f32 0.0, %v3936
        %3938 = vmatmul.bf16.gmra.mxu0 %v3786
        %v3939 = vpop.f32.mrf.mxu0
        %v3940 = vadd.f32 0.0, %v3939
        %v3941 = vpop.f32.mrf.mxu0
        %v3942 = vadd.f32 0.0, %v3941
        %3943 = vmatmul.bf16.gmra.mxu0 %v3789
        %v3944 = vpop.f32.mrf.mxu0
        %v3945 = vadd.f32 0.0, %v3944
        %v3946 = vpop.f32.mrf.mxu0
        %v3947 = vadd.f32 0.0, %v3946
        %3948 = vmatmul.bf16.gmra.mxu0 %v3792
        %v3949 = vpop.f32.mrf.mxu0
        %v3950 = vadd.f32 0.0, %v3949
        %v3951 = vpop.f32.mrf.mxu0
        %v3952 = vadd.f32 0.0, %v3951
        %3953 = vmatmul.bf16.gmra.mxu0 %v3795
        %v3954 = vpop.f32.mrf.mxu0
        %v3955 = vadd.f32 0.0, %v3954
        %v3956 = vpop.f32.mrf.mxu0
        %v3957 = vadd.f32 0.0, %v3956
        %3958 = vmatmul.bf16.gmra.mxu0 %v3798
        %v3959 = vpop.f32.mrf.mxu0
        %v3960 = vadd.f32 0.0, %v3959
        %v3961 = vpop.f32.mrf.mxu0
        %v3962 = vadd.f32 0.0, %v3961
        %3963 = vmatmul.bf16.gmra.mxu0 %v3801
        %v3964 = vpop.f32.mrf.mxu0
        %v3965 = vadd.f32 0.0, %v3964
        %v3966 = vpop.f32.mrf.mxu0
        %v3967 = vadd.f32 0.0, %v3966
        %3968 = vmatmul.bf16.gmra.mxu0 %v3804
        %v3969 = vpop.f32.mrf.mxu0
        %v3970 = vadd.f32 0.0, %v3969
        %v3971 = vpop.f32.mrf.mxu0
        %v3972 = vadd.f32 0.0, %v3971
        %3973 = vmatmul.bf16.gmra.mxu0 %v3807
        %v3974 = vpop.f32.mrf.mxu0
        %v3975 = vadd.f32 0.0, %v3974
        %v3976 = vpop.f32.mrf.mxu0
        %v3977 = vadd.f32 0.0, %v3976
        %3978 = vmatmul.bf16.gmra.mxu0 %v3810
        %v3979 = vpop.f32.mrf.mxu0
        %v3980 = vadd.f32 0.0, %v3979
        %v3981 = vpop.f32.mrf.mxu0
        %v3982 = vadd.f32 0.0, %v3981
        %3983 = vdwg.mxu0
        %v3984 = vadd.f32 %v3426, %v3825
        %v3985 = vadd.f32 %v3427, %v3827
        %v3986 = vadd.f32 %v3428, %v3830
        %v3987 = vadd.f32 %v3429, %v3832
        %v3988 = vadd.f32 %v3430, %v3835
        %v3989 = vadd.f32 %v3431, %v3837
        %v3990 = vadd.f32 %v3432, %v3840
        %v3991 = vadd.f32 %v3433, %v3842
        %v3992 = vadd.f32 %v3434, %v3845
        %v3993 = vadd.f32 %v3435, %v3847
        %v3994 = vadd.f32 %v3436, %v3850
        %v3995 = vadd.f32 %v3437, %v3852
        %v3996 = vadd.f32 %v3438, %v3855
        %v3997 = vadd.f32 %v3439, %v3857
        %v3998 = vadd.f32 %v3440, %v3860
        %v3999 = vadd.f32 %v3441, %v3862
        %v4000 = vadd.f32 %v3442, %v3865
        %v4001 = vadd.f32 %v3443, %v3867
        %v4002 = vadd.f32 %v3444, %v3870
        %v4003 = vadd.f32 %v3445, %v3872
        %v4004 = vadd.f32 %v3446, %v3875
        %v4005 = vadd.f32 %v3447, %v3877
        %v4006 = vadd.f32 %v3448, %v3880
        %v4007 = vadd.f32 %v3449, %v3882
        %v4008 = vadd.f32 %v3450, %v3885
        %v4009 = vadd.f32 %v3451, %v3887
        %v4010 = vadd.f32 %v3452, %v3890
        %v4011 = vadd.f32 %v3453, %v3892
        %v4012 = vadd.f32 %v3454, %v3895
        %v4013 = vadd.f32 %v3455, %v3897
        %v4014 = vadd.f32 %v3456, %v3900
        %v4015 = vadd.f32 %v3457, %v3902
        %v4016 = vadd.f32 %v3458, %v3905
        %v4017 = vadd.f32 %v3459, %v3907
        %v4018 = vadd.f32 %v3460, %v3910
        %v4019 = vadd.f32 %v3461, %v3912
        %v4020 = vadd.f32 %v3462, %v3915
        %v4021 = vadd.f32 %v3463, %v3917
        %v4022 = vadd.f32 %v3464, %v3920
        %v4023 = vadd.f32 %v3465, %v3922
        %v4024 = vadd.f32 %v3466, %v3925
        %v4025 = vadd.f32 %v3467, %v3927
        %v4026 = vadd.f32 %v3468, %v3930
        %v4027 = vadd.f32 %v3469, %v3932
        %v4028 = vadd.f32 %v3470, %v3935
        %v4029 = vadd.f32 %v3471, %v3937
        %v4030 = vadd.f32 %v3472, %v3940
        %v4031 = vadd.f32 %v3473, %v3942
        %v4032 = vadd.f32 %v3474, %v3945
        %v4033 = vadd.f32 %v3475, %v3947
        %v4034 = vadd.f32 %v3476, %v3950
        %v4035 = vadd.f32 %v3477, %v3952
        %v4036 = vadd.f32 %v3478, %v3955
        %v4037 = vadd.f32 %v3479, %v3957
        %v4038 = vadd.f32 %v3480, %v3960
        %v4039 = vadd.f32 %v3481, %v3962
        %v4040 = vadd.f32 %v3482, %v3965
        %v4041 = vadd.f32 %v3483, %v3967
        %v4042 = vadd.f32 %v3484, %v3970
        %v4043 = vadd.f32 %v3485, %v3972
        %v4044 = vadd.f32 %v3486, %v3975
        %v4045 = vadd.f32 %v3487, %v3977
        %v4046 = vadd.f32 %v3488, %v3980
        %v4047 = vadd.f32 %v3489, %v3982
        %v4048 = vld [vmem:[%s762] sm:$0xf]
        %v4049 = vld [vmem:[%s762 + $0x4] sm:$0xf]
        %v4050 = vld [vmem:[%s762 + $0x8] sm:$0x1]
        %v4051 = vld [vmem:[%s762 + $0xc] sm:$0xf]
        %v4052 = vld [vmem:[%s762 + $0x10] sm:$0xf]
        %v4053 = vld [vmem:[%s762 + $0x14] sm:$0x1]
        %v4054 = vld [vmem:[%s762 + $0x18] sm:$0xf]
        %v4055 = vld [vmem:[%s762 + $0x1c] sm:$0xf]
        %v4056 = vld [vmem:[%s762 + $0x20] sm:$0x1]
        %v4057 = vld [vmem:[%s762 + $0x24] sm:$0xf]
        %v4058 = vld [vmem:[%s762 + $0x28] sm:$0xf]
        %v4059 = vld [vmem:[%s762 + $0x2c] sm:$0x1]
        %v4060 = vld [vmem:[%s762 + $0x30] sm:$0xf]
        %v4061 = vld [vmem:[%s762 + $0x34] sm:$0xf]
        %v4062 = vld [vmem:[%s762 + $0x38] sm:$0x1]
        %v4063 = vld [vmem:[%s762 + $0x3c] sm:$0xf]
        %v4064 = vld [vmem:[%s762 + $0x40] sm:$0xf]
        %v4065 = vld [vmem:[%s762 + $0x44] sm:$0x1]
        %v4066 = vld [vmem:[%s762 + $0x48] sm:$0xf]
        %v4067 = vld [vmem:[%s762 + $0x4c] sm:$0xf]
        %v4068 = vld [vmem:[%s762 + $0x50] sm:$0x1]
        %v4069 = vld [vmem:[%s762 + $0x54] sm:$0xf]
        %v4070 = vld [vmem:[%s762 + $0x58] sm:$0xf]
        %v4071 = vld [vmem:[%s762 + $0x5c] sm:$0x1]
        %v4072 = vld [vmem:[%s762 + $0x60] sm:$0xf]
        %v4073 = vld [vmem:[%s762 + $0x64] sm:$0xf]
        %v4074 = vld [vmem:[%s762 + $0x68] sm:$0x1]
        %v4075 = vld [vmem:[%s762 + $0x6c] sm:$0xf]
        %v4076 = vld [vmem:[%s762 + $0x70] sm:$0xf]
        %v4077 = vld [vmem:[%s762 + $0x74] sm:$0x1]
        %v4078 = vld [vmem:[%s762 + $0x78] sm:$0xf]
        %v4079 = vld [vmem:[%s762 + $0x7c] sm:$0xf]
        %v4080 = vld [vmem:[%s762 + $0x80] sm:$0x1]
        %v4081 = vld [vmem:[%s762 + $0x84] sm:$0xf]
        %v4082 = vld [vmem:[%s762 + $0x88] sm:$0xf]
        %v4083 = vld [vmem:[%s762 + $0x8c] sm:$0x1]
        %v4084 = vld [vmem:[%s762 + $0x90] sm:$0xf]
        %v4085 = vld [vmem:[%s762 + $0x94] sm:$0xf]
        %v4086 = vld [vmem:[%s762 + $0x98] sm:$0x1]
        %v4087 = vld [vmem:[%s762 + $0x9c] sm:$0xf]
        %v4088 = vld [vmem:[%s762 + $0xa0] sm:$0xf]
        %v4089 = vld [vmem:[%s762 + $0xa4] sm:$0x1]
        %v4090 = vld [vmem:[%s762 + $0xa8] sm:$0xf]
        %v4091 = vld [vmem:[%s762 + $0xac] sm:$0xf]
        %v4092 = vld [vmem:[%s762 + $0xb0] sm:$0x1]
        %v4093 = vld [vmem:[%s762 + $0xb4] sm:$0xf]
        %v4094 = vld [vmem:[%s762 + $0xb8] sm:$0xf]
        %v4095 = vld [vmem:[%s762 + $0xbc] sm:$0x1]
        %v4096 = vld [vmem:[%s762 + $0xc0] sm:$0xf]
        %v4097 = vld [vmem:[%s762 + $0xc4] sm:$0xf]
        %v4098 = vld [vmem:[%s762 + $0xc8] sm:$0x1]
        %v4099 = vld [vmem:[%s762 + $0xcc] sm:$0xf]
        %v4100 = vld [vmem:[%s762 + $0xd0] sm:$0xf]
        %v4101 = vld [vmem:[%s762 + $0xd4] sm:$0x1]
        %v4102 = vld [vmem:[%s762 + $0xd8] sm:$0xf]
        %v4103 = vld [vmem:[%s762 + $0xdc] sm:$0xf]
        %v4104 = vld [vmem:[%s762 + $0xe0] sm:$0x1]
        %v4105 = vld [vmem:[%s762 + $0xe4] sm:$0xf]
        %v4106 = vld [vmem:[%s762 + $0xe8] sm:$0xf]
        %v4107 = vld [vmem:[%s762 + $0xec] sm:$0x1]
        %v4108 = vld [vmem:[%s762 + $0xf0] sm:$0xf]
        %v4109 = vld [vmem:[%s762 + $0xf4] sm:$0xf]
        %v4110 = vld [vmem:[%s762 + $0xf8] sm:$0x1]
        %v4111 = vld [vmem:[%s762 + $0xfc] sm:$0xf]
        %v4112 = vld [vmem:[%s762 + $0x100] sm:$0xf]
        %v4113 = vld [vmem:[%s762 + $0x104] sm:$0x1]
        %v4114 = vld [vmem:[%s762 + $0x108] sm:$0xf]
        %v4115 = vld [vmem:[%s762 + $0x10c] sm:$0xf]
        %v4116 = vld [vmem:[%s762 + $0x110] sm:$0x1]
        %v4117 = vld [vmem:[%s762 + $0x114] sm:$0xf]
        %v4118 = vld [vmem:[%s762 + $0x118] sm:$0xf]
        %v4119 = vld [vmem:[%s762 + $0x11c] sm:$0x1]
        %v4120 = vld [vmem:[%s762 + $0x120] sm:$0xf]
        %v4121 = vld [vmem:[%s762 + $0x124] sm:$0xf]
        %v4122 = vld [vmem:[%s762 + $0x128] sm:$0x1]
        %v4123 = vld [vmem:[%s762 + $0x12c] sm:$0xf]
        %v4124 = vld [vmem:[%s762 + $0x130] sm:$0xf]
        %v4125 = vld [vmem:[%s762 + $0x134] sm:$0x1]
        %v4126 = vld [vmem:[%s762 + $0x138] sm:$0xf]
        %v4127 = vld [vmem:[%s762 + $0x13c] sm:$0xf]
        %v4128 = vld [vmem:[%s762 + $0x140] sm:$0x1]
        %v4129 = vld [vmem:[%s762 + $0x144] sm:$0xf]
        %v4130 = vld [vmem:[%s762 + $0x148] sm:$0xf]
        %v4131 = vld [vmem:[%s762 + $0x14c] sm:$0x1]
        %v4132 = vld [vmem:[%s762 + $0x150] sm:$0xf]
        %v4133 = vld [vmem:[%s762 + $0x154] sm:$0xf]
        %v4134 = vld [vmem:[%s762 + $0x158] sm:$0x1]
        %v4135 = vld [vmem:[%s762 + $0x15c] sm:$0xf]
        %v4136 = vld [vmem:[%s762 + $0x160] sm:$0xf]
        %v4137 = vld [vmem:[%s762 + $0x164] sm:$0x1]
        %v4138 = vld [vmem:[%s762 + $0x168] sm:$0xf]
        %v4139 = vld [vmem:[%s762 + $0x16c] sm:$0xf]
        %v4140 = vld [vmem:[%s762 + $0x170] sm:$0x1]
        %v4141 = vld [vmem:[%s762 + $0x174] sm:$0xf]
        %v4142 = vld [vmem:[%s762 + $0x178] sm:$0xf]
        %v4143 = vld [vmem:[%s762 + $0x17c] sm:$0x1]
        %v4145 = vshrl.u32 %v4048, 16
        %v4147 = vrot.slane %v4145, 4
        %v4148 = vshll.u32 %v4048, 16
        %v4150 = vrot.slane %v4148, 5
        %v4151 = vor.u32 %v4147, %v4150
        %v4152 = vrot.slane %v4151, 4
        %v4154 = vshll.u32 %v4049, 16
        %v4156 = vrot.slane %v4154, 5
        %v4157 = vsel %vm1172, %v4152, %v4156
        %v4158 = vshrl.u32 %v4049, 16
        %v4160 = vrot.slane %v4158, 4
        %v4161 = vor.u32 %v4160, %v4156
        %v4162 = vrot.slane %v4161, 4
        %v4164 = vshll.u32 %v4050, 16
        %v4166 = vrot.slane %v4164, 5
        %v4167 = vsel %vm1172, %v4162, %v4166
        %v4169 = vshrl.u32 %v4051, 16
        %v4171 = vrot.slane %v4169, 4
        %v4172 = vshll.u32 %v4051, 16
        %v4174 = vrot.slane %v4172, 5
        %v4175 = vor.u32 %v4171, %v4174
        %v4176 = vrot.slane %v4175, 4
        %v4178 = vshll.u32 %v4052, 16
        %v4180 = vrot.slane %v4178, 5
        %v4181 = vsel %vm1172, %v4176, %v4180
        %v4182 = vshrl.u32 %v4052, 16
        %v4184 = vrot.slane %v4182, 4
        %v4185 = vor.u32 %v4184, %v4180
        %v4186 = vrot.slane %v4185, 4
        %v4188 = vshll.u32 %v4053, 16
        %v4190 = vrot.slane %v4188, 5
        %v4191 = vsel %vm1172, %v4186, %v4190
        %v4193 = vshrl.u32 %v4054, 16
        %v4195 = vrot.slane %v4193, 4
        %v4196 = vshll.u32 %v4054, 16
        %v4198 = vrot.slane %v4196, 5
        %v4199 = vor.u32 %v4195, %v4198
        %v4200 = vrot.slane %v4199, 4
        %v4202 = vshll.u32 %v4055, 16
        %v4204 = vrot.slane %v4202, 5
        %v4205 = vsel %vm1172, %v4200, %v4204
        %v4206 = vshrl.u32 %v4055, 16
        %v4208 = vrot.slane %v4206, 4
        %v4209 = vor.u32 %v4208, %v4204
        %v4210 = vrot.slane %v4209, 4
        %v4212 = vshll.u32 %v4056, 16
        %v4214 = vrot.slane %v4212, 5
        %v4215 = vsel %vm1172, %v4210, %v4214
        %v4217 = vshrl.u32 %v4057, 16
        %v4219 = vrot.slane %v4217, 4
        %v4220 = vshll.u32 %v4057, 16
        %v4222 = vrot.slane %v4220, 5
        %v4223 = vor.u32 %v4219, %v4222
        %v4224 = vrot.slane %v4223, 4
        %v4226 = vshll.u32 %v4058, 16
        %v4228 = vrot.slane %v4226, 5
        %v4229 = vsel %vm1172, %v4224, %v4228
        %v4230 = vshrl.u32 %v4058, 16
        %v4232 = vrot.slane %v4230, 4
        %v4233 = vor.u32 %v4232, %v4228
        %v4234 = vrot.slane %v4233, 4
        %v4236 = vshll.u32 %v4059, 16
        %v4238 = vrot.slane %v4236, 5
        %v4239 = vsel %vm1172, %v4234, %v4238
        %v4241 = vshrl.u32 %v4060, 16
        %v4243 = vrot.slane %v4241, 4
        %v4244 = vshll.u32 %v4060, 16
        %v4246 = vrot.slane %v4244, 5
        %v4247 = vor.u32 %v4243, %v4246
        %v4248 = vrot.slane %v4247, 4
        %v4250 = vshll.u32 %v4061, 16
        %v4252 = vrot.slane %v4250, 5
        %v4253 = vsel %vm1172, %v4248, %v4252
        %v4254 = vshrl.u32 %v4061, 16
        %v4256 = vrot.slane %v4254, 4
        %v4257 = vor.u32 %v4256, %v4252
        %v4258 = vrot.slane %v4257, 4
        %v4260 = vshll.u32 %v4062, 16
        %v4262 = vrot.slane %v4260, 5
        %v4263 = vsel %vm1172, %v4258, %v4262
        %v4265 = vshrl.u32 %v4063, 16
        %v4267 = vrot.slane %v4265, 4
        %v4268 = vshll.u32 %v4063, 16
        %v4270 = vrot.slane %v4268, 5
        %v4271 = vor.u32 %v4267, %v4270
        %v4272 = vrot.slane %v4271, 4
        %v4274 = vshll.u32 %v4064, 16
        %v4276 = vrot.slane %v4274, 5
        %v4277 = vsel %vm1172, %v4272, %v4276
        %v4278 = vshrl.u32 %v4064, 16
        %v4280 = vrot.slane %v4278, 4
        %v4281 = vor.u32 %v4280, %v4276
        %v4282 = vrot.slane %v4281, 4
        %v4284 = vshll.u32 %v4065, 16
        %v4286 = vrot.slane %v4284, 5
        %v4287 = vsel %vm1172, %v4282, %v4286
        %v4289 = vshrl.u32 %v4066, 16
        %v4291 = vrot.slane %v4289, 4
        %v4292 = vshll.u32 %v4066, 16
        %v4294 = vrot.slane %v4292, 5
        %v4295 = vor.u32 %v4291, %v4294
        %v4296 = vrot.slane %v4295, 4
        %v4298 = vshll.u32 %v4067, 16
        %v4300 = vrot.slane %v4298, 5
        %v4301 = vsel %vm1172, %v4296, %v4300
        %v4302 = vshrl.u32 %v4067, 16
        %v4304 = vrot.slane %v4302, 4
        %v4305 = vor.u32 %v4304, %v4300
        %v4306 = vrot.slane %v4305, 4
        %v4308 = vshll.u32 %v4068, 16
        %v4310 = vrot.slane %v4308, 5
        %v4311 = vsel %vm1172, %v4306, %v4310
        %v4313 = vshrl.u32 %v4069, 16
        %v4315 = vrot.slane %v4313, 4
        %v4316 = vshll.u32 %v4069, 16
        %v4318 = vrot.slane %v4316, 5
        %v4319 = vor.u32 %v4315, %v4318
        %v4320 = vrot.slane %v4319, 4
        %v4322 = vshll.u32 %v4070, 16
        %v4324 = vrot.slane %v4322, 5
        %v4325 = vsel %vm1172, %v4320, %v4324
        %v4326 = vshrl.u32 %v4070, 16
        %v4328 = vrot.slane %v4326, 4
        %v4329 = vor.u32 %v4328, %v4324
        %v4330 = vrot.slane %v4329, 4
        %v4332 = vshll.u32 %v4071, 16
        %v4334 = vrot.slane %v4332, 5
        %v4335 = vsel %vm1172, %v4330, %v4334
        %v4337 = vshrl.u32 %v4072, 16
        %v4339 = vrot.slane %v4337, 4
        %v4340 = vshll.u32 %v4072, 16
        %v4342 = vrot.slane %v4340, 5
        %v4343 = vor.u32 %v4339, %v4342
        %v4344 = vrot.slane %v4343, 4
        %v4346 = vshll.u32 %v4073, 16
        %v4348 = vrot.slane %v4346, 5
        %v4349 = vsel %vm1172, %v4344, %v4348
        %v4350 = vshrl.u32 %v4073, 16
        %v4352 = vrot.slane %v4350, 4
        %v4353 = vor.u32 %v4352, %v4348
        %v4354 = vrot.slane %v4353, 4
        %v4356 = vshll.u32 %v4074, 16
        %v4358 = vrot.slane %v4356, 5
        %v4359 = vsel %vm1172, %v4354, %v4358
        %v4361 = vshrl.u32 %v4075, 16
        %v4363 = vrot.slane %v4361, 4
        %v4364 = vshll.u32 %v4075, 16
        %v4366 = vrot.slane %v4364, 5
        %v4367 = vor.u32 %v4363, %v4366
        %v4368 = vrot.slane %v4367, 4
        %v4370 = vshll.u32 %v4076, 16
        %v4372 = vrot.slane %v4370, 5
        %v4373 = vsel %vm1172, %v4368, %v4372
        %v4374 = vshrl.u32 %v4076, 16
        %v4376 = vrot.slane %v4374, 4
        %v4377 = vor.u32 %v4376, %v4372
        %v4378 = vrot.slane %v4377, 4
        %v4380 = vshll.u32 %v4077, 16
        %v4382 = vrot.slane %v4380, 5
        %v4383 = vsel %vm1172, %v4378, %v4382
        %v4385 = vshrl.u32 %v4078, 16
        %v4387 = vrot.slane %v4385, 4
        %v4388 = vshll.u32 %v4078, 16
        %v4390 = vrot.slane %v4388, 5
        %v4391 = vor.u32 %v4387, %v4390
        %v4392 = vrot.slane %v4391, 4
        %v4394 = vshll.u32 %v4079, 16
        %v4396 = vrot.slane %v4394, 5
        %v4397 = vsel %vm1172, %v4392, %v4396
        %v4398 = vshrl.u32 %v4079, 16
        %v4400 = vrot.slane %v4398, 4
        %v4401 = vor.u32 %v4400, %v4396
        %v4402 = vrot.slane %v4401, 4
        %v4404 = vshll.u32 %v4080, 16
        %v4406 = vrot.slane %v4404, 5
        %v4407 = vsel %vm1172, %v4402, %v4406
        %v4409 = vshrl.u32 %v4081, 16
        %v4411 = vrot.slane %v4409, 4
        %v4412 = vshll.u32 %v4081, 16
        %v4414 = vrot.slane %v4412, 5
        %v4415 = vor.u32 %v4411, %v4414
        %v4416 = vrot.slane %v4415, 4
        %v4418 = vshll.u32 %v4082, 16
        %v4420 = vrot.slane %v4418, 5
        %v4421 = vsel %vm1172, %v4416, %v4420
        %v4422 = vshrl.u32 %v4082, 16
        %v4424 = vrot.slane %v4422, 4
        %v4425 = vor.u32 %v4424, %v4420
        %v4426 = vrot.slane %v4425, 4
        %v4428 = vshll.u32 %v4083, 16
        %v4430 = vrot.slane %v4428, 5
        %v4431 = vsel %vm1172, %v4426, %v4430
        %v4433 = vshrl.u32 %v4084, 16
        %v4435 = vrot.slane %v4433, 4
        %v4436 = vshll.u32 %v4084, 16
        %v4438 = vrot.slane %v4436, 5
        %v4439 = vor.u32 %v4435, %v4438
        %v4440 = vrot.slane %v4439, 4
        %v4442 = vshll.u32 %v4085, 16
        %v4444 = vrot.slane %v4442, 5
        %v4445 = vsel %vm1172, %v4440, %v4444
        %v4446 = vshrl.u32 %v4085, 16
        %v4448 = vrot.slane %v4446, 4
        %v4449 = vor.u32 %v4448, %v4444
        %v4450 = vrot.slane %v4449, 4
        %v4452 = vshll.u32 %v4086, 16
        %v4454 = vrot.slane %v4452, 5
        %v4455 = vsel %vm1172, %v4450, %v4454
        %v4457 = vshrl.u32 %v4087, 16
        %v4459 = vrot.slane %v4457, 4
        %v4460 = vshll.u32 %v4087, 16
        %v4462 = vrot.slane %v4460, 5
        %v4463 = vor.u32 %v4459, %v4462
        %v4464 = vrot.slane %v4463, 4
        %v4466 = vshll.u32 %v4088, 16
        %v4468 = vrot.slane %v4466, 5
        %v4469 = vsel %vm1172, %v4464, %v4468
        %v4470 = vshrl.u32 %v4088, 16
        %v4472 = vrot.slane %v4470, 4
        %v4473 = vor.u32 %v4472, %v4468
        %v4474 = vrot.slane %v4473, 4
        %v4476 = vshll.u32 %v4089, 16
        %v4478 = vrot.slane %v4476, 5
        %v4479 = vsel %vm1172, %v4474, %v4478
        %v4481 = vshrl.u32 %v4090, 16
        %v4483 = vrot.slane %v4481, 4
        %v4484 = vshll.u32 %v4090, 16
        %v4486 = vrot.slane %v4484, 5
        %v4487 = vor.u32 %v4483, %v4486
        %v4488 = vrot.slane %v4487, 4
        %v4490 = vshll.u32 %v4091, 16
        %v4492 = vrot.slane %v4490, 5
        %v4493 = vsel %vm1172, %v4488, %v4492
        %v4494 = vshrl.u32 %v4091, 16
        %v4496 = vrot.slane %v4494, 4
        %v4497 = vor.u32 %v4496, %v4492
        %v4498 = vrot.slane %v4497, 4
        %v4500 = vshll.u32 %v4092, 16
        %v4502 = vrot.slane %v4500, 5
        %v4503 = vsel %vm1172, %v4498, %v4502
        %v4505 = vshrl.u32 %v4093, 16
        %v4507 = vrot.slane %v4505, 4
        %v4508 = vshll.u32 %v4093, 16
        %v4510 = vrot.slane %v4508, 5
        %v4511 = vor.u32 %v4507, %v4510
        %v4512 = vrot.slane %v4511, 4
        %v4514 = vshll.u32 %v4094, 16
        %v4516 = vrot.slane %v4514, 5
        %v4517 = vsel %vm1172, %v4512, %v4516
        %v4518 = vshrl.u32 %v4094, 16
        %v4520 = vrot.slane %v4518, 4
        %v4521 = vor.u32 %v4520, %v4516
        %v4522 = vrot.slane %v4521, 4
        %v4524 = vshll.u32 %v4095, 16
        %v4526 = vrot.slane %v4524, 5
        %v4527 = vsel %vm1172, %v4522, %v4526
        %v4529 = vshrl.u32 %v4096, 16
        %v4531 = vrot.slane %v4529, 4
        %v4532 = vshll.u32 %v4096, 16
        %v4534 = vrot.slane %v4532, 5
        %v4535 = vor.u32 %v4531, %v4534
        %v4536 = vrot.slane %v4535, 4
        %v4538 = vshll.u32 %v4097, 16
        %v4540 = vrot.slane %v4538, 5
        %v4541 = vsel %vm1172, %v4536, %v4540
        %v4542 = vshrl.u32 %v4097, 16
        %v4544 = vrot.slane %v4542, 4
        %v4545 = vor.u32 %v4544, %v4540
        %v4546 = vrot.slane %v4545, 4
        %v4548 = vshll.u32 %v4098, 16
        %v4550 = vrot.slane %v4548, 5
        %v4551 = vsel %vm1172, %v4546, %v4550
        %v4553 = vshrl.u32 %v4099, 16
        %v4555 = vrot.slane %v4553, 4
        %v4556 = vshll.u32 %v4099, 16
        %v4558 = vrot.slane %v4556, 5
        %v4559 = vor.u32 %v4555, %v4558
        %v4560 = vrot.slane %v4559, 4
        %v4562 = vshll.u32 %v4100, 16
        %v4564 = vrot.slane %v4562, 5
        %v4565 = vsel %vm1172, %v4560, %v4564
        %v4566 = vshrl.u32 %v4100, 16
        %v4568 = vrot.slane %v4566, 4
        %v4569 = vor.u32 %v4568, %v4564
        %v4570 = vrot.slane %v4569, 4
        %v4572 = vshll.u32 %v4101, 16
        %v4574 = vrot.slane %v4572, 5
        %v4575 = vsel %vm1172, %v4570, %v4574
        %v4577 = vshrl.u32 %v4102, 16
        %v4579 = vrot.slane %v4577, 4
        %v4580 = vshll.u32 %v4102, 16
        %v4582 = vrot.slane %v4580, 5
        %v4583 = vor.u32 %v4579, %v4582
        %v4584 = vrot.slane %v4583, 4
        %v4586 = vshll.u32 %v4103, 16
        %v4588 = vrot.slane %v4586, 5
        %v4589 = vsel %vm1172, %v4584, %v4588
        %v4590 = vshrl.u32 %v4103, 16
        %v4592 = vrot.slane %v4590, 4
        %v4593 = vor.u32 %v4592, %v4588
        %v4594 = vrot.slane %v4593, 4
        %v4596 = vshll.u32 %v4104, 16
        %v4598 = vrot.slane %v4596, 5
        %v4599 = vsel %vm1172, %v4594, %v4598
        %v4601 = vshrl.u32 %v4105, 16
        %v4603 = vrot.slane %v4601, 4
        %v4604 = vshll.u32 %v4105, 16
        %v4606 = vrot.slane %v4604, 5
        %v4607 = vor.u32 %v4603, %v4606
        %v4608 = vrot.slane %v4607, 4
        %v4610 = vshll.u32 %v4106, 16
        %v4612 = vrot.slane %v4610, 5
        %v4613 = vsel %vm1172, %v4608, %v4612
        %v4614 = vshrl.u32 %v4106, 16
        %v4616 = vrot.slane %v4614, 4
        %v4617 = vor.u32 %v4616, %v4612
        %v4618 = vrot.slane %v4617, 4
        %v4620 = vshll.u32 %v4107, 16
        %v4622 = vrot.slane %v4620, 5
        %v4623 = vsel %vm1172, %v4618, %v4622
        %v4625 = vshrl.u32 %v4108, 16
        %v4627 = vrot.slane %v4625, 4
        %v4628 = vshll.u32 %v4108, 16
        %v4630 = vrot.slane %v4628, 5
        %v4631 = vor.u32 %v4627, %v4630
        %v4632 = vrot.slane %v4631, 4
        %v4634 = vshll.u32 %v4109, 16
        %v4636 = vrot.slane %v4634, 5
        %v4637 = vsel %vm1172, %v4632, %v4636
        %v4638 = vshrl.u32 %v4109, 16
        %v4640 = vrot.slane %v4638, 4
        %v4641 = vor.u32 %v4640, %v4636
        %v4642 = vrot.slane %v4641, 4
        %v4644 = vshll.u32 %v4110, 16
        %v4646 = vrot.slane %v4644, 5
        %v4647 = vsel %vm1172, %v4642, %v4646
        %v4649 = vshrl.u32 %v4111, 16
        %v4651 = vrot.slane %v4649, 4
        %v4652 = vshll.u32 %v4111, 16
        %v4654 = vrot.slane %v4652, 5
        %v4655 = vor.u32 %v4651, %v4654
        %v4656 = vrot.slane %v4655, 4
        %v4658 = vshll.u32 %v4112, 16
        %v4660 = vrot.slane %v4658, 5
        %v4661 = vsel %vm1172, %v4656, %v4660
        %v4662 = vshrl.u32 %v4112, 16
        %v4664 = vrot.slane %v4662, 4
        %v4665 = vor.u32 %v4664, %v4660
        %v4666 = vrot.slane %v4665, 4
        %v4668 = vshll.u32 %v4113, 16
        %v4670 = vrot.slane %v4668, 5
        %v4671 = vsel %vm1172, %v4666, %v4670
        %v4673 = vshrl.u32 %v4114, 16
        %v4675 = vrot.slane %v4673, 4
        %v4676 = vshll.u32 %v4114, 16
        %v4678 = vrot.slane %v4676, 5
        %v4679 = vor.u32 %v4675, %v4678
        %v4680 = vrot.slane %v4679, 4
        %v4682 = vshll.u32 %v4115, 16
        %v4684 = vrot.slane %v4682, 5
        %v4685 = vsel %vm1172, %v4680, %v4684
        %v4686 = vshrl.u32 %v4115, 16
        %v4688 = vrot.slane %v4686, 4
        %v4689 = vor.u32 %v4688, %v4684
        %v4690 = vrot.slane %v4689, 4
        %v4692 = vshll.u32 %v4116, 16
        %v4694 = vrot.slane %v4692, 5
        %v4695 = vsel %vm1172, %v4690, %v4694
        %v4697 = vshrl.u32 %v4117, 16
        %v4699 = vrot.slane %v4697, 4
        %v4700 = vshll.u32 %v4117, 16
        %v4702 = vrot.slane %v4700, 5
        %v4703 = vor.u32 %v4699, %v4702
        %v4704 = vrot.slane %v4703, 4
        %v4706 = vshll.u32 %v4118, 16
        %v4708 = vrot.slane %v4706, 5
        %v4709 = vsel %vm1172, %v4704, %v4708
        %v4710 = vshrl.u32 %v4118, 16
        %v4712 = vrot.slane %v4710, 4
        %v4713 = vor.u32 %v4712, %v4708
        %v4714 = vrot.slane %v4713, 4
        %v4716 = vshll.u32 %v4119, 16
        %v4718 = vrot.slane %v4716, 5
        %v4719 = vsel %vm1172, %v4714, %v4718
        %v4721 = vshrl.u32 %v4120, 16
        %v4723 = vrot.slane %v4721, 4
        %v4724 = vshll.u32 %v4120, 16
        %v4726 = vrot.slane %v4724, 5
        %v4727 = vor.u32 %v4723, %v4726
        %v4728 = vrot.slane %v4727, 4
        %v4730 = vshll.u32 %v4121, 16
        %v4732 = vrot.slane %v4730, 5
        %v4733 = vsel %vm1172, %v4728, %v4732
        %v4734 = vshrl.u32 %v4121, 16
        %v4736 = vrot.slane %v4734, 4
        %v4737 = vor.u32 %v4736, %v4732
        %v4738 = vrot.slane %v4737, 4
        %v4740 = vshll.u32 %v4122, 16
        %v4742 = vrot.slane %v4740, 5
        %v4743 = vsel %vm1172, %v4738, %v4742
        %v4745 = vshrl.u32 %v4123, 16
        %v4747 = vrot.slane %v4745, 4
        %v4748 = vshll.u32 %v4123, 16
        %v4750 = vrot.slane %v4748, 5
        %v4751 = vor.u32 %v4747, %v4750
        %v4752 = vrot.slane %v4751, 4
        %v4754 = vshll.u32 %v4124, 16
        %v4756 = vrot.slane %v4754, 5
        %v4757 = vsel %vm1172, %v4752, %v4756
        %v4758 = vshrl.u32 %v4124, 16
        %v4760 = vrot.slane %v4758, 4
        %v4761 = vor.u32 %v4760, %v4756
        %v4762 = vrot.slane %v4761, 4
        %v4764 = vshll.u32 %v4125, 16
        %v4766 = vrot.slane %v4764, 5
        %v4767 = vsel %vm1172, %v4762, %v4766
        %v4769 = vshrl.u32 %v4126, 16
        %v4771 = vrot.slane %v4769, 4
        %v4772 = vshll.u32 %v4126, 16
        %v4774 = vrot.slane %v4772, 5
        %v4775 = vor.u32 %v4771, %v4774
        %v4776 = vrot.slane %v4775, 4
        %v4778 = vshll.u32 %v4127, 16
        %v4780 = vrot.slane %v4778, 5
        %v4781 = vsel %vm1172, %v4776, %v4780
        %v4782 = vshrl.u32 %v4127, 16
        %v4784 = vrot.slane %v4782, 4
        %v4785 = vor.u32 %v4784, %v4780
        %v4786 = vrot.slane %v4785, 4
        %v4788 = vshll.u32 %v4128, 16
        %v4790 = vrot.slane %v4788, 5
        %v4791 = vsel %vm1172, %v4786, %v4790
        %v4793 = vshrl.u32 %v4129, 16
        %v4795 = vrot.slane %v4793, 4
        %v4796 = vshll.u32 %v4129, 16
        %v4798 = vrot.slane %v4796, 5
        %v4799 = vor.u32 %v4795, %v4798
        %v4800 = vrot.slane %v4799, 4
        %v4802 = vshll.u32 %v4130, 16
        %v4804 = vrot.slane %v4802, 5
        %v4805 = vsel %vm1172, %v4800, %v4804
        %v4806 = vshrl.u32 %v4130, 16
        %v4808 = vrot.slane %v4806, 4
        %v4809 = vor.u32 %v4808, %v4804
        %v4810 = vrot.slane %v4809, 4
        %v4812 = vshll.u32 %v4131, 16
        %v4814 = vrot.slane %v4812, 5
        %v4815 = vsel %vm1172, %v4810, %v4814
        %v4817 = vshrl.u32 %v4132, 16
        %v4819 = vrot.slane %v4817, 4
        %v4820 = vshll.u32 %v4132, 16
        %v4822 = vrot.slane %v4820, 5
        %v4823 = vor.u32 %v4819, %v4822
        %v4824 = vrot.slane %v4823, 4
        %v4826 = vshll.u32 %v4133, 16
        %v4828 = vrot.slane %v4826, 5
        %v4829 = vsel %vm1172, %v4824, %v4828
        %v4830 = vshrl.u32 %v4133, 16
        %v4832 = vrot.slane %v4830, 4
        %v4833 = vor.u32 %v4832, %v4828
        %v4834 = vrot.slane %v4833, 4
        %v4836 = vshll.u32 %v4134, 16
        %v4838 = vrot.slane %v4836, 5
        %v4839 = vsel %vm1172, %v4834, %v4838
        %v4841 = vshrl.u32 %v4135, 16
        %v4843 = vrot.slane %v4841, 4
        %v4844 = vshll.u32 %v4135, 16
        %v4846 = vrot.slane %v4844, 5
        %v4847 = vor.u32 %v4843, %v4846
        %v4848 = vrot.slane %v4847, 4
        %v4850 = vshll.u32 %v4136, 16
        %v4852 = vrot.slane %v4850, 5
        %v4853 = vsel %vm1172, %v4848, %v4852
        %v4854 = vshrl.u32 %v4136, 16
        %v4856 = vrot.slane %v4854, 4
        %v4857 = vor.u32 %v4856, %v4852
        %v4858 = vrot.slane %v4857, 4
        %v4860 = vshll.u32 %v4137, 16
        %v4862 = vrot.slane %v4860, 5
        %v4863 = vsel %vm1172, %v4858, %v4862
        %v4865 = vshrl.u32 %v4138, 16
        %v4867 = vrot.slane %v4865, 4
        %v4868 = vshll.u32 %v4138, 16
        %v4870 = vrot.slane %v4868, 5
        %v4871 = vor.u32 %v4867, %v4870
        %v4872 = vrot.slane %v4871, 4
        %v4874 = vshll.u32 %v4139, 16
        %v4876 = vrot.slane %v4874, 5
        %v4877 = vsel %vm1172, %v4872, %v4876
        %v4878 = vshrl.u32 %v4139, 16
        %v4880 = vrot.slane %v4878, 4
        %v4881 = vor.u32 %v4880, %v4876
        %v4882 = vrot.slane %v4881, 4
        %v4884 = vshll.u32 %v4140, 16
        %v4886 = vrot.slane %v4884, 5
        %v4887 = vsel %vm1172, %v4882, %v4886
        %v4889 = vshrl.u32 %v4141, 16
        %v4891 = vrot.slane %v4889, 4
        %v4892 = vshll.u32 %v4141, 16
        %v4894 = vrot.slane %v4892, 5
        %v4895 = vor.u32 %v4891, %v4894
        %v4896 = vrot.slane %v4895, 4
        %v4898 = vshll.u32 %v4142, 16
        %v4900 = vrot.slane %v4898, 5
        %v4901 = vsel %vm1172, %v4896, %v4900
        %v4902 = vshrl.u32 %v4142, 16
        %v4904 = vrot.slane %v4902, 4
        %v4905 = vor.u32 %v4904, %v4900
        %v4906 = vrot.slane %v4905, 4
        %v4908 = vshll.u32 %v4143, 16
        %v4910 = vrot.slane %v4908, 5
        %v4911 = vsel %vm1172, %v4906, %v4910
        %s4912 = scalar_lea.vmem %s1, 8
        %v4913 = vld [vmem:[%s4912] sm:$0x3]
        %v4914 = vunpack.c.l.b16 %v4157
        %v4915 = vunpack.c.l.b16 %v4167
        %v4916 = vunpack.c.l.b16 %v4181
        %v4917 = vunpack.c.l.b16 %v4191
        %v4918 = vunpack.c.l.b16 %v4205
        %v4919 = vunpack.c.l.b16 %v4215
        %v4920 = vunpack.c.l.b16 %v4229
        %v4921 = vunpack.c.l.b16 %v4239
        %v4922 = vunpack.c.l.b16 %v4253
        %v4923 = vunpack.c.l.b16 %v4263
        %v4924 = vunpack.c.l.b16 %v4277
        %v4925 = vunpack.c.l.b16 %v4287
        %v4926 = vunpack.c.l.b16 %v4301
        %v4927 = vunpack.c.l.b16 %v4311
        %v4928 = vunpack.c.l.b16 %v4325
        %v4929 = vunpack.c.l.b16 %v4335
        %v4930 = vunpack.c.l.b16 %v4349
        %v4931 = vunpack.c.l.b16 %v4359
        %v4932 = vunpack.c.l.b16 %v4373
        %v4933 = vunpack.c.l.b16 %v4383
        %v4934 = vunpack.c.l.b16 %v4397
        %v4935 = vunpack.c.l.b16 %v4407
        %v4936 = vunpack.c.l.b16 %v4421
        %v4937 = vunpack.c.l.b16 %v4431
        %v4938 = vunpack.c.l.b16 %v4445
        %v4939 = vunpack.c.l.b16 %v4455
        %v4940 = vunpack.c.l.b16 %v4469
        %v4941 = vunpack.c.l.b16 %v4479
        %v4942 = vunpack.c.l.b16 %v4493
        %v4943 = vunpack.c.l.b16 %v4503
        %v4944 = vunpack.c.l.b16 %v4517
        %v4945 = vunpack.c.l.b16 %v4527
        %v4946 = vunpack.c.l.b16 %v4541
        %v4947 = vunpack.c.l.b16 %v4551
        %v4948 = vunpack.c.l.b16 %v4565
        %v4949 = vunpack.c.l.b16 %v4575
        %v4950 = vunpack.c.l.b16 %v4589
        %v4951 = vunpack.c.l.b16 %v4599
        %v4952 = vunpack.c.l.b16 %v4613
        %v4953 = vunpack.c.l.b16 %v4623
        %v4954 = vunpack.c.l.b16 %v4637
        %v4955 = vunpack.c.l.b16 %v4647
        %v4956 = vunpack.c.l.b16 %v4661
        %v4957 = vunpack.c.l.b16 %v4671
        %v4958 = vunpack.c.l.b16 %v4685
        %v4959 = vunpack.c.l.b16 %v4695
        %v4960 = vunpack.c.l.b16 %v4709
        %v4961 = vunpack.c.l.b16 %v4719
        %v4962 = vunpack.c.l.b16 %v4733
        %v4963 = vunpack.c.l.b16 %v4743
        %v4964 = vunpack.c.l.b16 %v4757
        %v4965 = vunpack.c.l.b16 %v4767
        %v4966 = vunpack.c.l.b16 %v4781
        %v4967 = vunpack.c.l.b16 %v4791
        %v4968 = vunpack.c.l.b16 %v4805
        %v4969 = vunpack.c.l.b16 %v4815
        %v4970 = vunpack.c.l.b16 %v4829
        %v4971 = vunpack.c.l.b16 %v4839
        %v4972 = vunpack.c.l.b16 %v4853
        %v4973 = vunpack.c.l.b16 %v4863
        %v4974 = vunpack.c.l.b16 %v4877
        %v4975 = vunpack.c.l.b16 %v4887
        %v4976 = vunpack.c.l.b16 %v4901
        %v4977 = vunpack.c.l.b16 %v4911
        %v4978 = vpack.c.b16 %v4915, %v4914
        %v4979 = vpack.c.b16 %v4917, %v4916
        %v4980 = vpack.c.b16 %v4919, %v4918
        %v4981 = vpack.c.b16 %v4921, %v4920
        %v4982 = vpack.c.b16 %v4923, %v4922
        %v4983 = vpack.c.b16 %v4925, %v4924
        %v4984 = vpack.c.b16 %v4927, %v4926
        %v4985 = vpack.c.b16 %v4929, %v4928
        %v4986 = vpack.c.b16 %v4931, %v4930
        %v4987 = vpack.c.b16 %v4933, %v4932
        %v4988 = vpack.c.b16 %v4935, %v4934
        %v4989 = vpack.c.b16 %v4937, %v4936
        %v4990 = vpack.c.b16 %v4939, %v4938
        %v4991 = vpack.c.b16 %v4941, %v4940
        %v4992 = vpack.c.b16 %v4943, %v4942
        %v4993 = vpack.c.b16 %v4945, %v4944
        %v4994 = vpack.c.b16 %v4947, %v4946
        %v4995 = vpack.c.b16 %v4949, %v4948
        %v4996 = vpack.c.b16 %v4951, %v4950
        %v4997 = vpack.c.b16 %v4953, %v4952
        %v4998 = vpack.c.b16 %v4955, %v4954
        %v4999 = vpack.c.b16 %v4957, %v4956
        %v5000 = vpack.c.b16 %v4959, %v4958
        %v5001 = vpack.c.b16 %v4961, %v4960
        %v5002 = vpack.c.b16 %v4963, %v4962
        %v5003 = vpack.c.b16 %v4965, %v4964
        %v5004 = vpack.c.b16 %v4967, %v4966
        %v5005 = vpack.c.b16 %v4969, %v4968
        %v5006 = vpack.c.b16 %v4971, %v4970
        %v5007 = vpack.c.b16 %v4973, %v4972
        %v5008 = vpack.c.b16 %v4975, %v4974
        %v5009 = vpack.c.b16 %v4977, %v4976
        %v5011 = vsel %vm2039, %v4978, 0
        %v5014 = vsel %vm2039, %v4979, 0
        %v5017 = vsel %vm2039, %v4980, 0
        %v5020 = vsel %vm2039, %v4981, 0
        %v5023 = vsel %vm2039, %v4982, 0
        %v5026 = vsel %vm2039, %v4983, 0
        %v5029 = vsel %vm2039, %v4984, 0
        %v5032 = vsel %vm2039, %v4985, 0
        %v5035 = vsel %vm2039, %v4986, 0
        %v5038 = vsel %vm2039, %v4987, 0
        %v5041 = vsel %vm2039, %v4988, 0
        %v5044 = vsel %vm2039, %v4989, 0
        %v5047 = vsel %vm2039, %v4990, 0
        %v5050 = vsel %vm2039, %v4991, 0
        %v5053 = vsel %vm2039, %v4992, 0
        %v5056 = vsel %vm2039, %v4993, 0
        %v5059 = vsel %vm2039, %v4994, 0
        %v5062 = vsel %vm2039, %v4995, 0
        %v5065 = vsel %vm2039, %v4996, 0
        %v5068 = vsel %vm2039, %v4997, 0
        %v5071 = vsel %vm2039, %v4998, 0
        %v5074 = vsel %vm2039, %v4999, 0
        %v5077 = vsel %vm2039, %v5000, 0
        %v5080 = vsel %vm2039, %v5001, 0
        %v5083 = vsel %vm2039, %v5002, 0
        %v5086 = vsel %vm2039, %v5003, 0
        %v5089 = vsel %vm2039, %v5004, 0
        %v5092 = vsel %vm2039, %v5005, 0
        %v5095 = vsel %vm2039, %v5006, 0
        %v5098 = vsel %vm2039, %v5007, 0
        %v5101 = vsel %vm2039, %v5008, 0
        %v5104 = vsel %vm2039, %v5009, 0
        %v5107 = vsel %vm2136, %v4913, 0
        %5109 = vmatpush.bf16.msra.mxu0 0
        %5110 = vmatpush.bf16.msra.mxu0 0
        %5111 = vmatpush.bf16.msra.mxu0 0
        %5112 = vmatpush.bf16.msra.mxu0 0
        %5113 = vmatpush.bf16.msra.mxu0 0
        %5114 = vmatpush.bf16.msra.mxu0 0
        %5115 = vmatpush.bf16.msra.mxu0 0
        %5116 = vmatpush.bf16.msra.mxu0 %v5107
        %5117 = vmatmul.bf16.gmra.mxu0 %v5011
        %v5118 = vpop.f32.mrf.mxu0
        %v5119 = vadd.f32 0.0, %v5118
        %v5120 = vpop.f32.mrf.mxu0
        %v5121 = vadd.f32 0.0, %v5120
        %5122 = vmatmul.bf16.gmra.mxu0 %v5014
        %v5123 = vpop.f32.mrf.mxu0
        %v5124 = vadd.f32 0.0, %v5123
        %v5125 = vpop.f32.mrf.mxu0
        %v5126 = vadd.f32 0.0, %v5125
        %5127 = vmatmul.bf16.gmra.mxu0 %v5017
        %v5128 = vpop.f32.mrf.mxu0
        %v5129 = vadd.f32 0.0, %v5128
        %v5130 = vpop.f32.mrf.mxu0
        %v5131 = vadd.f32 0.0, %v5130
        %5132 = vmatmul.bf16.gmra.mxu0 %v5020
        %v5133 = vpop.f32.mrf.mxu0
        %v5134 = vadd.f32 0.0, %v5133
        %v5135 = vpop.f32.mrf.mxu0
        %v5136 = vadd.f32 0.0, %v5135
        %5137 = vmatmul.bf16.gmra.mxu0 %v5023
        %v5138 = vpop.f32.mrf.mxu0
        %v5139 = vadd.f32 0.0, %v5138
        %v5140 = vpop.f32.mrf.mxu0
        %v5141 = vadd.f32 0.0, %v5140
        %5142 = vmatmul.bf16.gmra.mxu0 %v5026
        %v5143 = vpop.f32.mrf.mxu0
        %v5144 = vadd.f32 0.0, %v5143
        %v5145 = vpop.f32.mrf.mxu0
        %v5146 = vadd.f32 0.0, %v5145
        %5147 = vmatmul.bf16.gmra.mxu0 %v5029
        %v5148 = vpop.f32.mrf.mxu0
        %v5149 = vadd.f32 0.0, %v5148
        %v5150 = vpop.f32.mrf.mxu0
        %v5151 = vadd.f32 0.0, %v5150
        %5152 = vmatmul.bf16.gmra.mxu0 %v5032
        %v5153 = vpop.f32.mrf.mxu0
        %v5154 = vadd.f32 0.0, %v5153
        %v5155 = vpop.f32.mrf.mxu0
        %v5156 = vadd.f32 0.0, %v5155
        %5157 = vmatmul.bf16.gmra.mxu0 %v5035
        %v5158 = vpop.f32.mrf.mxu0
        %v5159 = vadd.f32 0.0, %v5158
        %v5160 = vpop.f32.mrf.mxu0
        %v5161 = vadd.f32 0.0, %v5160
        %5162 = vmatmul.bf16.gmra.mxu0 %v5038
        %v5163 = vpop.f32.mrf.mxu0
        %v5164 = vadd.f32 0.0, %v5163
        %v5165 = vpop.f32.mrf.mxu0
        %v5166 = vadd.f32 0.0, %v5165
        %5167 = vmatmul.bf16.gmra.mxu0 %v5041
        %v5168 = vpop.f32.mrf.mxu0
        %v5169 = vadd.f32 0.0, %v5168
        %v5170 = vpop.f32.mrf.mxu0
        %v5171 = vadd.f32 0.0, %v5170
        %5172 = vmatmul.bf16.gmra.mxu0 %v5044
        %v5173 = vpop.f32.mrf.mxu0
        %v5174 = vadd.f32 0.0, %v5173
        %v5175 = vpop.f32.mrf.mxu0
        %v5176 = vadd.f32 0.0, %v5175
        %5177 = vmatmul.bf16.gmra.mxu0 %v5047
        %v5178 = vpop.f32.mrf.mxu0
        %v5179 = vadd.f32 0.0, %v5178
        %v5180 = vpop.f32.mrf.mxu0
        %v5181 = vadd.f32 0.0, %v5180
        %5182 = vmatmul.bf16.gmra.mxu0 %v5050
        %v5183 = vpop.f32.mrf.mxu0
        %v5184 = vadd.f32 0.0, %v5183
        %v5185 = vpop.f32.mrf.mxu0
        %v5186 = vadd.f32 0.0, %v5185
        %5187 = vmatmul.bf16.gmra.mxu0 %v5053
        %v5188 = vpop.f32.mrf.mxu0
        %v5189 = vadd.f32 0.0, %v5188
        %v5190 = vpop.f32.mrf.mxu0
        %v5191 = vadd.f32 0.0, %v5190
        %5192 = vmatmul.bf16.gmra.mxu0 %v5056
        %v5193 = vpop.f32.mrf.mxu0
        %v5194 = vadd.f32 0.0, %v5193
        %v5195 = vpop.f32.mrf.mxu0
        %v5196 = vadd.f32 0.0, %v5195
        %5197 = vmatmul.bf16.gmra.mxu0 %v5059
        %v5198 = vpop.f32.mrf.mxu0
        %v5199 = vadd.f32 0.0, %v5198
        %v5200 = vpop.f32.mrf.mxu0
        %v5201 = vadd.f32 0.0, %v5200
        %5202 = vmatmul.bf16.gmra.mxu0 %v5062
        %v5203 = vpop.f32.mrf.mxu0
        %v5204 = vadd.f32 0.0, %v5203
        %v5205 = vpop.f32.mrf.mxu0
        %v5206 = vadd.f32 0.0, %v5205
        %5207 = vmatmul.bf16.gmra.mxu0 %v5065
        %v5208 = vpop.f32.mrf.mxu0
        %v5209 = vadd.f32 0.0, %v5208
        %v5210 = vpop.f32.mrf.mxu0
        %v5211 = vadd.f32 0.0, %v5210
        %5212 = vmatmul.bf16.gmra.mxu0 %v5068
        %v5213 = vpop.f32.mrf.mxu0
        %v5214 = vadd.f32 0.0, %v5213
        %v5215 = vpop.f32.mrf.mxu0
        %v5216 = vadd.f32 0.0, %v5215
        %5217 = vmatmul.bf16.gmra.mxu0 %v5071
        %v5218 = vpop.f32.mrf.mxu0
        %v5219 = vadd.f32 0.0, %v5218
        %v5220 = vpop.f32.mrf.mxu0
        %v5221 = vadd.f32 0.0, %v5220
        %5222 = vmatmul.bf16.gmra.mxu0 %v5074
        %v5223 = vpop.f32.mrf.mxu0
        %v5224 = vadd.f32 0.0, %v5223
        %v5225 = vpop.f32.mrf.mxu0
        %v5226 = vadd.f32 0.0, %v5225
        %5227 = vmatmul.bf16.gmra.mxu0 %v5077
        %v5228 = vpop.f32.mrf.mxu0
        %v5229 = vadd.f32 0.0, %v5228
        %v5230 = vpop.f32.mrf.mxu0
        %v5231 = vadd.f32 0.0, %v5230
        %5232 = vmatmul.bf16.gmra.mxu0 %v5080
        %v5233 = vpop.f32.mrf.mxu0
        %v5234 = vadd.f32 0.0, %v5233
        %v5235 = vpop.f32.mrf.mxu0
        %v5236 = vadd.f32 0.0, %v5235
        %5237 = vmatmul.bf16.gmra.mxu0 %v5083
        %v5238 = vpop.f32.mrf.mxu0
        %v5239 = vadd.f32 0.0, %v5238
        %v5240 = vpop.f32.mrf.mxu0
        %v5241 = vadd.f32 0.0, %v5240
        %5242 = vmatmul.bf16.gmra.mxu0 %v5086
        %v5243 = vpop.f32.mrf.mxu0
        %v5244 = vadd.f32 0.0, %v5243
        %v5245 = vpop.f32.mrf.mxu0
        %v5246 = vadd.f32 0.0, %v5245
        %5247 = vmatmul.bf16.gmra.mxu0 %v5089
        %v5248 = vpop.f32.mrf.mxu0
        %v5249 = vadd.f32 0.0, %v5248
        %v5250 = vpop.f32.mrf.mxu0
        %v5251 = vadd.f32 0.0, %v5250
        %5252 = vmatmul.bf16.gmra.mxu0 %v5092
        %v5253 = vpop.f32.mrf.mxu0
        %v5254 = vadd.f32 0.0, %v5253
        %v5255 = vpop.f32.mrf.mxu0
        %v5256 = vadd.f32 0.0, %v5255
        %5257 = vmatmul.bf16.gmra.mxu0 %v5095
        %v5258 = vpop.f32.mrf.mxu0
        %v5259 = vadd.f32 0.0, %v5258
        %v5260 = vpop.f32.mrf.mxu0
        %v5261 = vadd.f32 0.0, %v5260
        %5262 = vmatmul.bf16.gmra.mxu0 %v5098
        %v5263 = vpop.f32.mrf.mxu0
        %v5264 = vadd.f32 0.0, %v5263
        %v5265 = vpop.f32.mrf.mxu0
        %v5266 = vadd.f32 0.0, %v5265
        %5267 = vmatmul.bf16.gmra.mxu0 %v5101
        %v5268 = vpop.f32.mrf.mxu0
        %v5269 = vadd.f32 0.0, %v5268
        %v5270 = vpop.f32.mrf.mxu0
        %v5271 = vadd.f32 0.0, %v5270
        %5272 = vmatmul.bf16.gmra.mxu0 %v5104
        %v5273 = vpop.f32.mrf.mxu0
        %v5274 = vadd.f32 0.0, %v5273
        %v5275 = vpop.f32.mrf.mxu0
        %v5276 = vadd.f32 0.0, %v5275
        %5277 = vdwg.mxu0
        %v5278 = vadd.f32 %v3984, %v5119
        %v5279 = vadd.f32 %v3985, %v5121
        %v5280 = vadd.f32 %v3986, %v5124
        %v5281 = vadd.f32 %v3987, %v5126
        %v5282 = vadd.f32 %v3988, %v5129
        %v5283 = vadd.f32 %v3989, %v5131
        %v5284 = vadd.f32 %v3990, %v5134
        %v5285 = vadd.f32 %v3991, %v5136
        %v5286 = vadd.f32 %v3992, %v5139
        %v5287 = vadd.f32 %v3993, %v5141
        %v5288 = vadd.f32 %v3994, %v5144
        %v5289 = vadd.f32 %v3995, %v5146
        %v5290 = vadd.f32 %v3996, %v5149
        %v5291 = vadd.f32 %v3997, %v5151
        %v5292 = vadd.f32 %v3998, %v5154
        %v5293 = vadd.f32 %v3999, %v5156
        %v5294 = vadd.f32 %v4000, %v5159
        %v5295 = vadd.f32 %v4001, %v5161
        %v5296 = vadd.f32 %v4002, %v5164
        %v5297 = vadd.f32 %v4003, %v5166
        %v5298 = vadd.f32 %v4004, %v5169
        %v5299 = vadd.f32 %v4005, %v5171
        %v5300 = vadd.f32 %v4006, %v5174
        %v5301 = vadd.f32 %v4007, %v5176
        %v5302 = vadd.f32 %v4008, %v5179
        %v5303 = vadd.f32 %v4009, %v5181
        %v5304 = vadd.f32 %v4010, %v5184
        %v5305 = vadd.f32 %v4011, %v5186
        %v5306 = vadd.f32 %v4012, %v5189
        %v5307 = vadd.f32 %v4013, %v5191
        %v5308 = vadd.f32 %v4014, %v5194
        %v5309 = vadd.f32 %v4015, %v5196
        %v5310 = vadd.f32 %v4016, %v5199
        %v5311 = vadd.f32 %v4017, %v5201
        %v5312 = vadd.f32 %v4018, %v5204
        %v5313 = vadd.f32 %v4019, %v5206
        %v5314 = vadd.f32 %v4020, %v5209
        %v5315 = vadd.f32 %v4021, %v5211
        %v5316 = vadd.f32 %v4022, %v5214
        %v5317 = vadd.f32 %v4023, %v5216
        %v5318 = vadd.f32 %v4024, %v5219
        %v5319 = vadd.f32 %v4025, %v5221
        %v5320 = vadd.f32 %v4026, %v5224
        %v5321 = vadd.f32 %v4027, %v5226
        %v5322 = vadd.f32 %v4028, %v5229
        %v5323 = vadd.f32 %v4029, %v5231
        %v5324 = vadd.f32 %v4030, %v5234
        %v5325 = vadd.f32 %v4031, %v5236
        %v5326 = vadd.f32 %v4032, %v5239
        %v5327 = vadd.f32 %v4033, %v5241
        %v5328 = vadd.f32 %v4034, %v5244
        %v5329 = vadd.f32 %v4035, %v5246
        %v5330 = vadd.f32 %v4036, %v5249
        %v5331 = vadd.f32 %v4037, %v5251
        %v5332 = vadd.f32 %v4038, %v5254
        %v5333 = vadd.f32 %v4039, %v5256
        %v5334 = vadd.f32 %v4040, %v5259
        %v5335 = vadd.f32 %v4041, %v5261
        %v5336 = vadd.f32 %v4042, %v5264
        %v5337 = vadd.f32 %v4043, %v5266
        %v5338 = vadd.f32 %v4044, %v5269
        %v5339 = vadd.f32 %v4045, %v5271
        %v5340 = vadd.f32 %v4046, %v5274
        %v5341 = vadd.f32 %v4047, %v5276
        %v5342 = vld [vmem:[%s762] sm:$0xe]
        %v5343 = vld [vmem:[%s762 + $0xc] sm:$0xe]
        %v5344 = vld [vmem:[%s762 + $0x18] sm:$0xe]
        %v5345 = vld [vmem:[%s762 + $0x24] sm:$0xe]
        %v5346 = vld [vmem:[%s762 + $0x30] sm:$0xe]
        %v5347 = vld [vmem:[%s762 + $0x3c] sm:$0xe]
        %v5348 = vld [vmem:[%s762 + $0x48] sm:$0xe]
        %v5349 = vld [vmem:[%s762 + $0x54] sm:$0xe]
        %v5350 = vld [vmem:[%s762 + $0x60] sm:$0xe]
        %v5351 = vld [vmem:[%s762 + $0x6c] sm:$0xe]
        %v5352 = vld [vmem:[%s762 + $0x78] sm:$0xe]
        %v5353 = vld [vmem:[%s762 + $0x84] sm:$0xe]
        %v5354 = vld [vmem:[%s762 + $0x90] sm:$0xe]
        %v5355 = vld [vmem:[%s762 + $0x9c] sm:$0xe]
        %v5356 = vld [vmem:[%s762 + $0xa8] sm:$0xe]
        %v5357 = vld [vmem:[%s762 + $0xb4] sm:$0xe]
        %v5358 = vld [vmem:[%s762 + $0xc0] sm:$0xe]
        %v5359 = vld [vmem:[%s762 + $0xcc] sm:$0xe]
        %v5360 = vld [vmem:[%s762 + $0xd8] sm:$0xe]
        %v5361 = vld [vmem:[%s762 + $0xe4] sm:$0xe]
        %v5362 = vld [vmem:[%s762 + $0xf0] sm:$0xe]
        %v5363 = vld [vmem:[%s762 + $0xfc] sm:$0xe]
        %v5364 = vld [vmem:[%s762 + $0x108] sm:$0xe]
        %v5365 = vld [vmem:[%s762 + $0x114] sm:$0xe]
        %v5366 = vld [vmem:[%s762 + $0x120] sm:$0xe]
        %v5367 = vld [vmem:[%s762 + $0x12c] sm:$0xe]
        %v5368 = vld [vmem:[%s762 + $0x138] sm:$0xe]
        %v5369 = vld [vmem:[%s762 + $0x144] sm:$0xe]
        %v5370 = vld [vmem:[%s762 + $0x150] sm:$0xe]
        %v5371 = vld [vmem:[%s762 + $0x15c] sm:$0xe]
        %v5372 = vld [vmem:[%s762 + $0x168] sm:$0xe]
        %v5373 = vld [vmem:[%s762 + $0x174] sm:$0xe]
        %v5470 = vrot.slane %v5342, 5
        %v5471 = vrot.slane %v5470, 4
        %v5472 = vrot.slane %v4049, 5
        %v5473 = vsel %vm2835, %v5471, %v5472
        %v5474 = vrot.slane %v5472, 4
        %v5475 = vrot.slane %v4050, 5
        %v5476 = vsel %vm2835, %v5474, %v5475
        %v5477 = vrot.slane %v5343, 5
        %v5478 = vrot.slane %v5477, 4
        %v5479 = vrot.slane %v4052, 5
        %v5480 = vsel %vm2835, %v5478, %v5479
        %v5481 = vrot.slane %v5479, 4
        %v5482 = vrot.slane %v4053, 5
        %v5483 = vsel %vm2835, %v5481, %v5482
        %v5484 = vrot.slane %v5344, 5
        %v5485 = vrot.slane %v5484, 4
        %v5486 = vrot.slane %v4055, 5
        %v5487 = vsel %vm2835, %v5485, %v5486
        %v5488 = vrot.slane %v5486, 4
        %v5489 = vrot.slane %v4056, 5
        %v5490 = vsel %vm2835, %v5488, %v5489
        %v5491 = vrot.slane %v5345, 5
        %v5492 = vrot.slane %v5491, 4
        %v5493 = vrot.slane %v4058, 5
        %v5494 = vsel %vm2835, %v5492, %v5493
        %v5495 = vrot.slane %v5493, 4
        %v5496 = vrot.slane %v4059, 5
        %v5497 = vsel %vm2835, %v5495, %v5496
        %v5498 = vrot.slane %v5346, 5
        %v5499 = vrot.slane %v5498, 4
        %v5500 = vrot.slane %v4061, 5
        %v5501 = vsel %vm2835, %v5499, %v5500
        %v5502 = vrot.slane %v5500, 4
        %v5503 = vrot.slane %v4062, 5
        %v5504 = vsel %vm2835, %v5502, %v5503
        %v5505 = vrot.slane %v5347, 5
        %v5506 = vrot.slane %v5505, 4
        %v5507 = vrot.slane %v4064, 5
        %v5508 = vsel %vm2835, %v5506, %v5507
        %v5509 = vrot.slane %v5507, 4
        %v5510 = vrot.slane %v4065, 5
        %v5511 = vsel %vm2835, %v5509, %v5510
        %v5512 = vrot.slane %v5348, 5
        %v5513 = vrot.slane %v5512, 4
        %v5514 = vrot.slane %v4067, 5
        %v5515 = vsel %vm2835, %v5513, %v5514
        %v5516 = vrot.slane %v5514, 4
        %v5517 = vrot.slane %v4068, 5
        %v5518 = vsel %vm2835, %v5516, %v5517
        %v5519 = vrot.slane %v5349, 5
        %v5520 = vrot.slane %v5519, 4
        %v5521 = vrot.slane %v4070, 5
        %v5522 = vsel %vm2835, %v5520, %v5521
        %v5523 = vrot.slane %v5521, 4
        %v5524 = vrot.slane %v4071, 5
        %v5525 = vsel %vm2835, %v5523, %v5524
        %v5526 = vrot.slane %v5350, 5
        %v5527 = vrot.slane %v5526, 4
        %v5528 = vrot.slane %v4073, 5
        %v5529 = vsel %vm2835, %v5527, %v5528
        %v5530 = vrot.slane %v5528, 4
        %v5531 = vrot.slane %v4074, 5
        %v5532 = vsel %vm2835, %v5530, %v5531
        %v5533 = vrot.slane %v5351, 5
        %v5534 = vrot.slane %v5533, 4
        %v5535 = vrot.slane %v4076, 5
        %v5536 = vsel %vm2835, %v5534, %v5535
        %v5537 = vrot.slane %v5535, 4
        %v5538 = vrot.slane %v4077, 5
        %v5539 = vsel %vm2835, %v5537, %v5538
        %v5540 = vrot.slane %v5352, 5
        %v5541 = vrot.slane %v5540, 4
        %v5542 = vrot.slane %v4079, 5
        %v5543 = vsel %vm2835, %v5541, %v5542
        %v5544 = vrot.slane %v5542, 4
        %v5545 = vrot.slane %v4080, 5
        %v5546 = vsel %vm2835, %v5544, %v5545
        %v5547 = vrot.slane %v5353, 5
        %v5548 = vrot.slane %v5547, 4
        %v5549 = vrot.slane %v4082, 5
        %v5550 = vsel %vm2835, %v5548, %v5549
        %v5551 = vrot.slane %v5549, 4
        %v5552 = vrot.slane %v4083, 5
        %v5553 = vsel %vm2835, %v5551, %v5552
        %v5554 = vrot.slane %v5354, 5
        %v5555 = vrot.slane %v5554, 4
        %v5556 = vrot.slane %v4085, 5
        %v5557 = vsel %vm2835, %v5555, %v5556
        %v5558 = vrot.slane %v5556, 4
        %v5559 = vrot.slane %v4086, 5
        %v5560 = vsel %vm2835, %v5558, %v5559
        %v5561 = vrot.slane %v5355, 5
        %v5562 = vrot.slane %v5561, 4
        %v5563 = vrot.slane %v4088, 5
        %v5564 = vsel %vm2835, %v5562, %v5563
        %v5565 = vrot.slane %v5563, 4
        %v5566 = vrot.slane %v4089, 5
        %v5567 = vsel %vm2835, %v5565, %v5566
        %v5568 = vrot.slane %v5356, 5
        %v5569 = vrot.slane %v5568, 4
        %v5570 = vrot.slane %v4091, 5
        %v5571 = vsel %vm2835, %v5569, %v5570
        %v5572 = vrot.slane %v5570, 4
        %v5573 = vrot.slane %v4092, 5
        %v5574 = vsel %vm2835, %v5572, %v5573
        %v5575 = vrot.slane %v5357, 5
        %v5576 = vrot.slane %v5575, 4
        %v5577 = vrot.slane %v4094, 5
        %v5578 = vsel %vm2835, %v5576, %v5577
        %v5579 = vrot.slane %v5577, 4
        %v5580 = vrot.slane %v4095, 5
        %v5581 = vsel %vm2835, %v5579, %v5580
        %v5582 = vrot.slane %v5358, 5
        %v5583 = vrot.slane %v5582, 4
        %v5584 = vrot.slane %v4097, 5
        %v5585 = vsel %vm2835, %v5583, %v5584
        %v5586 = vrot.slane %v5584, 4
        %v5587 = vrot.slane %v4098, 5
        %v5588 = vsel %vm2835, %v5586, %v5587
        %v5589 = vrot.slane %v5359, 5
        %v5590 = vrot.slane %v5589, 4
        %v5591 = vrot.slane %v4100, 5
        %v5592 = vsel %vm2835, %v5590, %v5591
        %v5593 = vrot.slane %v5591, 4
        %v5594 = vrot.slane %v4101, 5
        %v5595 = vsel %vm2835, %v5593, %v5594
        %v5596 = vrot.slane %v5360, 5
        %v5597 = vrot.slane %v5596, 4
        %v5598 = vrot.slane %v4103, 5
        %v5599 = vsel %vm2835, %v5597, %v5598
        %v5600 = vrot.slane %v5598, 4
        %v5601 = vrot.slane %v4104, 5
        %v5602 = vsel %vm2835, %v5600, %v5601
        %v5603 = vrot.slane %v5361, 5
        %v5604 = vrot.slane %v5603, 4
        %v5605 = vrot.slane %v4106, 5
        %v5606 = vsel %vm2835, %v5604, %v5605
        %v5607 = vrot.slane %v5605, 4
        %v5608 = vrot.slane %v4107, 5
        %v5609 = vsel %vm2835, %v5607, %v5608
        %v5610 = vrot.slane %v5362, 5
        %v5611 = vrot.slane %v5610, 4
        %v5612 = vrot.slane %v4109, 5
        %v5613 = vsel %vm2835, %v5611, %v5612
        %v5614 = vrot.slane %v5612, 4
        %v5615 = vrot.slane %v4110, 5
        %v5616 = vsel %vm2835, %v5614, %v5615
        %v5617 = vrot.slane %v5363, 5
        %v5618 = vrot.slane %v5617, 4
        %v5619 = vrot.slane %v4112, 5
        %v5620 = vsel %vm2835, %v5618, %v5619
        %v5621 = vrot.slane %v5619, 4
        %v5622 = vrot.slane %v4113, 5
        %v5623 = vsel %vm2835, %v5621, %v5622
        %v5624 = vrot.slane %v5364, 5
        %v5625 = vrot.slane %v5624, 4
        %v5626 = vrot.slane %v4115, 5
        %v5627 = vsel %vm2835, %v5625, %v5626
        %v5628 = vrot.slane %v5626, 4
        %v5629 = vrot.slane %v4116, 5
        %v5630 = vsel %vm2835, %v5628, %v5629
        %v5631 = vrot.slane %v5365, 5
        %v5632 = vrot.slane %v5631, 4
        %v5633 = vrot.slane %v4118, 5
        %v5634 = vsel %vm2835, %v5632, %v5633
        %v5635 = vrot.slane %v5633, 4
        %v5636 = vrot.slane %v4119, 5
        %v5637 = vsel %vm2835, %v5635, %v5636
        %v5638 = vrot.slane %v5366, 5
        %v5639 = vrot.slane %v5638, 4
        %v5640 = vrot.slane %v4121, 5
        %v5641 = vsel %vm2835, %v5639, %v5640
        %v5642 = vrot.slane %v5640, 4
        %v5643 = vrot.slane %v4122, 5
        %v5644 = vsel %vm2835, %v5642, %v5643
        %v5645 = vrot.slane %v5367, 5
        %v5646 = vrot.slane %v5645, 4
        %v5647 = vrot.slane %v4124, 5
        %v5648 = vsel %vm2835, %v5646, %v5647
        %v5649 = vrot.slane %v5647, 4
        %v5650 = vrot.slane %v4125, 5
        %v5651 = vsel %vm2835, %v5649, %v5650
        %v5652 = vrot.slane %v5368, 5
        %v5653 = vrot.slane %v5652, 4
        %v5654 = vrot.slane %v4127, 5
        %v5655 = vsel %vm2835, %v5653, %v5654
        %v5656 = vrot.slane %v5654, 4
        %v5657 = vrot.slane %v4128, 5
        %v5658 = vsel %vm2835, %v5656, %v5657
        %v5659 = vrot.slane %v5369, 5
        %v5660 = vrot.slane %v5659, 4
        %v5661 = vrot.slane %v4130, 5
        %v5662 = vsel %vm2835, %v5660, %v5661
        %v5663 = vrot.slane %v5661, 4
        %v5664 = vrot.slane %v4131, 5
        %v5665 = vsel %vm2835, %v5663, %v5664
        %v5666 = vrot.slane %v5370, 5
        %v5667 = vrot.slane %v5666, 4
        %v5668 = vrot.slane %v4133, 5
        %v5669 = vsel %vm2835, %v5667, %v5668
        %v5670 = vrot.slane %v5668, 4
        %v5671 = vrot.slane %v4134, 5
        %v5672 = vsel %vm2835, %v5670, %v5671
        %v5673 = vrot.slane %v5371, 5
        %v5674 = vrot.slane %v5673, 4
        %v5675 = vrot.slane %v4136, 5
        %v5676 = vsel %vm2835, %v5674, %v5675
        %v5677 = vrot.slane %v5675, 4
        %v5678 = vrot.slane %v4137, 5
        %v5679 = vsel %vm2835, %v5677, %v5678
        %v5680 = vrot.slane %v5372, 5
        %v5681 = vrot.slane %v5680, 4
        %v5682 = vrot.slane %v4139, 5
        %v5683 = vsel %vm2835, %v5681, %v5682
        %v5684 = vrot.slane %v5682, 4
        %v5685 = vrot.slane %v4140, 5
        %v5686 = vsel %vm2835, %v5684, %v5685
        %v5687 = vrot.slane %v5373, 5
        %v5688 = vrot.slane %v5687, 4
        %v5689 = vrot.slane %v4142, 5
        %v5690 = vsel %vm2835, %v5688, %v5689
        %v5691 = vrot.slane %v5689, 4
        %v5692 = vrot.slane %v4143, 5
        %v5693 = vsel %vm2835, %v5691, %v5692
        %s5694 = scalar_lea.vmem %s1, 10
        %v5695 = vld [vmem:[%s5694] sm:$0x3]
        %v5696 = vunpack.c.l.b16 %v5473
        %v5697 = vunpack.c.l.b16 %v5476
        %v5698 = vunpack.c.l.b16 %v5480
        %v5699 = vunpack.c.l.b16 %v5483
        %v5700 = vunpack.c.l.b16 %v5487
        %v5701 = vunpack.c.l.b16 %v5490
        %v5702 = vunpack.c.l.b16 %v5494
        %v5703 = vunpack.c.l.b16 %v5497
        %v5704 = vunpack.c.l.b16 %v5501
        %v5705 = vunpack.c.l.b16 %v5504
        %v5706 = vunpack.c.l.b16 %v5508
        %v5707 = vunpack.c.l.b16 %v5511
        %v5708 = vunpack.c.l.b16 %v5515
        %v5709 = vunpack.c.l.b16 %v5518
        %v5710 = vunpack.c.l.b16 %v5522
        %v5711 = vunpack.c.l.b16 %v5525
        %v5712 = vunpack.c.l.b16 %v5529
        %v5713 = vunpack.c.l.b16 %v5532
        %v5714 = vunpack.c.l.b16 %v5536
        %v5715 = vunpack.c.l.b16 %v5539
        %v5716 = vunpack.c.l.b16 %v5543
        %v5717 = vunpack.c.l.b16 %v5546
        %v5718 = vunpack.c.l.b16 %v5550
        %v5719 = vunpack.c.l.b16 %v5553
        %v5720 = vunpack.c.l.b16 %v5557
        %v5721 = vunpack.c.l.b16 %v5560
        %v5722 = vunpack.c.l.b16 %v5564
        %v5723 = vunpack.c.l.b16 %v5567
        %v5724 = vunpack.c.l.b16 %v5571
        %v5725 = vunpack.c.l.b16 %v5574
        %v5726 = vunpack.c.l.b16 %v5578
        %v5727 = vunpack.c.l.b16 %v5581
        %v5728 = vunpack.c.l.b16 %v5585
        %v5729 = vunpack.c.l.b16 %v5588
        %v5730 = vunpack.c.l.b16 %v5592
        %v5731 = vunpack.c.l.b16 %v5595
        %v5732 = vunpack.c.l.b16 %v5599
        %v5733 = vunpack.c.l.b16 %v5602
        %v5734 = vunpack.c.l.b16 %v5606
        %v5735 = vunpack.c.l.b16 %v5609
        %v5736 = vunpack.c.l.b16 %v5613
        %v5737 = vunpack.c.l.b16 %v5616
        %v5738 = vunpack.c.l.b16 %v5620
        %v5739 = vunpack.c.l.b16 %v5623
        %v5740 = vunpack.c.l.b16 %v5627
        %v5741 = vunpack.c.l.b16 %v5630
        %v5742 = vunpack.c.l.b16 %v5634
        %v5743 = vunpack.c.l.b16 %v5637
        %v5744 = vunpack.c.l.b16 %v5641
        %v5745 = vunpack.c.l.b16 %v5644
        %v5746 = vunpack.c.l.b16 %v5648
        %v5747 = vunpack.c.l.b16 %v5651
        %v5748 = vunpack.c.l.b16 %v5655
        %v5749 = vunpack.c.l.b16 %v5658
        %v5750 = vunpack.c.l.b16 %v5662
        %v5751 = vunpack.c.l.b16 %v5665
        %v5752 = vunpack.c.l.b16 %v5669
        %v5753 = vunpack.c.l.b16 %v5672
        %v5754 = vunpack.c.l.b16 %v5676
        %v5755 = vunpack.c.l.b16 %v5679
        %v5756 = vunpack.c.l.b16 %v5683
        %v5757 = vunpack.c.l.b16 %v5686
        %v5758 = vunpack.c.l.b16 %v5690
        %v5759 = vunpack.c.l.b16 %v5693
        %v5760 = vpack.c.b16 %v5697, %v5696
        %v5761 = vpack.c.b16 %v5699, %v5698
        %v5762 = vpack.c.b16 %v5701, %v5700
        %v5763 = vpack.c.b16 %v5703, %v5702
        %v5764 = vpack.c.b16 %v5705, %v5704
        %v5765 = vpack.c.b16 %v5707, %v5706
        %v5766 = vpack.c.b16 %v5709, %v5708
        %v5767 = vpack.c.b16 %v5711, %v5710
        %v5768 = vpack.c.b16 %v5713, %v5712
        %v5769 = vpack.c.b16 %v5715, %v5714
        %v5770 = vpack.c.b16 %v5717, %v5716
        %v5771 = vpack.c.b16 %v5719, %v5718
        %v5772 = vpack.c.b16 %v5721, %v5720
        %v5773 = vpack.c.b16 %v5723, %v5722
        %v5774 = vpack.c.b16 %v5725, %v5724
        %v5775 = vpack.c.b16 %v5727, %v5726
        %v5776 = vpack.c.b16 %v5729, %v5728
        %v5777 = vpack.c.b16 %v5731, %v5730
        %v5778 = vpack.c.b16 %v5733, %v5732
        %v5779 = vpack.c.b16 %v5735, %v5734
        %v5780 = vpack.c.b16 %v5737, %v5736
        %v5781 = vpack.c.b16 %v5739, %v5738
        %v5782 = vpack.c.b16 %v5741, %v5740
        %v5783 = vpack.c.b16 %v5743, %v5742
        %v5784 = vpack.c.b16 %v5745, %v5744
        %v5785 = vpack.c.b16 %v5747, %v5746
        %v5786 = vpack.c.b16 %v5749, %v5748
        %v5787 = vpack.c.b16 %v5751, %v5750
        %v5788 = vpack.c.b16 %v5753, %v5752
        %v5789 = vpack.c.b16 %v5755, %v5754
        %v5790 = vpack.c.b16 %v5757, %v5756
        %v5791 = vpack.c.b16 %v5759, %v5758
        %v5793 = vsel %vm2039, %v5760, 0
        %v5796 = vsel %vm2039, %v5761, 0
        %v5799 = vsel %vm2039, %v5762, 0
        %v5802 = vsel %vm2039, %v5763, 0
        %v5805 = vsel %vm2039, %v5764, 0
        %v5808 = vsel %vm2039, %v5765, 0
        %v5811 = vsel %vm2039, %v5766, 0
        %v5814 = vsel %vm2039, %v5767, 0
        %v5817 = vsel %vm2039, %v5768, 0
        %v5820 = vsel %vm2039, %v5769, 0
        %v5823 = vsel %vm2039, %v5770, 0
        %v5826 = vsel %vm2039, %v5771, 0
        %v5829 = vsel %vm2039, %v5772, 0
        %v5832 = vsel %vm2039, %v5773, 0
        %v5835 = vsel %vm2039, %v5774, 0
        %v5838 = vsel %vm2039, %v5775, 0
        %v5841 = vsel %vm2039, %v5776, 0
        %v5844 = vsel %vm2039, %v5777, 0
        %v5847 = vsel %vm2039, %v5778, 0
        %v5850 = vsel %vm2039, %v5779, 0
        %v5853 = vsel %vm2039, %v5780, 0
        %v5856 = vsel %vm2039, %v5781, 0
        %v5859 = vsel %vm2039, %v5782, 0
        %v5862 = vsel %vm2039, %v5783, 0
        %v5865 = vsel %vm2039, %v5784, 0
        %v5868 = vsel %vm2039, %v5785, 0
        %v5871 = vsel %vm2039, %v5786, 0
        %v5874 = vsel %vm2039, %v5787, 0
        %v5877 = vsel %vm2039, %v5788, 0
        %v5880 = vsel %vm2039, %v5789, 0
        %v5883 = vsel %vm2039, %v5790, 0
        %v5886 = vsel %vm2039, %v5791, 0
        %v5889 = vsel %vm2136, %v5695, 0
        %5891 = vmatpush.bf16.msra.mxu0 0
        %5892 = vmatpush.bf16.msra.mxu0 0
        %5893 = vmatpush.bf16.msra.mxu0 0
        %5894 = vmatpush.bf16.msra.mxu0 0
        %5895 = vmatpush.bf16.msra.mxu0 0
        %5896 = vmatpush.bf16.msra.mxu0 0
        %5897 = vmatpush.bf16.msra.mxu0 0
        %5898 = vmatpush.bf16.msra.mxu0 %v5889
        %5899 = vmatmul.bf16.gmra.mxu0 %v5793
        %v5900 = vpop.f32.mrf.mxu0
        %v5901 = vadd.f32 0.0, %v5900
        %v5902 = vpop.f32.mrf.mxu0
        %v5903 = vadd.f32 0.0, %v5902
        %5904 = vmatmul.bf16.gmra.mxu0 %v5796
        %v5905 = vpop.f32.mrf.mxu0
        %v5906 = vadd.f32 0.0, %v5905
        %v5907 = vpop.f32.mrf.mxu0
        %v5908 = vadd.f32 0.0, %v5907
        %5909 = vmatmul.bf16.gmra.mxu0 %v5799
        %v5910 = vpop.f32.mrf.mxu0
        %v5911 = vadd.f32 0.0, %v5910
        %v5912 = vpop.f32.mrf.mxu0
        %v5913 = vadd.f32 0.0, %v5912
        %5914 = vmatmul.bf16.gmra.mxu0 %v5802
        %v5915 = vpop.f32.mrf.mxu0
        %v5916 = vadd.f32 0.0, %v5915
        %v5917 = vpop.f32.mrf.mxu0
        %v5918 = vadd.f32 0.0, %v5917
        %5919 = vmatmul.bf16.gmra.mxu0 %v5805
        %v5920 = vpop.f32.mrf.mxu0
        %v5921 = vadd.f32 0.0, %v5920
        %v5922 = vpop.f32.mrf.mxu0
        %v5923 = vadd.f32 0.0, %v5922
        %5924 = vmatmul.bf16.gmra.mxu0 %v5808
        %v5925 = vpop.f32.mrf.mxu0
        %v5926 = vadd.f32 0.0, %v5925
        %v5927 = vpop.f32.mrf.mxu0
        %v5928 = vadd.f32 0.0, %v5927
        %5929 = vmatmul.bf16.gmra.mxu0 %v5811
        %v5930 = vpop.f32.mrf.mxu0
        %v5931 = vadd.f32 0.0, %v5930
        %v5932 = vpop.f32.mrf.mxu0
        %v5933 = vadd.f32 0.0, %v5932
        %5934 = vmatmul.bf16.gmra.mxu0 %v5814
        %v5935 = vpop.f32.mrf.mxu0
        %v5936 = vadd.f32 0.0, %v5935
        %v5937 = vpop.f32.mrf.mxu0
        %v5938 = vadd.f32 0.0, %v5937
        %5939 = vmatmul.bf16.gmra.mxu0 %v5817
        %v5940 = vpop.f32.mrf.mxu0
        %v5941 = vadd.f32 0.0, %v5940
        %v5942 = vpop.f32.mrf.mxu0
        %v5943 = vadd.f32 0.0, %v5942
        %5944 = vmatmul.bf16.gmra.mxu0 %v5820
        %v5945 = vpop.f32.mrf.mxu0
        %v5946 = vadd.f32 0.0, %v5945
        %v5947 = vpop.f32.mrf.mxu0
        %v5948 = vadd.f32 0.0, %v5947
        %5949 = vmatmul.bf16.gmra.mxu0 %v5823
        %v5950 = vpop.f32.mrf.mxu0
        %v5951 = vadd.f32 0.0, %v5950
        %v5952 = vpop.f32.mrf.mxu0
        %v5953 = vadd.f32 0.0, %v5952
        %5954 = vmatmul.bf16.gmra.mxu0 %v5826
        %v5955 = vpop.f32.mrf.mxu0
        %v5956 = vadd.f32 0.0, %v5955
        %v5957 = vpop.f32.mrf.mxu0
        %v5958 = vadd.f32 0.0, %v5957
        %5959 = vmatmul.bf16.gmra.mxu0 %v5829
        %v5960 = vpop.f32.mrf.mxu0
        %v5961 = vadd.f32 0.0, %v5960
        %v5962 = vpop.f32.mrf.mxu0
        %v5963 = vadd.f32 0.0, %v5962
        %5964 = vmatmul.bf16.gmra.mxu0 %v5832
        %v5965 = vpop.f32.mrf.mxu0
        %v5966 = vadd.f32 0.0, %v5965
        %v5967 = vpop.f32.mrf.mxu0
        %v5968 = vadd.f32 0.0, %v5967
        %5969 = vmatmul.bf16.gmra.mxu0 %v5835
        %v5970 = vpop.f32.mrf.mxu0
        %v5971 = vadd.f32 0.0, %v5970
        %v5972 = vpop.f32.mrf.mxu0
        %v5973 = vadd.f32 0.0, %v5972
        %5974 = vmatmul.bf16.gmra.mxu0 %v5838
        %v5975 = vpop.f32.mrf.mxu0
        %v5976 = vadd.f32 0.0, %v5975
        %v5977 = vpop.f32.mrf.mxu0
        %v5978 = vadd.f32 0.0, %v5977
        %5979 = vmatmul.bf16.gmra.mxu0 %v5841
        %v5980 = vpop.f32.mrf.mxu0
        %v5981 = vadd.f32 0.0, %v5980
        %v5982 = vpop.f32.mrf.mxu0
        %v5983 = vadd.f32 0.0, %v5982
        %5984 = vmatmul.bf16.gmra.mxu0 %v5844
        %v5985 = vpop.f32.mrf.mxu0
        %v5986 = vadd.f32 0.0, %v5985
        %v5987 = vpop.f32.mrf.mxu0
        %v5988 = vadd.f32 0.0, %v5987
        %5989 = vmatmul.bf16.gmra.mxu0 %v5847
        %v5990 = vpop.f32.mrf.mxu0
        %v5991 = vadd.f32 0.0, %v5990
        %v5992 = vpop.f32.mrf.mxu0
        %v5993 = vadd.f32 0.0, %v5992
        %5994 = vmatmul.bf16.gmra.mxu0 %v5850
        %v5995 = vpop.f32.mrf.mxu0
        %v5996 = vadd.f32 0.0, %v5995
        %v5997 = vpop.f32.mrf.mxu0
        %v5998 = vadd.f32 0.0, %v5997
        %5999 = vmatmul.bf16.gmra.mxu0 %v5853
        %v6000 = vpop.f32.mrf.mxu0
        %v6001 = vadd.f32 0.0, %v6000
        %v6002 = vpop.f32.mrf.mxu0
        %v6003 = vadd.f32 0.0, %v6002
        %6004 = vmatmul.bf16.gmra.mxu0 %v5856
        %v6005 = vpop.f32.mrf.mxu0
        %v6006 = vadd.f32 0.0, %v6005
        %v6007 = vpop.f32.mrf.mxu0
        %v6008 = vadd.f32 0.0, %v6007
        %6009 = vmatmul.bf16.gmra.mxu0 %v5859
        %v6010 = vpop.f32.mrf.mxu0
        %v6011 = vadd.f32 0.0, %v6010
        %v6012 = vpop.f32.mrf.mxu0
        %v6013 = vadd.f32 0.0, %v6012
        %6014 = vmatmul.bf16.gmra.mxu0 %v5862
        %v6015 = vpop.f32.mrf.mxu0
        %v6016 = vadd.f32 0.0, %v6015
        %v6017 = vpop.f32.mrf.mxu0
        %v6018 = vadd.f32 0.0, %v6017
        %6019 = vmatmul.bf16.gmra.mxu0 %v5865
        %v6020 = vpop.f32.mrf.mxu0
        %v6021 = vadd.f32 0.0, %v6020
        %v6022 = vpop.f32.mrf.mxu0
        %v6023 = vadd.f32 0.0, %v6022
        %6024 = vmatmul.bf16.gmra.mxu0 %v5868
        %v6025 = vpop.f32.mrf.mxu0
        %v6026 = vadd.f32 0.0, %v6025
        %v6027 = vpop.f32.mrf.mxu0
        %v6028 = vadd.f32 0.0, %v6027
        %6029 = vmatmul.bf16.gmra.mxu0 %v5871
        %v6030 = vpop.f32.mrf.mxu0
        %v6031 = vadd.f32 0.0, %v6030
        %v6032 = vpop.f32.mrf.mxu0
        %v6033 = vadd.f32 0.0, %v6032
        %6034 = vmatmul.bf16.gmra.mxu0 %v5874
        %v6035 = vpop.f32.mrf.mxu0
        %v6036 = vadd.f32 0.0, %v6035
        %v6037 = vpop.f32.mrf.mxu0
        %v6038 = vadd.f32 0.0, %v6037
        %6039 = vmatmul.bf16.gmra.mxu0 %v5877
        %v6040 = vpop.f32.mrf.mxu0
        %v6041 = vadd.f32 0.0, %v6040
        %v6042 = vpop.f32.mrf.mxu0
        %v6043 = vadd.f32 0.0, %v6042
        %6044 = vmatmul.bf16.gmra.mxu0 %v5880
        %v6045 = vpop.f32.mrf.mxu0
        %v6046 = vadd.f32 0.0, %v6045
        %v6047 = vpop.f32.mrf.mxu0
        %v6048 = vadd.f32 0.0, %v6047
        %6049 = vmatmul.bf16.gmra.mxu0 %v5883
        %v6050 = vpop.f32.mrf.mxu0
        %v6051 = vadd.f32 0.0, %v6050
        %v6052 = vpop.f32.mrf.mxu0
        %v6053 = vadd.f32 0.0, %v6052
        %6054 = vmatmul.bf16.gmra.mxu0 %v5886
        %v6055 = vpop.f32.mrf.mxu0
        %v6056 = vadd.f32 0.0, %v6055
        %v6057 = vpop.f32.mrf.mxu0
        %v6058 = vadd.f32 0.0, %v6057
        %6059 = vdwg.mxu0
        %v6060 = vadd.f32 %v5278, %v5901
        %v6061 = vadd.f32 %v5279, %v5903
        %v6062 = vadd.f32 %v5280, %v5906
        %v6063 = vadd.f32 %v5281, %v5908
        %v6064 = vadd.f32 %v5282, %v5911
        %v6065 = vadd.f32 %v5283, %v5913
        %v6066 = vadd.f32 %v5284, %v5916
        %v6067 = vadd.f32 %v5285, %v5918
        %v6068 = vadd.f32 %v5286, %v5921
        %v6069 = vadd.f32 %v5287, %v5923
        %v6070 = vadd.f32 %v5288, %v5926
        %v6071 = vadd.f32 %v5289, %v5928
        %v6072 = vadd.f32 %v5290, %v5931
        %v6073 = vadd.f32 %v5291, %v5933
        %v6074 = vadd.f32 %v5292, %v5936
        %v6075 = vadd.f32 %v5293, %v5938
        %v6076 = vadd.f32 %v5294, %v5941
        %v6077 = vadd.f32 %v5295, %v5943
        %v6078 = vadd.f32 %v5296, %v5946
        %v6079 = vadd.f32 %v5297, %v5948
        %v6080 = vadd.f32 %v5298, %v5951
        %v6081 = vadd.f32 %v5299, %v5953
        %v6082 = vadd.f32 %v5300, %v5956
        %v6083 = vadd.f32 %v5301, %v5958
        %v6084 = vadd.f32 %v5302, %v5961
        %v6085 = vadd.f32 %v5303, %v5963
        %v6086 = vadd.f32 %v5304, %v5966
        %v6087 = vadd.f32 %v5305, %v5968
        %v6088 = vadd.f32 %v5306, %v5971
        %v6089 = vadd.f32 %v5307, %v5973
        %v6090 = vadd.f32 %v5308, %v5976
        %v6091 = vadd.f32 %v5309, %v5978
        %v6092 = vadd.f32 %v5310, %v5981
        %v6093 = vadd.f32 %v5311, %v5983
        %v6094 = vadd.f32 %v5312, %v5986
        %v6095 = vadd.f32 %v5313, %v5988
        %v6096 = vadd.f32 %v5314, %v5991
        %v6097 = vadd.f32 %v5315, %v5993
        %v6098 = vadd.f32 %v5316, %v5996
        %v6099 = vadd.f32 %v5317, %v5998
        %v6100 = vadd.f32 %v5318, %v6001
        %v6101 = vadd.f32 %v5319, %v6003
        %v6102 = vadd.f32 %v5320, %v6006
        %v6103 = vadd.f32 %v5321, %v6008
        %v6104 = vadd.f32 %v5322, %v6011
        %v6105 = vadd.f32 %v5323, %v6013
        %v6106 = vadd.f32 %v5324, %v6016
        %v6107 = vadd.f32 %v5325, %v6018
        %v6108 = vadd.f32 %v5326, %v6021
        %v6109 = vadd.f32 %v5327, %v6023
        %v6110 = vadd.f32 %v5328, %v6026
        %v6111 = vadd.f32 %v5329, %v6028
        %v6112 = vadd.f32 %v5330, %v6031
        %v6113 = vadd.f32 %v5331, %v6033
        %v6114 = vadd.f32 %v5332, %v6036
        %v6115 = vadd.f32 %v5333, %v6038
        %v6116 = vadd.f32 %v5334, %v6041
        %v6117 = vadd.f32 %v5335, %v6043
        %v6118 = vadd.f32 %v5336, %v6046
        %v6119 = vadd.f32 %v5337, %v6048
        %v6120 = vadd.f32 %v5338, %v6051
        %v6121 = vadd.f32 %v5339, %v6053
        %v6122 = vadd.f32 %v5340, %v6056
        %v6123 = vadd.f32 %v5341, %v6058
        %s6124 = scalar_lea.vmem [#allocation2], 24
        %v6125 = vld [vmem:[%s6124] sm:$0xf]
        %v6126 = vld [vmem:[%s6124 + $0x4] sm:$0xf]
        %v6127 = vld [vmem:[%s6124 + $0xc] sm:$0xf]
        %v6128 = vld [vmem:[%s6124 + $0x10] sm:$0xf]
        %v6129 = vld [vmem:[%s6124 + $0x18] sm:$0xf]
        %v6130 = vld [vmem:[%s6124 + $0x1c] sm:$0xf]
        %v6131 = vld [vmem:[%s6124 + $0x24] sm:$0xf]
        %v6132 = vld [vmem:[%s6124 + $0x28] sm:$0xf]
        %v6133 = vld [vmem:[%s6124 + $0x30] sm:$0xf]
        %v6134 = vld [vmem:[%s6124 + $0x34] sm:$0xf]
        %v6135 = vld [vmem:[%s6124 + $0x3c] sm:$0xf]
        %v6136 = vld [vmem:[%s6124 + $0x40] sm:$0xf]
        %v6137 = vld [vmem:[%s6124 + $0x48] sm:$0xf]
        %v6138 = vld [vmem:[%s6124 + $0x4c] sm:$0xf]
        %v6139 = vld [vmem:[%s6124 + $0x54] sm:$0xf]
        %v6140 = vld [vmem:[%s6124 + $0x58] sm:$0xf]
        %v6141 = vld [vmem:[%s6124 + $0x60] sm:$0xf]
        %v6142 = vld [vmem:[%s6124 + $0x64] sm:$0xf]
        %v6143 = vld [vmem:[%s6124 + $0x6c] sm:$0xf]
        %v6144 = vld [vmem:[%s6124 + $0x70] sm:$0xf]
        %v6145 = vld [vmem:[%s6124 + $0x78] sm:$0xf]
        %v6146 = vld [vmem:[%s6124 + $0x7c] sm:$0xf]
        %v6147 = vld [vmem:[%s6124 + $0x84] sm:$0xf]
        %v6148 = vld [vmem:[%s6124 + $0x88] sm:$0xf]
        %v6149 = vld [vmem:[%s6124 + $0x90] sm:$0xf]
        %v6150 = vld [vmem:[%s6124 + $0x94] sm:$0xf]
        %v6151 = vld [vmem:[%s6124 + $0x9c] sm:$0xf]
        %v6152 = vld [vmem:[%s6124 + $0xa0] sm:$0xf]
        %v6153 = vld [vmem:[%s6124 + $0xa8] sm:$0xf]
        %v6154 = vld [vmem:[%s6124 + $0xac] sm:$0xf]
        %v6155 = vld [vmem:[%s6124 + $0xb4] sm:$0xf]
        %v6156 = vld [vmem:[%s6124 + $0xb8] sm:$0xf]
        %v6157 = vld [vmem:[%s6124 + $0xc0] sm:$0xf]
        %v6158 = vld [vmem:[%s6124 + $0xc4] sm:$0xf]
        %v6159 = vld [vmem:[%s6124 + $0xcc] sm:$0xf]
        %v6160 = vld [vmem:[%s6124 + $0xd0] sm:$0xf]
        %v6161 = vld [vmem:[%s6124 + $0xd8] sm:$0xf]
        %v6162 = vld [vmem:[%s6124 + $0xdc] sm:$0xf]
        %v6163 = vld [vmem:[%s6124 + $0xe4] sm:$0xf]
        %v6164 = vld [vmem:[%s6124 + $0xe8] sm:$0xf]
        %v6165 = vld [vmem:[%s6124 + $0xf0] sm:$0xf]
        %v6166 = vld [vmem:[%s6124 + $0xf4] sm:$0xf]
        %v6167 = vld [vmem:[%s6124 + $0xfc] sm:$0xf]
        %v6168 = vld [vmem:[%s6124 + $0x100] sm:$0xf]
        %v6169 = vld [vmem:[%s6124 + $0x108] sm:$0xf]
        %v6170 = vld [vmem:[%s6124 + $0x10c] sm:$0xf]
        %v6171 = vld [vmem:[%s6124 + $0x114] sm:$0xf]
        %v6172 = vld [vmem:[%s6124 + $0x118] sm:$0xf]
        %v6173 = vld [vmem:[%s6124 + $0x120] sm:$0xf]
        %v6174 = vld [vmem:[%s6124 + $0x124] sm:$0xf]
        %v6175 = vld [vmem:[%s6124 + $0x12c] sm:$0xf]
        %v6176 = vld [vmem:[%s6124 + $0x130] sm:$0xf]
        %v6177 = vld [vmem:[%s6124 + $0x138] sm:$0xf]
        %v6178 = vld [vmem:[%s6124 + $0x13c] sm:$0xf]
        %v6179 = vld [vmem:[%s6124 + $0x144] sm:$0xf]
        %v6180 = vld [vmem:[%s6124 + $0x148] sm:$0xf]
        %v6181 = vld [vmem:[%s6124 + $0x150] sm:$0xf]
        %v6182 = vld [vmem:[%s6124 + $0x154] sm:$0xf]
        %v6183 = vld [vmem:[%s6124 + $0x15c] sm:$0xf]
        %v6184 = vld [vmem:[%s6124 + $0x160] sm:$0xf]
        %v6185 = vld [vmem:[%s6124 + $0x168] sm:$0xf]
        %v6186 = vld [vmem:[%s6124 + $0x16c] sm:$0xf]
        %v6187 = vld [vmem:[%s6124 + $0x174] sm:$0xf]
        %v6188 = vld [vmem:[%s6124 + $0x178] sm:$0xf]
        %s6189 = scalar_lea.vmem %s1, 12
        %v6190 = vld [vmem:[%s6189] sm:$0x3]
        %v6255 = vunpack.c.l.b16 %v6125
        %v6256 = vunpack.c.l.b16 %v6126
        %v6257 = vunpack.c.l.b16 %v6127
        %v6258 = vunpack.c.l.b16 %v6128
        %v6259 = vunpack.c.l.b16 %v6129
        %v6260 = vunpack.c.l.b16 %v6130
        %v6261 = vunpack.c.l.b16 %v6131
        %v6262 = vunpack.c.l.b16 %v6132
        %v6263 = vunpack.c.l.b16 %v6133
        %v6264 = vunpack.c.l.b16 %v6134
        %v6265 = vunpack.c.l.b16 %v6135
        %v6266 = vunpack.c.l.b16 %v6136
        %v6267 = vunpack.c.l.b16 %v6137
        %v6268 = vunpack.c.l.b16 %v6138
        %v6269 = vunpack.c.l.b16 %v6139
        %v6270 = vunpack.c.l.b16 %v6140
        %v6271 = vunpack.c.l.b16 %v6141
        %v6272 = vunpack.c.l.b16 %v6142
        %v6273 = vunpack.c.l.b16 %v6143
        %v6274 = vunpack.c.l.b16 %v6144
        %v6275 = vunpack.c.l.b16 %v6145
        %v6276 = vunpack.c.l.b16 %v6146
        %v6277 = vunpack.c.l.b16 %v6147
        %v6278 = vunpack.c.l.b16 %v6148
        %v6279 = vunpack.c.l.b16 %v6149
        %v6280 = vunpack.c.l.b16 %v6150
        %v6281 = vunpack.c.l.b16 %v6151
        %v6282 = vunpack.c.l.b16 %v6152
        %v6283 = vunpack.c.l.b16 %v6153
        %v6284 = vunpack.c.l.b16 %v6154
        %v6285 = vunpack.c.l.b16 %v6155
        %v6286 = vunpack.c.l.b16 %v6156
        %v6287 = vunpack.c.l.b16 %v6157
        %v6288 = vunpack.c.l.b16 %v6158
        %v6289 = vunpack.c.l.b16 %v6159
        %v6290 = vunpack.c.l.b16 %v6160
        %v6291 = vunpack.c.l.b16 %v6161
        %v6292 = vunpack.c.l.b16 %v6162
        %v6293 = vunpack.c.l.b16 %v6163
        %v6294 = vunpack.c.l.b16 %v6164
        %v6295 = vunpack.c.l.b16 %v6165
        %v6296 = vunpack.c.l.b16 %v6166
        %v6297 = vunpack.c.l.b16 %v6167
        %v6298 = vunpack.c.l.b16 %v6168
        %v6299 = vunpack.c.l.b16 %v6169
        %v6300 = vunpack.c.l.b16 %v6170
        %v6301 = vunpack.c.l.b16 %v6171
        %v6302 = vunpack.c.l.b16 %v6172
        %v6303 = vunpack.c.l.b16 %v6173
        %v6304 = vunpack.c.l.b16 %v6174
        %v6305 = vunpack.c.l.b16 %v6175
        %v6306 = vunpack.c.l.b16 %v6176
        %v6307 = vunpack.c.l.b16 %v6177
        %v6308 = vunpack.c.l.b16 %v6178
        %v6309 = vunpack.c.l.b16 %v6179
        %v6310 = vunpack.c.l.b16 %v6180
        %v6311 = vunpack.c.l.b16 %v6181
        %v6312 = vunpack.c.l.b16 %v6182
        %v6313 = vunpack.c.l.b16 %v6183
        %v6314 = vunpack.c.l.b16 %v6184
        %v6315 = vunpack.c.l.b16 %v6185
        %v6316 = vunpack.c.l.b16 %v6186
        %v6317 = vunpack.c.l.b16 %v6187
        %v6318 = vunpack.c.l.b16 %v6188
        %v6319 = vpack.c.b16 %v6256, %v6255
        %v6320 = vpack.c.b16 %v6258, %v6257
        %v6321 = vpack.c.b16 %v6260, %v6259
        %v6322 = vpack.c.b16 %v6262, %v6261
        %v6323 = vpack.c.b16 %v6264, %v6263
        %v6324 = vpack.c.b16 %v6266, %v6265
        %v6325 = vpack.c.b16 %v6268, %v6267
        %v6326 = vpack.c.b16 %v6270, %v6269
        %v6327 = vpack.c.b16 %v6272, %v6271
        %v6328 = vpack.c.b16 %v6274, %v6273
        %v6329 = vpack.c.b16 %v6276, %v6275
        %v6330 = vpack.c.b16 %v6278, %v6277
        %v6331 = vpack.c.b16 %v6280, %v6279
        %v6332 = vpack.c.b16 %v6282, %v6281
        %v6333 = vpack.c.b16 %v6284, %v6283
        %v6334 = vpack.c.b16 %v6286, %v6285
        %v6335 = vpack.c.b16 %v6288, %v6287
        %v6336 = vpack.c.b16 %v6290, %v6289
        %v6337 = vpack.c.b16 %v6292, %v6291
        %v6338 = vpack.c.b16 %v6294, %v6293
        %v6339 = vpack.c.b16 %v6296, %v6295
        %v6340 = vpack.c.b16 %v6298, %v6297
        %v6341 = vpack.c.b16 %v6300, %v6299
        %v6342 = vpack.c.b16 %v6302, %v6301
        %v6343 = vpack.c.b16 %v6304, %v6303
        %v6344 = vpack.c.b16 %v6306, %v6305
        %v6345 = vpack.c.b16 %v6308, %v6307
        %v6346 = vpack.c.b16 %v6310, %v6309
        %v6347 = vpack.c.b16 %v6312, %v6311
        %v6348 = vpack.c.b16 %v6314, %v6313
        %v6349 = vpack.c.b16 %v6316, %v6315
        %v6350 = vpack.c.b16 %v6318, %v6317
        %v6352 = vsel %vm2039, %v6319, 0
        %v6355 = vsel %vm2039, %v6320, 0
        %v6358 = vsel %vm2039, %v6321, 0
        %v6361 = vsel %vm2039, %v6322, 0
        %v6364 = vsel %vm2039, %v6323, 0
        %v6367 = vsel %vm2039, %v6324, 0
        %v6370 = vsel %vm2039, %v6325, 0
        %v6373 = vsel %vm2039, %v6326, 0
        %v6376 = vsel %vm2039, %v6327, 0
        %v6379 = vsel %vm2039, %v6328, 0
        %v6382 = vsel %vm2039, %v6329, 0
        %v6385 = vsel %vm2039, %v6330, 0
        %v6388 = vsel %vm2039, %v6331, 0
        %v6391 = vsel %vm2039, %v6332, 0
        %v6394 = vsel %vm2039, %v6333, 0
        %v6397 = vsel %vm2039, %v6334, 0
        %v6400 = vsel %vm2039, %v6335, 0
        %v6403 = vsel %vm2039, %v6336, 0
        %v6406 = vsel %vm2039, %v6337, 0
        %v6409 = vsel %vm2039, %v6338, 0
        %v6412 = vsel %vm2039, %v6339, 0
        %v6415 = vsel %vm2039, %v6340, 0
        %v6418 = vsel %vm2039, %v6341, 0
        %v6421 = vsel %vm2039, %v6342, 0
        %v6424 = vsel %vm2039, %v6343, 0
        %v6427 = vsel %vm2039, %v6344, 0
        %v6430 = vsel %vm2039, %v6345, 0
        %v6433 = vsel %vm2039, %v6346, 0
        %v6436 = vsel %vm2039, %v6347, 0
        %v6439 = vsel %vm2039, %v6348, 0
        %v6442 = vsel %vm2039, %v6349, 0
        %v6445 = vsel %vm2039, %v6350, 0
        %v6448 = vsel %vm2136, %v6190, 0
        %6450 = vmatpush.bf16.msra.mxu0 0
        %6451 = vmatpush.bf16.msra.mxu0 0
        %6452 = vmatpush.bf16.msra.mxu0 0
        %6453 = vmatpush.bf16.msra.mxu0 0
        %6454 = vmatpush.bf16.msra.mxu0 0
        %6455 = vmatpush.bf16.msra.mxu0 0
        %6456 = vmatpush.bf16.msra.mxu0 0
        %6457 = vmatpush.bf16.msra.mxu0 %v6448
        %6458 = vmatmul.bf16.gmra.mxu0 %v6352
        %v6459 = vpop.f32.mrf.mxu0
        %v6460 = vadd.f32 0.0, %v6459
        %v6461 = vpop.f32.mrf.mxu0
        %v6462 = vadd.f32 0.0, %v6461
        %6463 = vmatmul.bf16.gmra.mxu0 %v6355
        %v6464 = vpop.f32.mrf.mxu0
        %v6465 = vadd.f32 0.0, %v6464
        %v6466 = vpop.f32.mrf.mxu0
        %v6467 = vadd.f32 0.0, %v6466
        %6468 = vmatmul.bf16.gmra.mxu0 %v6358
        %v6469 = vpop.f32.mrf.mxu0
        %v6470 = vadd.f32 0.0, %v6469
        %v6471 = vpop.f32.mrf.mxu0
        %v6472 = vadd.f32 0.0, %v6471
        %6473 = vmatmul.bf16.gmra.mxu0 %v6361
        %v6474 = vpop.f32.mrf.mxu0
        %v6475 = vadd.f32 0.0, %v6474
        %v6476 = vpop.f32.mrf.mxu0
        %v6477 = vadd.f32 0.0, %v6476
        %6478 = vmatmul.bf16.gmra.mxu0 %v6364
        %v6479 = vpop.f32.mrf.mxu0
        %v6480 = vadd.f32 0.0, %v6479
        %v6481 = vpop.f32.mrf.mxu0
        %v6482 = vadd.f32 0.0, %v6481
        %6483 = vmatmul.bf16.gmra.mxu0 %v6367
        %v6484 = vpop.f32.mrf.mxu0
        %v6485 = vadd.f32 0.0, %v6484
        %v6486 = vpop.f32.mrf.mxu0
        %v6487 = vadd.f32 0.0, %v6486
        %6488 = vmatmul.bf16.gmra.mxu0 %v6370
        %v6489 = vpop.f32.mrf.mxu0
        %v6490 = vadd.f32 0.0, %v6489
        %v6491 = vpop.f32.mrf.mxu0
        %v6492 = vadd.f32 0.0, %v6491
        %6493 = vmatmul.bf16.gmra.mxu0 %v6373
        %v6494 = vpop.f32.mrf.mxu0
        %v6495 = vadd.f32 0.0, %v6494
        %v6496 = vpop.f32.mrf.mxu0
        %v6497 = vadd.f32 0.0, %v6496
        %6498 = vmatmul.bf16.gmra.mxu0 %v6376
        %v6499 = vpop.f32.mrf.mxu0
        %v6500 = vadd.f32 0.0, %v6499
        %v6501 = vpop.f32.mrf.mxu0
        %v6502 = vadd.f32 0.0, %v6501
        %6503 = vmatmul.bf16.gmra.mxu0 %v6379
        %v6504 = vpop.f32.mrf.mxu0
        %v6505 = vadd.f32 0.0, %v6504
        %v6506 = vpop.f32.mrf.mxu0
        %v6507 = vadd.f32 0.0, %v6506
        %6508 = vmatmul.bf16.gmra.mxu0 %v6382
        %v6509 = vpop.f32.mrf.mxu0
        %v6510 = vadd.f32 0.0, %v6509
        %v6511 = vpop.f32.mrf.mxu0
        %v6512 = vadd.f32 0.0, %v6511
        %6513 = vmatmul.bf16.gmra.mxu0 %v6385
        %v6514 = vpop.f32.mrf.mxu0
        %v6515 = vadd.f32 0.0, %v6514
        %v6516 = vpop.f32.mrf.mxu0
        %v6517 = vadd.f32 0.0, %v6516
        %6518 = vmatmul.bf16.gmra.mxu0 %v6388
        %v6519 = vpop.f32.mrf.mxu0
        %v6520 = vadd.f32 0.0, %v6519
        %v6521 = vpop.f32.mrf.mxu0
        %v6522 = vadd.f32 0.0, %v6521
        %6523 = vmatmul.bf16.gmra.mxu0 %v6391
        %v6524 = vpop.f32.mrf.mxu0
        %v6525 = vadd.f32 0.0, %v6524
        %v6526 = vpop.f32.mrf.mxu0
        %v6527 = vadd.f32 0.0, %v6526
        %6528 = vmatmul.bf16.gmra.mxu0 %v6394
        %v6529 = vpop.f32.mrf.mxu0
        %v6530 = vadd.f32 0.0, %v6529
        %v6531 = vpop.f32.mrf.mxu0
        %v6532 = vadd.f32 0.0, %v6531
        %6533 = vmatmul.bf16.gmra.mxu0 %v6397
        %v6534 = vpop.f32.mrf.mxu0
        %v6535 = vadd.f32 0.0, %v6534
        %v6536 = vpop.f32.mrf.mxu0
        %v6537 = vadd.f32 0.0, %v6536
        %6538 = vmatmul.bf16.gmra.mxu0 %v6400
        %v6539 = vpop.f32.mrf.mxu0
        %v6540 = vadd.f32 0.0, %v6539
        %v6541 = vpop.f32.mrf.mxu0
        %v6542 = vadd.f32 0.0, %v6541
        %6543 = vmatmul.bf16.gmra.mxu0 %v6403
        %v6544 = vpop.f32.mrf.mxu0
        %v6545 = vadd.f32 0.0, %v6544
        %v6546 = vpop.f32.mrf.mxu0
        %v6547 = vadd.f32 0.0, %v6546
        %6548 = vmatmul.bf16.gmra.mxu0 %v6406
        %v6549 = vpop.f32.mrf.mxu0
        %v6550 = vadd.f32 0.0, %v6549
        %v6551 = vpop.f32.mrf.mxu0
        %v6552 = vadd.f32 0.0, %v6551
        %6553 = vmatmul.bf16.gmra.mxu0 %v6409
        %v6554 = vpop.f32.mrf.mxu0
        %v6555 = vadd.f32 0.0, %v6554
        %v6556 = vpop.f32.mrf.mxu0
        %v6557 = vadd.f32 0.0, %v6556
        %6558 = vmatmul.bf16.gmra.mxu0 %v6412
        %v6559 = vpop.f32.mrf.mxu0
        %v6560 = vadd.f32 0.0, %v6559
        %v6561 = vpop.f32.mrf.mxu0
        %v6562 = vadd.f32 0.0, %v6561
        %6563 = vmatmul.bf16.gmra.mxu0 %v6415
        %v6564 = vpop.f32.mrf.mxu0
        %v6565 = vadd.f32 0.0, %v6564
        %v6566 = vpop.f32.mrf.mxu0
        %v6567 = vadd.f32 0.0, %v6566
        %6568 = vmatmul.bf16.gmra.mxu0 %v6418
        %v6569 = vpop.f32.mrf.mxu0
        %v6570 = vadd.f32 0.0, %v6569
        %v6571 = vpop.f32.mrf.mxu0
        %v6572 = vadd.f32 0.0, %v6571
        %6573 = vmatmul.bf16.gmra.mxu0 %v6421
        %v6574 = vpop.f32.mrf.mxu0
        %v6575 = vadd.f32 0.0, %v6574
        %v6576 = vpop.f32.mrf.mxu0
        %v6577 = vadd.f32 0.0, %v6576
        %6578 = vmatmul.bf16.gmra.mxu0 %v6424
        %v6579 = vpop.f32.mrf.mxu0
        %v6580 = vadd.f32 0.0, %v6579
        %v6581 = vpop.f32.mrf.mxu0
        %v6582 = vadd.f32 0.0, %v6581
        %6583 = vmatmul.bf16.gmra.mxu0 %v6427
        %v6584 = vpop.f32.mrf.mxu0
        %v6585 = vadd.f32 0.0, %v6584
        %v6586 = vpop.f32.mrf.mxu0
        %v6587 = vadd.f32 0.0, %v6586
        %6588 = vmatmul.bf16.gmra.mxu0 %v6430
        %v6589 = vpop.f32.mrf.mxu0
        %v6590 = vadd.f32 0.0, %v6589
        %v6591 = vpop.f32.mrf.mxu0
        %v6592 = vadd.f32 0.0, %v6591
        %6593 = vmatmul.bf16.gmra.mxu0 %v6433
        %v6594 = vpop.f32.mrf.mxu0
        %v6595 = vadd.f32 0.0, %v6594
        %v6596 = vpop.f32.mrf.mxu0
        %v6597 = vadd.f32 0.0, %v6596
        %6598 = vmatmul.bf16.gmra.mxu0 %v6436
        %v6599 = vpop.f32.mrf.mxu0
        %v6600 = vadd.f32 0.0, %v6599
        %v6601 = vpop.f32.mrf.mxu0
        %v6602 = vadd.f32 0.0, %v6601
        %6603 = vmatmul.bf16.gmra.mxu0 %v6439
        %v6604 = vpop.f32.mrf.mxu0
        %v6605 = vadd.f32 0.0, %v6604
        %v6606 = vpop.f32.mrf.mxu0
        %v6607 = vadd.f32 0.0, %v6606
        %6608 = vmatmul.bf16.gmra.mxu0 %v6442
        %v6609 = vpop.f32.mrf.mxu0
        %v6610 = vadd.f32 0.0, %v6609
        %v6611 = vpop.f32.mrf.mxu0
        %v6612 = vadd.f32 0.0, %v6611
        %6613 = vmatmul.bf16.gmra.mxu0 %v6445
        %v6614 = vpop.f32.mrf.mxu0
        %v6615 = vadd.f32 0.0, %v6614
        %v6616 = vpop.f32.mrf.mxu0
        %v6617 = vadd.f32 0.0, %v6616
        %6618 = vdwg.mxu0
        %v6619 = vadd.f32 %v6060, %v6460
        %v6620 = vadd.f32 %v6061, %v6462
        %v6621 = vadd.f32 %v6062, %v6465
        %v6622 = vadd.f32 %v6063, %v6467
        %v6623 = vadd.f32 %v6064, %v6470
        %v6624 = vadd.f32 %v6065, %v6472
        %v6625 = vadd.f32 %v6066, %v6475
        %v6626 = vadd.f32 %v6067, %v6477
        %v6627 = vadd.f32 %v6068, %v6480
        %v6628 = vadd.f32 %v6069, %v6482
        %v6629 = vadd.f32 %v6070, %v6485
        %v6630 = vadd.f32 %v6071, %v6487
        %v6631 = vadd.f32 %v6072, %v6490
        %v6632 = vadd.f32 %v6073, %v6492
        %v6633 = vadd.f32 %v6074, %v6495
        %v6634 = vadd.f32 %v6075, %v6497
        %v6635 = vadd.f32 %v6076, %v6500
        %v6636 = vadd.f32 %v6077, %v6502
        %v6637 = vadd.f32 %v6078, %v6505
        %v6638 = vadd.f32 %v6079, %v6507
        %v6639 = vadd.f32 %v6080, %v6510
        %v6640 = vadd.f32 %v6081, %v6512
        %v6641 = vadd.f32 %v6082, %v6515
        %v6642 = vadd.f32 %v6083, %v6517
        %v6643 = vadd.f32 %v6084, %v6520
        %v6644 = vadd.f32 %v6085, %v6522
        %v6645 = vadd.f32 %v6086, %v6525
        %v6646 = vadd.f32 %v6087, %v6527
        %v6647 = vadd.f32 %v6088, %v6530
        %v6648 = vadd.f32 %v6089, %v6532
        %v6649 = vadd.f32 %v6090, %v6535
        %v6650 = vadd.f32 %v6091, %v6537
        %v6651 = vadd.f32 %v6092, %v6540
        %v6652 = vadd.f32 %v6093, %v6542
        %v6653 = vadd.f32 %v6094, %v6545
        %v6654 = vadd.f32 %v6095, %v6547
        %v6655 = vadd.f32 %v6096, %v6550
        %v6656 = vadd.f32 %v6097, %v6552
        %v6657 = vadd.f32 %v6098, %v6555
        %v6658 = vadd.f32 %v6099, %v6557
        %v6659 = vadd.f32 %v6100, %v6560
        %v6660 = vadd.f32 %v6101, %v6562
        %v6661 = vadd.f32 %v6102, %v6565
        %v6662 = vadd.f32 %v6103, %v6567
        %v6663 = vadd.f32 %v6104, %v6570
        %v6664 = vadd.f32 %v6105, %v6572
        %v6665 = vadd.f32 %v6106, %v6575
        %v6666 = vadd.f32 %v6107, %v6577
        %v6667 = vadd.f32 %v6108, %v6580
        %v6668 = vadd.f32 %v6109, %v6582
        %v6669 = vadd.f32 %v6110, %v6585
        %v6670 = vadd.f32 %v6111, %v6587
        %v6671 = vadd.f32 %v6112, %v6590
        %v6672 = vadd.f32 %v6113, %v6592
        %v6673 = vadd.f32 %v6114, %v6595
        %v6674 = vadd.f32 %v6115, %v6597
        %v6675 = vadd.f32 %v6116, %v6600
        %v6676 = vadd.f32 %v6117, %v6602
        %v6677 = vadd.f32 %v6118, %v6605
        %v6678 = vadd.f32 %v6119, %v6607
        %v6679 = vadd.f32 %v6120, %v6610
        %v6680 = vadd.f32 %v6121, %v6612
        %v6681 = vadd.f32 %v6122, %v6615
        %v6682 = vadd.f32 %v6123, %v6617
        %v6683 = vld [vmem:[%s6124] sm:$0xf]
        %v6684 = vld [vmem:[%s6124 + $0x4] sm:$0xf]
        %v6685 = vld [vmem:[%s6124 + $0x8] sm:$0x1]
        %v6686 = vld [vmem:[%s6124 + $0xc] sm:$0xf]
        %v6687 = vld [vmem:[%s6124 + $0x10] sm:$0xf]
        %v6688 = vld [vmem:[%s6124 + $0x14] sm:$0x1]
        %v6689 = vld [vmem:[%s6124 + $0x18] sm:$0xf]
        %v6690 = vld [vmem:[%s6124 + $0x1c] sm:$0xf]
        %v6691 = vld [vmem:[%s6124 + $0x20] sm:$0x1]
        %v6692 = vld [vmem:[%s6124 + $0x24] sm:$0xf]
        %v6693 = vld [vmem:[%s6124 + $0x28] sm:$0xf]
        %v6694 = vld [vmem:[%s6124 + $0x2c] sm:$0x1]
        %v6695 = vld [vmem:[%s6124 + $0x30] sm:$0xf]
        %v6696 = vld [vmem:[%s6124 + $0x34] sm:$0xf]
        %v6697 = vld [vmem:[%s6124 + $0x38] sm:$0x1]
        %v6698 = vld [vmem:[%s6124 + $0x3c] sm:$0xf]
        %v6699 = vld [vmem:[%s6124 + $0x40] sm:$0xf]
        %v6700 = vld [vmem:[%s6124 + $0x44] sm:$0x1]
        %v6701 = vld [vmem:[%s6124 + $0x48] sm:$0xf]
        %v6702 = vld [vmem:[%s6124 + $0x4c] sm:$0xf]
        %v6703 = vld [vmem:[%s6124 + $0x50] sm:$0x1]
        %v6704 = vld [vmem:[%s6124 + $0x54] sm:$0xf]
        %v6705 = vld [vmem:[%s6124 + $0x58] sm:$0xf]
        %v6706 = vld [vmem:[%s6124 + $0x5c] sm:$0x1]
        %v6707 = vld [vmem:[%s6124 + $0x60] sm:$0xf]
        %v6708 = vld [vmem:[%s6124 + $0x64] sm:$0xf]
        %v6709 = vld [vmem:[%s6124 + $0x68] sm:$0x1]
        %v6710 = vld [vmem:[%s6124 + $0x6c] sm:$0xf]
        %v6711 = vld [vmem:[%s6124 + $0x70] sm:$0xf]
        %v6712 = vld [vmem:[%s6124 + $0x74] sm:$0x1]
        %v6713 = vld [vmem:[%s6124 + $0x78] sm:$0xf]
        %v6714 = vld [vmem:[%s6124 + $0x7c] sm:$0xf]
        %v6715 = vld [vmem:[%s6124 + $0x80] sm:$0x1]
        %v6716 = vld [vmem:[%s6124 + $0x84] sm:$0xf]
        %v6717 = vld [vmem:[%s6124 + $0x88] sm:$0xf]
        %v6718 = vld [vmem:[%s6124 + $0x8c] sm:$0x1]
        %v6719 = vld [vmem:[%s6124 + $0x90] sm:$0xf]
        %v6720 = vld [vmem:[%s6124 + $0x94] sm:$0xf]
        %v6721 = vld [vmem:[%s6124 + $0x98] sm:$0x1]
        %v6722 = vld [vmem:[%s6124 + $0x9c] sm:$0xf]
        %v6723 = vld [vmem:[%s6124 + $0xa0] sm:$0xf]
        %v6724 = vld [vmem:[%s6124 + $0xa4] sm:$0x1]
        %v6725 = vld [vmem:[%s6124 + $0xa8] sm:$0xf]
        %v6726 = vld [vmem:[%s6124 + $0xac] sm:$0xf]
        %v6727 = vld [vmem:[%s6124 + $0xb0] sm:$0x1]
        %v6728 = vld [vmem:[%s6124 + $0xb4] sm:$0xf]
        %v6729 = vld [vmem:[%s6124 + $0xb8] sm:$0xf]
        %v6730 = vld [vmem:[%s6124 + $0xbc] sm:$0x1]
        %v6731 = vld [vmem:[%s6124 + $0xc0] sm:$0xf]
        %v6732 = vld [vmem:[%s6124 + $0xc4] sm:$0xf]
        %v6733 = vld [vmem:[%s6124 + $0xc8] sm:$0x1]
        %v6734 = vld [vmem:[%s6124 + $0xcc] sm:$0xf]
        %v6735 = vld [vmem:[%s6124 + $0xd0] sm:$0xf]
        %v6736 = vld [vmem:[%s6124 + $0xd4] sm:$0x1]
        %v6737 = vld [vmem:[%s6124 + $0xd8] sm:$0xf]
        %v6738 = vld [vmem:[%s6124 + $0xdc] sm:$0xf]
        %v6739 = vld [vmem:[%s6124 + $0xe0] sm:$0x1]
        %v6740 = vld [vmem:[%s6124 + $0xe4] sm:$0xf]
        %v6741 = vld [vmem:[%s6124 + $0xe8] sm:$0xf]
        %v6742 = vld [vmem:[%s6124 + $0xec] sm:$0x1]
        %v6743 = vld [vmem:[%s6124 + $0xf0] sm:$0xf]
        %v6744 = vld [vmem:[%s6124 + $0xf4] sm:$0xf]
        %v6745 = vld [vmem:[%s6124 + $0xf8] sm:$0x1]
        %v6746 = vld [vmem:[%s6124 + $0xfc] sm:$0xf]
        %v6747 = vld [vmem:[%s6124 + $0x100] sm:$0xf]
        %v6748 = vld [vmem:[%s6124 + $0x104] sm:$0x1]
        %v6749 = vld [vmem:[%s6124 + $0x108] sm:$0xf]
        %v6750 = vld [vmem:[%s6124 + $0x10c] sm:$0xf]
        %v6751 = vld [vmem:[%s6124 + $0x110] sm:$0x1]
        %v6752 = vld [vmem:[%s6124 + $0x114] sm:$0xf]
        %v6753 = vld [vmem:[%s6124 + $0x118] sm:$0xf]
        %v6754 = vld [vmem:[%s6124 + $0x11c] sm:$0x1]
        %v6755 = vld [vmem:[%s6124 + $0x120] sm:$0xf]
        %v6756 = vld [vmem:[%s6124 + $0x124] sm:$0xf]
        %v6757 = vld [vmem:[%s6124 + $0x128] sm:$0x1]
        %v6758 = vld [vmem:[%s6124 + $0x12c] sm:$0xf]
        %v6759 = vld [vmem:[%s6124 + $0x130] sm:$0xf]
        %v6760 = vld [vmem:[%s6124 + $0x134] sm:$0x1]
        %v6761 = vld [vmem:[%s6124 + $0x138] sm:$0xf]
        %v6762 = vld [vmem:[%s6124 + $0x13c] sm:$0xf]
        %v6763 = vld [vmem:[%s6124 + $0x140] sm:$0x1]
        %v6764 = vld [vmem:[%s6124 + $0x144] sm:$0xf]
        %v6765 = vld [vmem:[%s6124 + $0x148] sm:$0xf]
        %v6766 = vld [vmem:[%s6124 + $0x14c] sm:$0x1]
        %v6767 = vld [vmem:[%s6124 + $0x150] sm:$0xf]
        %v6768 = vld [vmem:[%s6124 + $0x154] sm:$0xf]
        %v6769 = vld [vmem:[%s6124 + $0x158] sm:$0x1]
        %v6770 = vld [vmem:[%s6124 + $0x15c] sm:$0xf]
        %v6771 = vld [vmem:[%s6124 + $0x160] sm:$0xf]
        %v6772 = vld [vmem:[%s6124 + $0x164] sm:$0x1]
        %v6773 = vld [vmem:[%s6124 + $0x168] sm:$0xf]
        %v6774 = vld [vmem:[%s6124 + $0x16c] sm:$0xf]
        %v6775 = vld [vmem:[%s6124 + $0x170] sm:$0x1]
        %v6776 = vld [vmem:[%s6124 + $0x174] sm:$0xf]
        %v6777 = vld [vmem:[%s6124 + $0x178] sm:$0xf]
        %v6778 = vld [vmem:[%s6124 + $0x17c] sm:$0x1]
        %v6780 = vshrl.u32 %v6683, 16
        %v6782 = vrot.slane %v6780, 4
        %v6783 = vshll.u32 %v6683, 16
        %v6785 = vrot.slane %v6783, 5
        %v6786 = vor.u32 %v6782, %v6785
        %v6787 = vrot.slane %v6786, 4
        %v6789 = vshll.u32 %v6684, 16
        %v6791 = vrot.slane %v6789, 5
        %v6792 = vsel %vm1172, %v6787, %v6791
        %v6793 = vshrl.u32 %v6684, 16
        %v6795 = vrot.slane %v6793, 4
        %v6796 = vor.u32 %v6795, %v6791
        %v6797 = vrot.slane %v6796, 4
        %v6799 = vshll.u32 %v6685, 16
        %v6801 = vrot.slane %v6799, 5
        %v6802 = vsel %vm1172, %v6797, %v6801
        %v6804 = vshrl.u32 %v6686, 16
        %v6806 = vrot.slane %v6804, 4
        %v6807 = vshll.u32 %v6686, 16
        %v6809 = vrot.slane %v6807, 5
        %v6810 = vor.u32 %v6806, %v6809
        %v6811 = vrot.slane %v6810, 4
        %v6813 = vshll.u32 %v6687, 16
        %v6815 = vrot.slane %v6813, 5
        %v6816 = vsel %vm1172, %v6811, %v6815
        %v6817 = vshrl.u32 %v6687, 16
        %v6819 = vrot.slane %v6817, 4
        %v6820 = vor.u32 %v6819, %v6815
        %v6821 = vrot.slane %v6820, 4
        %v6823 = vshll.u32 %v6688, 16
        %v6825 = vrot.slane %v6823, 5
        %v6826 = vsel %vm1172, %v6821, %v6825
        %v6828 = vshrl.u32 %v6689, 16
        %v6830 = vrot.slane %v6828, 4
        %v6831 = vshll.u32 %v6689, 16
        %v6833 = vrot.slane %v6831, 5
        %v6834 = vor.u32 %v6830, %v6833
        %v6835 = vrot.slane %v6834, 4
        %v6837 = vshll.u32 %v6690, 16
        %v6839 = vrot.slane %v6837, 5
        %v6840 = vsel %vm1172, %v6835, %v6839
        %v6841 = vshrl.u32 %v6690, 16
        %v6843 = vrot.slane %v6841, 4
        %v6844 = vor.u32 %v6843, %v6839
        %v6845 = vrot.slane %v6844, 4
        %v6847 = vshll.u32 %v6691, 16
        %v6849 = vrot.slane %v6847, 5
        %v6850 = vsel %vm1172, %v6845, %v6849
        %v6852 = vshrl.u32 %v6692, 16
        %v6854 = vrot.slane %v6852, 4
        %v6855 = vshll.u32 %v6692, 16
        %v6857 = vrot.slane %v6855, 5
        %v6858 = vor.u32 %v6854, %v6857
        %v6859 = vrot.slane %v6858, 4
        %v6861 = vshll.u32 %v6693, 16
        %v6863 = vrot.slane %v6861, 5
        %v6864 = vsel %vm1172, %v6859, %v6863
        %v6865 = vshrl.u32 %v6693, 16
        %v6867 = vrot.slane %v6865, 4
        %v6868 = vor.u32 %v6867, %v6863
        %v6869 = vrot.slane %v6868, 4
        %v6871 = vshll.u32 %v6694, 16
        %v6873 = vrot.slane %v6871, 5
        %v6874 = vsel %vm1172, %v6869, %v6873
        %v6876 = vshrl.u32 %v6695, 16
        %v6878 = vrot.slane %v6876, 4
        %v6879 = vshll.u32 %v6695, 16
        %v6881 = vrot.slane %v6879, 5
        %v6882 = vor.u32 %v6878, %v6881
        %v6883 = vrot.slane %v6882, 4
        %v6885 = vshll.u32 %v6696, 16
        %v6887 = vrot.slane %v6885, 5
        %v6888 = vsel %vm1172, %v6883, %v6887
        %v6889 = vshrl.u32 %v6696, 16
        %v6891 = vrot.slane %v6889, 4
        %v6892 = vor.u32 %v6891, %v6887
        %v6893 = vrot.slane %v6892, 4
        %v6895 = vshll.u32 %v6697, 16
        %v6897 = vrot.slane %v6895, 5
        %v6898 = vsel %vm1172, %v6893, %v6897
        %v6900 = vshrl.u32 %v6698, 16
        %v6902 = vrot.slane %v6900, 4
        %v6903 = vshll.u32 %v6698, 16
        %v6905 = vrot.slane %v6903, 5
        %v6906 = vor.u32 %v6902, %v6905
        %v6907 = vrot.slane %v6906, 4
        %v6909 = vshll.u32 %v6699, 16
        %v6911 = vrot.slane %v6909, 5
        %v6912 = vsel %vm1172, %v6907, %v6911
        %v6913 = vshrl.u32 %v6699, 16
        %v6915 = vrot.slane %v6913, 4
        %v6916 = vor.u32 %v6915, %v6911
        %v6917 = vrot.slane %v6916, 4
        %v6919 = vshll.u32 %v6700, 16
        %v6921 = vrot.slane %v6919, 5
        %v6922 = vsel %vm1172, %v6917, %v6921
        %v6924 = vshrl.u32 %v6701, 16
        %v6926 = vrot.slane %v6924, 4
        %v6927 = vshll.u32 %v6701, 16
        %v6929 = vrot.slane %v6927, 5
        %v6930 = vor.u32 %v6926, %v6929
        %v6931 = vrot.slane %v6930, 4
        %v6933 = vshll.u32 %v6702, 16
        %v6935 = vrot.slane %v6933, 5
        %v6936 = vsel %vm1172, %v6931, %v6935
        %v6937 = vshrl.u32 %v6702, 16
        %v6939 = vrot.slane %v6937, 4
        %v6940 = vor.u32 %v6939, %v6935
        %v6941 = vrot.slane %v6940, 4
        %v6943 = vshll.u32 %v6703, 16
        %v6945 = vrot.slane %v6943, 5
        %v6946 = vsel %vm1172, %v6941, %v6945
        %v6948 = vshrl.u32 %v6704, 16
        %v6950 = vrot.slane %v6948, 4
        %v6951 = vshll.u32 %v6704, 16
        %v6953 = vrot.slane %v6951, 5
        %v6954 = vor.u32 %v6950, %v6953
        %v6955 = vrot.slane %v6954, 4
        %v6957 = vshll.u32 %v6705, 16
        %v6959 = vrot.slane %v6957, 5
        %v6960 = vsel %vm1172, %v6955, %v6959
        %v6961 = vshrl.u32 %v6705, 16
        %v6963 = vrot.slane %v6961, 4
        %v6964 = vor.u32 %v6963, %v6959
        %v6965 = vrot.slane %v6964, 4
        %v6967 = vshll.u32 %v6706, 16
        %v6969 = vrot.slane %v6967, 5
        %v6970 = vsel %vm1172, %v6965, %v6969
        %v6972 = vshrl.u32 %v6707, 16
        %v6974 = vrot.slane %v6972, 4
        %v6975 = vshll.u32 %v6707, 16
        %v6977 = vrot.slane %v6975, 5
        %v6978 = vor.u32 %v6974, %v6977
        %v6979 = vrot.slane %v6978, 4
        %v6981 = vshll.u32 %v6708, 16
        %v6983 = vrot.slane %v6981, 5
        %v6984 = vsel %vm1172, %v6979, %v6983
        %v6985 = vshrl.u32 %v6708, 16
        %v6987 = vrot.slane %v6985, 4
        %v6988 = vor.u32 %v6987, %v6983
        %v6989 = vrot.slane %v6988, 4
        %v6991 = vshll.u32 %v6709, 16
        %v6993 = vrot.slane %v6991, 5
        %v6994 = vsel %vm1172, %v6989, %v6993
        %v6996 = vshrl.u32 %v6710, 16
        %v6998 = vrot.slane %v6996, 4
        %v6999 = vshll.u32 %v6710, 16
        %v7001 = vrot.slane %v6999, 5
        %v7002 = vor.u32 %v6998, %v7001
        %v7003 = vrot.slane %v7002, 4
        %v7005 = vshll.u32 %v6711, 16
        %v7007 = vrot.slane %v7005, 5
        %v7008 = vsel %vm1172, %v7003, %v7007
        %v7009 = vshrl.u32 %v6711, 16
        %v7011 = vrot.slane %v7009, 4
        %v7012 = vor.u32 %v7011, %v7007
        %v7013 = vrot.slane %v7012, 4
        %v7015 = vshll.u32 %v6712, 16
        %v7017 = vrot.slane %v7015, 5
        %v7018 = vsel %vm1172, %v7013, %v7017
        %v7020 = vshrl.u32 %v6713, 16
        %v7022 = vrot.slane %v7020, 4
        %v7023 = vshll.u32 %v6713, 16
        %v7025 = vrot.slane %v7023, 5
        %v7026 = vor.u32 %v7022, %v7025
        %v7027 = vrot.slane %v7026, 4
        %v7029 = vshll.u32 %v6714, 16
        %v7031 = vrot.slane %v7029, 5
        %v7032 = vsel %vm1172, %v7027, %v7031
        %v7033 = vshrl.u32 %v6714, 16
        %v7035 = vrot.slane %v7033, 4
        %v7036 = vor.u32 %v7035, %v7031
        %v7037 = vrot.slane %v7036, 4
        %v7039 = vshll.u32 %v6715, 16
        %v7041 = vrot.slane %v7039, 5
        %v7042 = vsel %vm1172, %v7037, %v7041
        %v7044 = vshrl.u32 %v6716, 16
        %v7046 = vrot.slane %v7044, 4
        %v7047 = vshll.u32 %v6716, 16
        %v7049 = vrot.slane %v7047, 5
        %v7050 = vor.u32 %v7046, %v7049
        %v7051 = vrot.slane %v7050, 4
        %v7053 = vshll.u32 %v6717, 16
        %v7055 = vrot.slane %v7053, 5
        %v7056 = vsel %vm1172, %v7051, %v7055
        %v7057 = vshrl.u32 %v6717, 16
        %v7059 = vrot.slane %v7057, 4
        %v7060 = vor.u32 %v7059, %v7055
        %v7061 = vrot.slane %v7060, 4
        %v7063 = vshll.u32 %v6718, 16
        %v7065 = vrot.slane %v7063, 5
        %v7066 = vsel %vm1172, %v7061, %v7065
        %v7068 = vshrl.u32 %v6719, 16
        %v7070 = vrot.slane %v7068, 4
        %v7071 = vshll.u32 %v6719, 16
        %v7073 = vrot.slane %v7071, 5
        %v7074 = vor.u32 %v7070, %v7073
        %v7075 = vrot.slane %v7074, 4
        %v7077 = vshll.u32 %v6720, 16
        %v7079 = vrot.slane %v7077, 5
        %v7080 = vsel %vm1172, %v7075, %v7079
        %v7081 = vshrl.u32 %v6720, 16
        %v7083 = vrot.slane %v7081, 4
        %v7084 = vor.u32 %v7083, %v7079
        %v7085 = vrot.slane %v7084, 4
        %v7087 = vshll.u32 %v6721, 16
        %v7089 = vrot.slane %v7087, 5
        %v7090 = vsel %vm1172, %v7085, %v7089
        %v7092 = vshrl.u32 %v6722, 16
        %v7094 = vrot.slane %v7092, 4
        %v7095 = vshll.u32 %v6722, 16
        %v7097 = vrot.slane %v7095, 5
        %v7098 = vor.u32 %v7094, %v7097
        %v7099 = vrot.slane %v7098, 4
        %v7101 = vshll.u32 %v6723, 16
        %v7103 = vrot.slane %v7101, 5
        %v7104 = vsel %vm1172, %v7099, %v7103
        %v7105 = vshrl.u32 %v6723, 16
        %v7107 = vrot.slane %v7105, 4
        %v7108 = vor.u32 %v7107, %v7103
        %v7109 = vrot.slane %v7108, 4
        %v7111 = vshll.u32 %v6724, 16
        %v7113 = vrot.slane %v7111, 5
        %v7114 = vsel %vm1172, %v7109, %v7113
        %v7116 = vshrl.u32 %v6725, 16
        %v7118 = vrot.slane %v7116, 4
        %v7119 = vshll.u32 %v6725, 16
        %v7121 = vrot.slane %v7119, 5
        %v7122 = vor.u32 %v7118, %v7121
        %v7123 = vrot.slane %v7122, 4
        %v7125 = vshll.u32 %v6726, 16
        %v7127 = vrot.slane %v7125, 5
        %v7128 = vsel %vm1172, %v7123, %v7127
        %v7129 = vshrl.u32 %v6726, 16
        %v7131 = vrot.slane %v7129, 4
        %v7132 = vor.u32 %v7131, %v7127
        %v7133 = vrot.slane %v7132, 4
        %v7135 = vshll.u32 %v6727, 16
        %v7137 = vrot.slane %v7135, 5
        %v7138 = vsel %vm1172, %v7133, %v7137
        %v7140 = vshrl.u32 %v6728, 16
        %v7142 = vrot.slane %v7140, 4
        %v7143 = vshll.u32 %v6728, 16
        %v7145 = vrot.slane %v7143, 5
        %v7146 = vor.u32 %v7142, %v7145
        %v7147 = vrot.slane %v7146, 4
        %v7149 = vshll.u32 %v6729, 16
        %v7151 = vrot.slane %v7149, 5
        %v7152 = vsel %vm1172, %v7147, %v7151
        %v7153 = vshrl.u32 %v6729, 16
        %v7155 = vrot.slane %v7153, 4
        %v7156 = vor.u32 %v7155, %v7151
        %v7157 = vrot.slane %v7156, 4
        %v7159 = vshll.u32 %v6730, 16
        %v7161 = vrot.slane %v7159, 5
        %v7162 = vsel %vm1172, %v7157, %v7161
        %v7164 = vshrl.u32 %v6731, 16
        %v7166 = vrot.slane %v7164, 4
        %v7167 = vshll.u32 %v6731, 16
        %v7169 = vrot.slane %v7167, 5
        %v7170 = vor.u32 %v7166, %v7169
        %v7171 = vrot.slane %v7170, 4
        %v7173 = vshll.u32 %v6732, 16
        %v7175 = vrot.slane %v7173, 5
        %v7176 = vsel %vm1172, %v7171, %v7175
        %v7177 = vshrl.u32 %v6732, 16
        %v7179 = vrot.slane %v7177, 4
        %v7180 = vor.u32 %v7179, %v7175
        %v7181 = vrot.slane %v7180, 4
        %v7183 = vshll.u32 %v6733, 16
        %v7185 = vrot.slane %v7183, 5
        %v7186 = vsel %vm1172, %v7181, %v7185
        %v7188 = vshrl.u32 %v6734, 16
        %v7190 = vrot.slane %v7188, 4
        %v7191 = vshll.u32 %v6734, 16
        %v7193 = vrot.slane %v7191, 5
        %v7194 = vor.u32 %v7190, %v7193
        %v7195 = vrot.slane %v7194, 4
        %v7197 = vshll.u32 %v6735, 16
        %v7199 = vrot.slane %v7197, 5
        %v7200 = vsel %vm1172, %v7195, %v7199
        %v7201 = vshrl.u32 %v6735, 16
        %v7203 = vrot.slane %v7201, 4
        %v7204 = vor.u32 %v7203, %v7199
        %v7205 = vrot.slane %v7204, 4
        %v7207 = vshll.u32 %v6736, 16
        %v7209 = vrot.slane %v7207, 5
        %v7210 = vsel %vm1172, %v7205, %v7209
        %v7212 = vshrl.u32 %v6737, 16
        %v7214 = vrot.slane %v7212, 4
        %v7215 = vshll.u32 %v6737, 16
        %v7217 = vrot.slane %v7215, 5
        %v7218 = vor.u32 %v7214, %v7217
        %v7219 = vrot.slane %v7218, 4
        %v7221 = vshll.u32 %v6738, 16
        %v7223 = vrot.slane %v7221, 5
        %v7224 = vsel %vm1172, %v7219, %v7223
        %v7225 = vshrl.u32 %v6738, 16
        %v7227 = vrot.slane %v7225, 4
        %v7228 = vor.u32 %v7227, %v7223
        %v7229 = vrot.slane %v7228, 4
        %v7231 = vshll.u32 %v6739, 16
        %v7233 = vrot.slane %v7231, 5
        %v7234 = vsel %vm1172, %v7229, %v7233
        %v7236 = vshrl.u32 %v6740, 16
        %v7238 = vrot.slane %v7236, 4
        %v7239 = vshll.u32 %v6740, 16
        %v7241 = vrot.slane %v7239, 5
        %v7242 = vor.u32 %v7238, %v7241
        %v7243 = vrot.slane %v7242, 4
        %v7245 = vshll.u32 %v6741, 16
        %v7247 = vrot.slane %v7245, 5
        %v7248 = vsel %vm1172, %v7243, %v7247
        %v7249 = vshrl.u32 %v6741, 16
        %v7251 = vrot.slane %v7249, 4
        %v7252 = vor.u32 %v7251, %v7247
        %v7253 = vrot.slane %v7252, 4
        %v7255 = vshll.u32 %v6742, 16
        %v7257 = vrot.slane %v7255, 5
        %v7258 = vsel %vm1172, %v7253, %v7257
        %v7260 = vshrl.u32 %v6743, 16
        %v7262 = vrot.slane %v7260, 4
        %v7263 = vshll.u32 %v6743, 16
        %v7265 = vrot.slane %v7263, 5
        %v7266 = vor.u32 %v7262, %v7265
        %v7267 = vrot.slane %v7266, 4
        %v7269 = vshll.u32 %v6744, 16
        %v7271 = vrot.slane %v7269, 5
        %v7272 = vsel %vm1172, %v7267, %v7271
        %v7273 = vshrl.u32 %v6744, 16
        %v7275 = vrot.slane %v7273, 4
        %v7276 = vor.u32 %v7275, %v7271
        %v7277 = vrot.slane %v7276, 4
        %v7279 = vshll.u32 %v6745, 16
        %v7281 = vrot.slane %v7279, 5
        %v7282 = vsel %vm1172, %v7277, %v7281
        %v7284 = vshrl.u32 %v6746, 16
        %v7286 = vrot.slane %v7284, 4
        %v7287 = vshll.u32 %v6746, 16
        %v7289 = vrot.slane %v7287, 5
        %v7290 = vor.u32 %v7286, %v7289
        %v7291 = vrot.slane %v7290, 4
        %v7293 = vshll.u32 %v6747, 16
        %v7295 = vrot.slane %v7293, 5
        %v7296 = vsel %vm1172, %v7291, %v7295
        %v7297 = vshrl.u32 %v6747, 16
        %v7299 = vrot.slane %v7297, 4
        %v7300 = vor.u32 %v7299, %v7295
        %v7301 = vrot.slane %v7300, 4
        %v7303 = vshll.u32 %v6748, 16
        %v7305 = vrot.slane %v7303, 5
        %v7306 = vsel %vm1172, %v7301, %v7305
        %v7308 = vshrl.u32 %v6749, 16
        %v7310 = vrot.slane %v7308, 4
        %v7311 = vshll.u32 %v6749, 16
        %v7313 = vrot.slane %v7311, 5
        %v7314 = vor.u32 %v7310, %v7313
        %v7315 = vrot.slane %v7314, 4
        %v7317 = vshll.u32 %v6750, 16
        %v7319 = vrot.slane %v7317, 5
        %v7320 = vsel %vm1172, %v7315, %v7319
        %v7321 = vshrl.u32 %v6750, 16
        %v7323 = vrot.slane %v7321, 4
        %v7324 = vor.u32 %v7323, %v7319
        %v7325 = vrot.slane %v7324, 4
        %v7327 = vshll.u32 %v6751, 16
        %v7329 = vrot.slane %v7327, 5
        %v7330 = vsel %vm1172, %v7325, %v7329
        %v7332 = vshrl.u32 %v6752, 16
        %v7334 = vrot.slane %v7332, 4
        %v7335 = vshll.u32 %v6752, 16
        %v7337 = vrot.slane %v7335, 5
        %v7338 = vor.u32 %v7334, %v7337
        %v7339 = vrot.slane %v7338, 4
        %v7341 = vshll.u32 %v6753, 16
        %v7343 = vrot.slane %v7341, 5
        %v7344 = vsel %vm1172, %v7339, %v7343
        %v7345 = vshrl.u32 %v6753, 16
        %v7347 = vrot.slane %v7345, 4
        %v7348 = vor.u32 %v7347, %v7343
        %v7349 = vrot.slane %v7348, 4
        %v7351 = vshll.u32 %v6754, 16
        %v7353 = vrot.slane %v7351, 5
        %v7354 = vsel %vm1172, %v7349, %v7353
        %v7356 = vshrl.u32 %v6755, 16
        %v7358 = vrot.slane %v7356, 4
        %v7359 = vshll.u32 %v6755, 16
        %v7361 = vrot.slane %v7359, 5
        %v7362 = vor.u32 %v7358, %v7361
        %v7363 = vrot.slane %v7362, 4
        %v7365 = vshll.u32 %v6756, 16
        %v7367 = vrot.slane %v7365, 5
        %v7368 = vsel %vm1172, %v7363, %v7367
        %v7369 = vshrl.u32 %v6756, 16
        %v7371 = vrot.slane %v7369, 4
        %v7372 = vor.u32 %v7371, %v7367
        %v7373 = vrot.slane %v7372, 4
        %v7375 = vshll.u32 %v6757, 16
        %v7377 = vrot.slane %v7375, 5
        %v7378 = vsel %vm1172, %v7373, %v7377
        %v7380 = vshrl.u32 %v6758, 16
        %v7382 = vrot.slane %v7380, 4
        %v7383 = vshll.u32 %v6758, 16
        %v7385 = vrot.slane %v7383, 5
        %v7386 = vor.u32 %v7382, %v7385
        %v7387 = vrot.slane %v7386, 4
        %v7389 = vshll.u32 %v6759, 16
        %v7391 = vrot.slane %v7389, 5
        %v7392 = vsel %vm1172, %v7387, %v7391
        %v7393 = vshrl.u32 %v6759, 16
        %v7395 = vrot.slane %v7393, 4
        %v7396 = vor.u32 %v7395, %v7391
        %v7397 = vrot.slane %v7396, 4
        %v7399 = vshll.u32 %v6760, 16
        %v7401 = vrot.slane %v7399, 5
        %v7402 = vsel %vm1172, %v7397, %v7401
        %v7404 = vshrl.u32 %v6761, 16
        %v7406 = vrot.slane %v7404, 4
        %v7407 = vshll.u32 %v6761, 16
        %v7409 = vrot.slane %v7407, 5
        %v7410 = vor.u32 %v7406, %v7409
        %v7411 = vrot.slane %v7410, 4
        %v7413 = vshll.u32 %v6762, 16
        %v7415 = vrot.slane %v7413, 5
        %v7416 = vsel %vm1172, %v7411, %v7415
        %v7417 = vshrl.u32 %v6762, 16
        %v7419 = vrot.slane %v7417, 4
        %v7420 = vor.u32 %v7419, %v7415
        %v7421 = vrot.slane %v7420, 4
        %v7423 = vshll.u32 %v6763, 16
        %v7425 = vrot.slane %v7423, 5
        %v7426 = vsel %vm1172, %v7421, %v7425
        %v7428 = vshrl.u32 %v6764, 16
        %v7430 = vrot.slane %v7428, 4
        %v7431 = vshll.u32 %v6764, 16
        %v7433 = vrot.slane %v7431, 5
        %v7434 = vor.u32 %v7430, %v7433
        %v7435 = vrot.slane %v7434, 4
        %v7437 = vshll.u32 %v6765, 16
        %v7439 = vrot.slane %v7437, 5
        %v7440 = vsel %vm1172, %v7435, %v7439
        %v7441 = vshrl.u32 %v6765, 16
        %v7443 = vrot.slane %v7441, 4
        %v7444 = vor.u32 %v7443, %v7439
        %v7445 = vrot.slane %v7444, 4
        %v7447 = vshll.u32 %v6766, 16
        %v7449 = vrot.slane %v7447, 5
        %v7450 = vsel %vm1172, %v7445, %v7449
        %v7452 = vshrl.u32 %v6767, 16
        %v7454 = vrot.slane %v7452, 4
        %v7455 = vshll.u32 %v6767, 16
        %v7457 = vrot.slane %v7455, 5
        %v7458 = vor.u32 %v7454, %v7457
        %v7459 = vrot.slane %v7458, 4
        %v7461 = vshll.u32 %v6768, 16
        %v7463 = vrot.slane %v7461, 5
        %v7464 = vsel %vm1172, %v7459, %v7463
        %v7465 = vshrl.u32 %v6768, 16
        %v7467 = vrot.slane %v7465, 4
        %v7468 = vor.u32 %v7467, %v7463
        %v7469 = vrot.slane %v7468, 4
        %v7471 = vshll.u32 %v6769, 16
        %v7473 = vrot.slane %v7471, 5
        %v7474 = vsel %vm1172, %v7469, %v7473
        %v7476 = vshrl.u32 %v6770, 16
        %v7478 = vrot.slane %v7476, 4
        %v7479 = vshll.u32 %v6770, 16
        %v7481 = vrot.slane %v7479, 5
        %v7482 = vor.u32 %v7478, %v7481
        %v7483 = vrot.slane %v7482, 4
        %v7485 = vshll.u32 %v6771, 16
        %v7487 = vrot.slane %v7485, 5
        %v7488 = vsel %vm1172, %v7483, %v7487
        %v7489 = vshrl.u32 %v6771, 16
        %v7491 = vrot.slane %v7489, 4
        %v7492 = vor.u32 %v7491, %v7487
        %v7493 = vrot.slane %v7492, 4
        %v7495 = vshll.u32 %v6772, 16
        %v7497 = vrot.slane %v7495, 5
        %v7498 = vsel %vm1172, %v7493, %v7497
        %v7500 = vshrl.u32 %v6773, 16
        %v7502 = vrot.slane %v7500, 4
        %v7503 = vshll.u32 %v6773, 16
        %v7505 = vrot.slane %v7503, 5
        %v7506 = vor.u32 %v7502, %v7505
        %v7507 = vrot.slane %v7506, 4
        %v7509 = vshll.u32 %v6774, 16
        %v7511 = vrot.slane %v7509, 5
        %v7512 = vsel %vm1172, %v7507, %v7511
        %v7513 = vshrl.u32 %v6774, 16
        %v7515 = vrot.slane %v7513, 4
        %v7516 = vor.u32 %v7515, %v7511
        %v7517 = vrot.slane %v7516, 4
        %v7519 = vshll.u32 %v6775, 16
        %v7521 = vrot.slane %v7519, 5
        %v7522 = vsel %vm1172, %v7517, %v7521
        %v7524 = vshrl.u32 %v6776, 16
        %v7526 = vrot.slane %v7524, 4
        %v7527 = vshll.u32 %v6776, 16
        %v7529 = vrot.slane %v7527, 5
        %v7530 = vor.u32 %v7526, %v7529
        %v7531 = vrot.slane %v7530, 4
        %v7533 = vshll.u32 %v6777, 16
        %v7535 = vrot.slane %v7533, 5
        %v7536 = vsel %vm1172, %v7531, %v7535
        %v7537 = vshrl.u32 %v6777, 16
        %v7539 = vrot.slane %v7537, 4
        %v7540 = vor.u32 %v7539, %v7535
        %v7541 = vrot.slane %v7540, 4
        %v7543 = vshll.u32 %v6778, 16
        %v7545 = vrot.slane %v7543, 5
        %v7546 = vsel %vm1172, %v7541, %v7545
        %s7547 = scalar_lea.vmem %s1, 14
        %v7548 = vld [vmem:[%s7547] sm:$0x3]
        %v7549 = vunpack.c.l.b16 %v6792
        %v7550 = vunpack.c.l.b16 %v6802
        %v7551 = vunpack.c.l.b16 %v6816
        %v7552 = vunpack.c.l.b16 %v6826
        %v7553 = vunpack.c.l.b16 %v6840
        %v7554 = vunpack.c.l.b16 %v6850
        %v7555 = vunpack.c.l.b16 %v6864
        %v7556 = vunpack.c.l.b16 %v6874
        %v7557 = vunpack.c.l.b16 %v6888
        %v7558 = vunpack.c.l.b16 %v6898
        %v7559 = vunpack.c.l.b16 %v6912
        %v7560 = vunpack.c.l.b16 %v6922
        %v7561 = vunpack.c.l.b16 %v6936
        %v7562 = vunpack.c.l.b16 %v6946
        %v7563 = vunpack.c.l.b16 %v6960
        %v7564 = vunpack.c.l.b16 %v6970
        %v7565 = vunpack.c.l.b16 %v6984
        %v7566 = vunpack.c.l.b16 %v6994
        %v7567 = vunpack.c.l.b16 %v7008
        %v7568 = vunpack.c.l.b16 %v7018
        %v7569 = vunpack.c.l.b16 %v7032
        %v7570 = vunpack.c.l.b16 %v7042
        %v7571 = vunpack.c.l.b16 %v7056
        %v7572 = vunpack.c.l.b16 %v7066
        %v7573 = vunpack.c.l.b16 %v7080
        %v7574 = vunpack.c.l.b16 %v7090
        %v7575 = vunpack.c.l.b16 %v7104
        %v7576 = vunpack.c.l.b16 %v7114
        %v7577 = vunpack.c.l.b16 %v7128
        %v7578 = vunpack.c.l.b16 %v7138
        %v7579 = vunpack.c.l.b16 %v7152
        %v7580 = vunpack.c.l.b16 %v7162
        %v7581 = vunpack.c.l.b16 %v7176
        %v7582 = vunpack.c.l.b16 %v7186
        %v7583 = vunpack.c.l.b16 %v7200
        %v7584 = vunpack.c.l.b16 %v7210
        %v7585 = vunpack.c.l.b16 %v7224
        %v7586 = vunpack.c.l.b16 %v7234
        %v7587 = vunpack.c.l.b16 %v7248
        %v7588 = vunpack.c.l.b16 %v7258
        %v7589 = vunpack.c.l.b16 %v7272
        %v7590 = vunpack.c.l.b16 %v7282
        %v7591 = vunpack.c.l.b16 %v7296
        %v7592 = vunpack.c.l.b16 %v7306
        %v7593 = vunpack.c.l.b16 %v7320
        %v7594 = vunpack.c.l.b16 %v7330
        %v7595 = vunpack.c.l.b16 %v7344
        %v7596 = vunpack.c.l.b16 %v7354
        %v7597 = vunpack.c.l.b16 %v7368
        %v7598 = vunpack.c.l.b16 %v7378
        %v7599 = vunpack.c.l.b16 %v7392
        %v7600 = vunpack.c.l.b16 %v7402
        %v7601 = vunpack.c.l.b16 %v7416
        %v7602 = vunpack.c.l.b16 %v7426
        %v7603 = vunpack.c.l.b16 %v7440
        %v7604 = vunpack.c.l.b16 %v7450
        %v7605 = vunpack.c.l.b16 %v7464
        %v7606 = vunpack.c.l.b16 %v7474
        %v7607 = vunpack.c.l.b16 %v7488
        %v7608 = vunpack.c.l.b16 %v7498
        %v7609 = vunpack.c.l.b16 %v7512
        %v7610 = vunpack.c.l.b16 %v7522
        %v7611 = vunpack.c.l.b16 %v7536
        %v7612 = vunpack.c.l.b16 %v7546
        %v7613 = vpack.c.b16 %v7550, %v7549
        %v7614 = vpack.c.b16 %v7552, %v7551
        %v7615 = vpack.c.b16 %v7554, %v7553
        %v7616 = vpack.c.b16 %v7556, %v7555
        %v7617 = vpack.c.b16 %v7558, %v7557
        %v7618 = vpack.c.b16 %v7560, %v7559
        %v7619 = vpack.c.b16 %v7562, %v7561
        %v7620 = vpack.c.b16 %v7564, %v7563
        %v7621 = vpack.c.b16 %v7566, %v7565
        %v7622 = vpack.c.b16 %v7568, %v7567
        %v7623 = vpack.c.b16 %v7570, %v7569
        %v7624 = vpack.c.b16 %v7572, %v7571
        %v7625 = vpack.c.b16 %v7574, %v7573
        %v7626 = vpack.c.b16 %v7576, %v7575
        %v7627 = vpack.c.b16 %v7578, %v7577
        %v7628 = vpack.c.b16 %v7580, %v7579
        %v7629 = vpack.c.b16 %v7582, %v7581
        %v7630 = vpack.c.b16 %v7584, %v7583
        %v7631 = vpack.c.b16 %v7586, %v7585
        %v7632 = vpack.c.b16 %v7588, %v7587
        %v7633 = vpack.c.b16 %v7590, %v7589
        %v7634 = vpack.c.b16 %v7592, %v7591
        %v7635 = vpack.c.b16 %v7594, %v7593
        %v7636 = vpack.c.b16 %v7596, %v7595
        %v7637 = vpack.c.b16 %v7598, %v7597
        %v7638 = vpack.c.b16 %v7600, %v7599
        %v7639 = vpack.c.b16 %v7602, %v7601
        %v7640 = vpack.c.b16 %v7604, %v7603
        %v7641 = vpack.c.b16 %v7606, %v7605
        %v7642 = vpack.c.b16 %v7608, %v7607
        %v7643 = vpack.c.b16 %v7610, %v7609
        %v7644 = vpack.c.b16 %v7612, %v7611
        %v7646 = vsel %vm2039, %v7613, 0
        %v7649 = vsel %vm2039, %v7614, 0
        %v7652 = vsel %vm2039, %v7615, 0
        %v7655 = vsel %vm2039, %v7616, 0
        %v7658 = vsel %vm2039, %v7617, 0
        %v7661 = vsel %vm2039, %v7618, 0
        %v7664 = vsel %vm2039, %v7619, 0
        %v7667 = vsel %vm2039, %v7620, 0
        %v7670 = vsel %vm2039, %v7621, 0
        %v7673 = vsel %vm2039, %v7622, 0
        %v7676 = vsel %vm2039, %v7623, 0
        %v7679 = vsel %vm2039, %v7624, 0
        %v7682 = vsel %vm2039, %v7625, 0
        %v7685 = vsel %vm2039, %v7626, 0
        %v7688 = vsel %vm2039, %v7627, 0
        %v7691 = vsel %vm2039, %v7628, 0
        %v7694 = vsel %vm2039, %v7629, 0
        %v7697 = vsel %vm2039, %v7630, 0
        %v7700 = vsel %vm2039, %v7631, 0
        %v7703 = vsel %vm2039, %v7632, 0
        %v7706 = vsel %vm2039, %v7633, 0
        %v7709 = vsel %vm2039, %v7634, 0
        %v7712 = vsel %vm2039, %v7635, 0
        %v7715 = vsel %vm2039, %v7636, 0
        %v7718 = vsel %vm2039, %v7637, 0
        %v7721 = vsel %vm2039, %v7638, 0
        %v7724 = vsel %vm2039, %v7639, 0
        %v7727 = vsel %vm2039, %v7640, 0
        %v7730 = vsel %vm2039, %v7641, 0
        %v7733 = vsel %vm2039, %v7642, 0
        %v7736 = vsel %vm2039, %v7643, 0
        %v7739 = vsel %vm2039, %v7644, 0
        %v7742 = vsel %vm2136, %v7548, 0
        %7744 = vmatpush.bf16.msra.mxu0 0
        %7745 = vmatpush.bf16.msra.mxu0 0
        %7746 = vmatpush.bf16.msra.mxu0 0
        %7747 = vmatpush.bf16.msra.mxu0 0
        %7748 = vmatpush.bf16.msra.mxu0 0
        %7749 = vmatpush.bf16.msra.mxu0 0
        %7750 = vmatpush.bf16.msra.mxu0 0
        %7751 = vmatpush.bf16.msra.mxu0 %v7742
        %7752 = vmatmul.bf16.gmra.mxu0 %v7646
        %v7753 = vpop.f32.mrf.mxu0
        %v7754 = vadd.f32 0.0, %v7753
        %v7755 = vpop.f32.mrf.mxu0
        %v7756 = vadd.f32 0.0, %v7755
        %7757 = vmatmul.bf16.gmra.mxu0 %v7649
        %v7758 = vpop.f32.mrf.mxu0
        %v7759 = vadd.f32 0.0, %v7758
        %v7760 = vpop.f32.mrf.mxu0
        %v7761 = vadd.f32 0.0, %v7760
        %7762 = vmatmul.bf16.gmra.mxu0 %v7652
        %v7763 = vpop.f32.mrf.mxu0
        %v7764 = vadd.f32 0.0, %v7763
        %v7765 = vpop.f32.mrf.mxu0
        %v7766 = vadd.f32 0.0, %v7765
        %7767 = vmatmul.bf16.gmra.mxu0 %v7655
        %v7768 = vpop.f32.mrf.mxu0
        %v7769 = vadd.f32 0.0, %v7768
        %v7770 = vpop.f32.mrf.mxu0
        %v7771 = vadd.f32 0.0, %v7770
        %7772 = vmatmul.bf16.gmra.mxu0 %v7658
        %v7773 = vpop.f32.mrf.mxu0
        %v7774 = vadd.f32 0.0, %v7773
        %v7775 = vpop.f32.mrf.mxu0
        %v7776 = vadd.f32 0.0, %v7775
        %7777 = vmatmul.bf16.gmra.mxu0 %v7661
        %v7778 = vpop.f32.mrf.mxu0
        %v7779 = vadd.f32 0.0, %v7778
        %v7780 = vpop.f32.mrf.mxu0
        %v7781 = vadd.f32 0.0, %v7780
        %7782 = vmatmul.bf16.gmra.mxu0 %v7664
        %v7783 = vpop.f32.mrf.mxu0
        %v7784 = vadd.f32 0.0, %v7783
        %v7785 = vpop.f32.mrf.mxu0
        %v7786 = vadd.f32 0.0, %v7785
        %7787 = vmatmul.bf16.gmra.mxu0 %v7667
        %v7788 = vpop.f32.mrf.mxu0
        %v7789 = vadd.f32 0.0, %v7788
        %v7790 = vpop.f32.mrf.mxu0
        %v7791 = vadd.f32 0.0, %v7790
        %7792 = vmatmul.bf16.gmra.mxu0 %v7670
        %v7793 = vpop.f32.mrf.mxu0
        %v7794 = vadd.f32 0.0, %v7793
        %v7795 = vpop.f32.mrf.mxu0
        %v7796 = vadd.f32 0.0, %v7795
        %7797 = vmatmul.bf16.gmra.mxu0 %v7673
        %v7798 = vpop.f32.mrf.mxu0
        %v7799 = vadd.f32 0.0, %v7798
        %v7800 = vpop.f32.mrf.mxu0
        %v7801 = vadd.f32 0.0, %v7800
        %7802 = vmatmul.bf16.gmra.mxu0 %v7676
        %v7803 = vpop.f32.mrf.mxu0
        %v7804 = vadd.f32 0.0, %v7803
        %v7805 = vpop.f32.mrf.mxu0
        %v7806 = vadd.f32 0.0, %v7805
        %7807 = vmatmul.bf16.gmra.mxu0 %v7679
        %v7808 = vpop.f32.mrf.mxu0
        %v7809 = vadd.f32 0.0, %v7808
        %v7810 = vpop.f32.mrf.mxu0
        %v7811 = vadd.f32 0.0, %v7810
        %7812 = vmatmul.bf16.gmra.mxu0 %v7682
        %v7813 = vpop.f32.mrf.mxu0
        %v7814 = vadd.f32 0.0, %v7813
        %v7815 = vpop.f32.mrf.mxu0
        %v7816 = vadd.f32 0.0, %v7815
        %7817 = vmatmul.bf16.gmra.mxu0 %v7685
        %v7818 = vpop.f32.mrf.mxu0
        %v7819 = vadd.f32 0.0, %v7818
        %v7820 = vpop.f32.mrf.mxu0
        %v7821 = vadd.f32 0.0, %v7820
        %7822 = vmatmul.bf16.gmra.mxu0 %v7688
        %v7823 = vpop.f32.mrf.mxu0
        %v7824 = vadd.f32 0.0, %v7823
        %v7825 = vpop.f32.mrf.mxu0
        %v7826 = vadd.f32 0.0, %v7825
        %7827 = vmatmul.bf16.gmra.mxu0 %v7691
        %v7828 = vpop.f32.mrf.mxu0
        %v7829 = vadd.f32 0.0, %v7828
        %v7830 = vpop.f32.mrf.mxu0
        %v7831 = vadd.f32 0.0, %v7830
        %7832 = vmatmul.bf16.gmra.mxu0 %v7694
        %v7833 = vpop.f32.mrf.mxu0
        %v7834 = vadd.f32 0.0, %v7833
        %v7835 = vpop.f32.mrf.mxu0
        %v7836 = vadd.f32 0.0, %v7835
        %7837 = vmatmul.bf16.gmra.mxu0 %v7697
        %v7838 = vpop.f32.mrf.mxu0
        %v7839 = vadd.f32 0.0, %v7838
        %v7840 = vpop.f32.mrf.mxu0
        %v7841 = vadd.f32 0.0, %v7840
        %7842 = vmatmul.bf16.gmra.mxu0 %v7700
        %v7843 = vpop.f32.mrf.mxu0
        %v7844 = vadd.f32 0.0, %v7843
        %v7845 = vpop.f32.mrf.mxu0
        %v7846 = vadd.f32 0.0, %v7845
        %7847 = vmatmul.bf16.gmra.mxu0 %v7703
        %v7848 = vpop.f32.mrf.mxu0
        %v7849 = vadd.f32 0.0, %v7848
        %v7850 = vpop.f32.mrf.mxu0
        %v7851 = vadd.f32 0.0, %v7850
        %7852 = vmatmul.bf16.gmra.mxu0 %v7706
        %v7853 = vpop.f32.mrf.mxu0
        %v7854 = vadd.f32 0.0, %v7853
        %v7855 = vpop.f32.mrf.mxu0
        %v7856 = vadd.f32 0.0, %v7855
        %7857 = vmatmul.bf16.gmra.mxu0 %v7709
        %v7858 = vpop.f32.mrf.mxu0
        %v7859 = vadd.f32 0.0, %v7858
        %v7860 = vpop.f32.mrf.mxu0
        %v7861 = vadd.f32 0.0, %v7860
        %7862 = vmatmul.bf16.gmra.mxu0 %v7712
        %v7863 = vpop.f32.mrf.mxu0
        %v7864 = vadd.f32 0.0, %v7863
        %v7865 = vpop.f32.mrf.mxu0
        %v7866 = vadd.f32 0.0, %v7865
        %7867 = vmatmul.bf16.gmra.mxu0 %v7715
        %v7868 = vpop.f32.mrf.mxu0
        %v7869 = vadd.f32 0.0, %v7868
        %v7870 = vpop.f32.mrf.mxu0
        %v7871 = vadd.f32 0.0, %v7870
        %7872 = vmatmul.bf16.gmra.mxu0 %v7718
        %v7873 = vpop.f32.mrf.mxu0
        %v7874 = vadd.f32 0.0, %v7873
        %v7875 = vpop.f32.mrf.mxu0
        %v7876 = vadd.f32 0.0, %v7875
        %7877 = vmatmul.bf16.gmra.mxu0 %v7721
        %v7878 = vpop.f32.mrf.mxu0
        %v7879 = vadd.f32 0.0, %v7878
        %v7880 = vpop.f32.mrf.mxu0
        %v7881 = vadd.f32 0.0, %v7880
        %7882 = vmatmul.bf16.gmra.mxu0 %v7724
        %v7883 = vpop.f32.mrf.mxu0
        %v7884 = vadd.f32 0.0, %v7883
        %v7885 = vpop.f32.mrf.mxu0
        %v7886 = vadd.f32 0.0, %v7885
        %7887 = vmatmul.bf16.gmra.mxu0 %v7727
        %v7888 = vpop.f32.mrf.mxu0
        %v7889 = vadd.f32 0.0, %v7888
        %v7890 = vpop.f32.mrf.mxu0
        %v7891 = vadd.f32 0.0, %v7890
        %7892 = vmatmul.bf16.gmra.mxu0 %v7730
        %v7893 = vpop.f32.mrf.mxu0
        %v7894 = vadd.f32 0.0, %v7893
        %v7895 = vpop.f32.mrf.mxu0
        %v7896 = vadd.f32 0.0, %v7895
        %7897 = vmatmul.bf16.gmra.mxu0 %v7733
        %v7898 = vpop.f32.mrf.mxu0
        %v7899 = vadd.f32 0.0, %v7898
        %v7900 = vpop.f32.mrf.mxu0
        %v7901 = vadd.f32 0.0, %v7900
        %7902 = vmatmul.bf16.gmra.mxu0 %v7736
        %v7903 = vpop.f32.mrf.mxu0
        %v7904 = vadd.f32 0.0, %v7903
        %v7905 = vpop.f32.mrf.mxu0
        %v7906 = vadd.f32 0.0, %v7905
        %7907 = vmatmul.bf16.gmra.mxu0 %v7739
        %v7908 = vpop.f32.mrf.mxu0
        %v7909 = vadd.f32 0.0, %v7908
        %v7910 = vpop.f32.mrf.mxu0
        %v7911 = vadd.f32 0.0, %v7910
        %7912 = vdwg.mxu0
        %v7913 = vadd.f32 %v6619, %v7754
        %v7914 = vadd.f32 %v6620, %v7756
        %v7915 = vadd.f32 %v6621, %v7759
        %v7916 = vadd.f32 %v6622, %v7761
        %v7917 = vadd.f32 %v6623, %v7764
        %v7918 = vadd.f32 %v6624, %v7766
        %v7919 = vadd.f32 %v6625, %v7769
        %v7920 = vadd.f32 %v6626, %v7771
        %v7921 = vadd.f32 %v6627, %v7774
        %v7922 = vadd.f32 %v6628, %v7776
        %v7923 = vadd.f32 %v6629, %v7779
        %v7924 = vadd.f32 %v6630, %v7781
        %v7925 = vadd.f32 %v6631, %v7784
        %v7926 = vadd.f32 %v6632, %v7786
        %v7927 = vadd.f32 %v6633, %v7789
        %v7928 = vadd.f32 %v6634, %v7791
        %v7929 = vadd.f32 %v6635, %v7794
        %v7930 = vadd.f32 %v6636, %v7796
        %v7931 = vadd.f32 %v6637, %v7799
        %v7932 = vadd.f32 %v6638, %v7801
        %v7933 = vadd.f32 %v6639, %v7804
        %v7934 = vadd.f32 %v6640, %v7806
        %v7935 = vadd.f32 %v6641, %v7809
        %v7936 = vadd.f32 %v6642, %v7811
        %v7937 = vadd.f32 %v6643, %v7814
        %v7938 = vadd.f32 %v6644, %v7816
        %v7939 = vadd.f32 %v6645, %v7819
        %v7940 = vadd.f32 %v6646, %v7821
        %v7941 = vadd.f32 %v6647, %v7824
        %v7942 = vadd.f32 %v6648, %v7826
        %v7943 = vadd.f32 %v6649, %v7829
        %v7944 = vadd.f32 %v6650, %v7831
        %v7945 = vadd.f32 %v6651, %v7834
        %v7946 = vadd.f32 %v6652, %v7836
        %v7947 = vadd.f32 %v6653, %v7839
        %v7948 = vadd.f32 %v6654, %v7841
        %v7949 = vadd.f32 %v6655, %v7844
        %v7950 = vadd.f32 %v6656, %v7846
        %v7951 = vadd.f32 %v6657, %v7849
        %v7952 = vadd.f32 %v6658, %v7851
        %v7953 = vadd.f32 %v6659, %v7854
        %v7954 = vadd.f32 %v6660, %v7856
        %v7955 = vadd.f32 %v6661, %v7859
        %v7956 = vadd.f32 %v6662, %v7861
        %v7957 = vadd.f32 %v6663, %v7864
        %v7958 = vadd.f32 %v6664, %v7866
        %v7959 = vadd.f32 %v6665, %v7869
        %v7960 = vadd.f32 %v6666, %v7871
        %v7961 = vadd.f32 %v6667, %v7874
        %v7962 = vadd.f32 %v6668, %v7876
        %v7963 = vadd.f32 %v6669, %v7879
        %v7964 = vadd.f32 %v6670, %v7881
        %v7965 = vadd.f32 %v6671, %v7884
        %v7966 = vadd.f32 %v6672, %v7886
        %v7967 = vadd.f32 %v6673, %v7889
        %v7968 = vadd.f32 %v6674, %v7891
        %v7969 = vadd.f32 %v6675, %v7894
        %v7970 = vadd.f32 %v6676, %v7896
        %v7971 = vadd.f32 %v6677, %v7899
        %v7972 = vadd.f32 %v6678, %v7901
        %v7973 = vadd.f32 %v6679, %v7904
        %v7974 = vadd.f32 %v6680, %v7906
        %v7975 = vadd.f32 %v6681, %v7909
        %v7976 = vadd.f32 %v6682, %v7911
        %v7977 = vld [vmem:[%s6124] sm:$0xe]
        %v7978 = vld [vmem:[%s6124 + $0xc] sm:$0xe]
        %v7979 = vld [vmem:[%s6124 + $0x18] sm:$0xe]
        %v7980 = vld [vmem:[%s6124 + $0x24] sm:$0xe]
        %v7981 = vld [vmem:[%s6124 + $0x30] sm:$0xe]
        %v7982 = vld [vmem:[%s6124 + $0x3c] sm:$0xe]
        %v7983 = vld [vmem:[%s6124 + $0x48] sm:$0xe]
        %v7984 = vld [vmem:[%s6124 + $0x54] sm:$0xe]
        %v7985 = vld [vmem:[%s6124 + $0x60] sm:$0xe]
        %v7986 = vld [vmem:[%s6124 + $0x6c] sm:$0xe]
        %v7987 = vld [vmem:[%s6124 + $0x78] sm:$0xe]
        %v7988 = vld [vmem:[%s6124 + $0x84] sm:$0xe]
        %v7989 = vld [vmem:[%s6124 + $0x90] sm:$0xe]
        %v7990 = vld [vmem:[%s6124 + $0x9c] sm:$0xe]
        %v7991 = vld [vmem:[%s6124 + $0xa8] sm:$0xe]
        %v7992 = vld [vmem:[%s6124 + $0xb4] sm:$0xe]
        %v7993 = vld [vmem:[%s6124 + $0xc0] sm:$0xe]
        %v7994 = vld [vmem:[%s6124 + $0xcc] sm:$0xe]
        %v7995 = vld [vmem:[%s6124 + $0xd8] sm:$0xe]
        %v7996 = vld [vmem:[%s6124 + $0xe4] sm:$0xe]
        %v7997 = vld [vmem:[%s6124 + $0xf0] sm:$0xe]
        %v7998 = vld [vmem:[%s6124 + $0xfc] sm:$0xe]
        %v7999 = vld [vmem:[%s6124 + $0x108] sm:$0xe]
        %v8000 = vld [vmem:[%s6124 + $0x114] sm:$0xe]
        %v8001 = vld [vmem:[%s6124 + $0x120] sm:$0xe]
        %v8002 = vld [vmem:[%s6124 + $0x12c] sm:$0xe]
        %v8003 = vld [vmem:[%s6124 + $0x138] sm:$0xe]
        %v8004 = vld [vmem:[%s6124 + $0x144] sm:$0xe]
        %v8005 = vld [vmem:[%s6124 + $0x150] sm:$0xe]
        %v8006 = vld [vmem:[%s6124 + $0x15c] sm:$0xe]
        %v8007 = vld [vmem:[%s6124 + $0x168] sm:$0xe]
        %v8008 = vld [vmem:[%s6124 + $0x174] sm:$0xe]
        %v8105 = vrot.slane %v7977, 5
        %v8106 = vrot.slane %v8105, 4
        %v8107 = vrot.slane %v6684, 5
        %v8108 = vsel %vm2835, %v8106, %v8107
        %v8109 = vrot.slane %v8107, 4
        %v8110 = vrot.slane %v6685, 5
        %v8111 = vsel %vm2835, %v8109, %v8110
        %v8112 = vrot.slane %v7978, 5
        %v8113 = vrot.slane %v8112, 4
        %v8114 = vrot.slane %v6687, 5
        %v8115 = vsel %vm2835, %v8113, %v8114
        %v8116 = vrot.slane %v8114, 4
        %v8117 = vrot.slane %v6688, 5
        %v8118 = vsel %vm2835, %v8116, %v8117
        %v8119 = vrot.slane %v7979, 5
        %v8120 = vrot.slane %v8119, 4
        %v8121 = vrot.slane %v6690, 5
        %v8122 = vsel %vm2835, %v8120, %v8121
        %v8123 = vrot.slane %v8121, 4
        %v8124 = vrot.slane %v6691, 5
        %v8125 = vsel %vm2835, %v8123, %v8124
        %v8126 = vrot.slane %v7980, 5
        %v8127 = vrot.slane %v8126, 4
        %v8128 = vrot.slane %v6693, 5
        %v8129 = vsel %vm2835, %v8127, %v8128
        %v8130 = vrot.slane %v8128, 4
        %v8131 = vrot.slane %v6694, 5
        %v8132 = vsel %vm2835, %v8130, %v8131
        %v8133 = vrot.slane %v7981, 5
        %v8134 = vrot.slane %v8133, 4
        %v8135 = vrot.slane %v6696, 5
        %v8136 = vsel %vm2835, %v8134, %v8135
        %v8137 = vrot.slane %v8135, 4
        %v8138 = vrot.slane %v6697, 5
        %v8139 = vsel %vm2835, %v8137, %v8138
        %v8140 = vrot.slane %v7982, 5
        %v8141 = vrot.slane %v8140, 4
        %v8142 = vrot.slane %v6699, 5
        %v8143 = vsel %vm2835, %v8141, %v8142
        %v8144 = vrot.slane %v8142, 4
        %v8145 = vrot.slane %v6700, 5
        %v8146 = vsel %vm2835, %v8144, %v8145
        %v8147 = vrot.slane %v7983, 5
        %v8148 = vrot.slane %v8147, 4
        %v8149 = vrot.slane %v6702, 5
        %v8150 = vsel %vm2835, %v8148, %v8149
        %v8151 = vrot.slane %v8149, 4
        %v8152 = vrot.slane %v6703, 5
        %v8153 = vsel %vm2835, %v8151, %v8152
        %v8154 = vrot.slane %v7984, 5
        %v8155 = vrot.slane %v8154, 4
        %v8156 = vrot.slane %v6705, 5
        %v8157 = vsel %vm2835, %v8155, %v8156
        %v8158 = vrot.slane %v8156, 4
        %v8159 = vrot.slane %v6706, 5
        %v8160 = vsel %vm2835, %v8158, %v8159
        %v8161 = vrot.slane %v7985, 5
        %v8162 = vrot.slane %v8161, 4
        %v8163 = vrot.slane %v6708, 5
        %v8164 = vsel %vm2835, %v8162, %v8163
        %v8165 = vrot.slane %v8163, 4
        %v8166 = vrot.slane %v6709, 5
        %v8167 = vsel %vm2835, %v8165, %v8166
        %v8168 = vrot.slane %v7986, 5
        %v8169 = vrot.slane %v8168, 4
        %v8170 = vrot.slane %v6711, 5
        %v8171 = vsel %vm2835, %v8169, %v8170
        %v8172 = vrot.slane %v8170, 4
        %v8173 = vrot.slane %v6712, 5
        %v8174 = vsel %vm2835, %v8172, %v8173
        %v8175 = vrot.slane %v7987, 5
        %v8176 = vrot.slane %v8175, 4
        %v8177 = vrot.slane %v6714, 5
        %v8178 = vsel %vm2835, %v8176, %v8177
        %v8179 = vrot.slane %v8177, 4
        %v8180 = vrot.slane %v6715, 5
        %v8181 = vsel %vm2835, %v8179, %v8180
        %v8182 = vrot.slane %v7988, 5
        %v8183 = vrot.slane %v8182, 4
        %v8184 = vrot.slane %v6717, 5
        %v8185 = vsel %vm2835, %v8183, %v8184
        %v8186 = vrot.slane %v8184, 4
        %v8187 = vrot.slane %v6718, 5
        %v8188 = vsel %vm2835, %v8186, %v8187
        %v8189 = vrot.slane %v7989, 5
        %v8190 = vrot.slane %v8189, 4
        %v8191 = vrot.slane %v6720, 5
        %v8192 = vsel %vm2835, %v8190, %v8191
        %v8193 = vrot.slane %v8191, 4
        %v8194 = vrot.slane %v6721, 5
        %v8195 = vsel %vm2835, %v8193, %v8194
        %v8196 = vrot.slane %v7990, 5
        %v8197 = vrot.slane %v8196, 4
        %v8198 = vrot.slane %v6723, 5
        %v8199 = vsel %vm2835, %v8197, %v8198
        %v8200 = vrot.slane %v8198, 4
        %v8201 = vrot.slane %v6724, 5
        %v8202 = vsel %vm2835, %v8200, %v8201
        %v8203 = vrot.slane %v7991, 5
        %v8204 = vrot.slane %v8203, 4
        %v8205 = vrot.slane %v6726, 5
        %v8206 = vsel %vm2835, %v8204, %v8205
        %v8207 = vrot.slane %v8205, 4
        %v8208 = vrot.slane %v6727, 5
        %v8209 = vsel %vm2835, %v8207, %v8208
        %v8210 = vrot.slane %v7992, 5
        %v8211 = vrot.slane %v8210, 4
        %v8212 = vrot.slane %v6729, 5
        %v8213 = vsel %vm2835, %v8211, %v8212
        %v8214 = vrot.slane %v8212, 4
        %v8215 = vrot.slane %v6730, 5
        %v8216 = vsel %vm2835, %v8214, %v8215
        %v8217 = vrot.slane %v7993, 5
        %v8218 = vrot.slane %v8217, 4
        %v8219 = vrot.slane %v6732, 5
        %v8220 = vsel %vm2835, %v8218, %v8219
        %v8221 = vrot.slane %v8219, 4
        %v8222 = vrot.slane %v6733, 5
        %v8223 = vsel %vm2835, %v8221, %v8222
        %v8224 = vrot.slane %v7994, 5
        %v8225 = vrot.slane %v8224, 4
        %v8226 = vrot.slane %v6735, 5
        %v8227 = vsel %vm2835, %v8225, %v8226
        %v8228 = vrot.slane %v8226, 4
        %v8229 = vrot.slane %v6736, 5
        %v8230 = vsel %vm2835, %v8228, %v8229
        %v8231 = vrot.slane %v7995, 5
        %v8232 = vrot.slane %v8231, 4
        %v8233 = vrot.slane %v6738, 5
        %v8234 = vsel %vm2835, %v8232, %v8233
        %v8235 = vrot.slane %v8233, 4
        %v8236 = vrot.slane %v6739, 5
        %v8237 = vsel %vm2835, %v8235, %v8236
        %v8238 = vrot.slane %v7996, 5
        %v8239 = vrot.slane %v8238, 4
        %v8240 = vrot.slane %v6741, 5
        %v8241 = vsel %vm2835, %v8239, %v8240
        %v8242 = vrot.slane %v8240, 4
        %v8243 = vrot.slane %v6742, 5
        %v8244 = vsel %vm2835, %v8242, %v8243
        %v8245 = vrot.slane %v7997, 5
        %v8246 = vrot.slane %v8245, 4
        %v8247 = vrot.slane %v6744, 5
        %v8248 = vsel %vm2835, %v8246, %v8247
        %v8249 = vrot.slane %v8247, 4
        %v8250 = vrot.slane %v6745, 5
        %v8251 = vsel %vm2835, %v8249, %v8250
        %v8252 = vrot.slane %v7998, 5
        %v8253 = vrot.slane %v8252, 4
        %v8254 = vrot.slane %v6747, 5
        %v8255 = vsel %vm2835, %v8253, %v8254
        %v8256 = vrot.slane %v8254, 4
        %v8257 = vrot.slane %v6748, 5
        %v8258 = vsel %vm2835, %v8256, %v8257
        %v8259 = vrot.slane %v7999, 5
        %v8260 = vrot.slane %v8259, 4
        %v8261 = vrot.slane %v6750, 5
        %v8262 = vsel %vm2835, %v8260, %v8261
        %v8263 = vrot.slane %v8261, 4
        %v8264 = vrot.slane %v6751, 5
        %v8265 = vsel %vm2835, %v8263, %v8264
        %v8266 = vrot.slane %v8000, 5
        %v8267 = vrot.slane %v8266, 4
        %v8268 = vrot.slane %v6753, 5
        %v8269 = vsel %vm2835, %v8267, %v8268
        %v8270 = vrot.slane %v8268, 4
        %v8271 = vrot.slane %v6754, 5
        %v8272 = vsel %vm2835, %v8270, %v8271
        %v8273 = vrot.slane %v8001, 5
        %v8274 = vrot.slane %v8273, 4
        %v8275 = vrot.slane %v6756, 5
        %v8276 = vsel %vm2835, %v8274, %v8275
        %v8277 = vrot.slane %v8275, 4
        %v8278 = vrot.slane %v6757, 5
        %v8279 = vsel %vm2835, %v8277, %v8278
        %v8280 = vrot.slane %v8002, 5
        %v8281 = vrot.slane %v8280, 4
        %v8282 = vrot.slane %v6759, 5
        %v8283 = vsel %vm2835, %v8281, %v8282
        %v8284 = vrot.slane %v8282, 4
        %v8285 = vrot.slane %v6760, 5
        %v8286 = vsel %vm2835, %v8284, %v8285
        %v8287 = vrot.slane %v8003, 5
        %v8288 = vrot.slane %v8287, 4
        %v8289 = vrot.slane %v6762, 5
        %v8290 = vsel %vm2835, %v8288, %v8289
        %v8291 = vrot.slane %v8289, 4
        %v8292 = vrot.slane %v6763, 5
        %v8293 = vsel %vm2835, %v8291, %v8292
        %v8294 = vrot.slane %v8004, 5
        %v8295 = vrot.slane %v8294, 4
        %v8296 = vrot.slane %v6765, 5
        %v8297 = vsel %vm2835, %v8295, %v8296
        %v8298 = vrot.slane %v8296, 4
        %v8299 = vrot.slane %v6766, 5
        %v8300 = vsel %vm2835, %v8298, %v8299
        %v8301 = vrot.slane %v8005, 5
        %v8302 = vrot.slane %v8301, 4
        %v8303 = vrot.slane %v6768, 5
        %v8304 = vsel %vm2835, %v8302, %v8303
        %v8305 = vrot.slane %v8303, 4
        %v8306 = vrot.slane %v6769, 5
        %v8307 = vsel %vm2835, %v8305, %v8306
        %v8308 = vrot.slane %v8006, 5
        %v8309 = vrot.slane %v8308, 4
        %v8310 = vrot.slane %v6771, 5
        %v8311 = vsel %vm2835, %v8309, %v8310
        %v8312 = vrot.slane %v8310, 4
        %v8313 = vrot.slane %v6772, 5
        %v8314 = vsel %vm2835, %v8312, %v8313
        %v8315 = vrot.slane %v8007, 5
        %v8316 = vrot.slane %v8315, 4
        %v8317 = vrot.slane %v6774, 5
        %v8318 = vsel %vm2835, %v8316, %v8317
        %v8319 = vrot.slane %v8317, 4
        %v8320 = vrot.slane %v6775, 5
        %v8321 = vsel %vm2835, %v8319, %v8320
        %v8322 = vrot.slane %v8008, 5
        %v8323 = vrot.slane %v8322, 4
        %v8324 = vrot.slane %v6777, 5
        %v8325 = vsel %vm2835, %v8323, %v8324
        %v8326 = vrot.slane %v8324, 4
        %v8327 = vrot.slane %v6778, 5
        %v8328 = vsel %vm2835, %v8326, %v8327
        %s8329 = scalar_lea.vmem %s1, 16
        %v8330 = vld [vmem:[%s8329] sm:$0x3]
        %v8331 = vunpack.c.l.b16 %v8108
        %v8332 = vunpack.c.l.b16 %v8111
        %v8333 = vunpack.c.l.b16 %v8115
        %v8334 = vunpack.c.l.b16 %v8118
        %v8335 = vunpack.c.l.b16 %v8122
        %v8336 = vunpack.c.l.b16 %v8125
        %v8337 = vunpack.c.l.b16 %v8129
        %v8338 = vunpack.c.l.b16 %v8132
        %v8339 = vunpack.c.l.b16 %v8136
        %v8340 = vunpack.c.l.b16 %v8139
        %v8341 = vunpack.c.l.b16 %v8143
        %v8342 = vunpack.c.l.b16 %v8146
        %v8343 = vunpack.c.l.b16 %v8150
        %v8344 = vunpack.c.l.b16 %v8153
        %v8345 = vunpack.c.l.b16 %v8157
        %v8346 = vunpack.c.l.b16 %v8160
        %v8347 = vunpack.c.l.b16 %v8164
        %v8348 = vunpack.c.l.b16 %v8167
        %v8349 = vunpack.c.l.b16 %v8171
        %v8350 = vunpack.c.l.b16 %v8174
        %v8351 = vunpack.c.l.b16 %v8178
        %v8352 = vunpack.c.l.b16 %v8181
        %v8353 = vunpack.c.l.b16 %v8185
        %v8354 = vunpack.c.l.b16 %v8188
        %v8355 = vunpack.c.l.b16 %v8192
        %v8356 = vunpack.c.l.b16 %v8195
        %v8357 = vunpack.c.l.b16 %v8199
        %v8358 = vunpack.c.l.b16 %v8202
        %v8359 = vunpack.c.l.b16 %v8206
        %v8360 = vunpack.c.l.b16 %v8209
        %v8361 = vunpack.c.l.b16 %v8213
        %v8362 = vunpack.c.l.b16 %v8216
        %v8363 = vunpack.c.l.b16 %v8220
        %v8364 = vunpack.c.l.b16 %v8223
        %v8365 = vunpack.c.l.b16 %v8227
        %v8366 = vunpack.c.l.b16 %v8230
        %v8367 = vunpack.c.l.b16 %v8234
        %v8368 = vunpack.c.l.b16 %v8237
        %v8369 = vunpack.c.l.b16 %v8241
        %v8370 = vunpack.c.l.b16 %v8244
        %v8371 = vunpack.c.l.b16 %v8248
        %v8372 = vunpack.c.l.b16 %v8251
        %v8373 = vunpack.c.l.b16 %v8255
        %v8374 = vunpack.c.l.b16 %v8258
        %v8375 = vunpack.c.l.b16 %v8262
        %v8376 = vunpack.c.l.b16 %v8265
        %v8377 = vunpack.c.l.b16 %v8269
        %v8378 = vunpack.c.l.b16 %v8272
        %v8379 = vunpack.c.l.b16 %v8276
        %v8380 = vunpack.c.l.b16 %v8279
        %v8381 = vunpack.c.l.b16 %v8283
        %v8382 = vunpack.c.l.b16 %v8286
        %v8383 = vunpack.c.l.b16 %v8290
        %v8384 = vunpack.c.l.b16 %v8293
        %v8385 = vunpack.c.l.b16 %v8297
        %v8386 = vunpack.c.l.b16 %v8300
        %v8387 = vunpack.c.l.b16 %v8304
        %v8388 = vunpack.c.l.b16 %v8307
        %v8389 = vunpack.c.l.b16 %v8311
        %v8390 = vunpack.c.l.b16 %v8314
        %v8391 = vunpack.c.l.b16 %v8318
        %v8392 = vunpack.c.l.b16 %v8321
        %v8393 = vunpack.c.l.b16 %v8325
        %v8394 = vunpack.c.l.b16 %v8328
        %v8395 = vpack.c.b16 %v8332, %v8331
        %v8396 = vpack.c.b16 %v8334, %v8333
        %v8397 = vpack.c.b16 %v8336, %v8335
        %v8398 = vpack.c.b16 %v8338, %v8337
        %v8399 = vpack.c.b16 %v8340, %v8339
        %v8400 = vpack.c.b16 %v8342, %v8341
        %v8401 = vpack.c.b16 %v8344, %v8343
        %v8402 = vpack.c.b16 %v8346, %v8345
        %v8403 = vpack.c.b16 %v8348, %v8347
        %v8404 = vpack.c.b16 %v8350, %v8349
        %v8405 = vpack.c.b16 %v8352, %v8351
        %v8406 = vpack.c.b16 %v8354, %v8353
        %v8407 = vpack.c.b16 %v8356, %v8355
        %v8408 = vpack.c.b16 %v8358, %v8357
        %v8409 = vpack.c.b16 %v8360, %v8359
        %v8410 = vpack.c.b16 %v8362, %v8361
        %v8411 = vpack.c.b16 %v8364, %v8363
        %v8412 = vpack.c.b16 %v8366, %v8365
        %v8413 = vpack.c.b16 %v8368, %v8367
        %v8414 = vpack.c.b16 %v8370, %v8369
        %v8415 = vpack.c.b16 %v8372, %v8371
        %v8416 = vpack.c.b16 %v8374, %v8373
        %v8417 = vpack.c.b16 %v8376, %v8375
        %v8418 = vpack.c.b16 %v8378, %v8377
        %v8419 = vpack.c.b16 %v8380, %v8379
        %v8420 = vpack.c.b16 %v8382, %v8381
        %v8421 = vpack.c.b16 %v8384, %v8383
        %v8422 = vpack.c.b16 %v8386, %v8385
        %v8423 = vpack.c.b16 %v8388, %v8387
        %v8424 = vpack.c.b16 %v8390, %v8389
        %v8425 = vpack.c.b16 %v8392, %v8391
        %v8426 = vpack.c.b16 %v8394, %v8393
        %v8428 = vsel %vm2039, %v8395, 0
        %v8431 = vsel %vm2039, %v8396, 0
        %v8434 = vsel %vm2039, %v8397, 0
        %v8437 = vsel %vm2039, %v8398, 0
        %v8440 = vsel %vm2039, %v8399, 0
        %v8443 = vsel %vm2039, %v8400, 0
        %v8446 = vsel %vm2039, %v8401, 0
        %v8449 = vsel %vm2039, %v8402, 0
        %v8452 = vsel %vm2039, %v8403, 0
        %v8455 = vsel %vm2039, %v8404, 0
        %v8458 = vsel %vm2039, %v8405, 0
        %v8461 = vsel %vm2039, %v8406, 0
        %v8464 = vsel %vm2039, %v8407, 0
        %v8467 = vsel %vm2039, %v8408, 0
        %v8470 = vsel %vm2039, %v8409, 0
        %v8473 = vsel %vm2039, %v8410, 0
        %v8476 = vsel %vm2039, %v8411, 0
        %v8479 = vsel %vm2039, %v8412, 0
        %v8482 = vsel %vm2039, %v8413, 0
        %v8485 = vsel %vm2039, %v8414, 0
        %v8488 = vsel %vm2039, %v8415, 0
        %v8491 = vsel %vm2039, %v8416, 0
        %v8494 = vsel %vm2039, %v8417, 0
        %v8497 = vsel %vm2039, %v8418, 0
        %v8500 = vsel %vm2039, %v8419, 0
        %v8503 = vsel %vm2039, %v8420, 0
        %v8506 = vsel %vm2039, %v8421, 0
        %v8509 = vsel %vm2039, %v8422, 0
        %v8512 = vsel %vm2039, %v8423, 0
        %v8515 = vsel %vm2039, %v8424, 0
        %v8518 = vsel %vm2039, %v8425, 0
        %v8521 = vsel %vm2039, %v8426, 0
        %v8524 = vsel %vm2136, %v8330, 0
        %8526 = vmatpush.bf16.msra.mxu0 0
        %8527 = vmatpush.bf16.msra.mxu0 0
        %8528 = vmatpush.bf16.msra.mxu0 0
        %8529 = vmatpush.bf16.msra.mxu0 0
        %8530 = vmatpush.bf16.msra.mxu0 0
        %8531 = vmatpush.bf16.msra.mxu0 0
        %8532 = vmatpush.bf16.msra.mxu0 0
        %8533 = vmatpush.bf16.msra.mxu0 %v8524
        %8534 = vmatmul.bf16.gmra.mxu0 %v8428
        %v8535 = vpop.f32.mrf.mxu0
        %v8536 = vadd.f32 0.0, %v8535
        %v8537 = vpop.f32.mrf.mxu0
        %v8538 = vadd.f32 0.0, %v8537
        %8539 = vmatmul.bf16.gmra.mxu0 %v8431
        %v8540 = vpop.f32.mrf.mxu0
        %v8541 = vadd.f32 0.0, %v8540
        %v8542 = vpop.f32.mrf.mxu0
        %v8543 = vadd.f32 0.0, %v8542
        %8544 = vmatmul.bf16.gmra.mxu0 %v8434
        %v8545 = vpop.f32.mrf.mxu0
        %v8546 = vadd.f32 0.0, %v8545
        %v8547 = vpop.f32.mrf.mxu0
        %v8548 = vadd.f32 0.0, %v8547
        %8549 = vmatmul.bf16.gmra.mxu0 %v8437
        %v8550 = vpop.f32.mrf.mxu0
        %v8551 = vadd.f32 0.0, %v8550
        %v8552 = vpop.f32.mrf.mxu0
        %v8553 = vadd.f32 0.0, %v8552
        %8554 = vmatmul.bf16.gmra.mxu0 %v8440
        %v8555 = vpop.f32.mrf.mxu0
        %v8556 = vadd.f32 0.0, %v8555
        %v8557 = vpop.f32.mrf.mxu0
        %v8558 = vadd.f32 0.0, %v8557
        %8559 = vmatmul.bf16.gmra.mxu0 %v8443
        %v8560 = vpop.f32.mrf.mxu0
        %v8561 = vadd.f32 0.0, %v8560
        %v8562 = vpop.f32.mrf.mxu0
        %v8563 = vadd.f32 0.0, %v8562
        %8564 = vmatmul.bf16.gmra.mxu0 %v8446
        %v8565 = vpop.f32.mrf.mxu0
        %v8566 = vadd.f32 0.0, %v8565
        %v8567 = vpop.f32.mrf.mxu0
        %v8568 = vadd.f32 0.0, %v8567
        %8569 = vmatmul.bf16.gmra.mxu0 %v8449
        %v8570 = vpop.f32.mrf.mxu0
        %v8571 = vadd.f32 0.0, %v8570
        %v8572 = vpop.f32.mrf.mxu0
        %v8573 = vadd.f32 0.0, %v8572
        %8574 = vmatmul.bf16.gmra.mxu0 %v8452
        %v8575 = vpop.f32.mrf.mxu0
        %v8576 = vadd.f32 0.0, %v8575
        %v8577 = vpop.f32.mrf.mxu0
        %v8578 = vadd.f32 0.0, %v8577
        %8579 = vmatmul.bf16.gmra.mxu0 %v8455
        %v8580 = vpop.f32.mrf.mxu0
        %v8581 = vadd.f32 0.0, %v8580
        %v8582 = vpop.f32.mrf.mxu0
        %v8583 = vadd.f32 0.0, %v8582
        %8584 = vmatmul.bf16.gmra.mxu0 %v8458
        %v8585 = vpop.f32.mrf.mxu0
        %v8586 = vadd.f32 0.0, %v8585
        %v8587 = vpop.f32.mrf.mxu0
        %v8588 = vadd.f32 0.0, %v8587
        %8589 = vmatmul.bf16.gmra.mxu0 %v8461
        %v8590 = vpop.f32.mrf.mxu0
        %v8591 = vadd.f32 0.0, %v8590
        %v8592 = vpop.f32.mrf.mxu0
        %v8593 = vadd.f32 0.0, %v8592
        %8594 = vmatmul.bf16.gmra.mxu0 %v8464
        %v8595 = vpop.f32.mrf.mxu0
        %v8596 = vadd.f32 0.0, %v8595
        %v8597 = vpop.f32.mrf.mxu0
        %v8598 = vadd.f32 0.0, %v8597
        %8599 = vmatmul.bf16.gmra.mxu0 %v8467
        %v8600 = vpop.f32.mrf.mxu0
        %v8601 = vadd.f32 0.0, %v8600
        %v8602 = vpop.f32.mrf.mxu0
        %v8603 = vadd.f32 0.0, %v8602
        %8604 = vmatmul.bf16.gmra.mxu0 %v8470
        %v8605 = vpop.f32.mrf.mxu0
        %v8606 = vadd.f32 0.0, %v8605
        %v8607 = vpop.f32.mrf.mxu0
        %v8608 = vadd.f32 0.0, %v8607
        %8609 = vmatmul.bf16.gmra.mxu0 %v8473
        %v8610 = vpop.f32.mrf.mxu0
        %v8611 = vadd.f32 0.0, %v8610
        %v8612 = vpop.f32.mrf.mxu0
        %v8613 = vadd.f32 0.0, %v8612
        %8614 = vmatmul.bf16.gmra.mxu0 %v8476
        %v8615 = vpop.f32.mrf.mxu0
        %v8616 = vadd.f32 0.0, %v8615
        %v8617 = vpop.f32.mrf.mxu0
        %v8618 = vadd.f32 0.0, %v8617
        %8619 = vmatmul.bf16.gmra.mxu0 %v8479
        %v8620 = vpop.f32.mrf.mxu0
        %v8621 = vadd.f32 0.0, %v8620
        %v8622 = vpop.f32.mrf.mxu0
        %v8623 = vadd.f32 0.0, %v8622
        %8624 = vmatmul.bf16.gmra.mxu0 %v8482
        %v8625 = vpop.f32.mrf.mxu0
        %v8626 = vadd.f32 0.0, %v8625
        %v8627 = vpop.f32.mrf.mxu0
        %v8628 = vadd.f32 0.0, %v8627
        %8629 = vmatmul.bf16.gmra.mxu0 %v8485
        %v8630 = vpop.f32.mrf.mxu0
        %v8631 = vadd.f32 0.0, %v8630
        %v8632 = vpop.f32.mrf.mxu0
        %v8633 = vadd.f32 0.0, %v8632
        %8634 = vmatmul.bf16.gmra.mxu0 %v8488
        %v8635 = vpop.f32.mrf.mxu0
        %v8636 = vadd.f32 0.0, %v8635
        %v8637 = vpop.f32.mrf.mxu0
        %v8638 = vadd.f32 0.0, %v8637
        %8639 = vmatmul.bf16.gmra.mxu0 %v8491
        %v8640 = vpop.f32.mrf.mxu0
        %v8641 = vadd.f32 0.0, %v8640
        %v8642 = vpop.f32.mrf.mxu0
        %v8643 = vadd.f32 0.0, %v8642
        %8644 = vmatmul.bf16.gmra.mxu0 %v8494
        %v8645 = vpop.f32.mrf.mxu0
        %v8646 = vadd.f32 0.0, %v8645
        %v8647 = vpop.f32.mrf.mxu0
        %v8648 = vadd.f32 0.0, %v8647
        %8649 = vmatmul.bf16.gmra.mxu0 %v8497
        %v8650 = vpop.f32.mrf.mxu0
        %v8651 = vadd.f32 0.0, %v8650
        %v8652 = vpop.f32.mrf.mxu0
        %v8653 = vadd.f32 0.0, %v8652
        %8654 = vmatmul.bf16.gmra.mxu0 %v8500
        %v8655 = vpop.f32.mrf.mxu0
        %v8656 = vadd.f32 0.0, %v8655
        %v8657 = vpop.f32.mrf.mxu0
        %v8658 = vadd.f32 0.0, %v8657
        %8659 = vmatmul.bf16.gmra.mxu0 %v8503
        %v8660 = vpop.f32.mrf.mxu0
        %v8661 = vadd.f32 0.0, %v8660
        %v8662 = vpop.f32.mrf.mxu0
        %v8663 = vadd.f32 0.0, %v8662
        %8664 = vmatmul.bf16.gmra.mxu0 %v8506
        %v8665 = vpop.f32.mrf.mxu0
        %v8666 = vadd.f32 0.0, %v8665
        %v8667 = vpop.f32.mrf.mxu0
        %v8668 = vadd.f32 0.0, %v8667
        %8669 = vmatmul.bf16.gmra.mxu0 %v8509
        %v8670 = vpop.f32.mrf.mxu0
        %v8671 = vadd.f32 0.0, %v8670
        %v8672 = vpop.f32.mrf.mxu0
        %v8673 = vadd.f32 0.0, %v8672
        %8674 = vmatmul.bf16.gmra.mxu0 %v8512
        %v8675 = vpop.f32.mrf.mxu0
        %v8676 = vadd.f32 0.0, %v8675
        %v8677 = vpop.f32.mrf.mxu0
        %v8678 = vadd.f32 0.0, %v8677
        %8679 = vmatmul.bf16.gmra.mxu0 %v8515
        %v8680 = vpop.f32.mrf.mxu0
        %v8681 = vadd.f32 0.0, %v8680
        %v8682 = vpop.f32.mrf.mxu0
        %v8683 = vadd.f32 0.0, %v8682
        %8684 = vmatmul.bf16.gmra.mxu0 %v8518
        %v8685 = vpop.f32.mrf.mxu0
        %v8686 = vadd.f32 0.0, %v8685
        %v8687 = vpop.f32.mrf.mxu0
        %v8688 = vadd.f32 0.0, %v8687
        %8689 = vmatmul.bf16.gmra.mxu0 %v8521
        %v8690 = vpop.f32.mrf.mxu0
        %v8691 = vadd.f32 0.0, %v8690
        %v8692 = vpop.f32.mrf.mxu0
        %v8693 = vadd.f32 0.0, %v8692
        %8694 = vdwg.mxu0
        %v8695 = vadd.f32 %v7913, %v8536
        %v8696 = vadd.f32 %v7914, %v8538
        %v8697 = vadd.f32 %v7915, %v8541
        %v8698 = vadd.f32 %v7916, %v8543
        %v8699 = vadd.f32 %v7917, %v8546
        %v8700 = vadd.f32 %v7918, %v8548
        %v8701 = vadd.f32 %v7919, %v8551
        %v8702 = vadd.f32 %v7920, %v8553
        %v8703 = vadd.f32 %v7921, %v8556
        %v8704 = vadd.f32 %v7922, %v8558
        %v8705 = vadd.f32 %v7923, %v8561
        %v8706 = vadd.f32 %v7924, %v8563
        %v8707 = vadd.f32 %v7925, %v8566
        %v8708 = vadd.f32 %v7926, %v8568
        %v8709 = vadd.f32 %v7927, %v8571
        %v8710 = vadd.f32 %v7928, %v8573
        %v8711 = vadd.f32 %v7929, %v8576
        %v8712 = vadd.f32 %v7930, %v8578
        %v8713 = vadd.f32 %v7931, %v8581
        %v8714 = vadd.f32 %v7932, %v8583
        %v8715 = vadd.f32 %v7933, %v8586
        %v8716 = vadd.f32 %v7934, %v8588
        %v8717 = vadd.f32 %v7935, %v8591
        %v8718 = vadd.f32 %v7936, %v8593
        %v8719 = vadd.f32 %v7937, %v8596
        %v8720 = vadd.f32 %v7938, %v8598
        %v8721 = vadd.f32 %v7939, %v8601
        %v8722 = vadd.f32 %v7940, %v8603
        %v8723 = vadd.f32 %v7941, %v8606
        %v8724 = vadd.f32 %v7942, %v8608
        %v8725 = vadd.f32 %v7943, %v8611
        %v8726 = vadd.f32 %v7944, %v8613
        %v8727 = vadd.f32 %v7945, %v8616
        %v8728 = vadd.f32 %v7946, %v8618
        %v8729 = vadd.f32 %v7947, %v8621
        %v8730 = vadd.f32 %v7948, %v8623
        %v8731 = vadd.f32 %v7949, %v8626
        %v8732 = vadd.f32 %v7950, %v8628
        %v8733 = vadd.f32 %v7951, %v8631
        %v8734 = vadd.f32 %v7952, %v8633
        %v8735 = vadd.f32 %v7953, %v8636
        %v8736 = vadd.f32 %v7954, %v8638
        %v8737 = vadd.f32 %v7955, %v8641
        %v8738 = vadd.f32 %v7956, %v8643
        %v8739 = vadd.f32 %v7957, %v8646
        %v8740 = vadd.f32 %v7958, %v8648
        %v8741 = vadd.f32 %v7959, %v8651
        %v8742 = vadd.f32 %v7960, %v8653
        %v8743 = vadd.f32 %v7961, %v8656
        %v8744 = vadd.f32 %v7962, %v8658
        %v8745 = vadd.f32 %v7963, %v8661
        %v8746 = vadd.f32 %v7964, %v8663
        %v8747 = vadd.f32 %v7965, %v8666
        %v8748 = vadd.f32 %v7966, %v8668
        %v8749 = vadd.f32 %v7967, %v8671
        %v8750 = vadd.f32 %v7968, %v8673
        %v8751 = vadd.f32 %v7969, %v8676
        %v8752 = vadd.f32 %v7970, %v8678
        %v8753 = vadd.f32 %v7971, %v8681
        %v8754 = vadd.f32 %v7972, %v8683
        %v8755 = vadd.f32 %v7973, %v8686
        %v8756 = vadd.f32 %v7974, %v8688
        %v8757 = vadd.f32 %v7975, %v8691
        %v8758 = vadd.f32 %v7976, %v8693
        %vm8759 = vcmask 130048
        %v8760 = vsel %vm8759, %v8695, 0.0
        %v8761 = vsel %vm8759, %v8696, 0.0
        %v8762 = vadd.f32 %v8760, %v8761
        %v8763 = vsel %vm8759, %v8697, 0.0
        %v8764 = vadd.f32 %v8762, %v8763
        %v8765 = vsel %vm8759, %v8698, 0.0
        %v8766 = vadd.f32 %v8764, %v8765
        %v8767 = vsel %vm8759, %v8699, 0.0
        %v8768 = vadd.f32 %v8766, %v8767
        %v8769 = vsel %vm8759, %v8700, 0.0
        %v8770 = vadd.f32 %v8768, %v8769
        %v8771 = vsel %vm8759, %v8701, 0.0
        %v8772 = vadd.f32 %v8770, %v8771
        %v8773 = vsel %vm8759, %v8702, 0.0
        %v8774 = vadd.f32 %v8772, %v8773
        %v8775 = vsel %vm8759, %v8703, 0.0
        %v8776 = vadd.f32 %v8774, %v8775
        %v8777 = vsel %vm8759, %v8704, 0.0
        %v8778 = vadd.f32 %v8776, %v8777
        %v8779 = vsel %vm8759, %v8705, 0.0
        %v8780 = vadd.f32 %v8778, %v8779
        %v8781 = vsel %vm8759, %v8706, 0.0
        %v8782 = vadd.f32 %v8780, %v8781
        %v8783 = vsel %vm8759, %v8707, 0.0
        %v8784 = vadd.f32 %v8782, %v8783
        %v8785 = vsel %vm8759, %v8708, 0.0
        %v8786 = vadd.f32 %v8784, %v8785
        %v8787 = vsel %vm8759, %v8709, 0.0
        %v8788 = vadd.f32 %v8786, %v8787
        %v8789 = vsel %vm8759, %v8710, 0.0
        %v8790 = vadd.f32 %v8788, %v8789
        %v8791 = vsel %vm8759, %v8711, 0.0
        %v8792 = vadd.f32 %v8790, %v8791
        %v8793 = vsel %vm8759, %v8712, 0.0
        %v8794 = vadd.f32 %v8792, %v8793
        %v8795 = vsel %vm8759, %v8713, 0.0
        %v8796 = vadd.f32 %v8794, %v8795
        %v8797 = vsel %vm8759, %v8714, 0.0
        %v8798 = vadd.f32 %v8796, %v8797
        %v8799 = vsel %vm8759, %v8715, 0.0
        %v8800 = vadd.f32 %v8798, %v8799
        %v8801 = vsel %vm8759, %v8716, 0.0
        %v8802 = vadd.f32 %v8800, %v8801
        %v8803 = vsel %vm8759, %v8717, 0.0
        %v8804 = vadd.f32 %v8802, %v8803
        %v8805 = vsel %vm8759, %v8718, 0.0
        %v8806 = vadd.f32 %v8804, %v8805
        %v8807 = vsel %vm8759, %v8719, 0.0
        %v8808 = vadd.f32 %v8806, %v8807
        %v8809 = vsel %vm8759, %v8720, 0.0
        %v8810 = vadd.f32 %v8808, %v8809
        %v8811 = vsel %vm8759, %v8721, 0.0
        %v8812 = vadd.f32 %v8810, %v8811
        %v8813 = vsel %vm8759, %v8722, 0.0
        %v8814 = vadd.f32 %v8812, %v8813
        %v8815 = vsel %vm8759, %v8723, 0.0
        %v8816 = vadd.f32 %v8814, %v8815
        %v8817 = vsel %vm8759, %v8724, 0.0
        %v8818 = vadd.f32 %v8816, %v8817
        %v8819 = vsel %vm8759, %v8725, 0.0
        %v8820 = vadd.f32 %v8818, %v8819
        %v8821 = vsel %vm8759, %v8726, 0.0
        %v8822 = vadd.f32 %v8820, %v8821
        %v8823 = vsel %vm8759, %v8727, 0.0
        %v8824 = vadd.f32 %v8822, %v8823
        %v8825 = vsel %vm8759, %v8728, 0.0
        %v8826 = vadd.f32 %v8824, %v8825
        %v8827 = vsel %vm8759, %v8729, 0.0
        %v8828 = vadd.f32 %v8826, %v8827
        %v8829 = vsel %vm8759, %v8730, 0.0
        %v8830 = vadd.f32 %v8828, %v8829
        %v8831 = vsel %vm8759, %v8731, 0.0
        %v8832 = vadd.f32 %v8830, %v8831
        %v8833 = vsel %vm8759, %v8732, 0.0
        %v8834 = vadd.f32 %v8832, %v8833
        %v8835 = vsel %vm8759, %v8733, 0.0
        %v8836 = vadd.f32 %v8834, %v8835
        %v8837 = vsel %vm8759, %v8734, 0.0
        %v8838 = vadd.f32 %v8836, %v8837
        %v8839 = vsel %vm8759, %v8735, 0.0
        %v8840 = vadd.f32 %v8838, %v8839
        %v8841 = vsel %vm8759, %v8736, 0.0
        %v8842 = vadd.f32 %v8840, %v8841
        %v8843 = vsel %vm8759, %v8737, 0.0
        %v8844 = vadd.f32 %v8842, %v8843
        %v8845 = vsel %vm8759, %v8738, 0.0
        %v8846 = vadd.f32 %v8844, %v8845
        %v8847 = vsel %vm8759, %v8739, 0.0
        %v8848 = vadd.f32 %v8846, %v8847
        %v8849 = vsel %vm8759, %v8740, 0.0
        %v8850 = vadd.f32 %v8848, %v8849
        %v8851 = vsel %vm8759, %v8741, 0.0
        %v8852 = vadd.f32 %v8850, %v8851
        %v8853 = vsel %vm8759, %v8742, 0.0
        %v8854 = vadd.f32 %v8852, %v8853
        %v8855 = vsel %vm8759, %v8743, 0.0
        %v8856 = vadd.f32 %v8854, %v8855
        %v8857 = vsel %vm8759, %v8744, 0.0
        %v8858 = vadd.f32 %v8856, %v8857
        %v8859 = vsel %vm8759, %v8745, 0.0
        %v8860 = vadd.f32 %v8858, %v8859
        %v8861 = vsel %vm8759, %v8746, 0.0
        %v8862 = vadd.f32 %v8860, %v8861
        %v8863 = vsel %vm8759, %v8747, 0.0
        %v8864 = vadd.f32 %v8862, %v8863
        %v8865 = vsel %vm8759, %v8748, 0.0
        %v8866 = vadd.f32 %v8864, %v8865
        %v8867 = vsel %vm8759, %v8749, 0.0
        %v8868 = vadd.f32 %v8866, %v8867
        %v8869 = vsel %vm8759, %v8750, 0.0
        %v8870 = vadd.f32 %v8868, %v8869
        %v8871 = vsel %vm8759, %v8751, 0.0
        %v8872 = vadd.f32 %v8870, %v8871
        %v8873 = vsel %vm8759, %v8752, 0.0
        %v8874 = vadd.f32 %v8872, %v8873
        %v8875 = vsel %vm8759, %v8753, 0.0
        %v8876 = vadd.f32 %v8874, %v8875
        %v8877 = vsel %vm8759, %v8754, 0.0
        %v8878 = vadd.f32 %v8876, %v8877
        %v8879 = vsel %vm8759, %v8755, 0.0
        %v8880 = vadd.f32 %v8878, %v8879
        %v8881 = vsel %vm8759, %v8756, 0.0
        %v8882 = vadd.f32 %v8880, %v8881
        %v8883 = vsel %vm8759, %v8757, 0.0
        %v8884 = vadd.f32 %v8882, %v8883
        %v8885 = vsel %vm8759, %v8758, 0.0
        %v8886 = vadd.f32 %v8884, %v8885
        %v8887 = vrot.slane %v8886, 4
        %v8888 = vadd.f32 %v8886, %v8887
        %v8889 = vrot.slane %v8888, 2
        %v8890 = vadd.f32 %v8888, %v8889
        %v8891 = vrot.slane %v8890, 1
        %v8892 = vadd.f32 %v8890, %v8891
        %vm8893 = vcmask 122880
        %8894 = vst.msk [vmem:[%s182] sm:$0x1] %vm8893, %v8892
        %v8895 = vmul.f32 %v8695, %v8695
        %v8896 = vmul.f32 %v8696, %v8696
        %v8897 = vmul.f32 %v8697, %v8697
        %v8898 = vmul.f32 %v8698, %v8698
        %v8899 = vmul.f32 %v8699, %v8699
        %v8900 = vmul.f32 %v8700, %v8700
        %v8901 = vmul.f32 %v8701, %v8701
        %v8902 = vmul.f32 %v8702, %v8702
        %v8903 = vmul.f32 %v8703, %v8703
        %v8904 = vmul.f32 %v8704, %v8704
        %v8905 = vmul.f32 %v8705, %v8705
        %v8906 = vmul.f32 %v8706, %v8706
        %v8907 = vmul.f32 %v8707, %v8707
        %v8908 = vmul.f32 %v8708, %v8708
        %v8909 = vmul.f32 %v8709, %v8709
        %v8910 = vmul.f32 %v8710, %v8710
        %v8911 = vmul.f32 %v8711, %v8711
        %v8912 = vmul.f32 %v8712, %v8712
        %v8913 = vmul.f32 %v8713, %v8713
        %v8914 = vmul.f32 %v8714, %v8714
        %v8915 = vmul.f32 %v8715, %v8715
        %v8916 = vmul.f32 %v8716, %v8716
        %v8917 = vmul.f32 %v8717, %v8717
        %v8918 = vmul.f32 %v8718, %v8718
        %v8919 = vmul.f32 %v8719, %v8719
        %v8920 = vmul.f32 %v8720, %v8720
        %v8921 = vmul.f32 %v8721, %v8721
        %v8922 = vmul.f32 %v8722, %v8722
        %v8923 = vmul.f32 %v8723, %v8723
        %v8924 = vmul.f32 %v8724, %v8724
        %v8925 = vmul.f32 %v8725, %v8725
        %v8926 = vmul.f32 %v8726, %v8726
        %v8927 = vmul.f32 %v8727, %v8727
        %v8928 = vmul.f32 %v8728, %v8728
        %v8929 = vmul.f32 %v8729, %v8729
        %v8930 = vmul.f32 %v8730, %v8730
        %v8931 = vmul.f32 %v8731, %v8731
        %v8932 = vmul.f32 %v8732, %v8732
        %v8933 = vmul.f32 %v8733, %v8733
        %v8934 = vmul.f32 %v8734, %v8734
        %v8935 = vmul.f32 %v8735, %v8735
        %v8936 = vmul.f32 %v8736, %v8736
        %v8937 = vmul.f32 %v8737, %v8737
        %v8938 = vmul.f32 %v8738, %v8738
        %v8939 = vmul.f32 %v8739, %v8739
        %v8940 = vmul.f32 %v8740, %v8740
        %v8941 = vmul.f32 %v8741, %v8741
        %v8942 = vmul.f32 %v8742, %v8742
        %v8943 = vmul.f32 %v8743, %v8743
        %v8944 = vmul.f32 %v8744, %v8744
        %v8945 = vmul.f32 %v8745, %v8745
        %v8946 = vmul.f32 %v8746, %v8746
        %v8947 = vmul.f32 %v8747, %v8747
        %v8948 = vmul.f32 %v8748, %v8748
        %v8949 = vmul.f32 %v8749, %v8749
        %v8950 = vmul.f32 %v8750, %v8750
        %v8951 = vmul.f32 %v8751, %v8751
        %v8952 = vmul.f32 %v8752, %v8752
        %v8953 = vmul.f32 %v8753, %v8753
        %v8954 = vmul.f32 %v8754, %v8754
        %v8955 = vmul.f32 %v8755, %v8755
        %v8956 = vmul.f32 %v8756, %v8756
        %v8957 = vmul.f32 %v8757, %v8757
        %v8958 = vmul.f32 %v8758, %v8758
        %v8959 = vsel %vm8759, %v8895, 0.0
        %v8960 = vsel %vm8759, %v8896, 0.0
        %v8961 = vadd.f32 %v8959, %v8960
        %v8962 = vsel %vm8759, %v8897, 0.0
        %v8963 = vadd.f32 %v8961, %v8962
        %v8964 = vsel %vm8759, %v8898, 0.0
        %v8965 = vadd.f32 %v8963, %v8964
        %v8966 = vsel %vm8759, %v8899, 0.0
        %v8967 = vadd.f32 %v8965, %v8966
        %v8968 = vsel %vm8759, %v8900, 0.0
        %v8969 = vadd.f32 %v8967, %v8968
        %v8970 = vsel %vm8759, %v8901, 0.0
        %v8971 = vadd.f32 %v8969, %v8970
        %v8972 = vsel %vm8759, %v8902, 0.0
        %v8973 = vadd.f32 %v8971, %v8972
        %v8974 = vsel %vm8759, %v8903, 0.0
        %v8975 = vadd.f32 %v8973, %v8974
        %v8976 = vsel %vm8759, %v8904, 0.0
        %v8977 = vadd.f32 %v8975, %v8976
        %v8978 = vsel %vm8759, %v8905, 0.0
        %v8979 = vadd.f32 %v8977, %v8978
        %v8980 = vsel %vm8759, %v8906, 0.0
        %v8981 = vadd.f32 %v8979, %v8980
        %v8982 = vsel %vm8759, %v8907, 0.0
        %v8983 = vadd.f32 %v8981, %v8982
        %v8984 = vsel %vm8759, %v8908, 0.0
        %v8985 = vadd.f32 %v8983, %v8984
        %v8986 = vsel %vm8759, %v8909, 0.0
        %v8987 = vadd.f32 %v8985, %v8986
        %v8988 = vsel %vm8759, %v8910, 0.0
        %v8989 = vadd.f32 %v8987, %v8988
        %v8990 = vsel %vm8759, %v8911, 0.0
        %v8991 = vadd.f32 %v8989, %v8990
        %v8992 = vsel %vm8759, %v8912, 0.0
        %v8993 = vadd.f32 %v8991, %v8992
        %v8994 = vsel %vm8759, %v8913, 0.0
        %v8995 = vadd.f32 %v8993, %v8994
        %v8996 = vsel %vm8759, %v8914, 0.0
        %v8997 = vadd.f32 %v8995, %v8996
        %v8998 = vsel %vm8759, %v8915, 0.0
        %v8999 = vadd.f32 %v8997, %v8998
        %v9000 = vsel %vm8759, %v8916, 0.0
        %v9001 = vadd.f32 %v8999, %v9000
        %v9002 = vsel %vm8759, %v8917, 0.0
        %v9003 = vadd.f32 %v9001, %v9002
        %v9004 = vsel %vm8759, %v8918, 0.0
        %v9005 = vadd.f32 %v9003, %v9004
        %v9006 = vsel %vm8759, %v8919, 0.0
        %v9007 = vadd.f32 %v9005, %v9006
        %v9008 = vsel %vm8759, %v8920, 0.0
        %v9009 = vadd.f32 %v9007, %v9008
        %v9010 = vsel %vm8759, %v8921, 0.0
        %v9011 = vadd.f32 %v9009, %v9010
        %v9012 = vsel %vm8759, %v8922, 0.0
        %v9013 = vadd.f32 %v9011, %v9012
        %v9014 = vsel %vm8759, %v8923, 0.0
        %v9015 = vadd.f32 %v9013, %v9014
        %v9016 = vsel %vm8759, %v8924, 0.0
        %v9017 = vadd.f32 %v9015, %v9016
        %v9018 = vsel %vm8759, %v8925, 0.0
        %v9019 = vadd.f32 %v9017, %v9018
        %v9020 = vsel %vm8759, %v8926, 0.0
        %v9021 = vadd.f32 %v9019, %v9020
        %v9022 = vsel %vm8759, %v8927, 0.0
        %v9023 = vadd.f32 %v9021, %v9022
        %v9024 = vsel %vm8759, %v8928, 0.0
        %v9025 = vadd.f32 %v9023, %v9024
        %v9026 = vsel %vm8759, %v8929, 0.0
        %v9027 = vadd.f32 %v9025, %v9026
        %v9028 = vsel %vm8759, %v8930, 0.0
        %v9029 = vadd.f32 %v9027, %v9028
        %v9030 = vsel %vm8759, %v8931, 0.0
        %v9031 = vadd.f32 %v9029, %v9030
        %v9032 = vsel %vm8759, %v8932, 0.0
        %v9033 = vadd.f32 %v9031, %v9032
        %v9034 = vsel %vm8759, %v8933, 0.0
        %v9035 = vadd.f32 %v9033, %v9034
        %v9036 = vsel %vm8759, %v8934, 0.0
        %v9037 = vadd.f32 %v9035, %v9036
        %v9038 = vsel %vm8759, %v8935, 0.0
        %v9039 = vadd.f32 %v9037, %v9038
        %v9040 = vsel %vm8759, %v8936, 0.0
        %v9041 = vadd.f32 %v9039, %v9040
        %v9042 = vsel %vm8759, %v8937, 0.0
        %v9043 = vadd.f32 %v9041, %v9042
        %v9044 = vsel %vm8759, %v8938, 0.0
        %v9045 = vadd.f32 %v9043, %v9044
        %v9046 = vsel %vm8759, %v8939, 0.0
        %v9047 = vadd.f32 %v9045, %v9046
        %v9048 = vsel %vm8759, %v8940, 0.0
        %v9049 = vadd.f32 %v9047, %v9048
        %v9050 = vsel %vm8759, %v8941, 0.0
        %v9051 = vadd.f32 %v9049, %v9050
        %v9052 = vsel %vm8759, %v8942, 0.0
        %v9053 = vadd.f32 %v9051, %v9052
        %v9054 = vsel %vm8759, %v8943, 0.0
        %v9055 = vadd.f32 %v9053, %v9054
        %v9056 = vsel %vm8759, %v8944, 0.0
        %v9057 = vadd.f32 %v9055, %v9056
        %v9058 = vsel %vm8759, %v8945, 0.0
        %v9059 = vadd.f32 %v9057, %v9058
        %v9060 = vsel %vm8759, %v8946, 0.0
        %v9061 = vadd.f32 %v9059, %v9060
        %v9062 = vsel %vm8759, %v8947, 0.0
        %v9063 = vadd.f32 %v9061, %v9062
        %v9064 = vsel %vm8759, %v8948, 0.0
        %v9065 = vadd.f32 %v9063, %v9064
        %v9066 = vsel %vm8759, %v8949, 0.0
        %v9067 = vadd.f32 %v9065, %v9066
        %v9068 = vsel %vm8759, %v8950, 0.0
        %v9069 = vadd.f32 %v9067, %v9068
        %v9070 = vsel %vm8759, %v8951, 0.0
        %v9071 = vadd.f32 %v9069, %v9070
        %v9072 = vsel %vm8759, %v8952, 0.0
        %v9073 = vadd.f32 %v9071, %v9072
        %v9074 = vsel %vm8759, %v8953, 0.0
        %v9075 = vadd.f32 %v9073, %v9074
        %v9076 = vsel %vm8759, %v8954, 0.0
        %v9077 = vadd.f32 %v9075, %v9076
        %v9078 = vsel %vm8759, %v8955, 0.0
        %v9079 = vadd.f32 %v9077, %v9078
        %v9080 = vsel %vm8759, %v8956, 0.0
        %v9081 = vadd.f32 %v9079, %v9080
        %v9082 = vsel %vm8759, %v8957, 0.0
        %v9083 = vadd.f32 %v9081, %v9082
        %v9084 = vsel %vm8759, %v8958, 0.0
        %v9085 = vadd.f32 %v9083, %v9084
        %v9086 = vrot.slane %v9085, 4
        %v9087 = vadd.f32 %v9085, %v9086
        %v9088 = vrot.slane %v9087, 2
        %v9089 = vadd.f32 %v9087, %v9088
        %v9090 = vrot.slane %v9089, 1
        %v9091 = vadd.f32 %v9089, %v9090
        %9092 = vst.msk [vmem:[%s188] sm:$0x1] %vm8893, %v9091
        %s9093 = sand.u32 %s90, 1
        %s9094 = scalar_lea.sflag [#allocation4], %s9093
        %s9095 = sand.u32 %s90, 1
        %s9096 = scalar_lea.vmem [#allocation3], %s9095
        %s9097 = sand.u32 %s118, 1
        %s9098 = scalar_lea.sflag [#allocation6], %s9097
        %s9099 = sand.u32 %s118, 1
        %s9100 = scalar_lea.vmem [#allocation5], %s9099
        // Predicated region
        $region29: #{tpu_custom_call.1} parent=27 // pred_check
          %p9101 = pneg %p100
        $region30: #{tpu_custom_call.1} parent=27 // pred_check_branch
          %9103 = sbr.rel (%p9101) target = $region32
        $region31: #{tpu_custom_call.1} parent=27 // pred_region
          %9105 = vsyncadd %s9094, 0
          %s9106 = sadd.s32 %s26, %s25
          %s9107 = scalar_lea.hbm %s2, %s9106
          %s9109 = sshll.u32 %s9096, 4
          %s9110 = int_to_ptr.vmem [resolvable:$true] %s9109
          %s9111 = sshll.u32 %s9107, 4
          %s9112 = int_to_ptr.hbm [resolvable:$true] %s9111
          %9114 = dma.vmem_to_hbm [thread:$0]  %s9110, 16, %s9112, %s9094
        $region32: #{tpu_custom_call.1} parent=27 // pred_fallthru
          _
        // Predicated region
        $region33: #{tpu_custom_call.1} parent=27 // pred_check
          %p9115 = pneg %p128
        $region34: #{tpu_custom_call.1} parent=27 // pred_check_branch
          %9117 = sbr.rel (%p9115) target = $region36
        $region35: #{tpu_custom_call.1} parent=27 // pred_region
          %9119 = vsyncadd %s9098, 0
          %s9120 = sadd.s32 %s26, %s25
          %s9121 = scalar_lea.hbm %s3, %s9120
          %s9123 = sshll.u32 %s9100, 4
          %s9124 = int_to_ptr.vmem [resolvable:$true] %s9123
          %s9125 = sshll.u32 %s9121, 4
          %s9126 = int_to_ptr.hbm [resolvable:$true] %s9125
          %9128 = dma.vmem_to_hbm [thread:$0]  %s9124, 16, %s9126, %s9098
        $region36: #{tpu_custom_call.1} parent=27 // pred_fallthru
          _
      $region28: #{tpu_custom_call.1} parent=5 // pred_fallthru
        _
      %p9129 = scmp.le.s32.totalorder 2, %s16
      // Predicated region
      $region37: #{tpu_custom_call.1} parent=5 // pred_check
        %p9130 = pneg %p9129
      $region38: #{tpu_custom_call.1} parent=5 // pred_check_branch
        %9132 = sbr.rel (%p9130) target = $region40
      $region39: #{tpu_custom_call.1} parent=5 // pred_region
        %s9133 = ssub.s32 %s16, 2
        // Predicated region
        $region41: #{tpu_custom_call.1} parent=39 // pred_check
          %p9134 = pneg %p106
        $region42: #{tpu_custom_call.1} parent=39 // pred_check_branch
          %9136 = sbr.rel (%p9134) target = $region44
        $region43: #{tpu_custom_call.1} parent=39 // pred_region
          %s9137 = sand.u32 %s91, 1
          %s9138 = scalar_lea.sflag [#allocation4], %s9137
          %s9139 = sand.u32 %s91, 1
          %s9140 = scalar_lea.vmem [#allocation3], %s9139
          %9142 = dma.done %s9138, 16
        $region44: #{tpu_custom_call.1} parent=39 // pred_fallthru
          _
        // Predicated region
        $region45: #{tpu_custom_call.1} parent=39 // pred_check
          %p9143 = pneg %p134
        $region46: #{tpu_custom_call.1} parent=39 // pred_check_branch
          %9145 = sbr.rel (%p9143) target = $region48
        $region47: #{tpu_custom_call.1} parent=39 // pred_region
          %s9146 = sand.u32 %s119, 1
          %s9147 = scalar_lea.sflag [#allocation6], %s9146
          %s9148 = sand.u32 %s119, 1
          %s9149 = scalar_lea.vmem [#allocation5], %s9148
          %9151 = dma.done %s9147, 16
        $region48: #{tpu_custom_call.1} parent=39 // pred_fallthru
          _
      $region40: #{tpu_custom_call.1} parent=5 // pred_fallthru
        _
    $region6: #{tpu_custom_call.1} parent=1 // loop_footer
      %s20 = sadd.s32 1, %s16
    $region7: #{tpu_custom_call.1} parent=1 // loop_footer_branch
      %15 = sbr.rel target = $region3
    $region8: #{tpu_custom_call.1} parent=1 // loop_exit
      _
    %9152 = vsyncpa [#allocation4], 1
    %s9153 = scalar_lea.sflag [#allocation4], 1
    %9154 = vsyncpa %s9153, 1
    %9155 = vsyncpa [#allocation6], 1
    %s9156 = scalar_lea.sflag [#allocation6], 1
    %9157 = vsyncpa %s9156, 1

</llo_original>
